<compile_context>
chip_gen: v5e
topology: v5e:2x2
jax: 0.10.0
libtpu: 0.0.40
codegen_flags: <defaults>
</compile_context>

<pallas_src>
import functools

import jax
import jax.numpy as jnp
from jax import lax
from jax.experimental import pallas as pl
from jax.experimental.pallas import tpu as pltpu


# ----------------------------------------------------------------------------
# TestConvNet layer configuration (C_in, C_out, K).  Dropout layers omitted
# (identity at inference time).  ReLU after every conv except the last one.
# NOTE: the last layer is computed with cout=1 inside the kernel (channel 1 is
# discarded by forward()); the PyTorch-layout params still carry cout=2.
# ----------------------------------------------------------------------------
_LAYER_CFG = [
    (1, 16, 5),
    (16, 32, 5),
    (32, 64, 5),
    (64, 128, 5),
    (128, 256, 5),
    (256, 256, 5),
    (256, 256, 5),
    (256, 64, 5),
    (64, 32, 5),
    (32, 2, 1),
]
_RELU_FLAGS = [True] * 9 + [False]
_MAX_C = 256       # widest channel count in the net
_KMAX = 5          # widest conv kernel


def _fused_kernel(*refs, nb, L):
    """Whole-network forward for one (nb, L) batch tile.

    refs = (x_ref, w0, b0, ..., w9, b9, o_ref, pad_ref)
      x_ref  : (nb*L, 1)                 input rows in (b, l) order
      w_i    : (K_i * Cin_i, Cout_i)     im2col-ready weights (row kk*Cin + c)
      b_i    : (1, Cout_i)
      o_ref  : (nb*L, 1)                 output channel 0 of the last conv
      pad_ref: (nb, L + KMAX - 1, MAX_C) per-batch zero-halo staging (VMEM)
    """
    n_layers = len(_LAYER_CFG)
    x_ref = refs[0]
    wb_refs = refs[1:1 + 2 * n_layers]
    o_ref = refs[1 + 2 * n_layers]
    pad_ref = refs[2 + 2 * n_layers]
    M = nb * L

    # Zero the 2-row halos once (per grid step); interior rows are overwritten
    # per layer, and columns beyond each layer's cin are never read.
    pad_ref[:, 0:2, :] = jnp.zeros((nb, 2, _MAX_C), jnp.float32)
    pad_ref[:, 2 + L:4 + L, :] = jnp.zeros((nb, 2, _MAX_C), jnp.float32)

    act = x_ref[...].astype(jnp.float32)  # (M, 1)

    for li, ((cin, _cout, k), relu) in enumerate(zip(_LAYER_CFG, _RELU_FLAGS)):
        w_ref = wb_refs[2 * li]        # (k*cin, cout)
        b_ref = wb_refs[2 * li + 1]    # (1, cout)
        if k == 1:
            # Plain (M, cin) @ (cin, cout) matmul (last layer, cout=1).
            y = jnp.dot(act, w_ref[...], preferred_element_type=jnp.float32)
        else:
            # Stage the activation into the per-batch zero-halo buffer, then
            # accumulate k shifted dots (no im2col slab).  L % 8 == 0 makes
            # the (M, cin) <-> (nb, L, cin) reshapes layout no-ops.
            pad_ref[:, 2:2 + L, :cin] = act.reshape(nb, L, cin)
            y = None
            for kk in range(k):
                tap = pad_ref[:, kk:kk + L, :cin].reshape(M, cin)
                if cin == 1:
                    # Layer 0: contraction dim 1 -> VPU broadcast FMA instead
                    # of a near-empty MXU push.
                    part = tap * w_ref[kk:kk + 1, :]          # (M,1)*(1,cout)
                else:
                    part = jnp.dot(tap, w_ref[kk * cin:(kk + 1) * cin, :],
                                   preferred_element_type=jnp.float32)
                y = part if y is None else y + part
        y = y + b_ref[...].astype(jnp.float32)
        if relu:
            y = jnp.maximum(y, 0.0)
        act = y

    o_ref[...] = act.astype(o_ref.dtype)   # (M, 1)


# ----------------------------------------------------------------------------
# Parameter handling
# ----------------------------------------------------------------------------
def init_params(key):
    """Deterministic init mimicking PyTorch Conv1d default (uniform +-1/sqrt(fan_in)).

    Stored in the PyTorch layout (C_out, C_in, K).
    """
    params = []
    for (cin, cout, k) in _LAYER_CFG:
        key, kw, kb = jax.random.split(key, 3)
        bound = 1.0 / jnp.sqrt(cin * k)
        w = jax.random.uniform(kw, (cout, cin, k), jnp.float32, -bound, bound)
        b = jax.random.uniform(kb, (cout,), jnp.float32, -bound, bound)
        params.append((w, b))
    return params


def pack_params(params):
    """One-time conversion to kernel-native layout.

    (C_out, C_in, K) -> (K*C_in, C_out) with row index kk*C_in + c, matching
    the shifted-tap dots in the kernel.  Bias -> (1, C_out).  The last layer
    is sliced to its first output channel (forward() discards channel 1).
    """
    packed = []
    n_layers = len(_LAYER_CFG)
    for li, ((w, b), (cin, cout, k)) in enumerate(zip(params, _LAYER_CFG)):
        assert k % 2 == 1, "same-padding formula assumes odd kernel size"
        if li == n_layers - 1:
            w = w[0:1]                     # keep only channel 0 (cout -> 1)
            b = b[0:1]
            cout = 1
        w_kio = jnp.transpose(w, (2, 1, 0)).reshape(k * cin, cout)
        packed.append((w_kio, b.reshape(1, cout)))
    return packed


# ----------------------------------------------------------------------------
# Forward pass (single fused pallas_call)
# ----------------------------------------------------------------------------
def test_conv_net_forward(x_ncl, packed_params, batch_tile=None):
    """Forward pass of TestConvNet (inference). x_ncl: (N, 1, L) -> (N, 1, L)."""
    N, C, L = x_ncl.shape
    assert C == 1
    nb = N if batch_tile is None else batch_tile
    assert N % nb == 0
    num_tiles = N // nb
    M = nb * L

    # (N, 1, L) and (N*L, 1) share the same flat order -> bitcast-level
    # reshape, no transpose kernel, no extra HBM round trip.
    x_flat = x_ncl.reshape(N * L, 1)

    flat_args = []
    in_specs = [pl.BlockSpec((M, 1), lambda t: (t, 0))]
    for w, b in packed_params:
        flat_args += [w, b]
        in_specs.append(pl.BlockSpec(w.shape, lambda t: (0, 0)))
        in_specs.append(pl.BlockSpec(b.shape, lambda t: (0, 0)))

    out = pl.pallas_call(
        functools.partial(_fused_kernel, nb=nb, L=L),
        out_shape=jax.ShapeDtypeStruct((N * L, 1), x_ncl.dtype),
        grid=(num_tiles,),
        in_specs=in_specs,
        out_specs=pl.BlockSpec((M, 1), lambda t: (t, 0)),
        scratch_shapes=[
            # per-batch zero-halo staging buffer
            pltpu.VMEM((nb, L + _KMAX - 1, _MAX_C), jnp.float32),
        ],
        compiler_params=pltpu.CompilerParams(
            dimension_semantics=("parallel",),      # batch tiles across TCs
            vmem_limit_bytes=32 * 1024 * 1024,      # ~9 MB used; fits v5e-v7x
        ),
    )(x_flat, *flat_args)

    # (N*L, 1) -> (N, 1, L): same flat order, bitcast-level reshape.
    return out.reshape(N, 1, L)


# ----------------------------------------------------------------------------
# Pure-JAX reference (NCL layout, PyTorch-layout params, full 2-channel head)
# ----------------------------------------------------------------------------
def _reference_forward(x_ncl, params):
    data = x_ncl
    for (w, b), relu in zip(params, _RELU_FLAGS):
        k = w.shape[-1]
        pad = (k - 1) // 2
        data = lax.conv_general_dilated(
            data, w,
            window_strides=(1,),
            padding=[(pad, pad)],
            dimension_numbers=("NCH", "OIH", "NCH"),
            precision=lax.Precision.HIGHEST,
        ) + b[None, :, None]
        if relu:
            data = jnp.maximum(data, 0.0)
    return data[:, 0:1, :]


if __name__ == "__main__":
    key = jax.random.PRNGKey(0)
    k_param, k_x = jax.random.split(key)

    params = init_params(k_param)
    packed = pack_params(params)   # one-time layout conversion

    # Small input consistent with the module: batch=2, channels=1, length=16.
    N, C, L = 2, 1, 16
    x = jax.random.normal(k_x, (N, C, L), jnp.float32)

    out = jax.jit(test_conv_net_forward)(x, packed)
    out = jax.block_until_ready(out)

    ref = _reference_forward(x, params)
    assert out.shape == (N, 1, L), out.shape
    assert jnp.allclose(out, ref, rtol=1e-4, atol=1e-4), (
        float(jnp.max(jnp.abs(out - ref)))
    )

    print("KERNEL_OK")
</pallas_src>

<mosaic_0001>
module attributes {stable_mosaic.version = 11 : i64} {
  func.func @_fused_kernel(%arg0: i32, %arg1: memref<32x1xf32, #tpu.memory_space<vmem>>, %arg2: memref<5x16xf32, #tpu.memory_space<vmem>>, %arg3: memref<1x16xf32, #tpu.memory_space<vmem>>, %arg4: memref<80x32xf32, #tpu.memory_space<vmem>>, %arg5: memref<1x32xf32, #tpu.memory_space<vmem>>, %arg6: memref<160x64xf32, #tpu.memory_space<vmem>>, %arg7: memref<1x64xf32, #tpu.memory_space<vmem>>, %arg8: memref<320x128xf32, #tpu.memory_space<vmem>>, %arg9: memref<1x128xf32, #tpu.memory_space<vmem>>, %arg10: memref<640x256xf32, #tpu.memory_space<vmem>>, %arg11: memref<1x256xf32, #tpu.memory_space<vmem>>, %arg12: memref<1280x256xf32, #tpu.memory_space<vmem>>, %arg13: memref<1x256xf32, #tpu.memory_space<vmem>>, %arg14: memref<1280x256xf32, #tpu.memory_space<vmem>>, %arg15: memref<1x256xf32, #tpu.memory_space<vmem>>, %arg16: memref<1280x64xf32, #tpu.memory_space<vmem>>, %arg17: memref<1x64xf32, #tpu.memory_space<vmem>>, %arg18: memref<320x32xf32, #tpu.memory_space<vmem>>, %arg19: memref<1x32xf32, #tpu.memory_space<vmem>>, %arg20: memref<32x1xf32, #tpu.memory_space<vmem>>, %arg21: memref<1x1xf32, #tpu.memory_space<vmem>>, %arg22: memref<32x1xf32, #tpu.memory_space<vmem>>, %arg23: memref<2x20x256xf32, #tpu.memory_space<vmem>>) attributes {dimension_semantics = [#tpu.dimension_semantics<parallel>], iteration_bounds = array<i64: 1>, scalar_prefetch = 0 : i64, scratch_operands = 1 : i64, tpu.core_type = #tpu.core_type<tc>, window_params = [{transform_indices = @transform_0, window_bounds = array<i64: 32, 1>}, {pipeline_mode = #tpu.pipeline_mode<synchronous>, transform_indices = @transform_1, window_bounds = array<i64: 5, 16>}, {pipeline_mode = #tpu.pipeline_mode<synchronous>, transform_indices = @transform_2, window_bounds = array<i64: 1, 16>}, {pipeline_mode = #tpu.pipeline_mode<synchronous>, transform_indices = @transform_3, window_bounds = array<i64: 80, 32>}, {pipeline_mode = #tpu.pipeline_mode<synchronous>, transform_indices = @transform_4, window_bounds = array<i64: 1, 32>}, {pipeline_mode = #tpu.pipeline_mode<synchronous>, transform_indices = @transform_5, window_bounds = array<i64: 160, 64>}, {pipeline_mode = #tpu.pipeline_mode<synchronous>, transform_indices = @transform_6, window_bounds = array<i64: 1, 64>}, {pipeline_mode = #tpu.pipeline_mode<synchronous>, transform_indices = @transform_7, window_bounds = array<i64: 320, 128>}, {pipeline_mode = #tpu.pipeline_mode<synchronous>, transform_indices = @transform_8, window_bounds = array<i64: 1, 128>}, {pipeline_mode = #tpu.pipeline_mode<synchronous>, transform_indices = @transform_9, window_bounds = array<i64: 640, 256>}, {pipeline_mode = #tpu.pipeline_mode<synchronous>, transform_indices = @transform_10, window_bounds = array<i64: 1, 256>}, {pipeline_mode = #tpu.pipeline_mode<synchronous>, transform_indices = @transform_11, window_bounds = array<i64: 1280, 256>}, {pipeline_mode = #tpu.pipeline_mode<synchronous>, transform_indices = @transform_12, window_bounds = array<i64: 1, 256>}, {pipeline_mode = #tpu.pipeline_mode<synchronous>, transform_indices = @transform_13, window_bounds = array<i64: 1280, 256>}, {pipeline_mode = #tpu.pipeline_mode<synchronous>, transform_indices = @transform_14, window_bounds = array<i64: 1, 256>}, {pipeline_mode = #tpu.pipeline_mode<synchronous>, transform_indices = @transform_15, window_bounds = array<i64: 1280, 64>}, {pipeline_mode = #tpu.pipeline_mode<synchronous>, transform_indices = @transform_16, window_bounds = array<i64: 1, 64>}, {pipeline_mode = #tpu.pipeline_mode<synchronous>, transform_indices = @transform_17, window_bounds = array<i64: 320, 32>}, {pipeline_mode = #tpu.pipeline_mode<synchronous>, transform_indices = @transform_18, window_bounds = array<i64: 1, 32>}, {pipeline_mode = #tpu.pipeline_mode<synchronous>, transform_indices = @transform_19, window_bounds = array<i64: 32, 1>}, {pipeline_mode = #tpu.pipeline_mode<synchronous>, transform_indices = @transform_20, window_bounds = array<i64: 1, 1>}, {transform_indices = @transform_21, window_bounds = array<i64: 32, 1>}]} {
    %cst = arith.constant 0.000000e+00 : f32
    %0 = vector.broadcast %cst : f32 to vector<2x2x256xf32>
    %c0 = arith.constant 0 : index
    %c0_0 = arith.constant 0 : index
    %c0_1 = arith.constant 0 : index
    %1 = vector.load %arg23[%c0, %c0_0, %c0_1] : memref<2x20x256xf32, #tpu.memory_space<vmem>>, vector<2x2x256xf32>
    tpu.vector_store %arg23[%c0, %c0_0, %c0_1], %0 {strides = array<i32>} : memref<2x20x256xf32, #tpu.memory_space<vmem>>, vector<2x2x256xf32>,
    %cst_2 = arith.constant 0.000000e+00 : f32
    %2 = vector.broadcast %cst_2 : f32 to vector<2x2x256xf32>
    %c0_3 = arith.constant 0 : index
    %c18 = arith.constant 18 : index
    %c0_4 = arith.constant 0 : index
    %3 = vector.load %arg23[%c0_3, %c18, %c0_4] : memref<2x20x256xf32, #tpu.memory_space<vmem>>, vector<2x2x256xf32>
    tpu.vector_store %arg23[%c0_3, %c18, %c0_4], %2 {strides = array<i32>} : memref<2x20x256xf32, #tpu.memory_space<vmem>>, vector<2x2x256xf32>,
    %c0_5 = arith.constant 0 : index
    %c0_6 = arith.constant 0 : index
    %4 = vector.load %arg1[%c0_5, %c0_6] : memref<32x1xf32, #tpu.memory_space<vmem>>, vector<32x1xf32>
    %5 = vector.shape_cast %4 : vector<32x1xf32> to vector<2x16x1xf32>
    %c0_7 = arith.constant 0 : index
    %c2 = arith.constant 2 : index
    %c0_8 = arith.constant 0 : index
    %6 = vector.load %arg23[%c0_7, %c2, %c0_8] : memref<2x20x256xf32, #tpu.memory_space<vmem>>, vector<2x16x1xf32>
    tpu.vector_store %arg23[%c0_7, %c2, %c0_8], %5 {strides = array<i32>} : memref<2x20x256xf32, #tpu.memory_space<vmem>>, vector<2x16x1xf32>,
    %c0_9 = arith.constant 0 : index
    %c0_10 = arith.constant 0 : index
    %c0_11 = arith.constant 0 : index
    %7 = vector.load %arg23[%c0_9, %c0_10, %c0_11] : memref<2x20x256xf32, #tpu.memory_space<vmem>>, vector<2x16x1xf32>
    %8 = vector.shape_cast %7 : vector<2x16x1xf32> to vector<32x1xf32>
    %c0_12 = arith.constant 0 : index
    %c0_13 = arith.constant 0 : index
    %9 = vector.load %arg2[%c0_12, %c0_13] : memref<5x16xf32, #tpu.memory_space<vmem>>, vector<1x16xf32>
    %10 = vector.broadcast %8 : vector<32x1xf32> to vector<32x16xf32>
    %11 = vector.broadcast %9 : vector<1x16xf32> to vector<32x16xf32>
    %12 = arith.mulf %10, %11 : vector<32x16xf32>
    %c0_14 = arith.constant 0 : index
    %c1 = arith.constant 1 : index
    %c0_15 = arith.constant 0 : index
    %13 = vector.load %arg23[%c0_14, %c1, %c0_15] : memref<2x20x256xf32, #tpu.memory_space<vmem>>, vector<2x16x1xf32>
    %14 = vector.shape_cast %13 : vector<2x16x1xf32> to vector<32x1xf32>
    %c1_16 = arith.constant 1 : index
    %c0_17 = arith.constant 0 : index
    %15 = vector.load %arg2[%c1_16, %c0_17] : memref<5x16xf32, #tpu.memory_space<vmem>>, vector<1x16xf32>
    %16 = vector.broadcast %14 : vector<32x1xf32> to vector<32x16xf32>
    %17 = vector.broadcast %15 : vector<1x16xf32> to vector<32x16xf32>
    %18 = arith.mulf %16, %17 : vector<32x16xf32>
    %19 = arith.addf %12, %18 : vector<32x16xf32>
    %c0_18 = arith.constant 0 : index
    %c2_19 = arith.constant 2 : index
    %c0_20 = arith.constant 0 : index
    %20 = vector.load %arg23[%c0_18, %c2_19, %c0_20] : memref<2x20x256xf32, #tpu.memory_space<vmem>>, vector<2x16x1xf32>
    %21 = vector.shape_cast %20 : vector<2x16x1xf32> to vector<32x1xf32>
    %c2_21 = arith.constant 2 : index
    %c0_22 = arith.constant 0 : index
    %22 = vector.load %arg2[%c2_21, %c0_22] : memref<5x16xf32, #tpu.memory_space<vmem>>, vector<1x16xf32>
    %23 = vector.broadcast %21 : vector<32x1xf32> to vector<32x16xf32>
    %24 = vector.broadcast %22 : vector<1x16xf32> to vector<32x16xf32>
    %25 = arith.mulf %23, %24 : vector<32x16xf32>
    %26 = arith.addf %19, %25 : vector<32x16xf32>
    %c0_23 = arith.constant 0 : index
    %c3 = arith.constant 3 : index
    %c0_24 = arith.constant 0 : index
    %27 = vector.load %arg23[%c0_23, %c3, %c0_24] : memref<2x20x256xf32, #tpu.memory_space<vmem>>, vector<2x16x1xf32>
    %28 = vector.shape_cast %27 : vector<2x16x1xf32> to vector<32x1xf32>
    %c3_25 = arith.constant 3 : index
    %c0_26 = arith.constant 0 : index
    %29 = vector.load %arg2[%c3_25, %c0_26] : memref<5x16xf32, #tpu.memory_space<vmem>>, vector<1x16xf32>
    %30 = vector.broadcast %28 : vector<32x1xf32> to vector<32x16xf32>
    %31 = vector.broadcast %29 : vector<1x16xf32> to vector<32x16xf32>
    %32 = arith.mulf %30, %31 : vector<32x16xf32>
    %33 = arith.addf %26, %32 : vector<32x16xf32>
    %c0_27 = arith.constant 0 : index
    %c4 = arith.constant 4 : index
    %c0_28 = arith.constant 0 : index
    %34 = vector.load %arg23[%c0_27, %c4, %c0_28] : memref<2x20x256xf32, #tpu.memory_space<vmem>>, vector<2x16x1xf32>
    %35 = vector.shape_cast %34 : vector<2x16x1xf32> to vector<32x1xf32>
    %c4_29 = arith.constant 4 : index
    %c0_30 = arith.constant 0 : index
    %36 = vector.load %arg2[%c4_29, %c0_30] : memref<5x16xf32, #tpu.memory_space<vmem>>, vector<1x16xf32>
    %37 = vector.broadcast %35 : vector<32x1xf32> to vector<32x16xf32>
    %38 = vector.broadcast %36 : vector<1x16xf32> to vector<32x16xf32>
    %39 = arith.mulf %37, %38 : vector<32x16xf32>
    %40 = arith.addf %33, %39 : vector<32x16xf32>
    %c0_31 = arith.constant 0 : index
    %c0_32 = arith.constant 0 : index
    %41 = vector.load %arg3[%c0_31, %c0_32] : memref<1x16xf32, #tpu.memory_space<vmem>>, vector<1x16xf32>
    %42 = vector.broadcast %41 : vector<1x16xf32> to vector<32x16xf32>
    %43 = arith.addf %40, %42 : vector<32x16xf32>
    %cst_33 = arith.constant 0.000000e+00 : f32
    %44 = vector.broadcast %cst_33 : f32 to vector<32x16xf32>
    %45 = arith.maximumf %43, %44 : vector<32x16xf32>
    %46 = vector.shape_cast %45 : vector<32x16xf32> to vector<2x16x16xf32>
    %c0_34 = arith.constant 0 : index
    %c2_35 = arith.constant 2 : index
    %c0_36 = arith.constant 0 : index
    %47 = vector.load %arg23[%c0_34, %c2_35, %c0_36] : memref<2x20x256xf32, #tpu.memory_space<vmem>>, vector<2x16x16xf32>
    tpu.vector_store %arg23[%c0_34, %c2_35, %c0_36], %46 {strides = array<i32>} : memref<2x20x256xf32, #tpu.memory_space<vmem>>, vector<2x16x16xf32>,
    %c0_37 = arith.constant 0 : index
    %c0_38 = arith.constant 0 : index
    %c0_39 = arith.constant 0 : index
    %48 = vector.load %arg23[%c0_37, %c0_38, %c0_39] : memref<2x20x256xf32, #tpu.memory_space<vmem>>, vector<2x16x16xf32>
    %49 = vector.shape_cast %48 : vector<2x16x16xf32> to vector<32x16xf32>
    %c0_40 = arith.constant 0 : index
    %c0_41 = arith.constant 0 : index
    %50 = vector.load %arg4[%c0_40, %c0_41] : memref<80x32xf32, #tpu.memory_space<vmem>>, vector<16x32xf32>
    %cst_42 = arith.constant dense<0.000000e+00> : vector<32x32xf32>
    %51 = tpu.matmul %49, %50, %cst_42 {dimension_numbers = #tpu.dot_dimension_numbers<[1], [0], [0], [1], [0, 0, 1, 1], [], []>} : vector<32x16xf32>, vector<16x32xf32>, vector<32x32xf32> -> vector<32x32xf32>
    %c0_43 = arith.constant 0 : index
    %c1_44 = arith.constant 1 : index
    %c0_45 = arith.constant 0 : index
    %52 = vector.load %arg23[%c0_43, %c1_44, %c0_45] : memref<2x20x256xf32, #tpu.memory_space<vmem>>, vector<2x16x16xf32>
    %53 = vector.shape_cast %52 : vector<2x16x16xf32> to vector<32x16xf32>
    %c16 = arith.constant 16 : index
    %c0_46 = arith.constant 0 : index
    %54 = vector.load %arg4[%c16, %c0_46] : memref<80x32xf32, #tpu.memory_space<vmem>>, vector<16x32xf32>
    %cst_47 = arith.constant dense<0.000000e+00> : vector<32x32xf32>
    %55 = tpu.matmul %53, %54, %cst_47 {dimension_numbers = #tpu.dot_dimension_numbers<[1], [0], [0], [1], [0, 0, 1, 1], [], []>} : vector<32x16xf32>, vector<16x32xf32>, vector<32x32xf32> -> vector<32x32xf32>
    %56 = arith.addf %51, %55 : vector<32x32xf32>
    %c0_48 = arith.constant 0 : index
    %c2_49 = arith.constant 2 : index
    %c0_50 = arith.constant 0 : index
    %57 = vector.load %arg23[%c0_48, %c2_49, %c0_50] : memref<2x20x256xf32, #tpu.memory_space<vmem>>, vector<2x16x16xf32>
    %58 = vector.shape_cast %57 : vector<2x16x16xf32> to vector<32x16xf32>
    %c32 = arith.constant 32 : index
    %c0_51 = arith.constant 0 : index
    %59 = vector.load %arg4[%c32, %c0_51] : memref<80x32xf32, #tpu.memory_space<vmem>>, vector<16x32xf32>
    %cst_52 = arith.constant dense<0.000000e+00> : vector<32x32xf32>
    %60 = tpu.matmul %58, %59, %cst_52 {dimension_numbers = #tpu.dot_dimension_numbers<[1], [0], [0], [1], [0, 0, 1, 1], [], []>} : vector<32x16xf32>, vector<16x32xf32>, vector<32x32xf32> -> vector<32x32xf32>
    %61 = arith.addf %56, %60 : vector<32x32xf32>
    %c0_53 = arith.constant 0 : index
    %c3_54 = arith.constant 3 : index
    %c0_55 = arith.constant 0 : index
    %62 = vector.load %arg23[%c0_53, %c3_54, %c0_55] : memref<2x20x256xf32, #tpu.memory_space<vmem>>, vector<2x16x16xf32>
    %63 = vector.shape_cast %62 : vector<2x16x16xf32> to vector<32x16xf32>
    %c48 = arith.constant 48 : index
    %c0_56 = arith.constant 0 : index
    %64 = vector.load %arg4[%c48, %c0_56] : memref<80x32xf32, #tpu.memory_space<vmem>>, vector<16x32xf32>
    %cst_57 = arith.constant dense<0.000000e+00> : vector<32x32xf32>
    %65 = tpu.matmul %63, %64, %cst_57 {dimension_numbers = #tpu.dot_dimension_numbers<[1], [0], [0], [1], [0, 0, 1, 1], [], []>} : vector<32x16xf32>, vector<16x32xf32>, vector<32x32xf32> -> vector<32x32xf32>
    %66 = arith.addf %61, %65 : vector<32x32xf32>
    %c0_58 = arith.constant 0 : index
    %c4_59 = arith.constant 4 : index
    %c0_60 = arith.constant 0 : index
    %67 = vector.load %arg23[%c0_58, %c4_59, %c0_60] : memref<2x20x256xf32, #tpu.memory_space<vmem>>, vector<2x16x16xf32>
    %68 = vector.shape_cast %67 : vector<2x16x16xf32> to vector<32x16xf32>
    %c64 = arith.constant 64 : index
    %c0_61 = arith.constant 0 : index
    %69 = vector.load %arg4[%c64, %c0_61] : memref<80x32xf32, #tpu.memory_space<vmem>>, vector<16x32xf32>
    %cst_62 = arith.constant dense<0.000000e+00> : vector<32x32xf32>
    %70 = tpu.matmul %68, %69, %cst_62 {dimension_numbers = #tpu.dot_dimension_numbers<[1], [0], [0], [1], [0, 0, 1, 1], [], []>} : vector<32x16xf32>, vector<16x32xf32>, vector<32x32xf32> -> vector<32x32xf32>
    %71 = arith.addf %66, %70 : vector<32x32xf32>
    %c0_63 = arith.constant 0 : index
    %c0_64 = arith.constant 0 : index
    %72 = vector.load %arg5[%c0_63, %c0_64] : memref<1x32xf32, #tpu.memory_space<vmem>>, vector<1x32xf32>
    %73 = vector.broadcast %72 : vector<1x32xf32> to vector<32x32xf32>
    %74 = arith.addf %71, %73 : vector<32x32xf32>
    %cst_65 = arith.constant 0.000000e+00 : f32
    %75 = vector.broadcast %cst_65 : f32 to vector<32x32xf32>
    %76 = arith.maximumf %74, %75 : vector<32x32xf32>
    %77 = vector.shape_cast %76 : vector<32x32xf32> to vector<2x16x32xf32>
    %c0_66 = arith.constant 0 : index
    %c2_67 = arith.constant 2 : index
    %c0_68 = arith.constant 0 : index
    %78 = vector.load %arg23[%c0_66, %c2_67, %c0_68] : memref<2x20x256xf32, #tpu.memory_space<vmem>>, vector<2x16x32xf32>
    tpu.vector_store %arg23[%c0_66, %c2_67, %c0_68], %77 {strides = array<i32>} : memref<2x20x256xf32, #tpu.memory_space<vmem>>, vector<2x16x32xf32>,
    %c0_69 = arith.constant 0 : index
    %c0_70 = arith.constant 0 : index
    %c0_71 = arith.constant 0 : index
    %79 = vector.load %arg23[%c0_69, %c0_70, %c0_71] : memref<2x20x256xf32, #tpu.memory_space<vmem>>, vector<2x16x32xf32>
    %80 = vector.shape_cast %79 : vector<2x16x32xf32> to vector<32x32xf32>
    %c0_72 = arith.constant 0 : index
    %c0_73 = arith.constant 0 : index
    %81 = vector.load %arg6[%c0_72, %c0_73] : memref<160x64xf32, #tpu.memory_space<vmem>>, vector<32x64xf32>
    %cst_74 = arith.constant dense<0.000000e+00> : vector<32x64xf32>
    %82 = tpu.matmul %80, %81, %cst_74 {dimension_numbers = #tpu.dot_dimension_numbers<[1], [0], [0], [1], [0, 0, 1, 1], [], []>} : vector<32x32xf32>, vector<32x64xf32>, vector<32x64xf32> -> vector<32x64xf32>
    %c0_75 = arith.constant 0 : index
    %c1_76 = arith.constant 1 : index
    %c0_77 = arith.constant 0 : index
    %83 = vector.load %arg23[%c0_75, %c1_76, %c0_77] : memref<2x20x256xf32, #tpu.memory_space<vmem>>, vector<2x16x32xf32>
    %84 = vector.shape_cast %83 : vector<2x16x32xf32> to vector<32x32xf32>
    %c32_78 = arith.constant 32 : index
    %c0_79 = arith.constant 0 : index
    %85 = vector.load %arg6[%c32_78, %c0_79] : memref<160x64xf32, #tpu.memory_space<vmem>>, vector<32x64xf32>
    %cst_80 = arith.constant dense<0.000000e+00> : vector<32x64xf32>
    %86 = tpu.matmul %84, %85, %cst_80 {dimension_numbers = #tpu.dot_dimension_numbers<[1], [0], [0], [1], [0, 0, 1, 1], [], []>} : vector<32x32xf32>, vector<32x64xf32>, vector<32x64xf32> -> vector<32x64xf32>
    %87 = arith.addf %82, %86 : vector<32x64xf32>
    %c0_81 = arith.constant 0 : index
    %c2_82 = arith.constant 2 : index
    %c0_83 = arith.constant 0 : index
    %88 = vector.load %arg23[%c0_81, %c2_82, %c0_83] : memref<2x20x256xf32, #tpu.memory_space<vmem>>, vector<2x16x32xf32>
    %89 = vector.shape_cast %88 : vector<2x16x32xf32> to vector<32x32xf32>
    %c64_84 = arith.constant 64 : index
    %c0_85 = arith.constant 0 : index
    %90 = vector.load %arg6[%c64_84, %c0_85] : memref<160x64xf32, #tpu.memory_space<vmem>>, vector<32x64xf32>
    %cst_86 = arith.constant dense<0.000000e+00> : vector<32x64xf32>
    %91 = tpu.matmul %89, %90, %cst_86 {dimension_numbers = #tpu.dot_dimension_numbers<[1], [0], [0], [1], [0, 0, 1, 1], [], []>} : vector<32x32xf32>, vector<32x64xf32>, vector<32x64xf32> -> vector<32x64xf32>
    %92 = arith.addf %87, %91 : vector<32x64xf32>
    %c0_87 = arith.constant 0 : index
    %c3_88 = arith.constant 3 : index
    %c0_89 = arith.constant 0 : index
    %93 = vector.load %arg23[%c0_87, %c3_88, %c0_89] : memref<2x20x256xf32, #tpu.memory_space<vmem>>, vector<2x16x32xf32>
    %94 = vector.shape_cast %93 : vector<2x16x32xf32> to vector<32x32xf32>
    %c96 = arith.constant 96 : index
    %c0_90 = arith.constant 0 : index
    %95 = vector.load %arg6[%c96, %c0_90] : memref<160x64xf32, #tpu.memory_space<vmem>>, vector<32x64xf32>
    %cst_91 = arith.constant dense<0.000000e+00> : vector<32x64xf32>
    %96 = tpu.matmul %94, %95, %cst_91 {dimension_numbers = #tpu.dot_dimension_numbers<[1], [0], [0], [1], [0, 0, 1, 1], [], []>} : vector<32x32xf32>, vector<32x64xf32>, vector<32x64xf32> -> vector<32x64xf32>
    %97 = arith.addf %92, %96 : vector<32x64xf32>
    %c0_92 = arith.constant 0 : index
    %c4_93 = arith.constant 4 : index
    %c0_94 = arith.constant 0 : index
    %98 = vector.load %arg23[%c0_92, %c4_93, %c0_94] : memref<2x20x256xf32, #tpu.memory_space<vmem>>, vector<2x16x32xf32>
    %99 = vector.shape_cast %98 : vector<2x16x32xf32> to vector<32x32xf32>
    %c128 = arith.constant 128 : index
    %c0_95 = arith.constant 0 : index
    %100 = vector.load %arg6[%c128, %c0_95] : memref<160x64xf32, #tpu.memory_space<vmem>>, vector<32x64xf32>
    %cst_96 = arith.constant dense<0.000000e+00> : vector<32x64xf32>
    %101 = tpu.matmul %99, %100, %cst_96 {dimension_numbers = #tpu.dot_dimension_numbers<[1], [0], [0], [1], [0, 0, 1, 1], [], []>} : vector<32x32xf32>, vector<32x64xf32>, vector<32x64xf32> -> vector<32x64xf32>
    %102 = arith.addf %97, %101 : vector<32x64xf32>
    %c0_97 = arith.constant 0 : index
    %c0_98 = arith.constant 0 : index
    %103 = vector.load %arg7[%c0_97, %c0_98] : memref<1x64xf32, #tpu.memory_space<vmem>>, vector<1x64xf32>
    %104 = vector.broadcast %103 : vector<1x64xf32> to vector<32x64xf32>
    %105 = arith.addf %102, %104 : vector<32x64xf32>
    %cst_99 = arith.constant 0.000000e+00 : f32
    %106 = vector.broadcast %cst_99 : f32 to vector<32x64xf32>
    %107 = arith.maximumf %105, %106 : vector<32x64xf32>
    %108 = vector.shape_cast %107 : vector<32x64xf32> to vector<2x16x64xf32>
    %c0_100 = arith.constant 0 : index
    %c2_101 = arith.constant 2 : index
    %c0_102 = arith.constant 0 : index
    %109 = vector.load %arg23[%c0_100, %c2_101, %c0_102] : memref<2x20x256xf32, #tpu.memory_space<vmem>>, vector<2x16x64xf32>
    tpu.vector_store %arg23[%c0_100, %c2_101, %c0_102], %108 {strides = array<i32>} : memref<2x20x256xf32, #tpu.memory_space<vmem>>, vector<2x16x64xf32>,
    %c0_103 = arith.constant 0 : index
    %c0_104 = arith.constant 0 : index
    %c0_105 = arith.constant 0 : index
    %110 = vector.load %arg23[%c0_103, %c0_104, %c0_105] : memref<2x20x256xf32, #tpu.memory_space<vmem>>, vector<2x16x64xf32>
    %111 = vector.shape_cast %110 : vector<2x16x64xf32> to vector<32x64xf32>
    %c0_106 = arith.constant 0 : index
    %c0_107 = arith.constant 0 : index
    %112 = vector.load %arg8[%c0_106, %c0_107] : memref<320x128xf32, #tpu.memory_space<vmem>>, vector<64x128xf32>
    %cst_108 = arith.constant dense<0.000000e+00> : vector<32x128xf32>
    %113 = tpu.matmul %111, %112, %cst_108 {dimension_numbers = #tpu.dot_dimension_numbers<[1], [0], [0], [1], [0, 0, 1, 1], [], []>} : vector<32x64xf32>, vector<64x128xf32>, vector<32x128xf32> -> vector<32x128xf32>
    %c0_109 = arith.constant 0 : index
    %c1_110 = arith.constant 1 : index
    %c0_111 = arith.constant 0 : index
    %114 = vector.load %arg23[%c0_109, %c1_110, %c0_111] : memref<2x20x256xf32, #tpu.memory_space<vmem>>, vector<2x16x64xf32>
    %115 = vector.shape_cast %114 : vector<2x16x64xf32> to vector<32x64xf32>
    %c64_112 = arith.constant 64 : index
    %c0_113 = arith.constant 0 : index
    %116 = vector.load %arg8[%c64_112, %c0_113] : memref<320x128xf32, #tpu.memory_space<vmem>>, vector<64x128xf32>
    %cst_114 = arith.constant dense<0.000000e+00> : vector<32x128xf32>
    %117 = tpu.matmul %115, %116, %cst_114 {dimension_numbers = #tpu.dot_dimension_numbers<[1], [0], [0], [1], [0, 0, 1, 1], [], []>} : vector<32x64xf32>, vector<64x128xf32>, vector<32x128xf32> -> vector<32x128xf32>
    %118 = arith.addf %113, %117 : vector<32x128xf32>
    %c0_115 = arith.constant 0 : index
    %c2_116 = arith.constant 2 : index
    %c0_117 = arith.constant 0 : index
    %119 = vector.load %arg23[%c0_115, %c2_116, %c0_117] : memref<2x20x256xf32, #tpu.memory_space<vmem>>, vector<2x16x64xf32>
    %120 = vector.shape_cast %119 : vector<2x16x64xf32> to vector<32x64xf32>
    %c128_118 = arith.constant 128 : index
    %c0_119 = arith.constant 0 : index
    %121 = vector.load %arg8[%c128_118, %c0_119] : memref<320x128xf32, #tpu.memory_space<vmem>>, vector<64x128xf32>
    %cst_120 = arith.constant dense<0.000000e+00> : vector<32x128xf32>
    %122 = tpu.matmul %120, %121, %cst_120 {dimension_numbers = #tpu.dot_dimension_numbers<[1], [0], [0], [1], [0, 0, 1, 1], [], []>} : vector<32x64xf32>, vector<64x128xf32>, vector<32x128xf32> -> vector<32x128xf32>
    %123 = arith.addf %118, %122 : vector<32x128xf32>
    %c0_121 = arith.constant 0 : index
    %c3_122 = arith.constant 3 : index
    %c0_123 = arith.constant 0 : index
    %124 = vector.load %arg23[%c0_121, %c3_122, %c0_123] : memref<2x20x256xf32, #tpu.memory_space<vmem>>, vector<2x16x64xf32>
    %125 = vector.shape_cast %124 : vector<2x16x64xf32> to vector<32x64xf32>
    %c192 = arith.constant 192 : index
    %c0_124 = arith.constant 0 : index
    %126 = vector.load %arg8[%c192, %c0_124] : memref<320x128xf32, #tpu.memory_space<vmem>>, vector<64x128xf32>
    %cst_125 = arith.constant dense<0.000000e+00> : vector<32x128xf32>
    %127 = tpu.matmul %125, %126, %cst_125 {dimension_numbers = #tpu.dot_dimension_numbers<[1], [0], [0], [1], [0, 0, 1, 1], [], []>} : vector<32x64xf32>, vector<64x128xf32>, vector<32x128xf32> -> vector<32x128xf32>
    %128 = arith.addf %123, %127 : vector<32x128xf32>
    %c0_126 = arith.constant 0 : index
    %c4_127 = arith.constant 4 : index
    %c0_128 = arith.constant 0 : index
    %129 = vector.load %arg23[%c0_126, %c4_127, %c0_128] : memref<2x20x256xf32, #tpu.memory_space<vmem>>, vector<2x16x64xf32>
    %130 = vector.shape_cast %129 : vector<2x16x64xf32> to vector<32x64xf32>
    %c256 = arith.constant 256 : index
    %c0_129 = arith.constant 0 : index
    %131 = vector.load %arg8[%c256, %c0_129] : memref<320x128xf32, #tpu.memory_space<vmem>>, vector<64x128xf32>
    %cst_130 = arith.constant dense<0.000000e+00> : vector<32x128xf32>
    %132 = tpu.matmul %130, %131, %cst_130 {dimension_numbers = #tpu.dot_dimension_numbers<[1], [0], [0], [1], [0, 0, 1, 1], [], []>} : vector<32x64xf32>, vector<64x128xf32>, vector<32x128xf32> -> vector<32x128xf32>
    %133 = arith.addf %128, %132 : vector<32x128xf32>
    %c0_131 = arith.constant 0 : index
    %c0_132 = arith.constant 0 : index
    %134 = vector.load %arg9[%c0_131, %c0_132] : memref<1x128xf32, #tpu.memory_space<vmem>>, vector<1x128xf32>
    %135 = vector.broadcast %134 : vector<1x128xf32> to vector<32x128xf32>
    %136 = arith.addf %133, %135 : vector<32x128xf32>
    %cst_133 = arith.constant 0.000000e+00 : f32
    %137 = vector.broadcast %cst_133 : f32 to vector<32x128xf32>
    %138 = arith.maximumf %136, %137 : vector<32x128xf32>
    %139 = vector.shape_cast %138 : vector<32x128xf32> to vector<2x16x128xf32>
    %c0_134 = arith.constant 0 : index
    %c2_135 = arith.constant 2 : index
    %c0_136 = arith.constant 0 : index
    %140 = vector.load %arg23[%c0_134, %c2_135, %c0_136] : memref<2x20x256xf32, #tpu.memory_space<vmem>>, vector<2x16x128xf32>
    tpu.vector_store %arg23[%c0_134, %c2_135, %c0_136], %139 {strides = array<i32>} : memref<2x20x256xf32, #tpu.memory_space<vmem>>, vector<2x16x128xf32>,
    %c0_137 = arith.constant 0 : index
    %c0_138 = arith.constant 0 : index
    %c0_139 = arith.constant 0 : index
    %141 = vector.load %arg23[%c0_137, %c0_138, %c0_139] : memref<2x20x256xf32, #tpu.memory_space<vmem>>, vector<2x16x128xf32>
    %142 = vector.shape_cast %141 : vector<2x16x128xf32> to vector<32x128xf32>
    %c0_140 = arith.constant 0 : index
    %c0_141 = arith.constant 0 : index
    %143 = vector.load %arg10[%c0_140, %c0_141] : memref<640x256xf32, #tpu.memory_space<vmem>>, vector<128x256xf32>
    %cst_142 = arith.constant dense<0.000000e+00> : vector<32x256xf32>
    %144 = tpu.matmul %142, %143, %cst_142 {dimension_numbers = #tpu.dot_dimension_numbers<[1], [0], [0], [1], [0, 0, 1, 1], [], []>} : vector<32x128xf32>, vector<128x256xf32>, vector<32x256xf32> -> vector<32x256xf32>
    %c0_143 = arith.constant 0 : index
    %c1_144 = arith.constant 1 : index
    %c0_145 = arith.constant 0 : index
    %145 = vector.load %arg23[%c0_143, %c1_144, %c0_145] : memref<2x20x256xf32, #tpu.memory_space<vmem>>, vector<2x16x128xf32>
    %146 = vector.shape_cast %145 : vector<2x16x128xf32> to vector<32x128xf32>
    %c128_146 = arith.constant 128 : index
    %c0_147 = arith.constant 0 : index
    %147 = vector.load %arg10[%c128_146, %c0_147] : memref<640x256xf32, #tpu.memory_space<vmem>>, vector<128x256xf32>
    %cst_148 = arith.constant dense<0.000000e+00> : vector<32x256xf32>
    %148 = tpu.matmul %146, %147, %cst_148 {dimension_numbers = #tpu.dot_dimension_numbers<[1], [0], [0], [1], [0, 0, 1, 1], [], []>} : vector<32x128xf32>, vector<128x256xf32>, vector<32x256xf32> -> vector<32x256xf32>
    %149 = arith.addf %144, %148 : vector<32x256xf32>
    %c0_149 = arith.constant 0 : index
    %c2_150 = arith.constant 2 : index
    %c0_151 = arith.constant 0 : index
    %150 = vector.load %arg23[%c0_149, %c2_150, %c0_151] : memref<2x20x256xf32, #tpu.memory_space<vmem>>, vector<2x16x128xf32>
    %151 = vector.shape_cast %150 : vector<2x16x128xf32> to vector<32x128xf32>
    %c256_152 = arith.constant 256 : index
    %c0_153 = arith.constant 0 : index
    %152 = vector.load %arg10[%c256_152, %c0_153] : memref<640x256xf32, #tpu.memory_space<vmem>>, vector<128x256xf32>
    %cst_154 = arith.constant dense<0.000000e+00> : vector<32x256xf32>
    %153 = tpu.matmul %151, %152, %cst_154 {dimension_numbers = #tpu.dot_dimension_numbers<[1], [0], [0], [1], [0, 0, 1, 1], [], []>} : vector<32x128xf32>, vector<128x256xf32>, vector<32x256xf32> -> vector<32x256xf32>
    %154 = arith.addf %149, %153 : vector<32x256xf32>
    %c0_155 = arith.constant 0 : index
    %c3_156 = arith.constant 3 : index
    %c0_157 = arith.constant 0 : index
    %155 = vector.load %arg23[%c0_155, %c3_156, %c0_157] : memref<2x20x256xf32, #tpu.memory_space<vmem>>, vector<2x16x128xf32>
    %156 = vector.shape_cast %155 : vector<2x16x128xf32> to vector<32x128xf32>
    %c384 = arith.constant 384 : index
    %c0_158 = arith.constant 0 : index
    %157 = vector.load %arg10[%c384, %c0_158] : memref<640x256xf32, #tpu.memory_space<vmem>>, vector<128x256xf32>
    %cst_159 = arith.constant dense<0.000000e+00> : vector<32x256xf32>
    %158 = tpu.matmul %156, %157, %cst_159 {dimension_numbers = #tpu.dot_dimension_numbers<[1], [0], [0], [1], [0, 0, 1, 1], [], []>} : vector<32x128xf32>, vector<128x256xf32>, vector<32x256xf32> -> vector<32x256xf32>
    %159 = arith.addf %154, %158 : vector<32x256xf32>
    %c0_160 = arith.constant 0 : index
    %c4_161 = arith.constant 4 : index
    %c0_162 = arith.constant 0 : index
    %160 = vector.load %arg23[%c0_160, %c4_161, %c0_162] : memref<2x20x256xf32, #tpu.memory_space<vmem>>, vector<2x16x128xf32>
    %161 = vector.shape_cast %160 : vector<2x16x128xf32> to vector<32x128xf32>
    %c512 = arith.constant 512 : index
    %c0_163 = arith.constant 0 : index
    %162 = vector.load %arg10[%c512, %c0_163] : memref<640x256xf32, #tpu.memory_space<vmem>>, vector<128x256xf32>
    %cst_164 = arith.constant dense<0.000000e+00> : vector<32x256xf32>
    %163 = tpu.matmul %161, %162, %cst_164 {dimension_numbers = #tpu.dot_dimension_numbers<[1], [0], [0], [1], [0, 0, 1, 1], [], []>} : vector<32x128xf32>, vector<128x256xf32>, vector<32x256xf32> -> vector<32x256xf32>
    %164 = arith.addf %159, %163 : vector<32x256xf32>
    %c0_165 = arith.constant 0 : index
    %c0_166 = arith.constant 0 : index
    %165 = vector.load %arg11[%c0_165, %c0_166] : memref<1x256xf32, #tpu.memory_space<vmem>>, vector<1x256xf32>
    %166 = vector.broadcast %165 : vector<1x256xf32> to vector<32x256xf32>
    %167 = arith.addf %164, %166 : vector<32x256xf32>
    %cst_167 = arith.constant 0.000000e+00 : f32
    %168 = vector.broadcast %cst_167 : f32 to vector<32x256xf32>
    %169 = arith.maximumf %167, %168 : vector<32x256xf32>
    %170 = vector.shape_cast %169 : vector<32x256xf32> to vector<2x16x256xf32>
    %c0_168 = arith.constant 0 : index
    %c2_169 = arith.constant 2 : index
    %c0_170 = arith.constant 0 : index
    %171 = vector.load %arg23[%c0_168, %c2_169, %c0_170] : memref<2x20x256xf32, #tpu.memory_space<vmem>>, vector<2x16x256xf32>
    tpu.vector_store %arg23[%c0_168, %c2_169, %c0_170], %170 {strides = array<i32>} : memref<2x20x256xf32, #tpu.memory_space<vmem>>, vector<2x16x256xf32>,
    %c0_171 = arith.constant 0 : index
    %c0_172 = arith.constant 0 : index
    %c0_173 = arith.constant 0 : index
    %172 = vector.load %arg23[%c0_171, %c0_172, %c0_173] : memref<2x20x256xf32, #tpu.memory_space<vmem>>, vector<2x16x256xf32>
    %173 = vector.shape_cast %172 : vector<2x16x256xf32> to vector<32x256xf32>
    %c0_174 = arith.constant 0 : index
    %c0_175 = arith.constant 0 : index
    %174 = vector.load %arg12[%c0_174, %c0_175] : memref<1280x256xf32, #tpu.memory_space<vmem>>, vector<256x256xf32>
    %cst_176 = arith.constant dense<0.000000e+00> : vector<32x256xf32>
    %175 = tpu.matmul %173, %174, %cst_176 {dimension_numbers = #tpu.dot_dimension_numbers<[1], [0], [0], [1], [0, 0, 1, 1], [], []>} : vector<32x256xf32>, vector<256x256xf32>, vector<32x256xf32> -> vector<32x256xf32>
    %c0_177 = arith.constant 0 : index
    %c1_178 = arith.constant 1 : index
    %c0_179 = arith.constant 0 : index
    %176 = vector.load %arg23[%c0_177, %c1_178, %c0_179] : memref<2x20x256xf32, #tpu.memory_space<vmem>>, vector<2x16x256xf32>
    %177 = vector.shape_cast %176 : vector<2x16x256xf32> to vector<32x256xf32>
    %c256_180 = arith.constant 256 : index
    %c0_181 = arith.constant 0 : index
    %178 = vector.load %arg12[%c256_180, %c0_181] : memref<1280x256xf32, #tpu.memory_space<vmem>>, vector<256x256xf32>
    %cst_182 = arith.constant dense<0.000000e+00> : vector<32x256xf32>
    %179 = tpu.matmul %177, %178, %cst_182 {dimension_numbers = #tpu.dot_dimension_numbers<[1], [0], [0], [1], [0, 0, 1, 1], [], []>} : vector<32x256xf32>, vector<256x256xf32>, vector<32x256xf32> -> vector<32x256xf32>
    %180 = arith.addf %175, %179 : vector<32x256xf32>
    %c0_183 = arith.constant 0 : index
    %c2_184 = arith.constant 2 : index
    %c0_185 = arith.constant 0 : index
    %181 = vector.load %arg23[%c0_183, %c2_184, %c0_185] : memref<2x20x256xf32, #tpu.memory_space<vmem>>, vector<2x16x256xf32>
    %182 = vector.shape_cast %181 : vector<2x16x256xf32> to vector<32x256xf32>
    %c512_186 = arith.constant 512 : index
    %c0_187 = arith.constant 0 : index
    %183 = vector.load %arg12[%c512_186, %c0_187] : memref<1280x256xf32, #tpu.memory_space<vmem>>, vector<256x256xf32>
    %cst_188 = arith.constant dense<0.000000e+00> : vector<32x256xf32>
    %184 = tpu.matmul %182, %183, %cst_188 {dimension_numbers = #tpu.dot_dimension_numbers<[1], [0], [0], [1], [0, 0, 1, 1], [], []>} : vector<32x256xf32>, vector<256x256xf32>, vector<32x256xf32> -> vector<32x256xf32>
    %185 = arith.addf %180, %184 : vector<32x256xf32>
    %c0_189 = arith.constant 0 : index
    %c3_190 = arith.constant 3 : index
    %c0_191 = arith.constant 0 : index
    %186 = vector.load %arg23[%c0_189, %c3_190, %c0_191] : memref<2x20x256xf32, #tpu.memory_space<vmem>>, vector<2x16x256xf32>
    %187 = vector.shape_cast %186 : vector<2x16x256xf32> to vector<32x256xf32>
    %c768 = arith.constant 768 : index
    %c0_192 = arith.constant 0 : index
    %188 = vector.load %arg12[%c768, %c0_192] : memref<1280x256xf32, #tpu.memory_space<vmem>>, vector<256x256xf32>
    %cst_193 = arith.constant dense<0.000000e+00> : vector<32x256xf32>
    %189 = tpu.matmul %187, %188, %cst_193 {dimension_numbers = #tpu.dot_dimension_numbers<[1], [0], [0], [1], [0, 0, 1, 1], [], []>} : vector<32x256xf32>, vector<256x256xf32>, vector<32x256xf32> -> vector<32x256xf32>
    %190 = arith.addf %185, %189 : vector<32x256xf32>
    %c0_194 = arith.constant 0 : index
    %c4_195 = arith.constant 4 : index
    %c0_196 = arith.constant 0 : index
    %191 = vector.load %arg23[%c0_194, %c4_195, %c0_196] : memref<2x20x256xf32, #tpu.memory_space<vmem>>, vector<2x16x256xf32>
    %192 = vector.shape_cast %191 : vector<2x16x256xf32> to vector<32x256xf32>
    %c1024 = arith.constant 1024 : index
    %c0_197 = arith.constant 0 : index
    %193 = vector.load %arg12[%c1024, %c0_197] : memref<1280x256xf32, #tpu.memory_space<vmem>>, vector<256x256xf32>
    %cst_198 = arith.constant dense<0.000000e+00> : vector<32x256xf32>
    %194 = tpu.matmul %192, %193, %cst_198 {dimension_numbers = #tpu.dot_dimension_numbers<[1], [0], [0], [1], [0, 0, 1, 1], [], []>} : vector<32x256xf32>, vector<256x256xf32>, vector<32x256xf32> -> vector<32x256xf32>
    %195 = arith.addf %190, %194 : vector<32x256xf32>
    %c0_199 = arith.constant 0 : index
    %c0_200 = arith.constant 0 : index
    %196 = vector.load %arg13[%c0_199, %c0_200] : memref<1x256xf32, #tpu.memory_space<vmem>>, vector<1x256xf32>
    %197 = vector.broadcast %196 : vector<1x256xf32> to vector<32x256xf32>
    %198 = arith.addf %195, %197 : vector<32x256xf32>
    %cst_201 = arith.constant 0.000000e+00 : f32
    %199 = vector.broadcast %cst_201 : f32 to vector<32x256xf32>
    %200 = arith.maximumf %198, %199 : vector<32x256xf32>
    %201 = vector.shape_cast %200 : vector<32x256xf32> to vector<2x16x256xf32>
    %c0_202 = arith.constant 0 : index
    %c2_203 = arith.constant 2 : index
    %c0_204 = arith.constant 0 : index
    %202 = vector.load %arg23[%c0_202, %c2_203, %c0_204] : memref<2x20x256xf32, #tpu.memory_space<vmem>>, vector<2x16x256xf32>
    tpu.vector_store %arg23[%c0_202, %c2_203, %c0_204], %201 {strides = array<i32>} : memref<2x20x256xf32, #tpu.memory_space<vmem>>, vector<2x16x256xf32>,
    %c0_205 = arith.constant 0 : index
    %c0_206 = arith.constant 0 : index
    %c0_207 = arith.constant 0 : index
    %203 = vector.load %arg23[%c0_205, %c0_206, %c0_207] : memref<2x20x256xf32, #tpu.memory_space<vmem>>, vector<2x16x256xf32>
    %204 = vector.shape_cast %203 : vector<2x16x256xf32> to vector<32x256xf32>
    %c0_208 = arith.constant 0 : index
    %c0_209 = arith.constant 0 : index
    %205 = vector.load %arg14[%c0_208, %c0_209] : memref<1280x256xf32, #tpu.memory_space<vmem>>, vector<256x256xf32>
    %cst_210 = arith.constant dense<0.000000e+00> : vector<32x256xf32>
    %206 = tpu.matmul %204, %205, %cst_210 {dimension_numbers = #tpu.dot_dimension_numbers<[1], [0], [0], [1], [0, 0, 1, 1], [], []>} : vector<32x256xf32>, vector<256x256xf32>, vector<32x256xf32> -> vector<32x256xf32>
    %c0_211 = arith.constant 0 : index
    %c1_212 = arith.constant 1 : index
    %c0_213 = arith.constant 0 : index
    %207 = vector.load %arg23[%c0_211, %c1_212, %c0_213] : memref<2x20x256xf32, #tpu.memory_space<vmem>>, vector<2x16x256xf32>
    %208 = vector.shape_cast %207 : vector<2x16x256xf32> to vector<32x256xf32>
    %c256_214 = arith.constant 256 : index
    %c0_215 = arith.constant 0 : index
    %209 = vector.load %arg14[%c256_214, %c0_215] : memref<1280x256xf32, #tpu.memory_space<vmem>>, vector<256x256xf32>
    %cst_216 = arith.constant dense<0.000000e+00> : vector<32x256xf32>
    %210 = tpu.matmul %208, %209, %cst_216 {dimension_numbers = #tpu.dot_dimension_numbers<[1], [0], [0], [1], [0, 0, 1, 1], [], []>} : vector<32x256xf32>, vector<256x256xf32>, vector<32x256xf32> -> vector<32x256xf32>
    %211 = arith.addf %206, %210 : vector<32x256xf32>
    %c0_217 = arith.constant 0 : index
    %c2_218 = arith.constant 2 : index
    %c0_219 = arith.constant 0 : index
    %212 = vector.load %arg23[%c0_217, %c2_218, %c0_219] : memref<2x20x256xf32, #tpu.memory_space<vmem>>, vector<2x16x256xf32>
    %213 = vector.shape_cast %212 : vector<2x16x256xf32> to vector<32x256xf32>
    %c512_220 = arith.constant 512 : index
    %c0_221 = arith.constant 0 : index
    %214 = vector.load %arg14[%c512_220, %c0_221] : memref<1280x256xf32, #tpu.memory_space<vmem>>, vector<256x256xf32>
    %cst_222 = arith.constant dense<0.000000e+00> : vector<32x256xf32>
    %215 = tpu.matmul %213, %214, %cst_222 {dimension_numbers = #tpu.dot_dimension_numbers<[1], [0], [0], [1], [0, 0, 1, 1], [], []>} : vector<32x256xf32>, vector<256x256xf32>, vector<32x256xf32> -> vector<32x256xf32>
    %216 = arith.addf %211, %215 : vector<32x256xf32>
    %c0_223 = arith.constant 0 : index
    %c3_224 = arith.constant 3 : index
    %c0_225 = arith.constant 0 : index
    %217 = vector.load %arg23[%c0_223, %c3_224, %c0_225] : memref<2x20x256xf32, #tpu.memory_space<vmem>>, vector<2x16x256xf32>
    %218 = vector.shape_cast %217 : vector<2x16x256xf32> to vector<32x256xf32>
    %c768_226 = arith.constant 768 : index
    %c0_227 = arith.constant 0 : index
    %219 = vector.load %arg14[%c768_226, %c0_227] : memref<1280x256xf32, #tpu.memory_space<vmem>>, vector<256x256xf32>
    %cst_228 = arith.constant dense<0.000000e+00> : vector<32x256xf32>
    %220 = tpu.matmul %218, %219, %cst_228 {dimension_numbers = #tpu.dot_dimension_numbers<[1], [0], [0], [1], [0, 0, 1, 1], [], []>} : vector<32x256xf32>, vector<256x256xf32>, vector<32x256xf32> -> vector<32x256xf32>
    %221 = arith.addf %216, %220 : vector<32x256xf32>
    %c0_229 = arith.constant 0 : index
    %c4_230 = arith.constant 4 : index
    %c0_231 = arith.constant 0 : index
    %222 = vector.load %arg23[%c0_229, %c4_230, %c0_231] : memref<2x20x256xf32, #tpu.memory_space<vmem>>, vector<2x16x256xf32>
    %223 = vector.shape_cast %222 : vector<2x16x256xf32> to vector<32x256xf32>
    %c1024_232 = arith.constant 1024 : index
    %c0_233 = arith.constant 0 : index
    %224 = vector.load %arg14[%c1024_232, %c0_233] : memref<1280x256xf32, #tpu.memory_space<vmem>>, vector<256x256xf32>
    %cst_234 = arith.constant dense<0.000000e+00> : vector<32x256xf32>
    %225 = tpu.matmul %223, %224, %cst_234 {dimension_numbers = #tpu.dot_dimension_numbers<[1], [0], [0], [1], [0, 0, 1, 1], [], []>} : vector<32x256xf32>, vector<256x256xf32>, vector<32x256xf32> -> vector<32x256xf32>
    %226 = arith.addf %221, %225 : vector<32x256xf32>
    %c0_235 = arith.constant 0 : index
    %c0_236 = arith.constant 0 : index
    %227 = vector.load %arg15[%c0_235, %c0_236] : memref<1x256xf32, #tpu.memory_space<vmem>>, vector<1x256xf32>
    %228 = vector.broadcast %227 : vector<1x256xf32> to vector<32x256xf32>
    %229 = arith.addf %226, %228 : vector<32x256xf32>
    %cst_237 = arith.constant 0.000000e+00 : f32
    %230 = vector.broadcast %cst_237 : f32 to vector<32x256xf32>
    %231 = arith.maximumf %229, %230 : vector<32x256xf32>
    %232 = vector.shape_cast %231 : vector<32x256xf32> to vector<2x16x256xf32>
    %c0_238 = arith.constant 0 : index
    %c2_239 = arith.constant 2 : index
    %c0_240 = arith.constant 0 : index
    %233 = vector.load %arg23[%c0_238, %c2_239, %c0_240] : memref<2x20x256xf32, #tpu.memory_space<vmem>>, vector<2x16x256xf32>
    tpu.vector_store %arg23[%c0_238, %c2_239, %c0_240], %232 {strides = array<i32>} : memref<2x20x256xf32, #tpu.memory_space<vmem>>, vector<2x16x256xf32>,
    %c0_241 = arith.constant 0 : index
    %c0_242 = arith.constant 0 : index
    %c0_243 = arith.constant 0 : index
    %234 = vector.load %arg23[%c0_241, %c0_242, %c0_243] : memref<2x20x256xf32, #tpu.memory_space<vmem>>, vector<2x16x256xf32>
    %235 = vector.shape_cast %234 : vector<2x16x256xf32> to vector<32x256xf32>
    %c0_244 = arith.constant 0 : index
    %c0_245 = arith.constant 0 : index
    %236 = vector.load %arg16[%c0_244, %c0_245] : memref<1280x64xf32, #tpu.memory_space<vmem>>, vector<256x64xf32>
    %cst_246 = arith.constant dense<0.000000e+00> : vector<32x64xf32>
    %237 = tpu.matmul %235, %236, %cst_246 {dimension_numbers = #tpu.dot_dimension_numbers<[1], [0], [0], [1], [0, 0, 1, 1], [], []>} : vector<32x256xf32>, vector<256x64xf32>, vector<32x64xf32> -> vector<32x64xf32>
    %c0_247 = arith.constant 0 : index
    %c1_248 = arith.constant 1 : index
    %c0_249 = arith.constant 0 : index
    %238 = vector.load %arg23[%c0_247, %c1_248, %c0_249] : memref<2x20x256xf32, #tpu.memory_space<vmem>>, vector<2x16x256xf32>
    %239 = vector.shape_cast %238 : vector<2x16x256xf32> to vector<32x256xf32>
    %c256_250 = arith.constant 256 : index
    %c0_251 = arith.constant 0 : index
    %240 = vector.load %arg16[%c256_250, %c0_251] : memref<1280x64xf32, #tpu.memory_space<vmem>>, vector<256x64xf32>
    %cst_252 = arith.constant dense<0.000000e+00> : vector<32x64xf32>
    %241 = tpu.matmul %239, %240, %cst_252 {dimension_numbers = #tpu.dot_dimension_numbers<[1], [0], [0], [1], [0, 0, 1, 1], [], []>} : vector<32x256xf32>, vector<256x64xf32>, vector<32x64xf32> -> vector<32x64xf32>
    %242 = arith.addf %237, %241 : vector<32x64xf32>
    %c0_253 = arith.constant 0 : index
    %c2_254 = arith.constant 2 : index
    %c0_255 = arith.constant 0 : index
    %243 = vector.load %arg23[%c0_253, %c2_254, %c0_255] : memref<2x20x256xf32, #tpu.memory_space<vmem>>, vector<2x16x256xf32>
    %244 = vector.shape_cast %243 : vector<2x16x256xf32> to vector<32x256xf32>
    %c512_256 = arith.constant 512 : index
    %c0_257 = arith.constant 0 : index
    %245 = vector.load %arg16[%c512_256, %c0_257] : memref<1280x64xf32, #tpu.memory_space<vmem>>, vector<256x64xf32>
    %cst_258 = arith.constant dense<0.000000e+00> : vector<32x64xf32>
    %246 = tpu.matmul %244, %245, %cst_258 {dimension_numbers = #tpu.dot_dimension_numbers<[1], [0], [0], [1], [0, 0, 1, 1], [], []>} : vector<32x256xf32>, vector<256x64xf32>, vector<32x64xf32> -> vector<32x64xf32>
    %247 = arith.addf %242, %246 : vector<32x64xf32>
    %c0_259 = arith.constant 0 : index
    %c3_260 = arith.constant 3 : index
    %c0_261 = arith.constant 0 : index
    %248 = vector.load %arg23[%c0_259, %c3_260, %c0_261] : memref<2x20x256xf32, #tpu.memory_space<vmem>>, vector<2x16x256xf32>
    %249 = vector.shape_cast %248 : vector<2x16x256xf32> to vector<32x256xf32>
    %c768_262 = arith.constant 768 : index
    %c0_263 = arith.constant 0 : index
    %250 = vector.load %arg16[%c768_262, %c0_263] : memref<1280x64xf32, #tpu.memory_space<vmem>>, vector<256x64xf32>
    %cst_264 = arith.constant dense<0.000000e+00> : vector<32x64xf32>
    %251 = tpu.matmul %249, %250, %cst_264 {dimension_numbers = #tpu.dot_dimension_numbers<[1], [0], [0], [1], [0, 0, 1, 1], [], []>} : vector<32x256xf32>, vector<256x64xf32>, vector<32x64xf32> -> vector<32x64xf32>
    %252 = arith.addf %247, %251 : vector<32x64xf32>
    %c0_265 = arith.constant 0 : index
    %c4_266 = arith.constant 4 : index
    %c0_267 = arith.constant 0 : index
    %253 = vector.load %arg23[%c0_265, %c4_266, %c0_267] : memref<2x20x256xf32, #tpu.memory_space<vmem>>, vector<2x16x256xf32>
    %254 = vector.shape_cast %253 : vector<2x16x256xf32> to vector<32x256xf32>
    %c1024_268 = arith.constant 1024 : index
    %c0_269 = arith.constant 0 : index
    %255 = vector.load %arg16[%c1024_268, %c0_269] : memref<1280x64xf32, #tpu.memory_space<vmem>>, vector<256x64xf32>
    %cst_270 = arith.constant dense<0.000000e+00> : vector<32x64xf32>
    %256 = tpu.matmul %254, %255, %cst_270 {dimension_numbers = #tpu.dot_dimension_numbers<[1], [0], [0], [1], [0, 0, 1, 1], [], []>} : vector<32x256xf32>, vector<256x64xf32>, vector<32x64xf32> -> vector<32x64xf32>
    %257 = arith.addf %252, %256 : vector<32x64xf32>
    %c0_271 = arith.constant 0 : index
    %c0_272 = arith.constant 0 : index
    %258 = vector.load %arg17[%c0_271, %c0_272] : memref<1x64xf32, #tpu.memory_space<vmem>>, vector<1x64xf32>
    %259 = vector.broadcast %258 : vector<1x64xf32> to vector<32x64xf32>
    %260 = arith.addf %257, %259 : vector<32x64xf32>
    %cst_273 = arith.constant 0.000000e+00 : f32
    %261 = vector.broadcast %cst_273 : f32 to vector<32x64xf32>
    %262 = arith.maximumf %260, %261 : vector<32x64xf32>
    %263 = vector.shape_cast %262 : vector<32x64xf32> to vector<2x16x64xf32>
    %c0_274 = arith.constant 0 : index
    %c2_275 = arith.constant 2 : index
    %c0_276 = arith.constant 0 : index
    %264 = vector.load %arg23[%c0_274, %c2_275, %c0_276] : memref<2x20x256xf32, #tpu.memory_space<vmem>>, vector<2x16x64xf32>
    tpu.vector_store %arg23[%c0_274, %c2_275, %c0_276], %263 {strides = array<i32>} : memref<2x20x256xf32, #tpu.memory_space<vmem>>, vector<2x16x64xf32>,
    %c0_277 = arith.constant 0 : index
    %c0_278 = arith.constant 0 : index
    %c0_279 = arith.constant 0 : index
    %265 = vector.load %arg23[%c0_277, %c0_278, %c0_279] : memref<2x20x256xf32, #tpu.memory_space<vmem>>, vector<2x16x64xf32>
    %266 = vector.shape_cast %265 : vector<2x16x64xf32> to vector<32x64xf32>
    %c0_280 = arith.constant 0 : index
    %c0_281 = arith.constant 0 : index
    %267 = vector.load %arg18[%c0_280, %c0_281] : memref<320x32xf32, #tpu.memory_space<vmem>>, vector<64x32xf32>
    %cst_282 = arith.constant dense<0.000000e+00> : vector<32x32xf32>
    %268 = tpu.matmul %266, %267, %cst_282 {dimension_numbers = #tpu.dot_dimension_numbers<[1], [0], [0], [1], [0, 0, 1, 1], [], []>} : vector<32x64xf32>, vector<64x32xf32>, vector<32x32xf32> -> vector<32x32xf32>
    %c0_283 = arith.constant 0 : index
    %c1_284 = arith.constant 1 : index
    %c0_285 = arith.constant 0 : index
    %269 = vector.load %arg23[%c0_283, %c1_284, %c0_285] : memref<2x20x256xf32, #tpu.memory_space<vmem>>, vector<2x16x64xf32>
    %270 = vector.shape_cast %269 : vector<2x16x64xf32> to vector<32x64xf32>
    %c64_286 = arith.constant 64 : index
    %c0_287 = arith.constant 0 : index
    %271 = vector.load %arg18[%c64_286, %c0_287] : memref<320x32xf32, #tpu.memory_space<vmem>>, vector<64x32xf32>
    %cst_288 = arith.constant dense<0.000000e+00> : vector<32x32xf32>
    %272 = tpu.matmul %270, %271, %cst_288 {dimension_numbers = #tpu.dot_dimension_numbers<[1], [0], [0], [1], [0, 0, 1, 1], [], []>} : vector<32x64xf32>, vector<64x32xf32>, vector<32x32xf32> -> vector<32x32xf32>
    %273 = arith.addf %268, %272 : vector<32x32xf32>
    %c0_289 = arith.constant 0 : index
    %c2_290 = arith.constant 2 : index
    %c0_291 = arith.constant 0 : index
    %274 = vector.load %arg23[%c0_289, %c2_290, %c0_291] : memref<2x20x256xf32, #tpu.memory_space<vmem>>, vector<2x16x64xf32>
    %275 = vector.shape_cast %274 : vector<2x16x64xf32> to vector<32x64xf32>
    %c128_292 = arith.constant 128 : index
    %c0_293 = arith.constant 0 : index
    %276 = vector.load %arg18[%c128_292, %c0_293] : memref<320x32xf32, #tpu.memory_space<vmem>>, vector<64x32xf32>
    %cst_294 = arith.constant dense<0.000000e+00> : vector<32x32xf32>
    %277 = tpu.matmul %275, %276, %cst_294 {dimension_numbers = #tpu.dot_dimension_numbers<[1], [0], [0], [1], [0, 0, 1, 1], [], []>} : vector<32x64xf32>, vector<64x32xf32>, vector<32x32xf32> -> vector<32x32xf32>
    %278 = arith.addf %273, %277 : vector<32x32xf32>
    %c0_295 = arith.constant 0 : index
    %c3_296 = arith.constant 3 : index
    %c0_297 = arith.constant 0 : index
    %279 = vector.load %arg23[%c0_295, %c3_296, %c0_297] : memref<2x20x256xf32, #tpu.memory_space<vmem>>, vector<2x16x64xf32>
    %280 = vector.shape_cast %279 : vector<2x16x64xf32> to vector<32x64xf32>
    %c192_298 = arith.constant 192 : index
    %c0_299 = arith.constant 0 : index
    %281 = vector.load %arg18[%c192_298, %c0_299] : memref<320x32xf32, #tpu.memory_space<vmem>>, vector<64x32xf32>
    %cst_300 = arith.constant dense<0.000000e+00> : vector<32x32xf32>
    %282 = tpu.matmul %280, %281, %cst_300 {dimension_numbers = #tpu.dot_dimension_numbers<[1], [0], [0], [1], [0, 0, 1, 1], [], []>} : vector<32x64xf32>, vector<64x32xf32>, vector<32x32xf32> -> vector<32x32xf32>
    %283 = arith.addf %278, %282 : vector<32x32xf32>
    %c0_301 = arith.constant 0 : index
    %c4_302 = arith.constant 4 : index
    %c0_303 = arith.constant 0 : index
    %284 = vector.load %arg23[%c0_301, %c4_302, %c0_303] : memref<2x20x256xf32, #tpu.memory_space<vmem>>, vector<2x16x64xf32>
    %285 = vector.shape_cast %284 : vector<2x16x64xf32> to vector<32x64xf32>
    %c256_304 = arith.constant 256 : index
    %c0_305 = arith.constant 0 : index
    %286 = vector.load %arg18[%c256_304, %c0_305] : memref<320x32xf32, #tpu.memory_space<vmem>>, vector<64x32xf32>
    %cst_306 = arith.constant dense<0.000000e+00> : vector<32x32xf32>
    %287 = tpu.matmul %285, %286, %cst_306 {dimension_numbers = #tpu.dot_dimension_numbers<[1], [0], [0], [1], [0, 0, 1, 1], [], []>} : vector<32x64xf32>, vector<64x32xf32>, vector<32x32xf32> -> vector<32x32xf32>
    %288 = arith.addf %283, %287 : vector<32x32xf32>
    %c0_307 = arith.constant 0 : index
    %c0_308 = arith.constant 0 : index
    %289 = vector.load %arg19[%c0_307, %c0_308] : memref<1x32xf32, #tpu.memory_space<vmem>>, vector<1x32xf32>
    %290 = vector.broadcast %289 : vector<1x32xf32> to vector<32x32xf32>
    %291 = arith.addf %288, %290 : vector<32x32xf32>
    %cst_309 = arith.constant 0.000000e+00 : f32
    %292 = vector.broadcast %cst_309 : f32 to vector<32x32xf32>
    %293 = arith.maximumf %291, %292 : vector<32x32xf32>
    %c0_310 = arith.constant 0 : index
    %c0_311 = arith.constant 0 : index
    %294 = vector.load %arg20[%c0_310, %c0_311] : memref<32x1xf32, #tpu.memory_space<vmem>>, vector<32x1xf32>
    %cst_312 = arith.constant dense<0.000000e+00> : vector<32x1xf32>
    %295 = tpu.matmul %293, %294, %cst_312 {dimension_numbers = #tpu.dot_dimension_numbers<[1], [0], [0], [1], [0, 0, 1, 1], [], []>} : vector<32x32xf32>, vector<32x1xf32>, vector<32x1xf32> -> vector<32x1xf32>
    %c0_313 = arith.constant 0 : index
    %c0_314 = arith.constant 0 : index
    %296 = vector.load %arg21[%c0_313, %c0_314] : memref<1x1xf32, #tpu.memory_space<vmem>>, vector<1x1xf32>
    %297 = vector.broadcast %296 : vector<1x1xf32> to vector<32x1xf32>
    %298 = arith.addf %295, %297 : vector<32x1xf32>
    %c0_315 = arith.constant 0 : index
    %c0_316 = arith.constant 0 : index
    %299 = vector.load %arg22[%c0_315, %c0_316] : memref<32x1xf32, #tpu.memory_space<vmem>>, vector<32x1xf32>
    tpu.vector_store %arg22[%c0_315, %c0_316], %298 {strides = array<i32>} : memref<32x1xf32, #tpu.memory_space<vmem>>, vector<32x1xf32>,
    return
  }
  func.func @transform_0(%arg0: i32) -> (i32, i32) {
    %c0_i32 = arith.constant 0 : i32
    %c0_i32_0 = arith.constant 0 : i32
    return %arg0, %c0_i32 : i32, i32
  }
  func.func @transform_1(%arg0: i32) -> (i32, i32) {
    %c0_i32 = arith.constant 0 : i32
    %c0_i32_0 = arith.constant 0 : i32
    %c0_i32_1 = arith.constant 0 : i32
    return %c0_i32, %c0_i32_0 : i32, i32
  }
  func.func @transform_2(%arg0: i32) -> (i32, i32) {
    %c0_i32 = arith.constant 0 : i32
    %c0_i32_0 = arith.constant 0 : i32
    %c0_i32_1 = arith.constant 0 : i32
    return %c0_i32, %c0_i32_0 : i32, i32
  }
  func.func @transform_3(%arg0: i32) -> (i32, i32) {
    %c0_i32 = arith.constant 0 : i32
    %c0_i32_0 = arith.constant 0 : i32
    %c0_i32_1 = arith.constant 0 : i32
    return %c0_i32, %c0_i32_0 : i32, i32
  }
  func.func @transform_4(%arg0: i32) -> (i32, i32) {
    %c0_i32 = arith.constant 0 : i32
    %c0_i32_0 = arith.constant 0 : i32
    %c0_i32_1 = arith.constant 0 : i32
    return %c0_i32, %c0_i32_0 : i32, i32
  }
  func.func @transform_5(%arg0: i32) -> (i32, i32) {
    %c0_i32 = arith.constant 0 : i32
    %c0_i32_0 = arith.constant 0 : i32
    %c0_i32_1 = arith.constant 0 : i32
    return %c0_i32, %c0_i32_0 : i32, i32
  }
  func.func @transform_6(%arg0: i32) -> (i32, i32) {
    %c0_i32 = arith.constant 0 : i32
    %c0_i32_0 = arith.constant 0 : i32
    %c0_i32_1 = arith.constant 0 : i32
    return %c0_i32, %c0_i32_0 : i32, i32
  }
  func.func @transform_7(%arg0: i32) -> (i32, i32) {
    %c0_i32 = arith.constant 0 : i32
    %c0_i32_0 = arith.constant 0 : i32
    %c0_i32_1 = arith.constant 0 : i32
    return %c0_i32, %c0_i32_0 : i32, i32
  }
  func.func @transform_8(%arg0: i32) -> (i32, i32) {
    %c0_i32 = arith.constant 0 : i32
    %c0_i32_0 = arith.constant 0 : i32
    %c0_i32_1 = arith.constant 0 : i32
    return %c0_i32, %c0_i32_0 : i32, i32
  }
  func.func @transform_9(%arg0: i32) -> (i32, i32) {
    %c0_i32 = arith.constant 0 : i32
    %c0_i32_0 = arith.constant 0 : i32
    %c0_i32_1 = arith.constant 0 : i32
    return %c0_i32, %c0_i32_0 : i32, i32
  }
  func.func @transform_10(%arg0: i32) -> (i32, i32) {
    %c0_i32 = arith.constant 0 : i32
    %c0_i32_0 = arith.constant 0 : i32
    %c0_i32_1 = arith.constant 0 : i32
    return %c0_i32, %c0_i32_0 : i32, i32
  }
  func.func @transform_11(%arg0: i32) -> (i32, i32) {
    %c0_i32 = arith.constant 0 : i32
    %c0_i32_0 = arith.constant 0 : i32
    %c0_i32_1 = arith.constant 0 : i32
    return %c0_i32, %c0_i32_0 : i32, i32
  }
  func.func @transform_12(%arg0: i32) -> (i32, i32) {
    %c0_i32 = arith.constant 0 : i32
    %c0_i32_0 = arith.constant 0 : i32
    %c0_i32_1 = arith.constant 0 : i32
    return %c0_i32, %c0_i32_0 : i32, i32
  }
  func.func @transform_13(%arg0: i32) -> (i32, i32) {
    %c0_i32 = arith.constant 0 : i32
    %c0_i32_0 = arith.constant 0 : i32
    %c0_i32_1 = arith.constant 0 : i32
    return %c0_i32, %c0_i32_0 : i32, i32
  }
  func.func @transform_14(%arg0: i32) -> (i32, i32) {
    %c0_i32 = arith.constant 0 : i32
    %c0_i32_0 = arith.constant 0 : i32
    %c0_i32_1 = arith.constant 0 : i32
    return %c0_i32, %c0_i32_0 : i32, i32
  }
  func.func @transform_15(%arg0: i32) -> (i32, i32) {
    %c0_i32 = arith.constant 0 : i32
    %c0_i32_0 = arith.constant 0 : i32
    %c0_i32_1 = arith.constant 0 : i32
    return %c0_i32, %c0_i32_0 : i32, i32
  }
  func.func @transform_16(%arg0: i32) -> (i32, i32) {
    %c0_i32 = arith.constant 0 : i32
    %c0_i32_0 = arith.constant 0 : i32
    %c0_i32_1 = arith.constant 0 : i32
    return %c0_i32, %c0_i32_0 : i32, i32
  }
  func.func @transform_17(%arg0: i32) -> (i32, i32) {
    %c0_i32 = arith.constant 0 : i32
    %c0_i32_0 = arith.constant 0 : i32
    %c0_i32_1 = arith.constant 0 : i32
    return %c0_i32, %c0_i32_0 : i32, i32
  }
  func.func @transform_18(%arg0: i32) -> (i32, i32) {
    %c0_i32 = arith.constant 0 : i32
    %c0_i32_0 = arith.constant 0 : i32
    %c0_i32_1 = arith.constant 0 : i32
    return %c0_i32, %c0_i32_0 : i32, i32
  }
  func.func @transform_19(%arg0: i32) -> (i32, i32) {
    %c0_i32 = arith.constant 0 : i32
    %c0_i32_0 = arith.constant 0 : i32
    %c0_i32_1 = arith.constant 0 : i32
    return %c0_i32, %c0_i32_0 : i32, i32
  }
  func.func @transform_20(%arg0: i32) -> (i32, i32) {
    %c0_i32 = arith.constant 0 : i32
    %c0_i32_0 = arith.constant 0 : i32
    %c0_i32_1 = arith.constant 0 : i32
    return %c0_i32, %c0_i32_0 : i32, i32
  }
  func.func @transform_21(%arg0: i32) -> (i32, i32) {
    %c0_i32 = arith.constant 0 : i32
    %c0_i32_0 = arith.constant 0 : i32
    return %arg0, %c0_i32 : i32, i32
  }
}

</mosaic_0001>

<llo_original>
// kernel: test_conv_net_forward.1
$region0: #{test_conv_net_forward.1}
  #allocation0 [shape = 'u32[]', space=smem, size = 0x4, offset = 0x4, fixed_abs, tag = 'smem constant byte address 0x4 - core index']
  #allocation1 [shape = 'u32[72,128]{1,0:T(1,128)}', space=vmem, size = 0x9000, scoped, tag = 'internal scratch']
  #allocation2 [shape = 'f32[2,20,256]{2,1,0:T(8,128)}', space=vmem, size = 0xc000, scoped, tag = 'scratch operand']
  #allocation3 [shape = 'f32[1,1]{1,0:T(1,128)S(1)}', space=vmem, size = 0x200, scoped, tag = 'scoped memory for test_conv_net_forward.1']
  %s0 = inlined_call_operand.vmem [shape: f32[32,1], index: 0, kind: input, shape index: {}]
  %s1 = inlined_call_operand.vmem [shape: f32[5,16], index: 1, kind: input, shape index: {}]
  %s2 = inlined_call_operand.vmem [shape: f32[1,16], index: 2, kind: input, shape index: {}]
  %s3 = inlined_call_operand.vmem [shape: f32[80,32], index: 3, kind: input, shape index: {}]
  %s4 = inlined_call_operand.vmem [shape: f32[1,32], index: 4, kind: input, shape index: {}]
  %s5 = inlined_call_operand.vmem [shape: f32[160,64], index: 5, kind: input, shape index: {}]
  %s6 = inlined_call_operand.vmem [shape: f32[1,64], index: 6, kind: input, shape index: {}]
  %s7 = inlined_call_operand.hbm [shape: f32[320,128], index: 7, kind: input, shape index: {}]
  %s8 = inlined_call_operand.vmem [shape: f32[1,128], index: 8, kind: input, shape index: {}]
  %s9 = inlined_call_operand.hbm [shape: f32[640,256], index: 9, kind: input, shape index: {}]
  %s10 = inlined_call_operand.vmem [shape: f32[1,256], index: 10, kind: input, shape index: {}]
  %s11 = inlined_call_operand.vmem [shape: f32[1280,256], index: 11, kind: input, shape index: {}]
  %s12 = inlined_call_operand.vmem [shape: f32[1,256], index: 12, kind: input, shape index: {}]
  %s13 = inlined_call_operand.hbm [shape: f32[1280,256], index: 13, kind: input, shape index: {}]
  %s14 = inlined_call_operand.vmem [shape: f32[1,256], index: 14, kind: input, shape index: {}]
  %s15 = inlined_call_operand.vmem [shape: f32[1280,64], index: 15, kind: input, shape index: {}]
  %s16 = inlined_call_operand.vmem [shape: f32[1,64], index: 16, kind: input, shape index: {}]
  %s17 = inlined_call_operand.vmem [shape: f32[320,32], index: 17, kind: input, shape index: {}]
  %s18 = inlined_call_operand.vmem [shape: f32[1,32], index: 18, kind: input, shape index: {}]
  %s19 = inlined_call_operand.vmem [shape: f32[32,1], index: 19, kind: input, shape index: {}]
  %s20 = inlined_call_operand.<no memory space> [shape: f32[1,1], index: 20, kind: input, shape index: {}]
  %s21 = inlined_call_operand.vmem [shape: f32[32,1], index: 21, kind: output, shape index: {}]
  %s22 = sld [smem:[#allocation0]]
  $region106: #{test_conv_net_forward.1} parent=0
    _
  %s24 = ssub.s32 1, %s22
  %s25 = scalar_select 0, %s24, %s22
  %v26 = vstv %s20
  %27 = vst [vmem:[#allocation3] sm:$0x1] %v26
  $region1: #{test_conv_net_forward.1} parent=0
    #allocation4 [shape = 'u8[163840]{0}', space=vmem, size = 0x28000, scoped, tag = 'input window, operand 7, single buffered']
    #allocation5 [shape = 's32[1]{0}', space=sflag, size = 0x4, scoped, tag = 'scoped memory for test_conv_net_forward.1']
    #allocation6 [shape = 'u8[655360]{0}', space=vmem, size = 0xa0000, scoped, tag = 'input window, operand 9, single buffered']
    #allocation7 [shape = 's32[1]{0}', space=sflag, size = 0x4, scoped, tag = 'scoped memory for test_conv_net_forward.1']
    #allocation8 [shape = 'u8[1310720]{0}', space=vmem, size = 0x140000, scoped, tag = 'input window, operand 13, single buffered']
    %28 = vsyncpa [#allocation5], 0
    %29 = vsyncpa [#allocation7], 0
    // Predicated region
    $region2: #{test_conv_net_forward.1} parent=1 // pred_check
      _
    $region3: #{test_conv_net_forward.1} parent=1 // pred_check_branch
      %31 = sbr.rel (0) target = $region5
    $region4: #{test_conv_net_forward.1} parent=1 // pred_region
      _
    $region5: #{test_conv_net_forward.1} parent=1 // pred_fallthru
      _
    // Predicated region
    $region6: #{test_conv_net_forward.1} parent=1 // pred_check
      _
    $region7: #{test_conv_net_forward.1} parent=1 // pred_check_branch
      %33 = sbr.rel (0) target = $region9
    $region8: #{test_conv_net_forward.1} parent=1 // pred_region
      _
    $region9: #{test_conv_net_forward.1} parent=1 // pred_fallthru
      _
    // Predicated region
    $region10: #{test_conv_net_forward.1} parent=1 // pred_check
      _
    $region11: #{test_conv_net_forward.1} parent=1 // pred_check_branch
      %35 = sbr.rel (0) target = $region13
    $region12: #{test_conv_net_forward.1} parent=1 // pred_region
      _
    $region13: #{test_conv_net_forward.1} parent=1 // pred_fallthru
      _
    // Predicated region
    $region14: #{test_conv_net_forward.1} parent=1 // pred_check
      _
    $region15: #{test_conv_net_forward.1} parent=1 // pred_check_branch
      %37 = sbr.rel (0) target = $region17
    $region16: #{test_conv_net_forward.1} parent=1 // pred_region
      _
    $region17: #{test_conv_net_forward.1} parent=1 // pred_fallthru
      _
    // Predicated region
    $region18: #{test_conv_net_forward.1} parent=1 // pred_check
      _
    $region19: #{test_conv_net_forward.1} parent=1 // pred_check_branch
      %39 = sbr.rel (0) target = $region21
    $region20: #{test_conv_net_forward.1} parent=1 // pred_region
      _
    $region21: #{test_conv_net_forward.1} parent=1 // pred_fallthru
      _
    // Predicated region
    $region22: #{test_conv_net_forward.1} parent=1 // pred_check
      _
    $region23: #{test_conv_net_forward.1} parent=1 // pred_check_branch
      %41 = sbr.rel (0) target = $region25
    $region24: #{test_conv_net_forward.1} parent=1 // pred_region
      _
    $region25: #{test_conv_net_forward.1} parent=1 // pred_fallthru
      _
    // Predicated region
    $region26: #{test_conv_net_forward.1} parent=1 // pred_check
      _
    $region27: #{test_conv_net_forward.1} parent=1 // pred_check_branch
      %43 = sbr.rel (0) target = $region29
    $region28: #{test_conv_net_forward.1} parent=1 // pred_region
      _
    $region29: #{test_conv_net_forward.1} parent=1 // pred_fallthru
      _
    // Predicated region
    $region30: #{test_conv_net_forward.1} parent=1 // pred_check
      _
    $region31: #{test_conv_net_forward.1} parent=1 // pred_check_branch
      %45 = sbr.rel (0) target = $region33
    $region32: #{test_conv_net_forward.1} parent=1 // pred_region
      %47 = vsyncadd [#allocation5], 0
      %s48 = sshll.u32 %s7, 4
      %s49 = int_to_ptr.hbm [resolvable:$true] %s48
      %s50 = sshll.u32 [#allocation4], 4
      %s51 = int_to_ptr.vmem [resolvable:$true] %s50
      %56 = dma.hbm_to_vmem [thread:$0]  %s49, 5120, %s51, [#allocation5], 128, 128, 8
    $region33: #{test_conv_net_forward.1} parent=1 // pred_fallthru
      _
    // Predicated region
    $region34: #{test_conv_net_forward.1} parent=1 // pred_check
      _
    $region35: #{test_conv_net_forward.1} parent=1 // pred_check_branch
      %58 = sbr.rel (0) target = $region37
    $region36: #{test_conv_net_forward.1} parent=1 // pred_region
      _
    $region37: #{test_conv_net_forward.1} parent=1 // pred_fallthru
      _
    // Predicated region
    $region38: #{test_conv_net_forward.1} parent=1 // pred_check
      _
    $region39: #{test_conv_net_forward.1} parent=1 // pred_check_branch
      %60 = sbr.rel (0) target = $region41
    $region40: #{test_conv_net_forward.1} parent=1 // pred_region
      %62 = vsyncadd [#allocation7], 0
      %s63 = sshll.u32 %s9, 4
      %s64 = int_to_ptr.hbm [resolvable:$true] %s63
      %s65 = sshll.u32 [#allocation6], 4
      %s66 = int_to_ptr.vmem [resolvable:$true] %s65
      %71 = dma.hbm_to_vmem [thread:$0]  %s64, 20480, %s66, [#allocation7], 256, 256, 16
    $region41: #{test_conv_net_forward.1} parent=1 // pred_fallthru
      _
    // Predicated region
    $region42: #{test_conv_net_forward.1} parent=1 // pred_check
      _
    $region43: #{test_conv_net_forward.1} parent=1 // pred_check_branch
      %73 = sbr.rel (0) target = $region45
    $region44: #{test_conv_net_forward.1} parent=1 // pred_region
      _
    $region45: #{test_conv_net_forward.1} parent=1 // pred_fallthru
      _
    // Predicated region
    $region46: #{test_conv_net_forward.1} parent=1 // pred_check
      _
    $region47: #{test_conv_net_forward.1} parent=1 // pred_check_branch
      %75 = sbr.rel (0) target = $region49
    $region48: #{test_conv_net_forward.1} parent=1 // pred_region
      _
    $region49: #{test_conv_net_forward.1} parent=1 // pred_fallthru
      _
    // Predicated region
    $region50: #{test_conv_net_forward.1} parent=1 // pred_check
      _
    $region51: #{test_conv_net_forward.1} parent=1 // pred_check_branch
      %77 = sbr.rel (0) target = $region53
    $region52: #{test_conv_net_forward.1} parent=1 // pred_region
      _
    $region53: #{test_conv_net_forward.1} parent=1 // pred_fallthru
      _
    // Predicated region
    $region54: #{test_conv_net_forward.1} parent=1 // pred_check
      _
    $region55: #{test_conv_net_forward.1} parent=1 // pred_check_branch
      %79 = sbr.rel (0) target = $region57
    $region56: #{test_conv_net_forward.1} parent=1 // pred_region
      %81 = vsyncadd [#allocation7], 0
      %s82 = sshll.u32 %s13, 4
      %s83 = int_to_ptr.hbm [resolvable:$true] %s82
      %s84 = sshll.u32 [#allocation8], 4
      %s85 = int_to_ptr.vmem [resolvable:$true] %s84
      %90 = dma.hbm_to_vmem [thread:$0]  %s83, 40960, %s85, [#allocation7], 256, 256, 16
    $region57: #{test_conv_net_forward.1} parent=1 // pred_fallthru
      _
    // Predicated region
    $region58: #{test_conv_net_forward.1} parent=1 // pred_check
      _
    $region59: #{test_conv_net_forward.1} parent=1 // pred_check_branch
      %92 = sbr.rel (0) target = $region61
    $region60: #{test_conv_net_forward.1} parent=1 // pred_region
      _
    $region61: #{test_conv_net_forward.1} parent=1 // pred_fallthru
      _
    // Predicated region
    $region62: #{test_conv_net_forward.1} parent=1 // pred_check
      _
    $region63: #{test_conv_net_forward.1} parent=1 // pred_check_branch
      %94 = sbr.rel (0) target = $region65
    $region64: #{test_conv_net_forward.1} parent=1 // pred_region
      _
    $region65: #{test_conv_net_forward.1} parent=1 // pred_fallthru
      _
    // Predicated region
    $region66: #{test_conv_net_forward.1} parent=1 // pred_check
      _
    $region67: #{test_conv_net_forward.1} parent=1 // pred_check_branch
      %96 = sbr.rel (0) target = $region69
    $region68: #{test_conv_net_forward.1} parent=1 // pred_region
      _
    $region69: #{test_conv_net_forward.1} parent=1 // pred_fallthru
      _
    // Predicated region
    $region70: #{test_conv_net_forward.1} parent=1 // pred_check
      _
    $region71: #{test_conv_net_forward.1} parent=1 // pred_check_branch
      %98 = sbr.rel (0) target = $region73
    $region72: #{test_conv_net_forward.1} parent=1 // pred_region
      _
    $region73: #{test_conv_net_forward.1} parent=1 // pred_fallthru
      _
    // Predicated region
    $region74: #{test_conv_net_forward.1} parent=1 // pred_check
      _
    $region75: #{test_conv_net_forward.1} parent=1 // pred_check_branch
      %100 = sbr.rel (0) target = $region77
    $region76: #{test_conv_net_forward.1} parent=1 // pred_region
      _
    $region77: #{test_conv_net_forward.1} parent=1 // pred_fallthru
      _
    // Predicated region
    $region78: #{test_conv_net_forward.1} parent=1 // pred_check
      _
    $region79: #{test_conv_net_forward.1} parent=1 // pred_check_branch
      %102 = sbr.rel (0) target = $region81
    $region80: #{test_conv_net_forward.1} parent=1 // pred_region
      _
    $region81: #{test_conv_net_forward.1} parent=1 // pred_fallthru
      _
    // Predicated region
    $region82: #{test_conv_net_forward.1} parent=1 // pred_check
      _
    $region83: #{test_conv_net_forward.1} parent=1 // pred_check_branch
      %104 = sbr.rel (0) target = $region85
    $region84: #{test_conv_net_forward.1} parent=1 // pred_region
      _
    $region85: #{test_conv_net_forward.1} parent=1 // pred_fallthru
      _
    // Predicated region
    $region86: #{test_conv_net_forward.1} parent=1 // pred_check
      _
    $region87: #{test_conv_net_forward.1} parent=1 // pred_check_branch
      %106 = sbr.rel (0) target = $region89
    $region88: #{test_conv_net_forward.1} parent=1 // pred_region
      %108 = dma.done [#allocation5], 5120
    $region89: #{test_conv_net_forward.1} parent=1 // pred_fallthru
      _
    // Predicated region
    $region90: #{test_conv_net_forward.1} parent=1 // pred_check
      _
    $region91: #{test_conv_net_forward.1} parent=1 // pred_check_branch
      %110 = sbr.rel (0) target = $region93
    $region92: #{test_conv_net_forward.1} parent=1 // pred_region
      %112 = dma.done [#allocation7], 20480
    $region93: #{test_conv_net_forward.1} parent=1 // pred_fallthru
      _
    // Predicated region
    $region94: #{test_conv_net_forward.1} parent=1 // pred_check
      _
    $region95: #{test_conv_net_forward.1} parent=1 // pred_check_branch
      %114 = sbr.rel (0) target = $region97
    $region96: #{test_conv_net_forward.1} parent=1 // pred_region
      %116 = dma.done [#allocation7], 40960
    $region97: #{test_conv_net_forward.1} parent=1 // pred_fallthru
      _
    %117 = vst [vmem:[#allocation2] sm:$0x3] 0.0
    %118 = vst [vmem:[#allocation2 + $0x8] sm:$0x3] 0.0
    %119 = vst [vmem:[#allocation2 + $0x30] sm:$0x3] 0.0
    %120 = vst [vmem:[#allocation2 + $0x38] sm:$0x3] 0.0
    %121 = vst [vmem:[#allocation2 + $0x20] sm:$0xc] 0.0
    %122 = vst [vmem:[#allocation2 + $0x28] sm:$0xc] 0.0
    %123 = vst [vmem:[#allocation2 + $0x50] sm:$0xc] 0.0
    %124 = vst [vmem:[#allocation2 + $0x58] sm:$0xc] 0.0
    %v125 = vld [vmem:[%s0] sm:$0xff]
    %v126 = vld [vmem:[%s0 + $0x8] sm:$0xff]
    %v127 = vld [vmem:[%s0 + $0x10] sm:$0xff]
    %v128 = vld [vmem:[%s0 + $0x18] sm:$0xff]
    %vm133 = vcmask 1041408
    %v134 = vrot.slane %v125, 6
    %v135 = vrot.slane %v126, 6
    %v136 = vsel %vm133, %v134, %v135
    %v137 = vrot.slane %v127, 6
    %v138 = vrot.slane %v128, 6
    %v139 = vsel %vm133, %v137, %v138
    %vm146 = vcmask 7170
    %147 = vst.msk [vmem:[#allocation2] sm:$0xfc] %vm146, %v134
    %vm148 = vcmask 7168
    %149 = vst.msk [vmem:[#allocation2 + $0x10] sm:$0xff] %vm148, %v136
    %vm150 = vcmask 1024
    %151 = vst.msk [vmem:[#allocation2 + $0x20] sm:$0x3] %vm150, %v135
    %152 = vst.msk [vmem:[#allocation2 + $0x30] sm:$0xfc] %vm146, %v137
    %153 = vst.msk [vmem:[#allocation2 + $0x40] sm:$0xff] %vm148, %v139
    %154 = vst.msk [vmem:[#allocation2 + $0x50] sm:$0x3] %vm150, %v138
    %v155 = vld [vmem:[#allocation2] sm:$0xff]
    %v156 = vld [vmem:[#allocation2 + $0x10] sm:$0xff]
    %v157 = vld [vmem:[#allocation2 + $0x30] sm:$0xff]
    %v158 = vld [vmem:[#allocation2 + $0x40] sm:$0xff]
    %v159 = vld [vmem:[%s1] sm:$0x1]
    %161 = vset.pattern.permute.xlu0 0
    %162 = vperm.xlu0 %161, %v155
    %v163 = vpop.permute.xlu0 %162
    %166 = vset.pattern.permute.xlu0 0
    %167 = vperm.xlu0 %166, %v156
    %v168 = vpop.permute.xlu0 %167
    %171 = vset.pattern.permute.xlu0 0
    %172 = vperm.xlu0 %171, %v157
    %v173 = vpop.permute.xlu0 %172
    %176 = vset.pattern.permute.xlu0 0
    %177 = vperm.xlu0 %176, %v158
    %v178 = vpop.permute.xlu0 %177
    %v180 = vperm.slane %v159, 0
    %v181 = vmul.f32 %v163, %v180
    %v182 = vmul.f32 %v168, %v180
    %v183 = vmul.f32 %v173, %v180
    %v184 = vmul.f32 %v178, %v180
    %v185 = vld [vmem:[#allocation2] sm:$0xfe]
    %v186 = vld [vmem:[#allocation2 + $0x10] sm:$0xff]
    %v187 = vld [vmem:[#allocation2 + $0x20] sm:$0x1]
    %v188 = vld [vmem:[#allocation2 + $0x30] sm:$0xfe]
    %v189 = vld [vmem:[#allocation2 + $0x40] sm:$0xff]
    %v190 = vld [vmem:[#allocation2 + $0x50] sm:$0x1]
    %vm197 = vcmask 1046528
    %v198 = vrot.slane %v185, 1
    %v199 = vrot.slane %v186, 1
    %v200 = vsel %vm197, %v198, %v199
    %v201 = vrot.slane %v187, 1
    %v202 = vsel %vm197, %v199, %v201
    %v203 = vrot.slane %v188, 1
    %v204 = vrot.slane %v189, 1
    %v205 = vsel %vm197, %v203, %v204
    %v206 = vrot.slane %v190, 1
    %v207 = vsel %vm197, %v204, %v206
    %v208 = vld [vmem:[%s1 + $0x1] sm:$0x1]
    %209 = vset.pattern.permute.xlu0 0
    %210 = vperm.xlu0 %209, %v200
    %v211 = vpop.permute.xlu0 %210
    %213 = vset.pattern.permute.xlu0 0
    %214 = vperm.xlu0 %213, %v202
    %v215 = vpop.permute.xlu0 %214
    %217 = vset.pattern.permute.xlu0 0
    %218 = vperm.xlu0 %217, %v205
    %v219 = vpop.permute.xlu0 %218
    %221 = vset.pattern.permute.xlu0 0
    %222 = vperm.xlu0 %221, %v207
    %v223 = vpop.permute.xlu0 %222
    %v225 = vperm.slane %v208, 0
    %v226 = vmul.f32 %v211, %v225
    %v227 = vmul.f32 %v215, %v225
    %v228 = vmul.f32 %v219, %v225
    %v229 = vmul.f32 %v223, %v225
    %v230 = vadd.f32 %v181, %v226
    %v231 = vadd.f32 %v182, %v227
    %v232 = vadd.f32 %v183, %v228
    %v233 = vadd.f32 %v184, %v229
    %v234 = vld [vmem:[#allocation2] sm:$0xfc]
    %v235 = vld [vmem:[#allocation2 + $0x20] sm:$0x3]
    %v236 = vld [vmem:[#allocation2 + $0x30] sm:$0xfc]
    %v237 = vld [vmem:[#allocation2 + $0x50] sm:$0x3]
    %vm242 = vcmask 1045504
    %v243 = vrot.slane %v234, 2
    %v244 = vrot.slane %v186, 2
    %v245 = vsel %vm242, %v243, %v244
    %v246 = vrot.slane %v235, 2
    %v247 = vsel %vm242, %v244, %v246
    %v248 = vrot.slane %v236, 2
    %v249 = vrot.slane %v189, 2
    %v250 = vsel %vm242, %v248, %v249
    %v251 = vrot.slane %v237, 2
    %v252 = vsel %vm242, %v249, %v251
    %v253 = vld [vmem:[%s1 + $0x2] sm:$0x1]
    %254 = vset.pattern.permute.xlu0 0
    %255 = vperm.xlu0 %254, %v245
    %v256 = vpop.permute.xlu0 %255
    %258 = vset.pattern.permute.xlu0 0
    %259 = vperm.xlu0 %258, %v247
    %v260 = vpop.permute.xlu0 %259
    %262 = vset.pattern.permute.xlu0 0
    %263 = vperm.xlu0 %262, %v250
    %v264 = vpop.permute.xlu0 %263
    %266 = vset.pattern.permute.xlu0 0
    %267 = vperm.xlu0 %266, %v252
    %v268 = vpop.permute.xlu0 %267
    %v270 = vperm.slane %v253, 0
    %v271 = vmul.f32 %v256, %v270
    %v272 = vmul.f32 %v260, %v270
    %v273 = vmul.f32 %v264, %v270
    %v274 = vmul.f32 %v268, %v270
    %v275 = vadd.f32 %v230, %v271
    %v276 = vadd.f32 %v231, %v272
    %v277 = vadd.f32 %v232, %v273
    %v278 = vadd.f32 %v233, %v274
    %v279 = vld [vmem:[#allocation2] sm:$0xf8]
    %v280 = vld [vmem:[#allocation2 + $0x20] sm:$0x7]
    %v281 = vld [vmem:[#allocation2 + $0x30] sm:$0xf8]
    %v282 = vld [vmem:[#allocation2 + $0x50] sm:$0x7]
    %vm287 = vcmask 1044480
    %v288 = vrot.slane %v279, 3
    %v289 = vrot.slane %v186, 3
    %v290 = vsel %vm287, %v288, %v289
    %v291 = vrot.slane %v280, 3
    %v292 = vsel %vm287, %v289, %v291
    %v293 = vrot.slane %v281, 3
    %v294 = vrot.slane %v189, 3
    %v295 = vsel %vm287, %v293, %v294
    %v296 = vrot.slane %v282, 3
    %v297 = vsel %vm287, %v294, %v296
    %v298 = vld [vmem:[%s1 + $0x3] sm:$0x1]
    %299 = vset.pattern.permute.xlu0 0
    %300 = vperm.xlu0 %299, %v290
    %v301 = vpop.permute.xlu0 %300
    %303 = vset.pattern.permute.xlu0 0
    %304 = vperm.xlu0 %303, %v292
    %v305 = vpop.permute.xlu0 %304
    %307 = vset.pattern.permute.xlu0 0
    %308 = vperm.xlu0 %307, %v295
    %v309 = vpop.permute.xlu0 %308
    %311 = vset.pattern.permute.xlu0 0
    %312 = vperm.xlu0 %311, %v297
    %v313 = vpop.permute.xlu0 %312
    %v315 = vperm.slane %v298, 0
    %v316 = vmul.f32 %v301, %v315
    %v317 = vmul.f32 %v305, %v315
    %v318 = vmul.f32 %v309, %v315
    %v319 = vmul.f32 %v313, %v315
    %v320 = vadd.f32 %v275, %v316
    %v321 = vadd.f32 %v276, %v317
    %v322 = vadd.f32 %v277, %v318
    %v323 = vadd.f32 %v278, %v319
    %v324 = vld [vmem:[#allocation2] sm:$0xf0]
    %v325 = vld [vmem:[#allocation2 + $0x20] sm:$0xf]
    %v326 = vld [vmem:[#allocation2 + $0x30] sm:$0xf0]
    %v327 = vld [vmem:[#allocation2 + $0x50] sm:$0xf]
    %vm332 = vcmask 1043456
    %v333 = vrot.slane %v324, 4
    %v334 = vrot.slane %v186, 4
    %v335 = vsel %vm332, %v333, %v334
    %v336 = vrot.slane %v325, 4
    %v337 = vsel %vm332, %v334, %v336
    %v338 = vrot.slane %v326, 4
    %v339 = vrot.slane %v189, 4
    %v340 = vsel %vm332, %v338, %v339
    %v341 = vrot.slane %v327, 4
    %v342 = vsel %vm332, %v339, %v341
    %v343 = vld [vmem:[%s1 + $0x4] sm:$0x1]
    %344 = vset.pattern.permute.xlu0 0
    %345 = vperm.xlu0 %344, %v335
    %v346 = vpop.permute.xlu0 %345
    %348 = vset.pattern.permute.xlu0 0
    %349 = vperm.xlu0 %348, %v337
    %v350 = vpop.permute.xlu0 %349
    %352 = vset.pattern.permute.xlu0 0
    %353 = vperm.xlu0 %352, %v340
    %v354 = vpop.permute.xlu0 %353
    %356 = vset.pattern.permute.xlu0 0
    %357 = vperm.xlu0 %356, %v342
    %v358 = vpop.permute.xlu0 %357
    %v360 = vperm.slane %v343, 0
    %v361 = vmul.f32 %v346, %v360
    %v362 = vmul.f32 %v350, %v360
    %v363 = vmul.f32 %v354, %v360
    %v364 = vmul.f32 %v358, %v360
    %v365 = vadd.f32 %v320, %v361
    %v366 = vadd.f32 %v321, %v362
    %v367 = vadd.f32 %v322, %v363
    %v368 = vadd.f32 %v323, %v364
    %v369 = vld [vmem:[%s2] sm:$0x1]
    %v371 = vperm.slane %v369, 0
    %v373 = vadd.f32 %v365, %v371
    %v374 = vadd.f32 %v366, %v371
    %v375 = vadd.f32 %v367, %v371
    %v376 = vadd.f32 %v368, %v371
    %v377 = vmax.f32 %v373, 0.0
    %v378 = vmax.f32 %v374, 0.0
    %v379 = vmax.f32 %v375, 0.0
    %v380 = vmax.f32 %v376, 0.0
    %v385 = vrot.slane %v377, 6
    %v386 = vrot.slane %v378, 6
    %v387 = vsel %vm133, %v385, %v386
    %v388 = vrot.slane %v379, 6
    %v389 = vrot.slane %v380, 6
    %v390 = vsel %vm133, %v388, %v389
    %vm397 = vcmask 130050
    %398 = vst.msk [vmem:[#allocation2] sm:$0xfc] %vm397, %v385
    %vm399 = vcmask 130048
    %400 = vst.msk [vmem:[#allocation2 + $0x10] sm:$0xff] %vm399, %v387
    %vm401 = vcmask 123904
    %402 = vst.msk [vmem:[#allocation2 + $0x20] sm:$0x3] %vm401, %v386
    %403 = vst.msk [vmem:[#allocation2 + $0x30] sm:$0xfc] %vm397, %v388
    %404 = vst.msk [vmem:[#allocation2 + $0x40] sm:$0xff] %vm399, %v390
    %405 = vst.msk [vmem:[#allocation2 + $0x50] sm:$0x3] %vm401, %v389
    %v406 = vld [vmem:[#allocation2] sm:$0xff]
    %v407 = vld [vmem:[#allocation2 + $0x10] sm:$0xff]
    %v408 = vld [vmem:[#allocation2 + $0x30] sm:$0xff]
    %v409 = vld [vmem:[#allocation2 + $0x40] sm:$0xff]
    %v410 = vld [vmem:[%s3] sm:$0xff]
    %v411 = vld [vmem:[%s3 + $0x8] sm:$0xff]
    %v412 = vld [vmem:[#allocation2] sm:$0xfe]
    %v413 = vld [vmem:[#allocation2 + $0x20] sm:$0x1]
    %v414 = vld [vmem:[#allocation2 + $0x30] sm:$0xfe]
    %v415 = vld [vmem:[#allocation2 + $0x50] sm:$0x1]
    %v422 = vrot.slane %v412, 1
    %v423 = vrot.slane %v407, 1
    %v424 = vsel %vm197, %v422, %v423
    %v425 = vrot.slane %v413, 1
    %v426 = vsel %vm197, %v423, %v425
    %v427 = vrot.slane %v414, 1
    %v428 = vrot.slane %v409, 1
    %v429 = vsel %vm197, %v427, %v428
    %v430 = vrot.slane %v415, 1
    %v431 = vsel %vm197, %v428, %v430
    %v432 = vld [vmem:[%s3 + $0x10] sm:$0xff]
    %v433 = vld [vmem:[%s3 + $0x18] sm:$0xff]
    %v434 = vsel %vm399, %v424, 0
    %v436 = vsel %vm399, %v426, 0
    %v438 = vsel %vm399, %v429, 0
    %v440 = vsel %vm399, %v431, 0
    %442 = vmatpush.msra.mxu0 0.0
    %443 = vmatpush.msra.mxu0 0.0
    %444 = vmatpush.msra.mxu0 0.0
    %445 = vmatpush.msra.mxu0 0.0
    %446 = vmatpush.msra.mxu0 0.0
    %447 = vmatpush.msra.mxu0 0.0
    %448 = vmatpush.msra.mxu0 0.0
    %449 = vmatpush.msra.mxu0 0.0
    %450 = vmatpush.msra.mxu0 0.0
    %451 = vmatpush.msra.mxu0 0.0
    %452 = vmatpush.msra.mxu0 0.0
    %453 = vmatpush.msra.mxu0 0.0
    %454 = vmatpush.msra.mxu0 0.0
    %455 = vmatpush.msra.mxu0 0.0
    %456 = vmatpush.msra.mxu0 %v433
    %457 = vmatpush.msra.mxu0 %v432
    %458 = vmatmul.f32.gmra.mxu0 %v434
    %v459 = vpop.f32.mrf.mxu0
    %v460 = vadd.f32 0.0, %v459
    %461 = vmatmul.f32.gmra.mxu0 %v436
    %v462 = vpop.f32.mrf.mxu0
    %v463 = vadd.f32 0.0, %v462
    %464 = vmatmul.f32.gmra.mxu0 %v438
    %v465 = vpop.f32.mrf.mxu0
    %v466 = vadd.f32 0.0, %v465
    %467 = vmatmul.f32.gmra.mxu0 %v440
    %v468 = vpop.f32.mrf.mxu0
    %v469 = vadd.f32 0.0, %v468
    %470 = vdwg.mxu0
    %v472 = vsel %vm399, %v406, 0
    %v474 = vsel %vm399, %v407, 0
    %v477 = vsel %vm399, %v408, 0
    %v479 = vsel %vm399, %v409, 0
    %481 = vmatpush.msra.mxu0 0.0
    %482 = vmatpush.msra.mxu0 0.0
    %483 = vmatpush.msra.mxu0 0.0
    %484 = vmatpush.msra.mxu0 0.0
    %485 = vmatpush.msra.mxu0 0.0
    %486 = vmatpush.msra.mxu0 0.0
    %487 = vmatpush.msra.mxu0 0.0
    %488 = vmatpush.msra.mxu0 0.0
    %489 = vmatpush.msra.mxu0 0.0
    %490 = vmatpush.msra.mxu0 0.0
    %491 = vmatpush.msra.mxu0 0.0
    %492 = vmatpush.msra.mxu0 0.0
    %493 = vmatpush.msra.mxu0 0.0
    %494 = vmatpush.msra.mxu0 0.0
    %495 = vmatpush.msra.mxu0 %v411
    %496 = vmatpush.msra.mxu0 %v410
    %497 = vmatmul.f32.gmra.mxu0 %v472
    %v498 = vpop.f32.mrf.mxu0
    %v499 = vadd.f32 %v460, %v498
    %500 = vmatmul.f32.gmra.mxu0 %v474
    %v501 = vpop.f32.mrf.mxu0
    %v502 = vadd.f32 %v463, %v501
    %503 = vmatmul.f32.gmra.mxu0 %v477
    %v504 = vpop.f32.mrf.mxu0
    %v505 = vadd.f32 %v466, %v504
    %506 = vmatmul.f32.gmra.mxu0 %v479
    %v507 = vpop.f32.mrf.mxu0
    %v508 = vadd.f32 %v469, %v507
    %509 = vdwg.mxu0
    %v510 = vld [vmem:[#allocation2] sm:$0xfc]
    %v511 = vld [vmem:[#allocation2 + $0x20] sm:$0x3]
    %v512 = vld [vmem:[#allocation2 + $0x30] sm:$0xfc]
    %v513 = vld [vmem:[#allocation2 + $0x50] sm:$0x3]
    %v518 = vrot.slane %v510, 2
    %v519 = vrot.slane %v407, 2
    %v520 = vsel %vm242, %v518, %v519
    %v521 = vrot.slane %v511, 2
    %v522 = vsel %vm242, %v519, %v521
    %v523 = vrot.slane %v512, 2
    %v524 = vrot.slane %v409, 2
    %v525 = vsel %vm242, %v523, %v524
    %v526 = vrot.slane %v513, 2
    %v527 = vsel %vm242, %v524, %v526
    %v528 = vld [vmem:[%s3 + $0x20] sm:$0xff]
    %v529 = vld [vmem:[%s3 + $0x28] sm:$0xff]
    %v530 = vsel %vm399, %v520, 0
    %v532 = vsel %vm399, %v522, 0
    %v534 = vsel %vm399, %v525, 0
    %v536 = vsel %vm399, %v527, 0
    %538 = vmatpush.msra.mxu0 0.0
    %539 = vmatpush.msra.mxu0 0.0
    %540 = vmatpush.msra.mxu0 0.0
    %541 = vmatpush.msra.mxu0 0.0
    %542 = vmatpush.msra.mxu0 0.0
    %543 = vmatpush.msra.mxu0 0.0
    %544 = vmatpush.msra.mxu0 0.0
    %545 = vmatpush.msra.mxu0 0.0
    %546 = vmatpush.msra.mxu0 0.0
    %547 = vmatpush.msra.mxu0 0.0
    %548 = vmatpush.msra.mxu0 0.0
    %549 = vmatpush.msra.mxu0 0.0
    %550 = vmatpush.msra.mxu0 0.0
    %551 = vmatpush.msra.mxu0 0.0
    %552 = vmatpush.msra.mxu0 %v529
    %553 = vmatpush.msra.mxu0 %v528
    %554 = vmatmul.f32.gmra.mxu0 %v530
    %v555 = vpop.f32.mrf.mxu0
    %v556 = vadd.f32 0.0, %v555
    %557 = vmatmul.f32.gmra.mxu0 %v532
    %v558 = vpop.f32.mrf.mxu0
    %v559 = vadd.f32 0.0, %v558
    %560 = vmatmul.f32.gmra.mxu0 %v534
    %v561 = vpop.f32.mrf.mxu0
    %v562 = vadd.f32 0.0, %v561
    %563 = vmatmul.f32.gmra.mxu0 %v536
    %v564 = vpop.f32.mrf.mxu0
    %v565 = vadd.f32 0.0, %v564
    %566 = vdwg.mxu0
    %v567 = vadd.f32 %v499, %v556
    %v568 = vadd.f32 %v502, %v559
    %v569 = vadd.f32 %v505, %v562
    %v570 = vadd.f32 %v508, %v565
    %v571 = vld [vmem:[#allocation2] sm:$0xf8]
    %v572 = vld [vmem:[#allocation2 + $0x20] sm:$0x7]
    %v573 = vld [vmem:[#allocation2 + $0x30] sm:$0xf8]
    %v574 = vld [vmem:[#allocation2 + $0x50] sm:$0x7]
    %v579 = vrot.slane %v571, 3
    %v580 = vrot.slane %v407, 3
    %v581 = vsel %vm287, %v579, %v580
    %v582 = vrot.slane %v572, 3
    %v583 = vsel %vm287, %v580, %v582
    %v584 = vrot.slane %v573, 3
    %v585 = vrot.slane %v409, 3
    %v586 = vsel %vm287, %v584, %v585
    %v587 = vrot.slane %v574, 3
    %v588 = vsel %vm287, %v585, %v587
    %v589 = vld [vmem:[%s3 + $0x30] sm:$0xff]
    %v590 = vld [vmem:[%s3 + $0x38] sm:$0xff]
    %v591 = vsel %vm399, %v581, 0
    %v593 = vsel %vm399, %v583, 0
    %v595 = vsel %vm399, %v586, 0
    %v597 = vsel %vm399, %v588, 0
    %599 = vmatpush.msra.mxu0 0.0
    %600 = vmatpush.msra.mxu0 0.0
    %601 = vmatpush.msra.mxu0 0.0
    %602 = vmatpush.msra.mxu0 0.0
    %603 = vmatpush.msra.mxu0 0.0
    %604 = vmatpush.msra.mxu0 0.0
    %605 = vmatpush.msra.mxu0 0.0
    %606 = vmatpush.msra.mxu0 0.0
    %607 = vmatpush.msra.mxu0 0.0
    %608 = vmatpush.msra.mxu0 0.0
    %609 = vmatpush.msra.mxu0 0.0
    %610 = vmatpush.msra.mxu0 0.0
    %611 = vmatpush.msra.mxu0 0.0
    %612 = vmatpush.msra.mxu0 0.0
    %613 = vmatpush.msra.mxu0 %v590
    %614 = vmatpush.msra.mxu0 %v589
    %615 = vmatmul.f32.gmra.mxu0 %v591
    %v616 = vpop.f32.mrf.mxu0
    %v617 = vadd.f32 0.0, %v616
    %618 = vmatmul.f32.gmra.mxu0 %v593
    %v619 = vpop.f32.mrf.mxu0
    %v620 = vadd.f32 0.0, %v619
    %621 = vmatmul.f32.gmra.mxu0 %v595
    %v622 = vpop.f32.mrf.mxu0
    %v623 = vadd.f32 0.0, %v622
    %624 = vmatmul.f32.gmra.mxu0 %v597
    %v625 = vpop.f32.mrf.mxu0
    %v626 = vadd.f32 0.0, %v625
    %627 = vdwg.mxu0
    %v628 = vadd.f32 %v567, %v617
    %v629 = vadd.f32 %v568, %v620
    %v630 = vadd.f32 %v569, %v623
    %v631 = vadd.f32 %v570, %v626
    %v632 = vld [vmem:[#allocation2] sm:$0xf0]
    %v633 = vld [vmem:[#allocation2 + $0x20] sm:$0xf]
    %v634 = vld [vmem:[#allocation2 + $0x30] sm:$0xf0]
    %v635 = vld [vmem:[#allocation2 + $0x50] sm:$0xf]
    %v640 = vrot.slane %v632, 4
    %v641 = vrot.slane %v407, 4
    %v642 = vsel %vm332, %v640, %v641
    %v643 = vrot.slane %v633, 4
    %v644 = vsel %vm332, %v641, %v643
    %v645 = vrot.slane %v634, 4
    %v646 = vrot.slane %v409, 4
    %v647 = vsel %vm332, %v645, %v646
    %v648 = vrot.slane %v635, 4
    %v649 = vsel %vm332, %v646, %v648
    %v650 = vld [vmem:[%s3 + $0x40] sm:$0xff]
    %v651 = vld [vmem:[%s3 + $0x48] sm:$0xff]
    %v652 = vsel %vm399, %v642, 0
    %v654 = vsel %vm399, %v644, 0
    %v656 = vsel %vm399, %v647, 0
    %v658 = vsel %vm399, %v649, 0
    %660 = vmatpush.msra.mxu0 0.0
    %661 = vmatpush.msra.mxu0 0.0
    %662 = vmatpush.msra.mxu0 0.0
    %663 = vmatpush.msra.mxu0 0.0
    %664 = vmatpush.msra.mxu0 0.0
    %665 = vmatpush.msra.mxu0 0.0
    %666 = vmatpush.msra.mxu0 0.0
    %667 = vmatpush.msra.mxu0 0.0
    %668 = vmatpush.msra.mxu0 0.0
    %669 = vmatpush.msra.mxu0 0.0
    %670 = vmatpush.msra.mxu0 0.0
    %671 = vmatpush.msra.mxu0 0.0
    %672 = vmatpush.msra.mxu0 0.0
    %673 = vmatpush.msra.mxu0 0.0
    %674 = vmatpush.msra.mxu0 %v651
    %675 = vmatpush.msra.mxu0 %v650
    %676 = vmatmul.f32.gmra.mxu0 %v652
    %v677 = vpop.f32.mrf.mxu0
    %v678 = vadd.f32 0.0, %v677
    %679 = vmatmul.f32.gmra.mxu0 %v654
    %v680 = vpop.f32.mrf.mxu0
    %v681 = vadd.f32 0.0, %v680
    %682 = vmatmul.f32.gmra.mxu0 %v656
    %v683 = vpop.f32.mrf.mxu0
    %v684 = vadd.f32 0.0, %v683
    %685 = vmatmul.f32.gmra.mxu0 %v658
    %v686 = vpop.f32.mrf.mxu0
    %v687 = vadd.f32 0.0, %v686
    %688 = vdwg.mxu0
    %v689 = vadd.f32 %v628, %v678
    %v690 = vadd.f32 %v629, %v681
    %v691 = vadd.f32 %v630, %v684
    %v692 = vadd.f32 %v631, %v687
    %v693 = vld [vmem:[%s4] sm:$0x1]
    %v695 = vperm.slane %v693, 0
    %v697 = vadd.f32 %v689, %v695
    %v698 = vadd.f32 %v690, %v695
    %v699 = vadd.f32 %v691, %v695
    %v700 = vadd.f32 %v692, %v695
    %v701 = vmax.f32 %v697, 0.0
    %v702 = vmax.f32 %v698, 0.0
    %v703 = vmax.f32 %v699, 0.0
    %v704 = vmax.f32 %v700, 0.0
    %v709 = vrot.slane %v701, 6
    %v710 = vrot.slane %v702, 6
    %v711 = vsel %vm133, %v709, %v710
    %v712 = vrot.slane %v703, 6
    %v713 = vrot.slane %v704, 6
    %v714 = vsel %vm133, %v712, %v713
    %vm721 = vcmask 261122
    %722 = vst.msk [vmem:[#allocation2] sm:$0xfc] %vm721, %v709
    %vm723 = vcmask 261120
    %724 = vst.msk [vmem:[#allocation2 + $0x10] sm:$0xff] %vm723, %v711
    %vm725 = vcmask 254976
    %726 = vst.msk [vmem:[#allocation2 + $0x20] sm:$0x3] %vm725, %v710
    %727 = vst.msk [vmem:[#allocation2 + $0x30] sm:$0xfc] %vm721, %v712
    %728 = vst.msk [vmem:[#allocation2 + $0x40] sm:$0xff] %vm723, %v714
    %729 = vst.msk [vmem:[#allocation2 + $0x50] sm:$0x3] %vm725, %v713
    %v730 = vld [vmem:[#allocation2] sm:$0xff]
    %v731 = vld [vmem:[#allocation2 + $0x10] sm:$0xff]
    %v732 = vld [vmem:[#allocation2 + $0x30] sm:$0xff]
    %v733 = vld [vmem:[#allocation2 + $0x40] sm:$0xff]
    %v734 = vld [vmem:[%s5] sm:$0xff]
    %v735 = vld [vmem:[%s5 + $0x8] sm:$0xff]
    %v736 = vld [vmem:[%s5 + $0x10] sm:$0xff]
    %v737 = vld [vmem:[%s5 + $0x18] sm:$0xff]
    %v738 = vld [vmem:[#allocation2] sm:$0xfe]
    %v739 = vld [vmem:[#allocation2 + $0x20] sm:$0x1]
    %v740 = vld [vmem:[#allocation2 + $0x30] sm:$0xfe]
    %v741 = vld [vmem:[#allocation2 + $0x50] sm:$0x1]
    %v748 = vrot.slane %v738, 1
    %v749 = vrot.slane %v731, 1
    %v750 = vsel %vm197, %v748, %v749
    %v751 = vrot.slane %v739, 1
    %v752 = vsel %vm197, %v749, %v751
    %v753 = vrot.slane %v740, 1
    %v754 = vrot.slane %v733, 1
    %v755 = vsel %vm197, %v753, %v754
    %v756 = vrot.slane %v741, 1
    %v757 = vsel %vm197, %v754, %v756
    %v758 = vld [vmem:[%s5 + $0x20] sm:$0xff]
    %v759 = vld [vmem:[%s5 + $0x28] sm:$0xff]
    %v760 = vld [vmem:[%s5 + $0x30] sm:$0xff]
    %v761 = vld [vmem:[%s5 + $0x38] sm:$0xff]
    %v762 = vsel %vm723, %v750, 0
    %v764 = vsel %vm723, %v752, 0
    %v766 = vsel %vm723, %v755, 0
    %v768 = vsel %vm723, %v757, 0
    %770 = vmatpush.msra.mxu0 0.0
    %771 = vmatpush.msra.mxu0 0.0
    %772 = vmatpush.msra.mxu0 0.0
    %773 = vmatpush.msra.mxu0 0.0
    %774 = vmatpush.msra.mxu0 0.0
    %775 = vmatpush.msra.mxu0 0.0
    %776 = vmatpush.msra.mxu0 0.0
    %777 = vmatpush.msra.mxu0 0.0
    %778 = vmatpush.msra.mxu0 0.0
    %779 = vmatpush.msra.mxu0 0.0
    %780 = vmatpush.msra.mxu0 0.0
    %781 = vmatpush.msra.mxu0 0.0
    %782 = vmatpush.msra.mxu0 %v761
    %783 = vmatpush.msra.mxu0 %v760
    %784 = vmatpush.msra.mxu0 %v759
    %785 = vmatpush.msra.mxu0 %v758
    %786 = vmatmul.f32.gmra.mxu0 %v762
    %v787 = vpop.f32.mrf.mxu0
    %v788 = vadd.f32 0.0, %v787
    %789 = vmatmul.f32.gmra.mxu0 %v764
    %v790 = vpop.f32.mrf.mxu0
    %v791 = vadd.f32 0.0, %v790
    %792 = vmatmul.f32.gmra.mxu0 %v766
    %v793 = vpop.f32.mrf.mxu0
    %v794 = vadd.f32 0.0, %v793
    %795 = vmatmul.f32.gmra.mxu0 %v768
    %v796 = vpop.f32.mrf.mxu0
    %v797 = vadd.f32 0.0, %v796
    %798 = vdwg.mxu0
    %v800 = vsel %vm723, %v730, 0
    %v802 = vsel %vm723, %v731, 0
    %v805 = vsel %vm723, %v732, 0
    %v807 = vsel %vm723, %v733, 0
    %809 = vmatpush.msra.mxu0 0.0
    %810 = vmatpush.msra.mxu0 0.0
    %811 = vmatpush.msra.mxu0 0.0
    %812 = vmatpush.msra.mxu0 0.0
    %813 = vmatpush.msra.mxu0 0.0
    %814 = vmatpush.msra.mxu0 0.0
    %815 = vmatpush.msra.mxu0 0.0
    %816 = vmatpush.msra.mxu0 0.0
    %817 = vmatpush.msra.mxu0 0.0
    %818 = vmatpush.msra.mxu0 0.0
    %819 = vmatpush.msra.mxu0 0.0
    %820 = vmatpush.msra.mxu0 0.0
    %821 = vmatpush.msra.mxu0 %v737
    %822 = vmatpush.msra.mxu0 %v736
    %823 = vmatpush.msra.mxu0 %v735
    %824 = vmatpush.msra.mxu0 %v734
    %825 = vmatmul.f32.gmra.mxu0 %v800
    %v826 = vpop.f32.mrf.mxu0
    %v827 = vadd.f32 %v788, %v826
    %828 = vmatmul.f32.gmra.mxu0 %v802
    %v829 = vpop.f32.mrf.mxu0
    %v830 = vadd.f32 %v791, %v829
    %831 = vmatmul.f32.gmra.mxu0 %v805
    %v832 = vpop.f32.mrf.mxu0
    %v833 = vadd.f32 %v794, %v832
    %834 = vmatmul.f32.gmra.mxu0 %v807
    %v835 = vpop.f32.mrf.mxu0
    %v836 = vadd.f32 %v797, %v835
    %837 = vdwg.mxu0
    %v838 = vld [vmem:[#allocation2] sm:$0xfc]
    %v839 = vld [vmem:[#allocation2 + $0x20] sm:$0x3]
    %v840 = vld [vmem:[#allocation2 + $0x30] sm:$0xfc]
    %v841 = vld [vmem:[#allocation2 + $0x50] sm:$0x3]
    %v846 = vrot.slane %v838, 2
    %v847 = vrot.slane %v731, 2
    %v848 = vsel %vm242, %v846, %v847
    %v849 = vrot.slane %v839, 2
    %v850 = vsel %vm242, %v847, %v849
    %v851 = vrot.slane %v840, 2
    %v852 = vrot.slane %v733, 2
    %v853 = vsel %vm242, %v851, %v852
    %v854 = vrot.slane %v841, 2
    %v855 = vsel %vm242, %v852, %v854
    %v856 = vld [vmem:[%s5 + $0x40] sm:$0xff]
    %v857 = vld [vmem:[%s5 + $0x48] sm:$0xff]
    %v858 = vld [vmem:[%s5 + $0x50] sm:$0xff]
    %v859 = vld [vmem:[%s5 + $0x58] sm:$0xff]
    %v860 = vsel %vm723, %v848, 0
    %v862 = vsel %vm723, %v850, 0
    %v864 = vsel %vm723, %v853, 0
    %v866 = vsel %vm723, %v855, 0
    %868 = vmatpush.msra.mxu0 0.0
    %869 = vmatpush.msra.mxu0 0.0
    %870 = vmatpush.msra.mxu0 0.0
    %871 = vmatpush.msra.mxu0 0.0
    %872 = vmatpush.msra.mxu0 0.0
    %873 = vmatpush.msra.mxu0 0.0
    %874 = vmatpush.msra.mxu0 0.0
    %875 = vmatpush.msra.mxu0 0.0
    %876 = vmatpush.msra.mxu0 0.0
    %877 = vmatpush.msra.mxu0 0.0
    %878 = vmatpush.msra.mxu0 0.0
    %879 = vmatpush.msra.mxu0 0.0
    %880 = vmatpush.msra.mxu0 %v859
    %881 = vmatpush.msra.mxu0 %v858
    %882 = vmatpush.msra.mxu0 %v857
    %883 = vmatpush.msra.mxu0 %v856
    %884 = vmatmul.f32.gmra.mxu0 %v860
    %v885 = vpop.f32.mrf.mxu0
    %v886 = vadd.f32 0.0, %v885
    %887 = vmatmul.f32.gmra.mxu0 %v862
    %v888 = vpop.f32.mrf.mxu0
    %v889 = vadd.f32 0.0, %v888
    %890 = vmatmul.f32.gmra.mxu0 %v864
    %v891 = vpop.f32.mrf.mxu0
    %v892 = vadd.f32 0.0, %v891
    %893 = vmatmul.f32.gmra.mxu0 %v866
    %v894 = vpop.f32.mrf.mxu0
    %v895 = vadd.f32 0.0, %v894
    %896 = vdwg.mxu0
    %v897 = vadd.f32 %v827, %v886
    %v898 = vadd.f32 %v830, %v889
    %v899 = vadd.f32 %v833, %v892
    %v900 = vadd.f32 %v836, %v895
    %v901 = vld [vmem:[#allocation2] sm:$0xf8]
    %v902 = vld [vmem:[#allocation2 + $0x20] sm:$0x7]
    %v903 = vld [vmem:[#allocation2 + $0x30] sm:$0xf8]
    %v904 = vld [vmem:[#allocation2 + $0x50] sm:$0x7]
    %v909 = vrot.slane %v901, 3
    %v910 = vrot.slane %v731, 3
    %v911 = vsel %vm287, %v909, %v910
    %v912 = vrot.slane %v902, 3
    %v913 = vsel %vm287, %v910, %v912
    %v914 = vrot.slane %v903, 3
    %v915 = vrot.slane %v733, 3
    %v916 = vsel %vm287, %v914, %v915
    %v917 = vrot.slane %v904, 3
    %v918 = vsel %vm287, %v915, %v917
    %v919 = vld [vmem:[%s5 + $0x60] sm:$0xff]
    %v920 = vld [vmem:[%s5 + $0x68] sm:$0xff]
    %v921 = vld [vmem:[%s5 + $0x70] sm:$0xff]
    %v922 = vld [vmem:[%s5 + $0x78] sm:$0xff]
    %v923 = vsel %vm723, %v911, 0
    %v925 = vsel %vm723, %v913, 0
    %v927 = vsel %vm723, %v916, 0
    %v929 = vsel %vm723, %v918, 0
    %931 = vmatpush.msra.mxu0 0.0
    %932 = vmatpush.msra.mxu0 0.0
    %933 = vmatpush.msra.mxu0 0.0
    %934 = vmatpush.msra.mxu0 0.0
    %935 = vmatpush.msra.mxu0 0.0
    %936 = vmatpush.msra.mxu0 0.0
    %937 = vmatpush.msra.mxu0 0.0
    %938 = vmatpush.msra.mxu0 0.0
    %939 = vmatpush.msra.mxu0 0.0
    %940 = vmatpush.msra.mxu0 0.0
    %941 = vmatpush.msra.mxu0 0.0
    %942 = vmatpush.msra.mxu0 0.0
    %943 = vmatpush.msra.mxu0 %v922
    %944 = vmatpush.msra.mxu0 %v921
    %945 = vmatpush.msra.mxu0 %v920
    %946 = vmatpush.msra.mxu0 %v919
    %947 = vmatmul.f32.gmra.mxu0 %v923
    %v948 = vpop.f32.mrf.mxu0
    %v949 = vadd.f32 0.0, %v948
    %950 = vmatmul.f32.gmra.mxu0 %v925
    %v951 = vpop.f32.mrf.mxu0
    %v952 = vadd.f32 0.0, %v951
    %953 = vmatmul.f32.gmra.mxu0 %v927
    %v954 = vpop.f32.mrf.mxu0
    %v955 = vadd.f32 0.0, %v954
    %956 = vmatmul.f32.gmra.mxu0 %v929
    %v957 = vpop.f32.mrf.mxu0
    %v958 = vadd.f32 0.0, %v957
    %959 = vdwg.mxu0
    %v960 = vadd.f32 %v897, %v949
    %v961 = vadd.f32 %v898, %v952
    %v962 = vadd.f32 %v899, %v955
    %v963 = vadd.f32 %v900, %v958
    %v964 = vld [vmem:[#allocation2] sm:$0xf0]
    %v965 = vld [vmem:[#allocation2 + $0x20] sm:$0xf]
    %v966 = vld [vmem:[#allocation2 + $0x30] sm:$0xf0]
    %v967 = vld [vmem:[#allocation2 + $0x50] sm:$0xf]
    %v972 = vrot.slane %v964, 4
    %v973 = vrot.slane %v731, 4
    %v974 = vsel %vm332, %v972, %v973
    %v975 = vrot.slane %v965, 4
    %v976 = vsel %vm332, %v973, %v975
    %v977 = vrot.slane %v966, 4
    %v978 = vrot.slane %v733, 4
    %v979 = vsel %vm332, %v977, %v978
    %v980 = vrot.slane %v967, 4
    %v981 = vsel %vm332, %v978, %v980
    %v982 = vld [vmem:[%s5 + $0x80] sm:$0xff]
    %v983 = vld [vmem:[%s5 + $0x88] sm:$0xff]
    %v984 = vld [vmem:[%s5 + $0x90] sm:$0xff]
    %v985 = vld [vmem:[%s5 + $0x98] sm:$0xff]
    %v986 = vsel %vm723, %v974, 0
    %v988 = vsel %vm723, %v976, 0
    %v990 = vsel %vm723, %v979, 0
    %v992 = vsel %vm723, %v981, 0
    %994 = vmatpush.msra.mxu0 0.0
    %995 = vmatpush.msra.mxu0 0.0
    %996 = vmatpush.msra.mxu0 0.0
    %997 = vmatpush.msra.mxu0 0.0
    %998 = vmatpush.msra.mxu0 0.0
    %999 = vmatpush.msra.mxu0 0.0
    %1000 = vmatpush.msra.mxu0 0.0
    %1001 = vmatpush.msra.mxu0 0.0
    %1002 = vmatpush.msra.mxu0 0.0
    %1003 = vmatpush.msra.mxu0 0.0
    %1004 = vmatpush.msra.mxu0 0.0
    %1005 = vmatpush.msra.mxu0 0.0
    %1006 = vmatpush.msra.mxu0 %v985
    %1007 = vmatpush.msra.mxu0 %v984
    %1008 = vmatpush.msra.mxu0 %v983
    %1009 = vmatpush.msra.mxu0 %v982
    %1010 = vmatmul.f32.gmra.mxu0 %v986
    %v1011 = vpop.f32.mrf.mxu0
    %v1012 = vadd.f32 0.0, %v1011
    %1013 = vmatmul.f32.gmra.mxu0 %v988
    %v1014 = vpop.f32.mrf.mxu0
    %v1015 = vadd.f32 0.0, %v1014
    %1016 = vmatmul.f32.gmra.mxu0 %v990
    %v1017 = vpop.f32.mrf.mxu0
    %v1018 = vadd.f32 0.0, %v1017
    %1019 = vmatmul.f32.gmra.mxu0 %v992
    %v1020 = vpop.f32.mrf.mxu0
    %v1021 = vadd.f32 0.0, %v1020
    %1022 = vdwg.mxu0
    %v1023 = vadd.f32 %v960, %v1012
    %v1024 = vadd.f32 %v961, %v1015
    %v1025 = vadd.f32 %v962, %v1018
    %v1026 = vadd.f32 %v963, %v1021
    %v1027 = vld [vmem:[%s6] sm:$0x1]
    %v1029 = vperm.slane %v1027, 0
    %v1031 = vadd.f32 %v1023, %v1029
    %v1032 = vadd.f32 %v1024, %v1029
    %v1033 = vadd.f32 %v1025, %v1029
    %v1034 = vadd.f32 %v1026, %v1029
    %v1035 = vmax.f32 %v1031, 0.0
    %v1036 = vmax.f32 %v1032, 0.0
    %v1037 = vmax.f32 %v1033, 0.0
    %v1038 = vmax.f32 %v1034, 0.0
    %v1043 = vrot.slane %v1035, 6
    %v1044 = vrot.slane %v1036, 6
    %v1045 = vsel %vm133, %v1043, %v1044
    %v1046 = vrot.slane %v1037, 6
    %v1047 = vrot.slane %v1038, 6
    %v1048 = vsel %vm133, %v1046, %v1047
    %vm1055 = vcmask 523266
    %1056 = vst.msk [vmem:[#allocation2] sm:$0xfc] %vm1055, %v1043
    %vm1057 = vcmask 523264
    %1058 = vst.msk [vmem:[#allocation2 + $0x10] sm:$0xff] %vm1057, %v1045
    %vm1059 = vcmask 517120
    %1060 = vst.msk [vmem:[#allocation2 + $0x20] sm:$0x3] %vm1059, %v1044
    %1061 = vst.msk [vmem:[#allocation2 + $0x30] sm:$0xfc] %vm1055, %v1046
    %1062 = vst.msk [vmem:[#allocation2 + $0x40] sm:$0xff] %vm1057, %v1048
    %1063 = vst.msk [vmem:[#allocation2 + $0x50] sm:$0x3] %vm1059, %v1047
    %v1064 = vld [vmem:[#allocation2] sm:$0xff]
    %v1065 = vld [vmem:[#allocation2 + $0x10] sm:$0xff]
    %v1066 = vld [vmem:[#allocation2 + $0x30] sm:$0xff]
    %v1067 = vld [vmem:[#allocation2 + $0x40] sm:$0xff]
    %v1068 = vld [vmem:[#allocation4] sm:$0xff]
    %v1069 = vld [vmem:[#allocation4 + $0x8] sm:$0xff]
    %v1070 = vld [vmem:[#allocation4 + $0x10] sm:$0xff]
    %v1071 = vld [vmem:[#allocation4 + $0x18] sm:$0xff]
    %v1072 = vld [vmem:[#allocation4 + $0x20] sm:$0xff]
    %v1073 = vld [vmem:[#allocation4 + $0x28] sm:$0xff]
    %v1074 = vld [vmem:[#allocation4 + $0x30] sm:$0xff]
    %v1075 = vld [vmem:[#allocation4 + $0x38] sm:$0xff]
    %v1076 = vld [vmem:[#allocation2] sm:$0xfe]
    %v1077 = vld [vmem:[#allocation2 + $0x20] sm:$0x1]
    %v1078 = vld [vmem:[#allocation2 + $0x30] sm:$0xfe]
    %v1079 = vld [vmem:[#allocation2 + $0x50] sm:$0x1]
    %v1086 = vrot.slane %v1076, 1
    %v1087 = vrot.slane %v1065, 1
    %v1088 = vsel %vm197, %v1086, %v1087
    %v1089 = vrot.slane %v1077, 1
    %v1090 = vsel %vm197, %v1087, %v1089
    %v1091 = vrot.slane %v1078, 1
    %v1092 = vrot.slane %v1067, 1
    %v1093 = vsel %vm197, %v1091, %v1092
    %v1094 = vrot.slane %v1079, 1
    %v1095 = vsel %vm197, %v1092, %v1094
    %v1096 = vld [vmem:[#allocation4 + $0x40] sm:$0xff]
    %v1097 = vld [vmem:[#allocation4 + $0x48] sm:$0xff]
    %v1098 = vld [vmem:[#allocation4 + $0x50] sm:$0xff]
    %v1099 = vld [vmem:[#allocation4 + $0x58] sm:$0xff]
    %v1100 = vld [vmem:[#allocation4 + $0x60] sm:$0xff]
    %v1101 = vld [vmem:[#allocation4 + $0x68] sm:$0xff]
    %v1102 = vld [vmem:[#allocation4 + $0x70] sm:$0xff]
    %v1103 = vld [vmem:[#allocation4 + $0x78] sm:$0xff]
    %v1104 = vsel %vm1057, %v1088, 0
    %v1106 = vsel %vm1057, %v1090, 0
    %v1108 = vsel %vm1057, %v1093, 0
    %v1110 = vsel %vm1057, %v1095, 0
    %1112 = vmatpush.msra.mxu0 0.0
    %1113 = vmatpush.msra.mxu0 0.0
    %1114 = vmatpush.msra.mxu0 0.0
    %1115 = vmatpush.msra.mxu0 0.0
    %1116 = vmatpush.msra.mxu0 0.0
    %1117 = vmatpush.msra.mxu0 0.0
    %1118 = vmatpush.msra.mxu0 0.0
    %1119 = vmatpush.msra.mxu0 0.0
    %1120 = vmatpush.msra.mxu0 %v1103
    %1121 = vmatpush.msra.mxu0 %v1102
    %1122 = vmatpush.msra.mxu0 %v1101
    %1123 = vmatpush.msra.mxu0 %v1100
    %1124 = vmatpush.msra.mxu0 %v1099
    %1125 = vmatpush.msra.mxu0 %v1098
    %1126 = vmatpush.msra.mxu0 %v1097
    %1127 = vmatpush.msra.mxu0 %v1096
    %1128 = vmatmul.f32.gmra.mxu0 %v1104
    %v1129 = vpop.f32.mrf.mxu0
    %v1130 = vadd.f32 0.0, %v1129
    %1131 = vmatmul.f32.gmra.mxu0 %v1106
    %v1132 = vpop.f32.mrf.mxu0
    %v1133 = vadd.f32 0.0, %v1132
    %1134 = vmatmul.f32.gmra.mxu0 %v1108
    %v1135 = vpop.f32.mrf.mxu0
    %v1136 = vadd.f32 0.0, %v1135
    %1137 = vmatmul.f32.gmra.mxu0 %v1110
    %v1138 = vpop.f32.mrf.mxu0
    %v1139 = vadd.f32 0.0, %v1138
    %1140 = vdwg.mxu0
    %v1142 = vsel %vm1057, %v1064, 0
    %v1144 = vsel %vm1057, %v1065, 0
    %v1147 = vsel %vm1057, %v1066, 0
    %v1149 = vsel %vm1057, %v1067, 0
    %1151 = vmatpush.msra.mxu0 0.0
    %1152 = vmatpush.msra.mxu0 0.0
    %1153 = vmatpush.msra.mxu0 0.0
    %1154 = vmatpush.msra.mxu0 0.0
    %1155 = vmatpush.msra.mxu0 0.0
    %1156 = vmatpush.msra.mxu0 0.0
    %1157 = vmatpush.msra.mxu0 0.0
    %1158 = vmatpush.msra.mxu0 0.0
    %1159 = vmatpush.msra.mxu0 %v1075
    %1160 = vmatpush.msra.mxu0 %v1074
    %1161 = vmatpush.msra.mxu0 %v1073
    %1162 = vmatpush.msra.mxu0 %v1072
    %1163 = vmatpush.msra.mxu0 %v1071
    %1164 = vmatpush.msra.mxu0 %v1070
    %1165 = vmatpush.msra.mxu0 %v1069
    %1166 = vmatpush.msra.mxu0 %v1068
    %1167 = vmatmul.f32.gmra.mxu0 %v1142
    %v1168 = vpop.f32.mrf.mxu0
    %v1169 = vadd.f32 %v1130, %v1168
    %1170 = vmatmul.f32.gmra.mxu0 %v1144
    %v1171 = vpop.f32.mrf.mxu0
    %v1172 = vadd.f32 %v1133, %v1171
    %1173 = vmatmul.f32.gmra.mxu0 %v1147
    %v1174 = vpop.f32.mrf.mxu0
    %v1175 = vadd.f32 %v1136, %v1174
    %1176 = vmatmul.f32.gmra.mxu0 %v1149
    %v1177 = vpop.f32.mrf.mxu0
    %v1178 = vadd.f32 %v1139, %v1177
    %1179 = vdwg.mxu0
    %v1180 = vld [vmem:[#allocation2] sm:$0xfc]
    %v1181 = vld [vmem:[#allocation2 + $0x20] sm:$0x3]
    %v1182 = vld [vmem:[#allocation2 + $0x30] sm:$0xfc]
    %v1183 = vld [vmem:[#allocation2 + $0x50] sm:$0x3]
    %v1188 = vrot.slane %v1180, 2
    %v1189 = vrot.slane %v1065, 2
    %v1190 = vsel %vm242, %v1188, %v1189
    %v1191 = vrot.slane %v1181, 2
    %v1192 = vsel %vm242, %v1189, %v1191
    %v1193 = vrot.slane %v1182, 2
    %v1194 = vrot.slane %v1067, 2
    %v1195 = vsel %vm242, %v1193, %v1194
    %v1196 = vrot.slane %v1183, 2
    %v1197 = vsel %vm242, %v1194, %v1196
    %v1198 = vld [vmem:[#allocation4 + $0x80] sm:$0xff]
    %v1199 = vld [vmem:[#allocation4 + $0x88] sm:$0xff]
    %v1200 = vld [vmem:[#allocation4 + $0x90] sm:$0xff]
    %v1201 = vld [vmem:[#allocation4 + $0x98] sm:$0xff]
    %v1202 = vld [vmem:[#allocation4 + $0xa0] sm:$0xff]
    %v1203 = vld [vmem:[#allocation4 + $0xa8] sm:$0xff]
    %v1204 = vld [vmem:[#allocation4 + $0xb0] sm:$0xff]
    %v1205 = vld [vmem:[#allocation4 + $0xb8] sm:$0xff]
    %v1206 = vsel %vm1057, %v1190, 0
    %v1208 = vsel %vm1057, %v1192, 0
    %v1210 = vsel %vm1057, %v1195, 0
    %v1212 = vsel %vm1057, %v1197, 0
    %1214 = vmatpush.msra.mxu0 0.0
    %1215 = vmatpush.msra.mxu0 0.0
    %1216 = vmatpush.msra.mxu0 0.0
    %1217 = vmatpush.msra.mxu0 0.0
    %1218 = vmatpush.msra.mxu0 0.0
    %1219 = vmatpush.msra.mxu0 0.0
    %1220 = vmatpush.msra.mxu0 0.0
    %1221 = vmatpush.msra.mxu0 0.0
    %1222 = vmatpush.msra.mxu0 %v1205
    %1223 = vmatpush.msra.mxu0 %v1204
    %1224 = vmatpush.msra.mxu0 %v1203
    %1225 = vmatpush.msra.mxu0 %v1202
    %1226 = vmatpush.msra.mxu0 %v1201
    %1227 = vmatpush.msra.mxu0 %v1200
    %1228 = vmatpush.msra.mxu0 %v1199
    %1229 = vmatpush.msra.mxu0 %v1198
    %1230 = vmatmul.f32.gmra.mxu0 %v1206
    %v1231 = vpop.f32.mrf.mxu0
    %v1232 = vadd.f32 0.0, %v1231
    %1233 = vmatmul.f32.gmra.mxu0 %v1208
    %v1234 = vpop.f32.mrf.mxu0
    %v1235 = vadd.f32 0.0, %v1234
    %1236 = vmatmul.f32.gmra.mxu0 %v1210
    %v1237 = vpop.f32.mrf.mxu0
    %v1238 = vadd.f32 0.0, %v1237
    %1239 = vmatmul.f32.gmra.mxu0 %v1212
    %v1240 = vpop.f32.mrf.mxu0
    %v1241 = vadd.f32 0.0, %v1240
    %1242 = vdwg.mxu0
    %v1243 = vadd.f32 %v1169, %v1232
    %v1244 = vadd.f32 %v1172, %v1235
    %v1245 = vadd.f32 %v1175, %v1238
    %v1246 = vadd.f32 %v1178, %v1241
    %v1247 = vld [vmem:[#allocation2] sm:$0xf8]
    %v1248 = vld [vmem:[#allocation2 + $0x20] sm:$0x7]
    %v1249 = vld [vmem:[#allocation2 + $0x30] sm:$0xf8]
    %v1250 = vld [vmem:[#allocation2 + $0x50] sm:$0x7]
    %v1255 = vrot.slane %v1247, 3
    %v1256 = vrot.slane %v1065, 3
    %v1257 = vsel %vm287, %v1255, %v1256
    %v1258 = vrot.slane %v1248, 3
    %v1259 = vsel %vm287, %v1256, %v1258
    %v1260 = vrot.slane %v1249, 3
    %v1261 = vrot.slane %v1067, 3
    %v1262 = vsel %vm287, %v1260, %v1261
    %v1263 = vrot.slane %v1250, 3
    %v1264 = vsel %vm287, %v1261, %v1263
    %v1265 = vld [vmem:[#allocation4 + $0xc0] sm:$0xff]
    %v1266 = vld [vmem:[#allocation4 + $0xc8] sm:$0xff]
    %v1267 = vld [vmem:[#allocation4 + $0xd0] sm:$0xff]
    %v1268 = vld [vmem:[#allocation4 + $0xd8] sm:$0xff]
    %v1269 = vld [vmem:[#allocation4 + $0xe0] sm:$0xff]
    %v1270 = vld [vmem:[#allocation4 + $0xe8] sm:$0xff]
    %v1271 = vld [vmem:[#allocation4 + $0xf0] sm:$0xff]
    %v1272 = vld [vmem:[#allocation4 + $0xf8] sm:$0xff]
    %v1273 = vsel %vm1057, %v1257, 0
    %v1275 = vsel %vm1057, %v1259, 0
    %v1277 = vsel %vm1057, %v1262, 0
    %v1279 = vsel %vm1057, %v1264, 0
    %1281 = vmatpush.msra.mxu0 0.0
    %1282 = vmatpush.msra.mxu0 0.0
    %1283 = vmatpush.msra.mxu0 0.0
    %1284 = vmatpush.msra.mxu0 0.0
    %1285 = vmatpush.msra.mxu0 0.0
    %1286 = vmatpush.msra.mxu0 0.0
    %1287 = vmatpush.msra.mxu0 0.0
    %1288 = vmatpush.msra.mxu0 0.0
    %1289 = vmatpush.msra.mxu0 %v1272
    %1290 = vmatpush.msra.mxu0 %v1271
    %1291 = vmatpush.msra.mxu0 %v1270
    %1292 = vmatpush.msra.mxu0 %v1269
    %1293 = vmatpush.msra.mxu0 %v1268
    %1294 = vmatpush.msra.mxu0 %v1267
    %1295 = vmatpush.msra.mxu0 %v1266
    %1296 = vmatpush.msra.mxu0 %v1265
    %1297 = vmatmul.f32.gmra.mxu0 %v1273
    %v1298 = vpop.f32.mrf.mxu0
    %v1299 = vadd.f32 0.0, %v1298
    %1300 = vmatmul.f32.gmra.mxu0 %v1275
    %v1301 = vpop.f32.mrf.mxu0
    %v1302 = vadd.f32 0.0, %v1301
    %1303 = vmatmul.f32.gmra.mxu0 %v1277
    %v1304 = vpop.f32.mrf.mxu0
    %v1305 = vadd.f32 0.0, %v1304
    %1306 = vmatmul.f32.gmra.mxu0 %v1279
    %v1307 = vpop.f32.mrf.mxu0
    %v1308 = vadd.f32 0.0, %v1307
    %1309 = vdwg.mxu0
    %v1310 = vadd.f32 %v1243, %v1299
    %v1311 = vadd.f32 %v1244, %v1302
    %v1312 = vadd.f32 %v1245, %v1305
    %v1313 = vadd.f32 %v1246, %v1308
    %v1314 = vld [vmem:[#allocation2] sm:$0xf0]
    %v1315 = vld [vmem:[#allocation2 + $0x20] sm:$0xf]
    %v1316 = vld [vmem:[#allocation2 + $0x30] sm:$0xf0]
    %v1317 = vld [vmem:[#allocation2 + $0x50] sm:$0xf]
    %v1322 = vrot.slane %v1314, 4
    %v1323 = vrot.slane %v1065, 4
    %v1324 = vsel %vm332, %v1322, %v1323
    %v1325 = vrot.slane %v1315, 4
    %v1326 = vsel %vm332, %v1323, %v1325
    %v1327 = vrot.slane %v1316, 4
    %v1328 = vrot.slane %v1067, 4
    %v1329 = vsel %vm332, %v1327, %v1328
    %v1330 = vrot.slane %v1317, 4
    %v1331 = vsel %vm332, %v1328, %v1330
    %v1332 = vld [vmem:[#allocation4 + $0x100] sm:$0xff]
    %v1333 = vld [vmem:[#allocation4 + $0x108] sm:$0xff]
    %v1334 = vld [vmem:[#allocation4 + $0x110] sm:$0xff]
    %v1335 = vld [vmem:[#allocation4 + $0x118] sm:$0xff]
    %v1336 = vld [vmem:[#allocation4 + $0x120] sm:$0xff]
    %v1337 = vld [vmem:[#allocation4 + $0x128] sm:$0xff]
    %v1338 = vld [vmem:[#allocation4 + $0x130] sm:$0xff]
    %v1339 = vld [vmem:[#allocation4 + $0x138] sm:$0xff]
    %v1340 = vsel %vm1057, %v1324, 0
    %v1342 = vsel %vm1057, %v1326, 0
    %v1344 = vsel %vm1057, %v1329, 0
    %v1346 = vsel %vm1057, %v1331, 0
    %1348 = vmatpush.msra.mxu0 0.0
    %1349 = vmatpush.msra.mxu0 0.0
    %1350 = vmatpush.msra.mxu0 0.0
    %1351 = vmatpush.msra.mxu0 0.0
    %1352 = vmatpush.msra.mxu0 0.0
    %1353 = vmatpush.msra.mxu0 0.0
    %1354 = vmatpush.msra.mxu0 0.0
    %1355 = vmatpush.msra.mxu0 0.0
    %1356 = vmatpush.msra.mxu0 %v1339
    %1357 = vmatpush.msra.mxu0 %v1338
    %1358 = vmatpush.msra.mxu0 %v1337
    %1359 = vmatpush.msra.mxu0 %v1336
    %1360 = vmatpush.msra.mxu0 %v1335
    %1361 = vmatpush.msra.mxu0 %v1334
    %1362 = vmatpush.msra.mxu0 %v1333
    %1363 = vmatpush.msra.mxu0 %v1332
    %1364 = vmatmul.f32.gmra.mxu0 %v1340
    %v1365 = vpop.f32.mrf.mxu0
    %v1366 = vadd.f32 0.0, %v1365
    %1367 = vmatmul.f32.gmra.mxu0 %v1342
    %v1368 = vpop.f32.mrf.mxu0
    %v1369 = vadd.f32 0.0, %v1368
    %1370 = vmatmul.f32.gmra.mxu0 %v1344
    %v1371 = vpop.f32.mrf.mxu0
    %v1372 = vadd.f32 0.0, %v1371
    %1373 = vmatmul.f32.gmra.mxu0 %v1346
    %v1374 = vpop.f32.mrf.mxu0
    %v1375 = vadd.f32 0.0, %v1374
    %1376 = vdwg.mxu0
    %v1377 = vadd.f32 %v1310, %v1366
    %v1378 = vadd.f32 %v1311, %v1369
    %v1379 = vadd.f32 %v1312, %v1372
    %v1380 = vadd.f32 %v1313, %v1375
    %v1381 = vld [vmem:[%s8] sm:$0x1]
    %v1383 = vperm.slane %v1381, 0
    %v1385 = vadd.f32 %v1377, %v1383
    %v1386 = vadd.f32 %v1378, %v1383
    %v1387 = vadd.f32 %v1379, %v1383
    %v1388 = vadd.f32 %v1380, %v1383
    %v1389 = vmax.f32 %v1385, 0.0
    %v1390 = vmax.f32 %v1386, 0.0
    %v1391 = vmax.f32 %v1387, 0.0
    %v1392 = vmax.f32 %v1388, 0.0
    %v1397 = vrot.slane %v1389, 6
    %v1398 = vrot.slane %v1390, 6
    %v1399 = vsel %vm133, %v1397, %v1398
    %v1400 = vrot.slane %v1391, 6
    %v1401 = vrot.slane %v1392, 6
    %v1402 = vsel %vm133, %v1400, %v1401
    %1409 = vst [vmem:[#allocation2] sm:$0xfc] %v1397
    %1410 = vst [vmem:[#allocation2 + $0x10] sm:$0xff] %v1399
    %1411 = vst [vmem:[#allocation2 + $0x20] sm:$0x3] %v1398
    %1412 = vst [vmem:[#allocation2 + $0x30] sm:$0xfc] %v1400
    %1413 = vst [vmem:[#allocation2 + $0x40] sm:$0xff] %v1402
    %1414 = vst [vmem:[#allocation2 + $0x50] sm:$0x3] %v1401
    %v1415 = vld [vmem:[#allocation2] sm:$0xff]
    %v1416 = vld [vmem:[#allocation2 + $0x10] sm:$0xff]
    %v1417 = vld [vmem:[#allocation2 + $0x30] sm:$0xff]
    %v1418 = vld [vmem:[#allocation2 + $0x40] sm:$0xff]
    %v1419 = vld [vmem:[#allocation6] sm:$0xff]
    %v1420 = vld [vmem:[#allocation6 + $0x8] sm:$0xff]
    %v1421 = vld [vmem:[#allocation6 + $0x10] sm:$0xff]
    %v1422 = vld [vmem:[#allocation6 + $0x18] sm:$0xff]
    %v1423 = vld [vmem:[#allocation6 + $0x20] sm:$0xff]
    %v1424 = vld [vmem:[#allocation6 + $0x28] sm:$0xff]
    %v1425 = vld [vmem:[#allocation6 + $0x30] sm:$0xff]
    %v1426 = vld [vmem:[#allocation6 + $0x38] sm:$0xff]
    %v1427 = vld [vmem:[#allocation6 + $0x40] sm:$0xff]
    %v1428 = vld [vmem:[#allocation6 + $0x48] sm:$0xff]
    %v1429 = vld [vmem:[#allocation6 + $0x50] sm:$0xff]
    %v1430 = vld [vmem:[#allocation6 + $0x58] sm:$0xff]
    %v1431 = vld [vmem:[#allocation6 + $0x60] sm:$0xff]
    %v1432 = vld [vmem:[#allocation6 + $0x68] sm:$0xff]
    %v1433 = vld [vmem:[#allocation6 + $0x70] sm:$0xff]
    %v1434 = vld [vmem:[#allocation6 + $0x78] sm:$0xff]
    %v1435 = vld [vmem:[#allocation6 + $0x80] sm:$0xff]
    %v1436 = vld [vmem:[#allocation6 + $0x88] sm:$0xff]
    %v1437 = vld [vmem:[#allocation6 + $0x90] sm:$0xff]
    %v1438 = vld [vmem:[#allocation6 + $0x98] sm:$0xff]
    %v1439 = vld [vmem:[#allocation6 + $0xa0] sm:$0xff]
    %v1440 = vld [vmem:[#allocation6 + $0xa8] sm:$0xff]
    %v1441 = vld [vmem:[#allocation6 + $0xb0] sm:$0xff]
    %v1442 = vld [vmem:[#allocation6 + $0xb8] sm:$0xff]
    %v1443 = vld [vmem:[#allocation6 + $0xc0] sm:$0xff]
    %v1444 = vld [vmem:[#allocation6 + $0xc8] sm:$0xff]
    %v1445 = vld [vmem:[#allocation6 + $0xd0] sm:$0xff]
    %v1446 = vld [vmem:[#allocation6 + $0xd8] sm:$0xff]
    %v1447 = vld [vmem:[#allocation6 + $0xe0] sm:$0xff]
    %v1448 = vld [vmem:[#allocation6 + $0xe8] sm:$0xff]
    %v1449 = vld [vmem:[#allocation6 + $0xf0] sm:$0xff]
    %v1450 = vld [vmem:[#allocation6 + $0xf8] sm:$0xff]
    %v1451 = vld [vmem:[#allocation2] sm:$0xfe]
    %v1452 = vld [vmem:[#allocation2 + $0x20] sm:$0x1]
    %v1453 = vld [vmem:[#allocation2 + $0x30] sm:$0xfe]
    %v1454 = vld [vmem:[#allocation2 + $0x50] sm:$0x1]
    %v1461 = vrot.slane %v1451, 1
    %v1462 = vrot.slane %v1416, 1
    %v1463 = vsel %vm197, %v1461, %v1462
    %v1464 = vrot.slane %v1452, 1
    %v1465 = vsel %vm197, %v1462, %v1464
    %v1466 = vrot.slane %v1453, 1
    %v1467 = vrot.slane %v1418, 1
    %v1468 = vsel %vm197, %v1466, %v1467
    %v1469 = vrot.slane %v1454, 1
    %v1470 = vsel %vm197, %v1467, %v1469
    %v1475 = vld [vmem:[#allocation6 + $0x100] sm:$0xff]
    %v1476 = vld [vmem:[#allocation6 + $0x108] sm:$0xff]
    %v1477 = vld [vmem:[#allocation6 + $0x110] sm:$0xff]
    %v1478 = vld [vmem:[#allocation6 + $0x118] sm:$0xff]
    %v1479 = vld [vmem:[#allocation6 + $0x120] sm:$0xff]
    %v1480 = vld [vmem:[#allocation6 + $0x128] sm:$0xff]
    %v1481 = vld [vmem:[#allocation6 + $0x130] sm:$0xff]
    %v1482 = vld [vmem:[#allocation6 + $0x138] sm:$0xff]
    %v1483 = vld [vmem:[#allocation6 + $0x140] sm:$0xff]
    %v1484 = vld [vmem:[#allocation6 + $0x148] sm:$0xff]
    %v1485 = vld [vmem:[#allocation6 + $0x150] sm:$0xff]
    %v1486 = vld [vmem:[#allocation6 + $0x158] sm:$0xff]
    %v1487 = vld [vmem:[#allocation6 + $0x160] sm:$0xff]
    %v1488 = vld [vmem:[#allocation6 + $0x168] sm:$0xff]
    %v1489 = vld [vmem:[#allocation6 + $0x170] sm:$0xff]
    %v1490 = vld [vmem:[#allocation6 + $0x178] sm:$0xff]
    %v1491 = vld [vmem:[#allocation6 + $0x180] sm:$0xff]
    %v1492 = vld [vmem:[#allocation6 + $0x188] sm:$0xff]
    %v1493 = vld [vmem:[#allocation6 + $0x190] sm:$0xff]
    %v1494 = vld [vmem:[#allocation6 + $0x198] sm:$0xff]
    %v1495 = vld [vmem:[#allocation6 + $0x1a0] sm:$0xff]
    %v1496 = vld [vmem:[#allocation6 + $0x1a8] sm:$0xff]
    %v1497 = vld [vmem:[#allocation6 + $0x1b0] sm:$0xff]
    %v1498 = vld [vmem:[#allocation6 + $0x1b8] sm:$0xff]
    %v1499 = vld [vmem:[#allocation6 + $0x1c0] sm:$0xff]
    %v1500 = vld [vmem:[#allocation6 + $0x1c8] sm:$0xff]
    %v1501 = vld [vmem:[#allocation6 + $0x1d0] sm:$0xff]
    %v1502 = vld [vmem:[#allocation6 + $0x1d8] sm:$0xff]
    %v1503 = vld [vmem:[#allocation6 + $0x1e0] sm:$0xff]
    %v1504 = vld [vmem:[#allocation6 + $0x1e8] sm:$0xff]
    %v1505 = vld [vmem:[#allocation6 + $0x1f0] sm:$0xff]
    %v1506 = vld [vmem:[#allocation6 + $0x1f8] sm:$0xff]
    %1507 = vmatpush.msra.mxu0 %v1505
    %1508 = vmatpush.msra.mxu0 %v1503
    %1509 = vmatpush.msra.mxu0 %v1501
    %1510 = vmatpush.msra.mxu0 %v1499
    %1511 = vmatpush.msra.mxu0 %v1497
    %1512 = vmatpush.msra.mxu0 %v1495
    %1513 = vmatpush.msra.mxu0 %v1493
    %1514 = vmatpush.msra.mxu0 %v1491
    %1515 = vmatpush.msra.mxu0 %v1489
    %1516 = vmatpush.msra.mxu0 %v1487
    %1517 = vmatpush.msra.mxu0 %v1485
    %1518 = vmatpush.msra.mxu0 %v1483
    %1519 = vmatpush.msra.mxu0 %v1481
    %1520 = vmatpush.msra.mxu0 %v1479
    %1521 = vmatpush.msra.mxu0 %v1477
    %1522 = vmatpush.msra.mxu0 %v1475
    %1523 = vmatmul.f32.gmra.mxu0 %v1463
    %v1524 = vpop.f32.mrf.mxu0
    %v1525 = vadd.f32 0.0, %v1524
    %1526 = vmatmul.f32.gmra.mxu0 %v1465
    %v1527 = vpop.f32.mrf.mxu0
    %v1528 = vadd.f32 0.0, %v1527
    %1529 = vmatmul.f32.gmra.mxu0 %v1468
    %v1530 = vpop.f32.mrf.mxu0
    %v1531 = vadd.f32 0.0, %v1530
    %1532 = vmatmul.f32.gmra.mxu0 %v1470
    %v1533 = vpop.f32.mrf.mxu0
    %v1534 = vadd.f32 0.0, %v1533
    %1535 = vdwg.mxu0
    %1536 = vmatpush.msra.mxu0 %v1506
    %1537 = vmatpush.msra.mxu0 %v1504
    %1538 = vmatpush.msra.mxu0 %v1502
    %1539 = vmatpush.msra.mxu0 %v1500
    %1540 = vmatpush.msra.mxu0 %v1498
    %1541 = vmatpush.msra.mxu0 %v1496
    %1542 = vmatpush.msra.mxu0 %v1494
    %1543 = vmatpush.msra.mxu0 %v1492
    %1544 = vmatpush.msra.mxu0 %v1490
    %1545 = vmatpush.msra.mxu0 %v1488
    %1546 = vmatpush.msra.mxu0 %v1486
    %1547 = vmatpush.msra.mxu0 %v1484
    %1548 = vmatpush.msra.mxu0 %v1482
    %1549 = vmatpush.msra.mxu0 %v1480
    %1550 = vmatpush.msra.mxu0 %v1478
    %1551 = vmatpush.msra.mxu0 %v1476
    %1552 = vmatmul.f32.gmra.mxu0 %v1463
    %v1553 = vpop.f32.mrf.mxu0
    %v1554 = vadd.f32 0.0, %v1553
    %1555 = vmatmul.f32.gmra.mxu0 %v1465
    %v1556 = vpop.f32.mrf.mxu0
    %v1557 = vadd.f32 0.0, %v1556
    %1558 = vmatmul.f32.gmra.mxu0 %v1468
    %v1559 = vpop.f32.mrf.mxu0
    %v1560 = vadd.f32 0.0, %v1559
    %1561 = vmatmul.f32.gmra.mxu0 %v1470
    %v1562 = vpop.f32.mrf.mxu0
    %v1563 = vadd.f32 0.0, %v1562
    %1564 = vdwg.mxu0
    %1565 = vmatpush.msra.mxu0 %v1449
    %1566 = vmatpush.msra.mxu0 %v1447
    %1567 = vmatpush.msra.mxu0 %v1445
    %1568 = vmatpush.msra.mxu0 %v1443
    %1569 = vmatpush.msra.mxu0 %v1441
    %1570 = vmatpush.msra.mxu0 %v1439
    %1571 = vmatpush.msra.mxu0 %v1437
    %1572 = vmatpush.msra.mxu0 %v1435
    %1573 = vmatpush.msra.mxu0 %v1433
    %1574 = vmatpush.msra.mxu0 %v1431
    %1575 = vmatpush.msra.mxu0 %v1429
    %1576 = vmatpush.msra.mxu0 %v1427
    %1577 = vmatpush.msra.mxu0 %v1425
    %1578 = vmatpush.msra.mxu0 %v1423
    %1579 = vmatpush.msra.mxu0 %v1421
    %1580 = vmatpush.msra.mxu0 %v1419
    %1581 = vmatmul.f32.gmra.mxu0 %v1415
    %v1582 = vpop.f32.mrf.mxu0
    %v1583 = vadd.f32 %v1525, %v1582
    %1584 = vmatmul.f32.gmra.mxu0 %v1416
    %v1585 = vpop.f32.mrf.mxu0
    %v1586 = vadd.f32 %v1528, %v1585
    %1587 = vmatmul.f32.gmra.mxu0 %v1417
    %v1588 = vpop.f32.mrf.mxu0
    %v1589 = vadd.f32 %v1531, %v1588
    %1590 = vmatmul.f32.gmra.mxu0 %v1418
    %v1591 = vpop.f32.mrf.mxu0
    %v1592 = vadd.f32 %v1534, %v1591
    %1593 = vdwg.mxu0
    %1594 = vmatpush.msra.mxu0 %v1450
    %1595 = vmatpush.msra.mxu0 %v1448
    %1596 = vmatpush.msra.mxu0 %v1446
    %1597 = vmatpush.msra.mxu0 %v1444
    %1598 = vmatpush.msra.mxu0 %v1442
    %1599 = vmatpush.msra.mxu0 %v1440
    %1600 = vmatpush.msra.mxu0 %v1438
    %1601 = vmatpush.msra.mxu0 %v1436
    %1602 = vmatpush.msra.mxu0 %v1434
    %1603 = vmatpush.msra.mxu0 %v1432
    %1604 = vmatpush.msra.mxu0 %v1430
    %1605 = vmatpush.msra.mxu0 %v1428
    %1606 = vmatpush.msra.mxu0 %v1426
    %1607 = vmatpush.msra.mxu0 %v1424
    %1608 = vmatpush.msra.mxu0 %v1422
    %1609 = vmatpush.msra.mxu0 %v1420
    %1610 = vmatmul.f32.gmra.mxu0 %v1415
    %v1611 = vpop.f32.mrf.mxu0
    %v1612 = vadd.f32 %v1554, %v1611
    %1613 = vmatmul.f32.gmra.mxu0 %v1416
    %v1614 = vpop.f32.mrf.mxu0
    %v1615 = vadd.f32 %v1557, %v1614
    %1616 = vmatmul.f32.gmra.mxu0 %v1417
    %v1617 = vpop.f32.mrf.mxu0
    %v1618 = vadd.f32 %v1560, %v1617
    %1619 = vmatmul.f32.gmra.mxu0 %v1418
    %v1620 = vpop.f32.mrf.mxu0
    %v1621 = vadd.f32 %v1563, %v1620
    %1622 = vdwg.mxu0
    %v1623 = vld [vmem:[#allocation2] sm:$0xfc]
    %v1624 = vld [vmem:[#allocation2 + $0x20] sm:$0x3]
    %v1625 = vld [vmem:[#allocation2 + $0x30] sm:$0xfc]
    %v1626 = vld [vmem:[#allocation2 + $0x50] sm:$0x3]
    %v1631 = vrot.slane %v1623, 2
    %v1632 = vrot.slane %v1416, 2
    %v1633 = vsel %vm242, %v1631, %v1632
    %v1634 = vrot.slane %v1624, 2
    %v1635 = vsel %vm242, %v1632, %v1634
    %v1636 = vrot.slane %v1625, 2
    %v1637 = vrot.slane %v1418, 2
    %v1638 = vsel %vm242, %v1636, %v1637
    %v1639 = vrot.slane %v1626, 2
    %v1640 = vsel %vm242, %v1637, %v1639
    %v1645 = vld [vmem:[#allocation6 + $0x200] sm:$0xff]
    %v1646 = vld [vmem:[#allocation6 + $0x208] sm:$0xff]
    %v1647 = vld [vmem:[#allocation6 + $0x210] sm:$0xff]
    %v1648 = vld [vmem:[#allocation6 + $0x218] sm:$0xff]
    %v1649 = vld [vmem:[#allocation6 + $0x220] sm:$0xff]
    %v1650 = vld [vmem:[#allocation6 + $0x228] sm:$0xff]
    %v1651 = vld [vmem:[#allocation6 + $0x230] sm:$0xff]
    %v1652 = vld [vmem:[#allocation6 + $0x238] sm:$0xff]
    %v1653 = vld [vmem:[#allocation6 + $0x240] sm:$0xff]
    %v1654 = vld [vmem:[#allocation6 + $0x248] sm:$0xff]
    %v1655 = vld [vmem:[#allocation6 + $0x250] sm:$0xff]
    %v1656 = vld [vmem:[#allocation6 + $0x258] sm:$0xff]
    %v1657 = vld [vmem:[#allocation6 + $0x260] sm:$0xff]
    %v1658 = vld [vmem:[#allocation6 + $0x268] sm:$0xff]
    %v1659 = vld [vmem:[#allocation6 + $0x270] sm:$0xff]
    %v1660 = vld [vmem:[#allocation6 + $0x278] sm:$0xff]
    %v1661 = vld [vmem:[#allocation6 + $0x280] sm:$0xff]
    %v1662 = vld [vmem:[#allocation6 + $0x288] sm:$0xff]
    %v1663 = vld [vmem:[#allocation6 + $0x290] sm:$0xff]
    %v1664 = vld [vmem:[#allocation6 + $0x298] sm:$0xff]
    %v1665 = vld [vmem:[#allocation6 + $0x2a0] sm:$0xff]
    %v1666 = vld [vmem:[#allocation6 + $0x2a8] sm:$0xff]
    %v1667 = vld [vmem:[#allocation6 + $0x2b0] sm:$0xff]
    %v1668 = vld [vmem:[#allocation6 + $0x2b8] sm:$0xff]
    %v1669 = vld [vmem:[#allocation6 + $0x2c0] sm:$0xff]
    %v1670 = vld [vmem:[#allocation6 + $0x2c8] sm:$0xff]
    %v1671 = vld [vmem:[#allocation6 + $0x2d0] sm:$0xff]
    %v1672 = vld [vmem:[#allocation6 + $0x2d8] sm:$0xff]
    %v1673 = vld [vmem:[#allocation6 + $0x2e0] sm:$0xff]
    %v1674 = vld [vmem:[#allocation6 + $0x2e8] sm:$0xff]
    %v1675 = vld [vmem:[#allocation6 + $0x2f0] sm:$0xff]
    %v1676 = vld [vmem:[#allocation6 + $0x2f8] sm:$0xff]
    %1677 = vmatpush.msra.mxu0 %v1675
    %1678 = vmatpush.msra.mxu0 %v1673
    %1679 = vmatpush.msra.mxu0 %v1671
    %1680 = vmatpush.msra.mxu0 %v1669
    %1681 = vmatpush.msra.mxu0 %v1667
    %1682 = vmatpush.msra.mxu0 %v1665
    %1683 = vmatpush.msra.mxu0 %v1663
    %1684 = vmatpush.msra.mxu0 %v1661
    %1685 = vmatpush.msra.mxu0 %v1659
    %1686 = vmatpush.msra.mxu0 %v1657
    %1687 = vmatpush.msra.mxu0 %v1655
    %1688 = vmatpush.msra.mxu0 %v1653
    %1689 = vmatpush.msra.mxu0 %v1651
    %1690 = vmatpush.msra.mxu0 %v1649
    %1691 = vmatpush.msra.mxu0 %v1647
    %1692 = vmatpush.msra.mxu0 %v1645
    %1693 = vmatmul.f32.gmra.mxu0 %v1633
    %v1694 = vpop.f32.mrf.mxu0
    %v1695 = vadd.f32 0.0, %v1694
    %1696 = vmatmul.f32.gmra.mxu0 %v1635
    %v1697 = vpop.f32.mrf.mxu0
    %v1698 = vadd.f32 0.0, %v1697
    %1699 = vmatmul.f32.gmra.mxu0 %v1638
    %v1700 = vpop.f32.mrf.mxu0
    %v1701 = vadd.f32 0.0, %v1700
    %1702 = vmatmul.f32.gmra.mxu0 %v1640
    %v1703 = vpop.f32.mrf.mxu0
    %v1704 = vadd.f32 0.0, %v1703
    %1705 = vdwg.mxu0
    %1706 = vmatpush.msra.mxu0 %v1676
    %1707 = vmatpush.msra.mxu0 %v1674
    %1708 = vmatpush.msra.mxu0 %v1672
    %1709 = vmatpush.msra.mxu0 %v1670
    %1710 = vmatpush.msra.mxu0 %v1668
    %1711 = vmatpush.msra.mxu0 %v1666
    %1712 = vmatpush.msra.mxu0 %v1664
    %1713 = vmatpush.msra.mxu0 %v1662
    %1714 = vmatpush.msra.mxu0 %v1660
    %1715 = vmatpush.msra.mxu0 %v1658
    %1716 = vmatpush.msra.mxu0 %v1656
    %1717 = vmatpush.msra.mxu0 %v1654
    %1718 = vmatpush.msra.mxu0 %v1652
    %1719 = vmatpush.msra.mxu0 %v1650
    %1720 = vmatpush.msra.mxu0 %v1648
    %1721 = vmatpush.msra.mxu0 %v1646
    %1722 = vmatmul.f32.gmra.mxu0 %v1633
    %v1723 = vpop.f32.mrf.mxu0
    %v1724 = vadd.f32 0.0, %v1723
    %1725 = vmatmul.f32.gmra.mxu0 %v1635
    %v1726 = vpop.f32.mrf.mxu0
    %v1727 = vadd.f32 0.0, %v1726
    %1728 = vmatmul.f32.gmra.mxu0 %v1638
    %v1729 = vpop.f32.mrf.mxu0
    %v1730 = vadd.f32 0.0, %v1729
    %1731 = vmatmul.f32.gmra.mxu0 %v1640
    %v1732 = vpop.f32.mrf.mxu0
    %v1733 = vadd.f32 0.0, %v1732
    %1734 = vdwg.mxu0
    %v1735 = vadd.f32 %v1583, %v1695
    %v1736 = vadd.f32 %v1612, %v1724
    %v1737 = vadd.f32 %v1586, %v1698
    %v1738 = vadd.f32 %v1615, %v1727
    %v1739 = vadd.f32 %v1589, %v1701
    %v1740 = vadd.f32 %v1618, %v1730
    %v1741 = vadd.f32 %v1592, %v1704
    %v1742 = vadd.f32 %v1621, %v1733
    %v1743 = vld [vmem:[#allocation2] sm:$0xf8]
    %v1744 = vld [vmem:[#allocation2 + $0x20] sm:$0x7]
    %v1745 = vld [vmem:[#allocation2 + $0x30] sm:$0xf8]
    %v1746 = vld [vmem:[#allocation2 + $0x50] sm:$0x7]
    %v1751 = vrot.slane %v1743, 3
    %v1752 = vrot.slane %v1416, 3
    %v1753 = vsel %vm287, %v1751, %v1752
    %v1754 = vrot.slane %v1744, 3
    %v1755 = vsel %vm287, %v1752, %v1754
    %v1756 = vrot.slane %v1745, 3
    %v1757 = vrot.slane %v1418, 3
    %v1758 = vsel %vm287, %v1756, %v1757
    %v1759 = vrot.slane %v1746, 3
    %v1760 = vsel %vm287, %v1757, %v1759
    %v1765 = vld [vmem:[#allocation6 + $0x300] sm:$0xff]
    %v1766 = vld [vmem:[#allocation6 + $0x308] sm:$0xff]
    %v1767 = vld [vmem:[#allocation6 + $0x310] sm:$0xff]
    %v1768 = vld [vmem:[#allocation6 + $0x318] sm:$0xff]
    %v1769 = vld [vmem:[#allocation6 + $0x320] sm:$0xff]
    %v1770 = vld [vmem:[#allocation6 + $0x328] sm:$0xff]
    %v1771 = vld [vmem:[#allocation6 + $0x330] sm:$0xff]
    %v1772 = vld [vmem:[#allocation6 + $0x338] sm:$0xff]
    %v1773 = vld [vmem:[#allocation6 + $0x340] sm:$0xff]
    %v1774 = vld [vmem:[#allocation6 + $0x348] sm:$0xff]
    %v1775 = vld [vmem:[#allocation6 + $0x350] sm:$0xff]
    %v1776 = vld [vmem:[#allocation6 + $0x358] sm:$0xff]
    %v1777 = vld [vmem:[#allocation6 + $0x360] sm:$0xff]
    %v1778 = vld [vmem:[#allocation6 + $0x368] sm:$0xff]
    %v1779 = vld [vmem:[#allocation6 + $0x370] sm:$0xff]
    %v1780 = vld [vmem:[#allocation6 + $0x378] sm:$0xff]
    %v1781 = vld [vmem:[#allocation6 + $0x380] sm:$0xff]
    %v1782 = vld [vmem:[#allocation6 + $0x388] sm:$0xff]
    %v1783 = vld [vmem:[#allocation6 + $0x390] sm:$0xff]
    %v1784 = vld [vmem:[#allocation6 + $0x398] sm:$0xff]
    %v1785 = vld [vmem:[#allocation6 + $0x3a0] sm:$0xff]
    %v1786 = vld [vmem:[#allocation6 + $0x3a8] sm:$0xff]
    %v1787 = vld [vmem:[#allocation6 + $0x3b0] sm:$0xff]
    %v1788 = vld [vmem:[#allocation6 + $0x3b8] sm:$0xff]
    %v1789 = vld [vmem:[#allocation6 + $0x3c0] sm:$0xff]
    %v1790 = vld [vmem:[#allocation6 + $0x3c8] sm:$0xff]
    %v1791 = vld [vmem:[#allocation6 + $0x3d0] sm:$0xff]
    %v1792 = vld [vmem:[#allocation6 + $0x3d8] sm:$0xff]
    %v1793 = vld [vmem:[#allocation6 + $0x3e0] sm:$0xff]
    %v1794 = vld [vmem:[#allocation6 + $0x3e8] sm:$0xff]
    %v1795 = vld [vmem:[#allocation6 + $0x3f0] sm:$0xff]
    %v1796 = vld [vmem:[#allocation6 + $0x3f8] sm:$0xff]
    %1797 = vmatpush.msra.mxu0 %v1795
    %1798 = vmatpush.msra.mxu0 %v1793
    %1799 = vmatpush.msra.mxu0 %v1791
    %1800 = vmatpush.msra.mxu0 %v1789
    %1801 = vmatpush.msra.mxu0 %v1787
    %1802 = vmatpush.msra.mxu0 %v1785
    %1803 = vmatpush.msra.mxu0 %v1783
    %1804 = vmatpush.msra.mxu0 %v1781
    %1805 = vmatpush.msra.mxu0 %v1779
    %1806 = vmatpush.msra.mxu0 %v1777
    %1807 = vmatpush.msra.mxu0 %v1775
    %1808 = vmatpush.msra.mxu0 %v1773
    %1809 = vmatpush.msra.mxu0 %v1771
    %1810 = vmatpush.msra.mxu0 %v1769
    %1811 = vmatpush.msra.mxu0 %v1767
    %1812 = vmatpush.msra.mxu0 %v1765
    %1813 = vmatmul.f32.gmra.mxu0 %v1753
    %v1814 = vpop.f32.mrf.mxu0
    %v1815 = vadd.f32 0.0, %v1814
    %1816 = vmatmul.f32.gmra.mxu0 %v1755
    %v1817 = vpop.f32.mrf.mxu0
    %v1818 = vadd.f32 0.0, %v1817
    %1819 = vmatmul.f32.gmra.mxu0 %v1758
    %v1820 = vpop.f32.mrf.mxu0
    %v1821 = vadd.f32 0.0, %v1820
    %1822 = vmatmul.f32.gmra.mxu0 %v1760
    %v1823 = vpop.f32.mrf.mxu0
    %v1824 = vadd.f32 0.0, %v1823
    %1825 = vdwg.mxu0
    %1826 = vmatpush.msra.mxu0 %v1796
    %1827 = vmatpush.msra.mxu0 %v1794
    %1828 = vmatpush.msra.mxu0 %v1792
    %1829 = vmatpush.msra.mxu0 %v1790
    %1830 = vmatpush.msra.mxu0 %v1788
    %1831 = vmatpush.msra.mxu0 %v1786
    %1832 = vmatpush.msra.mxu0 %v1784
    %1833 = vmatpush.msra.mxu0 %v1782
    %1834 = vmatpush.msra.mxu0 %v1780
    %1835 = vmatpush.msra.mxu0 %v1778
    %1836 = vmatpush.msra.mxu0 %v1776
    %1837 = vmatpush.msra.mxu0 %v1774
    %1838 = vmatpush.msra.mxu0 %v1772
    %1839 = vmatpush.msra.mxu0 %v1770
    %1840 = vmatpush.msra.mxu0 %v1768
    %1841 = vmatpush.msra.mxu0 %v1766
    %1842 = vmatmul.f32.gmra.mxu0 %v1753
    %v1843 = vpop.f32.mrf.mxu0
    %v1844 = vadd.f32 0.0, %v1843
    %1845 = vmatmul.f32.gmra.mxu0 %v1755
    %v1846 = vpop.f32.mrf.mxu0
    %v1847 = vadd.f32 0.0, %v1846
    %1848 = vmatmul.f32.gmra.mxu0 %v1758
    %v1849 = vpop.f32.mrf.mxu0
    %v1850 = vadd.f32 0.0, %v1849
    %1851 = vmatmul.f32.gmra.mxu0 %v1760
    %v1852 = vpop.f32.mrf.mxu0
    %v1853 = vadd.f32 0.0, %v1852
    %1854 = vdwg.mxu0
    %v1855 = vadd.f32 %v1735, %v1815
    %v1856 = vadd.f32 %v1736, %v1844
    %v1857 = vadd.f32 %v1737, %v1818
    %v1858 = vadd.f32 %v1738, %v1847
    %v1859 = vadd.f32 %v1739, %v1821
    %v1860 = vadd.f32 %v1740, %v1850
    %v1861 = vadd.f32 %v1741, %v1824
    %v1862 = vadd.f32 %v1742, %v1853
    %v1863 = vld [vmem:[#allocation2] sm:$0xf0]
    %v1864 = vld [vmem:[#allocation2 + $0x20] sm:$0xf]
    %v1865 = vld [vmem:[#allocation2 + $0x30] sm:$0xf0]
    %v1866 = vld [vmem:[#allocation2 + $0x50] sm:$0xf]
    %v1871 = vrot.slane %v1863, 4
    %v1872 = vrot.slane %v1416, 4
    %v1873 = vsel %vm332, %v1871, %v1872
    %v1874 = vrot.slane %v1864, 4
    %v1875 = vsel %vm332, %v1872, %v1874
    %v1876 = vrot.slane %v1865, 4
    %v1877 = vrot.slane %v1418, 4
    %v1878 = vsel %vm332, %v1876, %v1877
    %v1879 = vrot.slane %v1866, 4
    %v1880 = vsel %vm332, %v1877, %v1879
    %v1885 = vld [vmem:[#allocation6 + $0x400] sm:$0xff]
    %v1886 = vld [vmem:[#allocation6 + $0x408] sm:$0xff]
    %v1887 = vld [vmem:[#allocation6 + $0x410] sm:$0xff]
    %v1888 = vld [vmem:[#allocation6 + $0x418] sm:$0xff]
    %v1889 = vld [vmem:[#allocation6 + $0x420] sm:$0xff]
    %v1890 = vld [vmem:[#allocation6 + $0x428] sm:$0xff]
    %v1891 = vld [vmem:[#allocation6 + $0x430] sm:$0xff]
    %v1892 = vld [vmem:[#allocation6 + $0x438] sm:$0xff]
    %v1893 = vld [vmem:[#allocation6 + $0x440] sm:$0xff]
    %v1894 = vld [vmem:[#allocation6 + $0x448] sm:$0xff]
    %v1895 = vld [vmem:[#allocation6 + $0x450] sm:$0xff]
    %v1896 = vld [vmem:[#allocation6 + $0x458] sm:$0xff]
    %v1897 = vld [vmem:[#allocation6 + $0x460] sm:$0xff]
    %v1898 = vld [vmem:[#allocation6 + $0x468] sm:$0xff]
    %v1899 = vld [vmem:[#allocation6 + $0x470] sm:$0xff]
    %v1900 = vld [vmem:[#allocation6 + $0x478] sm:$0xff]
    %v1901 = vld [vmem:[#allocation6 + $0x480] sm:$0xff]
    %v1902 = vld [vmem:[#allocation6 + $0x488] sm:$0xff]
    %v1903 = vld [vmem:[#allocation6 + $0x490] sm:$0xff]
    %v1904 = vld [vmem:[#allocation6 + $0x498] sm:$0xff]
    %v1905 = vld [vmem:[#allocation6 + $0x4a0] sm:$0xff]
    %v1906 = vld [vmem:[#allocation6 + $0x4a8] sm:$0xff]
    %v1907 = vld [vmem:[#allocation6 + $0x4b0] sm:$0xff]
    %v1908 = vld [vmem:[#allocation6 + $0x4b8] sm:$0xff]
    %v1909 = vld [vmem:[#allocation6 + $0x4c0] sm:$0xff]
    %v1910 = vld [vmem:[#allocation6 + $0x4c8] sm:$0xff]
    %v1911 = vld [vmem:[#allocation6 + $0x4d0] sm:$0xff]
    %v1912 = vld [vmem:[#allocation6 + $0x4d8] sm:$0xff]
    %v1913 = vld [vmem:[#allocation6 + $0x4e0] sm:$0xff]
    %v1914 = vld [vmem:[#allocation6 + $0x4e8] sm:$0xff]
    %v1915 = vld [vmem:[#allocation6 + $0x4f0] sm:$0xff]
    %v1916 = vld [vmem:[#allocation6 + $0x4f8] sm:$0xff]
    %1917 = vmatpush.msra.mxu0 %v1915
    %1918 = vmatpush.msra.mxu0 %v1913
    %1919 = vmatpush.msra.mxu0 %v1911
    %1920 = vmatpush.msra.mxu0 %v1909
    %1921 = vmatpush.msra.mxu0 %v1907
    %1922 = vmatpush.msra.mxu0 %v1905
    %1923 = vmatpush.msra.mxu0 %v1903
    %1924 = vmatpush.msra.mxu0 %v1901
    %1925 = vmatpush.msra.mxu0 %v1899
    %1926 = vmatpush.msra.mxu0 %v1897
    %1927 = vmatpush.msra.mxu0 %v1895
    %1928 = vmatpush.msra.mxu0 %v1893
    %1929 = vmatpush.msra.mxu0 %v1891
    %1930 = vmatpush.msra.mxu0 %v1889
    %1931 = vmatpush.msra.mxu0 %v1887
    %1932 = vmatpush.msra.mxu0 %v1885
    %1933 = vmatmul.f32.gmra.mxu0 %v1873
    %v1934 = vpop.f32.mrf.mxu0
    %v1935 = vadd.f32 0.0, %v1934
    %1936 = vmatmul.f32.gmra.mxu0 %v1875
    %v1937 = vpop.f32.mrf.mxu0
    %v1938 = vadd.f32 0.0, %v1937
    %1939 = vmatmul.f32.gmra.mxu0 %v1878
    %v1940 = vpop.f32.mrf.mxu0
    %v1941 = vadd.f32 0.0, %v1940
    %1942 = vmatmul.f32.gmra.mxu0 %v1880
    %v1943 = vpop.f32.mrf.mxu0
    %v1944 = vadd.f32 0.0, %v1943
    %1945 = vdwg.mxu0
    %1946 = vmatpush.msra.mxu0 %v1916
    %1947 = vmatpush.msra.mxu0 %v1914
    %1948 = vmatpush.msra.mxu0 %v1912
    %1949 = vmatpush.msra.mxu0 %v1910
    %1950 = vmatpush.msra.mxu0 %v1908
    %1951 = vmatpush.msra.mxu0 %v1906
    %1952 = vmatpush.msra.mxu0 %v1904
    %1953 = vmatpush.msra.mxu0 %v1902
    %1954 = vmatpush.msra.mxu0 %v1900
    %1955 = vmatpush.msra.mxu0 %v1898
    %1956 = vmatpush.msra.mxu0 %v1896
    %1957 = vmatpush.msra.mxu0 %v1894
    %1958 = vmatpush.msra.mxu0 %v1892
    %1959 = vmatpush.msra.mxu0 %v1890
    %1960 = vmatpush.msra.mxu0 %v1888
    %1961 = vmatpush.msra.mxu0 %v1886
    %1962 = vmatmul.f32.gmra.mxu0 %v1873
    %v1963 = vpop.f32.mrf.mxu0
    %v1964 = vadd.f32 0.0, %v1963
    %1965 = vmatmul.f32.gmra.mxu0 %v1875
    %v1966 = vpop.f32.mrf.mxu0
    %v1967 = vadd.f32 0.0, %v1966
    %1968 = vmatmul.f32.gmra.mxu0 %v1878
    %v1969 = vpop.f32.mrf.mxu0
    %v1970 = vadd.f32 0.0, %v1969
    %1971 = vmatmul.f32.gmra.mxu0 %v1880
    %v1972 = vpop.f32.mrf.mxu0
    %v1973 = vadd.f32 0.0, %v1972
    %1974 = vdwg.mxu0
    %v1975 = vadd.f32 %v1855, %v1935
    %v1976 = vadd.f32 %v1856, %v1964
    %v1977 = vadd.f32 %v1857, %v1938
    %v1978 = vadd.f32 %v1858, %v1967
    %v1979 = vadd.f32 %v1859, %v1941
    %v1980 = vadd.f32 %v1860, %v1970
    %v1981 = vadd.f32 %v1861, %v1944
    %v1982 = vadd.f32 %v1862, %v1973
    %v1983 = vld [vmem:[%s10] sm:$0x3]
    %v1985 = vperm.slane %v1983, 0
    %v1986 = vperm.slane %v1983, 1
    %v1989 = vadd.f32 %v1975, %v1985
    %v1990 = vadd.f32 %v1976, %v1986
    %v1991 = vadd.f32 %v1977, %v1985
    %v1992 = vadd.f32 %v1978, %v1986
    %v1993 = vadd.f32 %v1979, %v1985
    %v1994 = vadd.f32 %v1980, %v1986
    %v1995 = vadd.f32 %v1981, %v1985
    %v1996 = vadd.f32 %v1982, %v1986
    %v1997 = vmax.f32 %v1989, 0.0
    %v1998 = vmax.f32 %v1990, 0.0
    %v1999 = vmax.f32 %v1991, 0.0
    %v2000 = vmax.f32 %v1992, 0.0
    %v2001 = vmax.f32 %v1993, 0.0
    %v2002 = vmax.f32 %v1994, 0.0
    %v2003 = vmax.f32 %v1995, 0.0
    %v2004 = vmax.f32 %v1996, 0.0
    %v2013 = vrot.slane %v1997, 6
    %v2014 = vrot.slane %v1998, 6
    %v2015 = vrot.slane %v1999, 6
    %v2016 = vsel %vm133, %v2013, %v2015
    %v2017 = vrot.slane %v2000, 6
    %v2018 = vsel %vm133, %v2014, %v2017
    %v2019 = vrot.slane %v2001, 6
    %v2020 = vrot.slane %v2002, 6
    %v2021 = vrot.slane %v2003, 6
    %v2022 = vsel %vm133, %v2019, %v2021
    %v2023 = vrot.slane %v2004, 6
    %v2024 = vsel %vm133, %v2020, %v2023
    %2037 = vst [vmem:[#allocation2] sm:$0xfc] %v2013
    %2038 = vst [vmem:[#allocation2 + $0x8] sm:$0xfc] %v2014
    %2039 = vst [vmem:[#allocation2 + $0x10] sm:$0xff] %v2016
    %2040 = vst [vmem:[#allocation2 + $0x18] sm:$0xff] %v2018
    %2041 = vst [vmem:[#allocation2 + $0x20] sm:$0x3] %v2015
    %2042 = vst [vmem:[#allocation2 + $0x28] sm:$0x3] %v2017
    %2043 = vst [vmem:[#allocation2 + $0x30] sm:$0xfc] %v2019
    %2044 = vst [vmem:[#allocation2 + $0x38] sm:$0xfc] %v2020
    %2045 = vst [vmem:[#allocation2 + $0x40] sm:$0xff] %v2022
    %2046 = vst [vmem:[#allocation2 + $0x48] sm:$0xff] %v2024
    %2047 = vst [vmem:[#allocation2 + $0x50] sm:$0x3] %v2021
    %2048 = vst [vmem:[#allocation2 + $0x58] sm:$0x3] %v2023
    %v2049 = vld [vmem:[#allocation2] sm:$0xff]
    %v2050 = vld [vmem:[#allocation2 + $0x8] sm:$0xff]
    %v2051 = vld [vmem:[#allocation2 + $0x10] sm:$0xff]
    %v2052 = vld [vmem:[#allocation2 + $0x18] sm:$0xff]
    %v2053 = vld [vmem:[#allocation2 + $0x30] sm:$0xff]
    %v2054 = vld [vmem:[#allocation2 + $0x38] sm:$0xff]
    %v2055 = vld [vmem:[#allocation2 + $0x40] sm:$0xff]
    %v2056 = vld [vmem:[#allocation2 + $0x48] sm:$0xff]
    %v2057 = vld [vmem:[%s11] sm:$0xff]
    %v2058 = vld [vmem:[%s11 + $0x8] sm:$0xff]
    %v2059 = vld [vmem:[%s11 + $0x10] sm:$0xff]
    %v2060 = vld [vmem:[%s11 + $0x18] sm:$0xff]
    %v2061 = vld [vmem:[%s11 + $0x20] sm:$0xff]
    %v2062 = vld [vmem:[%s11 + $0x28] sm:$0xff]
    %v2063 = vld [vmem:[%s11 + $0x30] sm:$0xff]
    %v2064 = vld [vmem:[%s11 + $0x38] sm:$0xff]
    %v2065 = vld [vmem:[%s11 + $0x40] sm:$0xff]
    %v2066 = vld [vmem:[%s11 + $0x48] sm:$0xff]
    %v2067 = vld [vmem:[%s11 + $0x50] sm:$0xff]
    %v2068 = vld [vmem:[%s11 + $0x58] sm:$0xff]
    %v2069 = vld [vmem:[%s11 + $0x60] sm:$0xff]
    %v2070 = vld [vmem:[%s11 + $0x68] sm:$0xff]
    %v2071 = vld [vmem:[%s11 + $0x70] sm:$0xff]
    %v2072 = vld [vmem:[%s11 + $0x78] sm:$0xff]
    %v2073 = vld [vmem:[%s11 + $0x80] sm:$0xff]
    %v2074 = vld [vmem:[%s11 + $0x88] sm:$0xff]
    %v2075 = vld [vmem:[%s11 + $0x90] sm:$0xff]
    %v2076 = vld [vmem:[%s11 + $0x98] sm:$0xff]
    %v2077 = vld [vmem:[%s11 + $0xa0] sm:$0xff]
    %v2078 = vld [vmem:[%s11 + $0xa8] sm:$0xff]
    %v2079 = vld [vmem:[%s11 + $0xb0] sm:$0xff]
    %v2080 = vld [vmem:[%s11 + $0xb8] sm:$0xff]
    %v2081 = vld [vmem:[%s11 + $0xc0] sm:$0xff]
    %v2082 = vld [vmem:[%s11 + $0xc8] sm:$0xff]
    %v2083 = vld [vmem:[%s11 + $0xd0] sm:$0xff]
    %v2084 = vld [vmem:[%s11 + $0xd8] sm:$0xff]
    %v2085 = vld [vmem:[%s11 + $0xe0] sm:$0xff]
    %v2086 = vld [vmem:[%s11 + $0xe8] sm:$0xff]
    %v2087 = vld [vmem:[%s11 + $0xf0] sm:$0xff]
    %v2088 = vld [vmem:[%s11 + $0xf8] sm:$0xff]
    %v2089 = vld [vmem:[%s11 + $0x100] sm:$0xff]
    %v2090 = vld [vmem:[%s11 + $0x108] sm:$0xff]
    %v2091 = vld [vmem:[%s11 + $0x110] sm:$0xff]
    %v2092 = vld [vmem:[%s11 + $0x118] sm:$0xff]
    %v2093 = vld [vmem:[%s11 + $0x120] sm:$0xff]
    %v2094 = vld [vmem:[%s11 + $0x128] sm:$0xff]
    %v2095 = vld [vmem:[%s11 + $0x130] sm:$0xff]
    %v2096 = vld [vmem:[%s11 + $0x138] sm:$0xff]
    %v2097 = vld [vmem:[%s11 + $0x140] sm:$0xff]
    %v2098 = vld [vmem:[%s11 + $0x148] sm:$0xff]
    %v2099 = vld [vmem:[%s11 + $0x150] sm:$0xff]
    %v2100 = vld [vmem:[%s11 + $0x158] sm:$0xff]
    %v2101 = vld [vmem:[%s11 + $0x160] sm:$0xff]
    %v2102 = vld [vmem:[%s11 + $0x168] sm:$0xff]
    %v2103 = vld [vmem:[%s11 + $0x170] sm:$0xff]
    %v2104 = vld [vmem:[%s11 + $0x178] sm:$0xff]
    %v2105 = vld [vmem:[%s11 + $0x180] sm:$0xff]
    %v2106 = vld [vmem:[%s11 + $0x188] sm:$0xff]
    %v2107 = vld [vmem:[%s11 + $0x190] sm:$0xff]
    %v2108 = vld [vmem:[%s11 + $0x198] sm:$0xff]
    %v2109 = vld [vmem:[%s11 + $0x1a0] sm:$0xff]
    %v2110 = vld [vmem:[%s11 + $0x1a8] sm:$0xff]
    %v2111 = vld [vmem:[%s11 + $0x1b0] sm:$0xff]
    %v2112 = vld [vmem:[%s11 + $0x1b8] sm:$0xff]
    %v2113 = vld [vmem:[%s11 + $0x1c0] sm:$0xff]
    %v2114 = vld [vmem:[%s11 + $0x1c8] sm:$0xff]
    %v2115 = vld [vmem:[%s11 + $0x1d0] sm:$0xff]
    %v2116 = vld [vmem:[%s11 + $0x1d8] sm:$0xff]
    %v2117 = vld [vmem:[%s11 + $0x1e0] sm:$0xff]
    %v2118 = vld [vmem:[%s11 + $0x1e8] sm:$0xff]
    %v2119 = vld [vmem:[%s11 + $0x1f0] sm:$0xff]
    %v2120 = vld [vmem:[%s11 + $0x1f8] sm:$0xff]
    %v2121 = vld [vmem:[#allocation2] sm:$0xfe]
    %v2122 = vld [vmem:[#allocation2 + $0x8] sm:$0xfe]
    %v2123 = vld [vmem:[#allocation2 + $0x20] sm:$0x1]
    %v2124 = vld [vmem:[#allocation2 + $0x28] sm:$0x1]
    %v2125 = vld [vmem:[#allocation2 + $0x30] sm:$0xfe]
    %v2126 = vld [vmem:[#allocation2 + $0x38] sm:$0xfe]
    %v2127 = vld [vmem:[#allocation2 + $0x50] sm:$0x1]
    %v2128 = vld [vmem:[#allocation2 + $0x58] sm:$0x1]
    %v2141 = vrot.slane %v2121, 1
    %v2142 = vrot.slane %v2051, 1
    %v2143 = vsel %vm197, %v2141, %v2142
    %v2144 = vrot.slane %v2122, 1
    %v2145 = vrot.slane %v2052, 1
    %v2146 = vsel %vm197, %v2144, %v2145
    %v2147 = vrot.slane %v2123, 1
    %v2148 = vsel %vm197, %v2142, %v2147
    %v2149 = vrot.slane %v2124, 1
    %v2150 = vsel %vm197, %v2145, %v2149
    %v2151 = vrot.slane %v2125, 1
    %v2152 = vrot.slane %v2055, 1
    %v2153 = vsel %vm197, %v2151, %v2152
    %v2154 = vrot.slane %v2126, 1
    %v2155 = vrot.slane %v2056, 1
    %v2156 = vsel %vm197, %v2154, %v2155
    %v2157 = vrot.slane %v2127, 1
    %v2158 = vsel %vm197, %v2152, %v2157
    %v2159 = vrot.slane %v2128, 1
    %v2160 = vsel %vm197, %v2155, %v2159
    %v2169 = vld [vmem:[%s11 + $0x200] sm:$0xff]
    %v2170 = vld [vmem:[%s11 + $0x208] sm:$0xff]
    %v2171 = vld [vmem:[%s11 + $0x210] sm:$0xff]
    %v2172 = vld [vmem:[%s11 + $0x218] sm:$0xff]
    %v2173 = vld [vmem:[%s11 + $0x220] sm:$0xff]
    %v2174 = vld [vmem:[%s11 + $0x228] sm:$0xff]
    %v2175 = vld [vmem:[%s11 + $0x230] sm:$0xff]
    %v2176 = vld [vmem:[%s11 + $0x238] sm:$0xff]
    %v2177 = vld [vmem:[%s11 + $0x240] sm:$0xff]
    %v2178 = vld [vmem:[%s11 + $0x248] sm:$0xff]
    %v2179 = vld [vmem:[%s11 + $0x250] sm:$0xff]
    %v2180 = vld [vmem:[%s11 + $0x258] sm:$0xff]
    %v2181 = vld [vmem:[%s11 + $0x260] sm:$0xff]
    %v2182 = vld [vmem:[%s11 + $0x268] sm:$0xff]
    %v2183 = vld [vmem:[%s11 + $0x270] sm:$0xff]
    %v2184 = vld [vmem:[%s11 + $0x278] sm:$0xff]
    %v2185 = vld [vmem:[%s11 + $0x280] sm:$0xff]
    %v2186 = vld [vmem:[%s11 + $0x288] sm:$0xff]
    %v2187 = vld [vmem:[%s11 + $0x290] sm:$0xff]
    %v2188 = vld [vmem:[%s11 + $0x298] sm:$0xff]
    %v2189 = vld [vmem:[%s11 + $0x2a0] sm:$0xff]
    %v2190 = vld [vmem:[%s11 + $0x2a8] sm:$0xff]
    %v2191 = vld [vmem:[%s11 + $0x2b0] sm:$0xff]
    %v2192 = vld [vmem:[%s11 + $0x2b8] sm:$0xff]
    %v2193 = vld [vmem:[%s11 + $0x2c0] sm:$0xff]
    %v2194 = vld [vmem:[%s11 + $0x2c8] sm:$0xff]
    %v2195 = vld [vmem:[%s11 + $0x2d0] sm:$0xff]
    %v2196 = vld [vmem:[%s11 + $0x2d8] sm:$0xff]
    %v2197 = vld [vmem:[%s11 + $0x2e0] sm:$0xff]
    %v2198 = vld [vmem:[%s11 + $0x2e8] sm:$0xff]
    %v2199 = vld [vmem:[%s11 + $0x2f0] sm:$0xff]
    %v2200 = vld [vmem:[%s11 + $0x2f8] sm:$0xff]
    %v2201 = vld [vmem:[%s11 + $0x300] sm:$0xff]
    %v2202 = vld [vmem:[%s11 + $0x308] sm:$0xff]
    %v2203 = vld [vmem:[%s11 + $0x310] sm:$0xff]
    %v2204 = vld [vmem:[%s11 + $0x318] sm:$0xff]
    %v2205 = vld [vmem:[%s11 + $0x320] sm:$0xff]
    %v2206 = vld [vmem:[%s11 + $0x328] sm:$0xff]
    %v2207 = vld [vmem:[%s11 + $0x330] sm:$0xff]
    %v2208 = vld [vmem:[%s11 + $0x338] sm:$0xff]
    %v2209 = vld [vmem:[%s11 + $0x340] sm:$0xff]
    %v2210 = vld [vmem:[%s11 + $0x348] sm:$0xff]
    %v2211 = vld [vmem:[%s11 + $0x350] sm:$0xff]
    %v2212 = vld [vmem:[%s11 + $0x358] sm:$0xff]
    %v2213 = vld [vmem:[%s11 + $0x360] sm:$0xff]
    %v2214 = vld [vmem:[%s11 + $0x368] sm:$0xff]
    %v2215 = vld [vmem:[%s11 + $0x370] sm:$0xff]
    %v2216 = vld [vmem:[%s11 + $0x378] sm:$0xff]
    %v2217 = vld [vmem:[%s11 + $0x380] sm:$0xff]
    %v2218 = vld [vmem:[%s11 + $0x388] sm:$0xff]
    %v2219 = vld [vmem:[%s11 + $0x390] sm:$0xff]
    %v2220 = vld [vmem:[%s11 + $0x398] sm:$0xff]
    %v2221 = vld [vmem:[%s11 + $0x3a0] sm:$0xff]
    %v2222 = vld [vmem:[%s11 + $0x3a8] sm:$0xff]
    %v2223 = vld [vmem:[%s11 + $0x3b0] sm:$0xff]
    %v2224 = vld [vmem:[%s11 + $0x3b8] sm:$0xff]
    %v2225 = vld [vmem:[%s11 + $0x3c0] sm:$0xff]
    %v2226 = vld [vmem:[%s11 + $0x3c8] sm:$0xff]
    %v2227 = vld [vmem:[%s11 + $0x3d0] sm:$0xff]
    %v2228 = vld [vmem:[%s11 + $0x3d8] sm:$0xff]
    %v2229 = vld [vmem:[%s11 + $0x3e0] sm:$0xff]
    %v2230 = vld [vmem:[%s11 + $0x3e8] sm:$0xff]
    %v2231 = vld [vmem:[%s11 + $0x3f0] sm:$0xff]
    %v2232 = vld [vmem:[%s11 + $0x3f8] sm:$0xff]
    %2233 = vmatpush.msra.mxu0 %v2199
    %2234 = vmatpush.msra.mxu0 %v2197
    %2235 = vmatpush.msra.mxu0 %v2195
    %2236 = vmatpush.msra.mxu0 %v2193
    %2237 = vmatpush.msra.mxu0 %v2191
    %2238 = vmatpush.msra.mxu0 %v2189
    %2239 = vmatpush.msra.mxu0 %v2187
    %2240 = vmatpush.msra.mxu0 %v2185
    %2241 = vmatpush.msra.mxu0 %v2183
    %2242 = vmatpush.msra.mxu0 %v2181
    %2243 = vmatpush.msra.mxu0 %v2179
    %2244 = vmatpush.msra.mxu0 %v2177
    %2245 = vmatpush.msra.mxu0 %v2175
    %2246 = vmatpush.msra.mxu0 %v2173
    %2247 = vmatpush.msra.mxu0 %v2171
    %2248 = vmatpush.msra.mxu0 %v2169
    %2249 = vmatmul.f32.gmra.mxu0 %v2143
    %v2250 = vpop.f32.mrf.mxu0
    %v2251 = vadd.f32 0.0, %v2250
    %2252 = vmatmul.f32.gmra.mxu0 %v2148
    %v2253 = vpop.f32.mrf.mxu0
    %v2254 = vadd.f32 0.0, %v2253
    %2255 = vmatmul.f32.gmra.mxu0 %v2153
    %v2256 = vpop.f32.mrf.mxu0
    %v2257 = vadd.f32 0.0, %v2256
    %2258 = vmatmul.f32.gmra.mxu0 %v2158
    %v2259 = vpop.f32.mrf.mxu0
    %v2260 = vadd.f32 0.0, %v2259
    %2261 = vdwg.mxu0
    %2262 = vmatpush.msra.mxu0 %v2231
    %2263 = vmatpush.msra.mxu0 %v2229
    %2264 = vmatpush.msra.mxu0 %v2227
    %2265 = vmatpush.msra.mxu0 %v2225
    %2266 = vmatpush.msra.mxu0 %v2223
    %2267 = vmatpush.msra.mxu0 %v2221
    %2268 = vmatpush.msra.mxu0 %v2219
    %2269 = vmatpush.msra.mxu0 %v2217
    %2270 = vmatpush.msra.mxu0 %v2215
    %2271 = vmatpush.msra.mxu0 %v2213
    %2272 = vmatpush.msra.mxu0 %v2211
    %2273 = vmatpush.msra.mxu0 %v2209
    %2274 = vmatpush.msra.mxu0 %v2207
    %2275 = vmatpush.msra.mxu0 %v2205
    %2276 = vmatpush.msra.mxu0 %v2203
    %2277 = vmatpush.msra.mxu0 %v2201
    %2278 = vmatmul.f32.gmra.mxu0 %v2146
    %v2279 = vpop.f32.mrf.mxu0
    %v2280 = vadd.f32 %v2251, %v2279
    %2281 = vmatmul.f32.gmra.mxu0 %v2150
    %v2282 = vpop.f32.mrf.mxu0
    %v2283 = vadd.f32 %v2254, %v2282
    %2284 = vmatmul.f32.gmra.mxu0 %v2156
    %v2285 = vpop.f32.mrf.mxu0
    %v2286 = vadd.f32 %v2257, %v2285
    %2287 = vmatmul.f32.gmra.mxu0 %v2160
    %v2288 = vpop.f32.mrf.mxu0
    %v2289 = vadd.f32 %v2260, %v2288
    %2290 = vdwg.mxu0
    %2291 = vmatpush.msra.mxu0 %v2200
    %2292 = vmatpush.msra.mxu0 %v2198
    %2293 = vmatpush.msra.mxu0 %v2196
    %2294 = vmatpush.msra.mxu0 %v2194
    %2295 = vmatpush.msra.mxu0 %v2192
    %2296 = vmatpush.msra.mxu0 %v2190
    %2297 = vmatpush.msra.mxu0 %v2188
    %2298 = vmatpush.msra.mxu0 %v2186
    %2299 = vmatpush.msra.mxu0 %v2184
    %2300 = vmatpush.msra.mxu0 %v2182
    %2301 = vmatpush.msra.mxu0 %v2180
    %2302 = vmatpush.msra.mxu0 %v2178
    %2303 = vmatpush.msra.mxu0 %v2176
    %2304 = vmatpush.msra.mxu0 %v2174
    %2305 = vmatpush.msra.mxu0 %v2172
    %2306 = vmatpush.msra.mxu0 %v2170
    %2307 = vmatmul.f32.gmra.mxu0 %v2143
    %v2308 = vpop.f32.mrf.mxu0
    %v2309 = vadd.f32 0.0, %v2308
    %2310 = vmatmul.f32.gmra.mxu0 %v2148
    %v2311 = vpop.f32.mrf.mxu0
    %v2312 = vadd.f32 0.0, %v2311
    %2313 = vmatmul.f32.gmra.mxu0 %v2153
    %v2314 = vpop.f32.mrf.mxu0
    %v2315 = vadd.f32 0.0, %v2314
    %2316 = vmatmul.f32.gmra.mxu0 %v2158
    %v2317 = vpop.f32.mrf.mxu0
    %v2318 = vadd.f32 0.0, %v2317
    %2319 = vdwg.mxu0
    %2320 = vmatpush.msra.mxu0 %v2232
    %2321 = vmatpush.msra.mxu0 %v2230
    %2322 = vmatpush.msra.mxu0 %v2228
    %2323 = vmatpush.msra.mxu0 %v2226
    %2324 = vmatpush.msra.mxu0 %v2224
    %2325 = vmatpush.msra.mxu0 %v2222
    %2326 = vmatpush.msra.mxu0 %v2220
    %2327 = vmatpush.msra.mxu0 %v2218
    %2328 = vmatpush.msra.mxu0 %v2216
    %2329 = vmatpush.msra.mxu0 %v2214
    %2330 = vmatpush.msra.mxu0 %v2212
    %2331 = vmatpush.msra.mxu0 %v2210
    %2332 = vmatpush.msra.mxu0 %v2208
    %2333 = vmatpush.msra.mxu0 %v2206
    %2334 = vmatpush.msra.mxu0 %v2204
    %2335 = vmatpush.msra.mxu0 %v2202
    %2336 = vmatmul.f32.gmra.mxu0 %v2146
    %v2337 = vpop.f32.mrf.mxu0
    %v2338 = vadd.f32 %v2309, %v2337
    %2339 = vmatmul.f32.gmra.mxu0 %v2150
    %v2340 = vpop.f32.mrf.mxu0
    %v2341 = vadd.f32 %v2312, %v2340
    %2342 = vmatmul.f32.gmra.mxu0 %v2156
    %v2343 = vpop.f32.mrf.mxu0
    %v2344 = vadd.f32 %v2315, %v2343
    %2345 = vmatmul.f32.gmra.mxu0 %v2160
    %v2346 = vpop.f32.mrf.mxu0
    %v2347 = vadd.f32 %v2318, %v2346
    %2348 = vdwg.mxu0
    %2349 = vmatpush.msra.mxu0 %v2087
    %2350 = vmatpush.msra.mxu0 %v2085
    %2351 = vmatpush.msra.mxu0 %v2083
    %2352 = vmatpush.msra.mxu0 %v2081
    %2353 = vmatpush.msra.mxu0 %v2079
    %2354 = vmatpush.msra.mxu0 %v2077
    %2355 = vmatpush.msra.mxu0 %v2075
    %2356 = vmatpush.msra.mxu0 %v2073
    %2357 = vmatpush.msra.mxu0 %v2071
    %2358 = vmatpush.msra.mxu0 %v2069
    %2359 = vmatpush.msra.mxu0 %v2067
    %2360 = vmatpush.msra.mxu0 %v2065
    %2361 = vmatpush.msra.mxu0 %v2063
    %2362 = vmatpush.msra.mxu0 %v2061
    %2363 = vmatpush.msra.mxu0 %v2059
    %2364 = vmatpush.msra.mxu0 %v2057
    %2365 = vmatmul.f32.gmra.mxu0 %v2049
    %v2366 = vpop.f32.mrf.mxu0
    %v2367 = vadd.f32 %v2280, %v2366
    %2368 = vmatmul.f32.gmra.mxu0 %v2051
    %v2369 = vpop.f32.mrf.mxu0
    %v2370 = vadd.f32 %v2283, %v2369
    %2371 = vmatmul.f32.gmra.mxu0 %v2053
    %v2372 = vpop.f32.mrf.mxu0
    %v2373 = vadd.f32 %v2286, %v2372
    %2374 = vmatmul.f32.gmra.mxu0 %v2055
    %v2375 = vpop.f32.mrf.mxu0
    %v2376 = vadd.f32 %v2289, %v2375
    %2377 = vdwg.mxu0
    %2378 = vmatpush.msra.mxu0 %v2119
    %2379 = vmatpush.msra.mxu0 %v2117
    %2380 = vmatpush.msra.mxu0 %v2115
    %2381 = vmatpush.msra.mxu0 %v2113
    %2382 = vmatpush.msra.mxu0 %v2111
    %2383 = vmatpush.msra.mxu0 %v2109
    %2384 = vmatpush.msra.mxu0 %v2107
    %2385 = vmatpush.msra.mxu0 %v2105
    %2386 = vmatpush.msra.mxu0 %v2103
    %2387 = vmatpush.msra.mxu0 %v2101
    %2388 = vmatpush.msra.mxu0 %v2099
    %2389 = vmatpush.msra.mxu0 %v2097
    %2390 = vmatpush.msra.mxu0 %v2095
    %2391 = vmatpush.msra.mxu0 %v2093
    %2392 = vmatpush.msra.mxu0 %v2091
    %2393 = vmatpush.msra.mxu0 %v2089
    %2394 = vmatmul.f32.gmra.mxu0 %v2050
    %v2395 = vpop.f32.mrf.mxu0
    %v2396 = vadd.f32 %v2367, %v2395
    %2397 = vmatmul.f32.gmra.mxu0 %v2052
    %v2398 = vpop.f32.mrf.mxu0
    %v2399 = vadd.f32 %v2370, %v2398
    %2400 = vmatmul.f32.gmra.mxu0 %v2054
    %v2401 = vpop.f32.mrf.mxu0
    %v2402 = vadd.f32 %v2373, %v2401
    %2403 = vmatmul.f32.gmra.mxu0 %v2056
    %v2404 = vpop.f32.mrf.mxu0
    %v2405 = vadd.f32 %v2376, %v2404
    %2406 = vdwg.mxu0
    %2407 = vmatpush.msra.mxu0 %v2088
    %2408 = vmatpush.msra.mxu0 %v2086
    %2409 = vmatpush.msra.mxu0 %v2084
    %2410 = vmatpush.msra.mxu0 %v2082
    %2411 = vmatpush.msra.mxu0 %v2080
    %2412 = vmatpush.msra.mxu0 %v2078
    %2413 = vmatpush.msra.mxu0 %v2076
    %2414 = vmatpush.msra.mxu0 %v2074
    %2415 = vmatpush.msra.mxu0 %v2072
    %2416 = vmatpush.msra.mxu0 %v2070
    %2417 = vmatpush.msra.mxu0 %v2068
    %2418 = vmatpush.msra.mxu0 %v2066
    %2419 = vmatpush.msra.mxu0 %v2064
    %2420 = vmatpush.msra.mxu0 %v2062
    %2421 = vmatpush.msra.mxu0 %v2060
    %2422 = vmatpush.msra.mxu0 %v2058
    %2423 = vmatmul.f32.gmra.mxu0 %v2049
    %v2424 = vpop.f32.mrf.mxu0
    %v2425 = vadd.f32 %v2338, %v2424
    %2426 = vmatmul.f32.gmra.mxu0 %v2051
    %v2427 = vpop.f32.mrf.mxu0
    %v2428 = vadd.f32 %v2341, %v2427
    %2429 = vmatmul.f32.gmra.mxu0 %v2053
    %v2430 = vpop.f32.mrf.mxu0
    %v2431 = vadd.f32 %v2344, %v2430
    %2432 = vmatmul.f32.gmra.mxu0 %v2055
    %v2433 = vpop.f32.mrf.mxu0
    %v2434 = vadd.f32 %v2347, %v2433
    %2435 = vdwg.mxu0
    %2436 = vmatpush.msra.mxu0 %v2120
    %2437 = vmatpush.msra.mxu0 %v2118
    %2438 = vmatpush.msra.mxu0 %v2116
    %2439 = vmatpush.msra.mxu0 %v2114
    %2440 = vmatpush.msra.mxu0 %v2112
    %2441 = vmatpush.msra.mxu0 %v2110
    %2442 = vmatpush.msra.mxu0 %v2108
    %2443 = vmatpush.msra.mxu0 %v2106
    %2444 = vmatpush.msra.mxu0 %v2104
    %2445 = vmatpush.msra.mxu0 %v2102
    %2446 = vmatpush.msra.mxu0 %v2100
    %2447 = vmatpush.msra.mxu0 %v2098
    %2448 = vmatpush.msra.mxu0 %v2096
    %2449 = vmatpush.msra.mxu0 %v2094
    %2450 = vmatpush.msra.mxu0 %v2092
    %2451 = vmatpush.msra.mxu0 %v2090
    %2452 = vmatmul.f32.gmra.mxu0 %v2050
    %v2453 = vpop.f32.mrf.mxu0
    %v2454 = vadd.f32 %v2425, %v2453
    %2455 = vmatmul.f32.gmra.mxu0 %v2052
    %v2456 = vpop.f32.mrf.mxu0
    %v2457 = vadd.f32 %v2428, %v2456
    %2458 = vmatmul.f32.gmra.mxu0 %v2054
    %v2459 = vpop.f32.mrf.mxu0
    %v2460 = vadd.f32 %v2431, %v2459
    %2461 = vmatmul.f32.gmra.mxu0 %v2056
    %v2462 = vpop.f32.mrf.mxu0
    %v2463 = vadd.f32 %v2434, %v2462
    %2464 = vdwg.mxu0
    %v2465 = vld [vmem:[#allocation2] sm:$0xfc]
    %v2466 = vld [vmem:[#allocation2 + $0x8] sm:$0xfc]
    %v2467 = vld [vmem:[#allocation2 + $0x20] sm:$0x3]
    %v2468 = vld [vmem:[#allocation2 + $0x28] sm:$0x3]
    %v2469 = vld [vmem:[#allocation2 + $0x30] sm:$0xfc]
    %v2470 = vld [vmem:[#allocation2 + $0x38] sm:$0xfc]
    %v2471 = vld [vmem:[#allocation2 + $0x50] sm:$0x3]
    %v2472 = vld [vmem:[#allocation2 + $0x58] sm:$0x3]
    %v2481 = vrot.slane %v2465, 2
    %v2482 = vrot.slane %v2051, 2
    %v2483 = vsel %vm242, %v2481, %v2482
    %v2484 = vrot.slane %v2466, 2
    %v2485 = vrot.slane %v2052, 2
    %v2486 = vsel %vm242, %v2484, %v2485
    %v2487 = vrot.slane %v2467, 2
    %v2488 = vsel %vm242, %v2482, %v2487
    %v2489 = vrot.slane %v2468, 2
    %v2490 = vsel %vm242, %v2485, %v2489
    %v2491 = vrot.slane %v2469, 2
    %v2492 = vrot.slane %v2055, 2
    %v2493 = vsel %vm242, %v2491, %v2492
    %v2494 = vrot.slane %v2470, 2
    %v2495 = vrot.slane %v2056, 2
    %v2496 = vsel %vm242, %v2494, %v2495
    %v2497 = vrot.slane %v2471, 2
    %v2498 = vsel %vm242, %v2492, %v2497
    %v2499 = vrot.slane %v2472, 2
    %v2500 = vsel %vm242, %v2495, %v2499
    %v2509 = vld [vmem:[%s11 + $0x400] sm:$0xff]
    %v2510 = vld [vmem:[%s11 + $0x408] sm:$0xff]
    %v2511 = vld [vmem:[%s11 + $0x410] sm:$0xff]
    %v2512 = vld [vmem:[%s11 + $0x418] sm:$0xff]
    %v2513 = vld [vmem:[%s11 + $0x420] sm:$0xff]
    %v2514 = vld [vmem:[%s11 + $0x428] sm:$0xff]
    %v2515 = vld [vmem:[%s11 + $0x430] sm:$0xff]
    %v2516 = vld [vmem:[%s11 + $0x438] sm:$0xff]
    %v2517 = vld [vmem:[%s11 + $0x440] sm:$0xff]
    %v2518 = vld [vmem:[%s11 + $0x448] sm:$0xff]
    %v2519 = vld [vmem:[%s11 + $0x450] sm:$0xff]
    %v2520 = vld [vmem:[%s11 + $0x458] sm:$0xff]
    %v2521 = vld [vmem:[%s11 + $0x460] sm:$0xff]
    %v2522 = vld [vmem:[%s11 + $0x468] sm:$0xff]
    %v2523 = vld [vmem:[%s11 + $0x470] sm:$0xff]
    %v2524 = vld [vmem:[%s11 + $0x478] sm:$0xff]
    %v2525 = vld [vmem:[%s11 + $0x480] sm:$0xff]
    %v2526 = vld [vmem:[%s11 + $0x488] sm:$0xff]
    %v2527 = vld [vmem:[%s11 + $0x490] sm:$0xff]
    %v2528 = vld [vmem:[%s11 + $0x498] sm:$0xff]
    %v2529 = vld [vmem:[%s11 + $0x4a0] sm:$0xff]
    %v2530 = vld [vmem:[%s11 + $0x4a8] sm:$0xff]
    %v2531 = vld [vmem:[%s11 + $0x4b0] sm:$0xff]
    %v2532 = vld [vmem:[%s11 + $0x4b8] sm:$0xff]
    %v2533 = vld [vmem:[%s11 + $0x4c0] sm:$0xff]
    %v2534 = vld [vmem:[%s11 + $0x4c8] sm:$0xff]
    %v2535 = vld [vmem:[%s11 + $0x4d0] sm:$0xff]
    %v2536 = vld [vmem:[%s11 + $0x4d8] sm:$0xff]
    %v2537 = vld [vmem:[%s11 + $0x4e0] sm:$0xff]
    %v2538 = vld [vmem:[%s11 + $0x4e8] sm:$0xff]
    %v2539 = vld [vmem:[%s11 + $0x4f0] sm:$0xff]
    %v2540 = vld [vmem:[%s11 + $0x4f8] sm:$0xff]
    %v2541 = vld [vmem:[%s11 + $0x500] sm:$0xff]
    %v2542 = vld [vmem:[%s11 + $0x508] sm:$0xff]
    %v2543 = vld [vmem:[%s11 + $0x510] sm:$0xff]
    %v2544 = vld [vmem:[%s11 + $0x518] sm:$0xff]
    %v2545 = vld [vmem:[%s11 + $0x520] sm:$0xff]
    %v2546 = vld [vmem:[%s11 + $0x528] sm:$0xff]
    %v2547 = vld [vmem:[%s11 + $0x530] sm:$0xff]
    %v2548 = vld [vmem:[%s11 + $0x538] sm:$0xff]
    %v2549 = vld [vmem:[%s11 + $0x540] sm:$0xff]
    %v2550 = vld [vmem:[%s11 + $0x548] sm:$0xff]
    %v2551 = vld [vmem:[%s11 + $0x550] sm:$0xff]
    %v2552 = vld [vmem:[%s11 + $0x558] sm:$0xff]
    %v2553 = vld [vmem:[%s11 + $0x560] sm:$0xff]
    %v2554 = vld [vmem:[%s11 + $0x568] sm:$0xff]
    %v2555 = vld [vmem:[%s11 + $0x570] sm:$0xff]
    %v2556 = vld [vmem:[%s11 + $0x578] sm:$0xff]
    %v2557 = vld [vmem:[%s11 + $0x580] sm:$0xff]
    %v2558 = vld [vmem:[%s11 + $0x588] sm:$0xff]
    %v2559 = vld [vmem:[%s11 + $0x590] sm:$0xff]
    %v2560 = vld [vmem:[%s11 + $0x598] sm:$0xff]
    %v2561 = vld [vmem:[%s11 + $0x5a0] sm:$0xff]
    %v2562 = vld [vmem:[%s11 + $0x5a8] sm:$0xff]
    %v2563 = vld [vmem:[%s11 + $0x5b0] sm:$0xff]
    %v2564 = vld [vmem:[%s11 + $0x5b8] sm:$0xff]
    %v2565 = vld [vmem:[%s11 + $0x5c0] sm:$0xff]
    %v2566 = vld [vmem:[%s11 + $0x5c8] sm:$0xff]
    %v2567 = vld [vmem:[%s11 + $0x5d0] sm:$0xff]
    %v2568 = vld [vmem:[%s11 + $0x5d8] sm:$0xff]
    %v2569 = vld [vmem:[%s11 + $0x5e0] sm:$0xff]
    %v2570 = vld [vmem:[%s11 + $0x5e8] sm:$0xff]
    %v2571 = vld [vmem:[%s11 + $0x5f0] sm:$0xff]
    %v2572 = vld [vmem:[%s11 + $0x5f8] sm:$0xff]
    %2573 = vmatpush.msra.mxu0 %v2539
    %2574 = vmatpush.msra.mxu0 %v2537
    %2575 = vmatpush.msra.mxu0 %v2535
    %2576 = vmatpush.msra.mxu0 %v2533
    %2577 = vmatpush.msra.mxu0 %v2531
    %2578 = vmatpush.msra.mxu0 %v2529
    %2579 = vmatpush.msra.mxu0 %v2527
    %2580 = vmatpush.msra.mxu0 %v2525
    %2581 = vmatpush.msra.mxu0 %v2523
    %2582 = vmatpush.msra.mxu0 %v2521
    %2583 = vmatpush.msra.mxu0 %v2519
    %2584 = vmatpush.msra.mxu0 %v2517
    %2585 = vmatpush.msra.mxu0 %v2515
    %2586 = vmatpush.msra.mxu0 %v2513
    %2587 = vmatpush.msra.mxu0 %v2511
    %2588 = vmatpush.msra.mxu0 %v2509
    %2589 = vmatmul.f32.gmra.mxu0 %v2483
    %v2590 = vpop.f32.mrf.mxu0
    %v2591 = vadd.f32 0.0, %v2590
    %2592 = vmatmul.f32.gmra.mxu0 %v2488
    %v2593 = vpop.f32.mrf.mxu0
    %v2594 = vadd.f32 0.0, %v2593
    %2595 = vmatmul.f32.gmra.mxu0 %v2493
    %v2596 = vpop.f32.mrf.mxu0
    %v2597 = vadd.f32 0.0, %v2596
    %2598 = vmatmul.f32.gmra.mxu0 %v2498
    %v2599 = vpop.f32.mrf.mxu0
    %v2600 = vadd.f32 0.0, %v2599
    %2601 = vdwg.mxu0
    %2602 = vmatpush.msra.mxu0 %v2571
    %2603 = vmatpush.msra.mxu0 %v2569
    %2604 = vmatpush.msra.mxu0 %v2567
    %2605 = vmatpush.msra.mxu0 %v2565
    %2606 = vmatpush.msra.mxu0 %v2563
    %2607 = vmatpush.msra.mxu0 %v2561
    %2608 = vmatpush.msra.mxu0 %v2559
    %2609 = vmatpush.msra.mxu0 %v2557
    %2610 = vmatpush.msra.mxu0 %v2555
    %2611 = vmatpush.msra.mxu0 %v2553
    %2612 = vmatpush.msra.mxu0 %v2551
    %2613 = vmatpush.msra.mxu0 %v2549
    %2614 = vmatpush.msra.mxu0 %v2547
    %2615 = vmatpush.msra.mxu0 %v2545
    %2616 = vmatpush.msra.mxu0 %v2543
    %2617 = vmatpush.msra.mxu0 %v2541
    %2618 = vmatmul.f32.gmra.mxu0 %v2486
    %v2619 = vpop.f32.mrf.mxu0
    %v2620 = vadd.f32 %v2591, %v2619
    %2621 = vmatmul.f32.gmra.mxu0 %v2490
    %v2622 = vpop.f32.mrf.mxu0
    %v2623 = vadd.f32 %v2594, %v2622
    %2624 = vmatmul.f32.gmra.mxu0 %v2496
    %v2625 = vpop.f32.mrf.mxu0
    %v2626 = vadd.f32 %v2597, %v2625
    %2627 = vmatmul.f32.gmra.mxu0 %v2500
    %v2628 = vpop.f32.mrf.mxu0
    %v2629 = vadd.f32 %v2600, %v2628
    %2630 = vdwg.mxu0
    %2631 = vmatpush.msra.mxu0 %v2540
    %2632 = vmatpush.msra.mxu0 %v2538
    %2633 = vmatpush.msra.mxu0 %v2536
    %2634 = vmatpush.msra.mxu0 %v2534
    %2635 = vmatpush.msra.mxu0 %v2532
    %2636 = vmatpush.msra.mxu0 %v2530
    %2637 = vmatpush.msra.mxu0 %v2528
    %2638 = vmatpush.msra.mxu0 %v2526
    %2639 = vmatpush.msra.mxu0 %v2524
    %2640 = vmatpush.msra.mxu0 %v2522
    %2641 = vmatpush.msra.mxu0 %v2520
    %2642 = vmatpush.msra.mxu0 %v2518
    %2643 = vmatpush.msra.mxu0 %v2516
    %2644 = vmatpush.msra.mxu0 %v2514
    %2645 = vmatpush.msra.mxu0 %v2512
    %2646 = vmatpush.msra.mxu0 %v2510
    %2647 = vmatmul.f32.gmra.mxu0 %v2483
    %v2648 = vpop.f32.mrf.mxu0
    %v2649 = vadd.f32 0.0, %v2648
    %2650 = vmatmul.f32.gmra.mxu0 %v2488
    %v2651 = vpop.f32.mrf.mxu0
    %v2652 = vadd.f32 0.0, %v2651
    %2653 = vmatmul.f32.gmra.mxu0 %v2493
    %v2654 = vpop.f32.mrf.mxu0
    %v2655 = vadd.f32 0.0, %v2654
    %2656 = vmatmul.f32.gmra.mxu0 %v2498
    %v2657 = vpop.f32.mrf.mxu0
    %v2658 = vadd.f32 0.0, %v2657
    %2659 = vdwg.mxu0
    %2660 = vmatpush.msra.mxu0 %v2572
    %2661 = vmatpush.msra.mxu0 %v2570
    %2662 = vmatpush.msra.mxu0 %v2568
    %2663 = vmatpush.msra.mxu0 %v2566
    %2664 = vmatpush.msra.mxu0 %v2564
    %2665 = vmatpush.msra.mxu0 %v2562
    %2666 = vmatpush.msra.mxu0 %v2560
    %2667 = vmatpush.msra.mxu0 %v2558
    %2668 = vmatpush.msra.mxu0 %v2556
    %2669 = vmatpush.msra.mxu0 %v2554
    %2670 = vmatpush.msra.mxu0 %v2552
    %2671 = vmatpush.msra.mxu0 %v2550
    %2672 = vmatpush.msra.mxu0 %v2548
    %2673 = vmatpush.msra.mxu0 %v2546
    %2674 = vmatpush.msra.mxu0 %v2544
    %2675 = vmatpush.msra.mxu0 %v2542
    %2676 = vmatmul.f32.gmra.mxu0 %v2486
    %v2677 = vpop.f32.mrf.mxu0
    %v2678 = vadd.f32 %v2649, %v2677
    %2679 = vmatmul.f32.gmra.mxu0 %v2490
    %v2680 = vpop.f32.mrf.mxu0
    %v2681 = vadd.f32 %v2652, %v2680
    %2682 = vmatmul.f32.gmra.mxu0 %v2496
    %v2683 = vpop.f32.mrf.mxu0
    %v2684 = vadd.f32 %v2655, %v2683
    %2685 = vmatmul.f32.gmra.mxu0 %v2500
    %v2686 = vpop.f32.mrf.mxu0
    %v2687 = vadd.f32 %v2658, %v2686
    %2688 = vdwg.mxu0
    %v2689 = vadd.f32 %v2396, %v2620
    %v2690 = vadd.f32 %v2454, %v2678
    %v2691 = vadd.f32 %v2399, %v2623
    %v2692 = vadd.f32 %v2457, %v2681
    %v2693 = vadd.f32 %v2402, %v2626
    %v2694 = vadd.f32 %v2460, %v2684
    %v2695 = vadd.f32 %v2405, %v2629
    %v2696 = vadd.f32 %v2463, %v2687
    %v2697 = vld [vmem:[#allocation2] sm:$0xf8]
    %v2698 = vld [vmem:[#allocation2 + $0x8] sm:$0xf8]
    %v2699 = vld [vmem:[#allocation2 + $0x20] sm:$0x7]
    %v2700 = vld [vmem:[#allocation2 + $0x28] sm:$0x7]
    %v2701 = vld [vmem:[#allocation2 + $0x30] sm:$0xf8]
    %v2702 = vld [vmem:[#allocation2 + $0x38] sm:$0xf8]
    %v2703 = vld [vmem:[#allocation2 + $0x50] sm:$0x7]
    %v2704 = vld [vmem:[#allocation2 + $0x58] sm:$0x7]
    %v2713 = vrot.slane %v2697, 3
    %v2714 = vrot.slane %v2051, 3
    %v2715 = vsel %vm287, %v2713, %v2714
    %v2716 = vrot.slane %v2698, 3
    %v2717 = vrot.slane %v2052, 3
    %v2718 = vsel %vm287, %v2716, %v2717
    %v2719 = vrot.slane %v2699, 3
    %v2720 = vsel %vm287, %v2714, %v2719
    %v2721 = vrot.slane %v2700, 3
    %v2722 = vsel %vm287, %v2717, %v2721
    %v2723 = vrot.slane %v2701, 3
    %v2724 = vrot.slane %v2055, 3
    %v2725 = vsel %vm287, %v2723, %v2724
    %v2726 = vrot.slane %v2702, 3
    %v2727 = vrot.slane %v2056, 3
    %v2728 = vsel %vm287, %v2726, %v2727
    %v2729 = vrot.slane %v2703, 3
    %v2730 = vsel %vm287, %v2724, %v2729
    %v2731 = vrot.slane %v2704, 3
    %v2732 = vsel %vm287, %v2727, %v2731
    %v2741 = vld [vmem:[%s11 + $0x600] sm:$0xff]
    %v2742 = vld [vmem:[%s11 + $0x608] sm:$0xff]
    %v2743 = vld [vmem:[%s11 + $0x610] sm:$0xff]
    %v2744 = vld [vmem:[%s11 + $0x618] sm:$0xff]
    %v2745 = vld [vmem:[%s11 + $0x620] sm:$0xff]
    %v2746 = vld [vmem:[%s11 + $0x628] sm:$0xff]
    %v2747 = vld [vmem:[%s11 + $0x630] sm:$0xff]
    %v2748 = vld [vmem:[%s11 + $0x638] sm:$0xff]
    %v2749 = vld [vmem:[%s11 + $0x640] sm:$0xff]
    %v2750 = vld [vmem:[%s11 + $0x648] sm:$0xff]
    %v2751 = vld [vmem:[%s11 + $0x650] sm:$0xff]
    %v2752 = vld [vmem:[%s11 + $0x658] sm:$0xff]
    %v2753 = vld [vmem:[%s11 + $0x660] sm:$0xff]
    %v2754 = vld [vmem:[%s11 + $0x668] sm:$0xff]
    %v2755 = vld [vmem:[%s11 + $0x670] sm:$0xff]
    %v2756 = vld [vmem:[%s11 + $0x678] sm:$0xff]
    %v2757 = vld [vmem:[%s11 + $0x680] sm:$0xff]
    %v2758 = vld [vmem:[%s11 + $0x688] sm:$0xff]
    %v2759 = vld [vmem:[%s11 + $0x690] sm:$0xff]
    %v2760 = vld [vmem:[%s11 + $0x698] sm:$0xff]
    %v2761 = vld [vmem:[%s11 + $0x6a0] sm:$0xff]
    %v2762 = vld [vmem:[%s11 + $0x6a8] sm:$0xff]
    %v2763 = vld [vmem:[%s11 + $0x6b0] sm:$0xff]
    %v2764 = vld [vmem:[%s11 + $0x6b8] sm:$0xff]
    %v2765 = vld [vmem:[%s11 + $0x6c0] sm:$0xff]
    %v2766 = vld [vmem:[%s11 + $0x6c8] sm:$0xff]
    %v2767 = vld [vmem:[%s11 + $0x6d0] sm:$0xff]
    %v2768 = vld [vmem:[%s11 + $0x6d8] sm:$0xff]
    %v2769 = vld [vmem:[%s11 + $0x6e0] sm:$0xff]
    %v2770 = vld [vmem:[%s11 + $0x6e8] sm:$0xff]
    %v2771 = vld [vmem:[%s11 + $0x6f0] sm:$0xff]
    %v2772 = vld [vmem:[%s11 + $0x6f8] sm:$0xff]
    %v2773 = vld [vmem:[%s11 + $0x700] sm:$0xff]
    %v2774 = vld [vmem:[%s11 + $0x708] sm:$0xff]
    %v2775 = vld [vmem:[%s11 + $0x710] sm:$0xff]
    %v2776 = vld [vmem:[%s11 + $0x718] sm:$0xff]
    %v2777 = vld [vmem:[%s11 + $0x720] sm:$0xff]
    %v2778 = vld [vmem:[%s11 + $0x728] sm:$0xff]
    %v2779 = vld [vmem:[%s11 + $0x730] sm:$0xff]
    %v2780 = vld [vmem:[%s11 + $0x738] sm:$0xff]
    %v2781 = vld [vmem:[%s11 + $0x740] sm:$0xff]
    %v2782 = vld [vmem:[%s11 + $0x748] sm:$0xff]
    %v2783 = vld [vmem:[%s11 + $0x750] sm:$0xff]
    %v2784 = vld [vmem:[%s11 + $0x758] sm:$0xff]
    %v2785 = vld [vmem:[%s11 + $0x760] sm:$0xff]
    %v2786 = vld [vmem:[%s11 + $0x768] sm:$0xff]
    %v2787 = vld [vmem:[%s11 + $0x770] sm:$0xff]
    %v2788 = vld [vmem:[%s11 + $0x778] sm:$0xff]
    %v2789 = vld [vmem:[%s11 + $0x780] sm:$0xff]
    %v2790 = vld [vmem:[%s11 + $0x788] sm:$0xff]
    %v2791 = vld [vmem:[%s11 + $0x790] sm:$0xff]
    %v2792 = vld [vmem:[%s11 + $0x798] sm:$0xff]
    %v2793 = vld [vmem:[%s11 + $0x7a0] sm:$0xff]
    %v2794 = vld [vmem:[%s11 + $0x7a8] sm:$0xff]
    %v2795 = vld [vmem:[%s11 + $0x7b0] sm:$0xff]
    %v2796 = vld [vmem:[%s11 + $0x7b8] sm:$0xff]
    %v2797 = vld [vmem:[%s11 + $0x7c0] sm:$0xff]
    %v2798 = vld [vmem:[%s11 + $0x7c8] sm:$0xff]
    %v2799 = vld [vmem:[%s11 + $0x7d0] sm:$0xff]
    %v2800 = vld [vmem:[%s11 + $0x7d8] sm:$0xff]
    %v2801 = vld [vmem:[%s11 + $0x7e0] sm:$0xff]
    %v2802 = vld [vmem:[%s11 + $0x7e8] sm:$0xff]
    %v2803 = vld [vmem:[%s11 + $0x7f0] sm:$0xff]
    %v2804 = vld [vmem:[%s11 + $0x7f8] sm:$0xff]
    %2805 = vmatpush.msra.mxu0 %v2771
    %2806 = vmatpush.msra.mxu0 %v2769
    %2807 = vmatpush.msra.mxu0 %v2767
    %2808 = vmatpush.msra.mxu0 %v2765
    %2809 = vmatpush.msra.mxu0 %v2763
    %2810 = vmatpush.msra.mxu0 %v2761
    %2811 = vmatpush.msra.mxu0 %v2759
    %2812 = vmatpush.msra.mxu0 %v2757
    %2813 = vmatpush.msra.mxu0 %v2755
    %2814 = vmatpush.msra.mxu0 %v2753
    %2815 = vmatpush.msra.mxu0 %v2751
    %2816 = vmatpush.msra.mxu0 %v2749
    %2817 = vmatpush.msra.mxu0 %v2747
    %2818 = vmatpush.msra.mxu0 %v2745
    %2819 = vmatpush.msra.mxu0 %v2743
    %2820 = vmatpush.msra.mxu0 %v2741
    %2821 = vmatmul.f32.gmra.mxu0 %v2715
    %v2822 = vpop.f32.mrf.mxu0
    %v2823 = vadd.f32 0.0, %v2822
    %2824 = vmatmul.f32.gmra.mxu0 %v2720
    %v2825 = vpop.f32.mrf.mxu0
    %v2826 = vadd.f32 0.0, %v2825
    %2827 = vmatmul.f32.gmra.mxu0 %v2725
    %v2828 = vpop.f32.mrf.mxu0
    %v2829 = vadd.f32 0.0, %v2828
    %2830 = vmatmul.f32.gmra.mxu0 %v2730
    %v2831 = vpop.f32.mrf.mxu0
    %v2832 = vadd.f32 0.0, %v2831
    %2833 = vdwg.mxu0
    %2834 = vmatpush.msra.mxu0 %v2803
    %2835 = vmatpush.msra.mxu0 %v2801
    %2836 = vmatpush.msra.mxu0 %v2799
    %2837 = vmatpush.msra.mxu0 %v2797
    %2838 = vmatpush.msra.mxu0 %v2795
    %2839 = vmatpush.msra.mxu0 %v2793
    %2840 = vmatpush.msra.mxu0 %v2791
    %2841 = vmatpush.msra.mxu0 %v2789
    %2842 = vmatpush.msra.mxu0 %v2787
    %2843 = vmatpush.msra.mxu0 %v2785
    %2844 = vmatpush.msra.mxu0 %v2783
    %2845 = vmatpush.msra.mxu0 %v2781
    %2846 = vmatpush.msra.mxu0 %v2779
    %2847 = vmatpush.msra.mxu0 %v2777
    %2848 = vmatpush.msra.mxu0 %v2775
    %2849 = vmatpush.msra.mxu0 %v2773
    %2850 = vmatmul.f32.gmra.mxu0 %v2718
    %v2851 = vpop.f32.mrf.mxu0
    %v2852 = vadd.f32 %v2823, %v2851
    %2853 = vmatmul.f32.gmra.mxu0 %v2722
    %v2854 = vpop.f32.mrf.mxu0
    %v2855 = vadd.f32 %v2826, %v2854
    %2856 = vmatmul.f32.gmra.mxu0 %v2728
    %v2857 = vpop.f32.mrf.mxu0
    %v2858 = vadd.f32 %v2829, %v2857
    %2859 = vmatmul.f32.gmra.mxu0 %v2732
    %v2860 = vpop.f32.mrf.mxu0
    %v2861 = vadd.f32 %v2832, %v2860
    %2862 = vdwg.mxu0
    %2863 = vmatpush.msra.mxu0 %v2772
    %2864 = vmatpush.msra.mxu0 %v2770
    %2865 = vmatpush.msra.mxu0 %v2768
    %2866 = vmatpush.msra.mxu0 %v2766
    %2867 = vmatpush.msra.mxu0 %v2764
    %2868 = vmatpush.msra.mxu0 %v2762
    %2869 = vmatpush.msra.mxu0 %v2760
    %2870 = vmatpush.msra.mxu0 %v2758
    %2871 = vmatpush.msra.mxu0 %v2756
    %2872 = vmatpush.msra.mxu0 %v2754
    %2873 = vmatpush.msra.mxu0 %v2752
    %2874 = vmatpush.msra.mxu0 %v2750
    %2875 = vmatpush.msra.mxu0 %v2748
    %2876 = vmatpush.msra.mxu0 %v2746
    %2877 = vmatpush.msra.mxu0 %v2744
    %2878 = vmatpush.msra.mxu0 %v2742
    %2879 = vmatmul.f32.gmra.mxu0 %v2715
    %v2880 = vpop.f32.mrf.mxu0
    %v2881 = vadd.f32 0.0, %v2880
    %2882 = vmatmul.f32.gmra.mxu0 %v2720
    %v2883 = vpop.f32.mrf.mxu0
    %v2884 = vadd.f32 0.0, %v2883
    %2885 = vmatmul.f32.gmra.mxu0 %v2725
    %v2886 = vpop.f32.mrf.mxu0
    %v2887 = vadd.f32 0.0, %v2886
    %2888 = vmatmul.f32.gmra.mxu0 %v2730
    %v2889 = vpop.f32.mrf.mxu0
    %v2890 = vadd.f32 0.0, %v2889
    %2891 = vdwg.mxu0
    %2892 = vmatpush.msra.mxu0 %v2804
    %2893 = vmatpush.msra.mxu0 %v2802
    %2894 = vmatpush.msra.mxu0 %v2800
    %2895 = vmatpush.msra.mxu0 %v2798
    %2896 = vmatpush.msra.mxu0 %v2796
    %2897 = vmatpush.msra.mxu0 %v2794
    %2898 = vmatpush.msra.mxu0 %v2792
    %2899 = vmatpush.msra.mxu0 %v2790
    %2900 = vmatpush.msra.mxu0 %v2788
    %2901 = vmatpush.msra.mxu0 %v2786
    %2902 = vmatpush.msra.mxu0 %v2784
    %2903 = vmatpush.msra.mxu0 %v2782
    %2904 = vmatpush.msra.mxu0 %v2780
    %2905 = vmatpush.msra.mxu0 %v2778
    %2906 = vmatpush.msra.mxu0 %v2776
    %2907 = vmatpush.msra.mxu0 %v2774
    %2908 = vmatmul.f32.gmra.mxu0 %v2718
    %v2909 = vpop.f32.mrf.mxu0
    %v2910 = vadd.f32 %v2881, %v2909
    %2911 = vmatmul.f32.gmra.mxu0 %v2722
    %v2912 = vpop.f32.mrf.mxu0
    %v2913 = vadd.f32 %v2884, %v2912
    %2914 = vmatmul.f32.gmra.mxu0 %v2728
    %v2915 = vpop.f32.mrf.mxu0
    %v2916 = vadd.f32 %v2887, %v2915
    %2917 = vmatmul.f32.gmra.mxu0 %v2732
    %v2918 = vpop.f32.mrf.mxu0
    %v2919 = vadd.f32 %v2890, %v2918
    %2920 = vdwg.mxu0
    %v2921 = vadd.f32 %v2689, %v2852
    %v2922 = vadd.f32 %v2690, %v2910
    %v2923 = vadd.f32 %v2691, %v2855
    %v2924 = vadd.f32 %v2692, %v2913
    %v2925 = vadd.f32 %v2693, %v2858
    %v2926 = vadd.f32 %v2694, %v2916
    %v2927 = vadd.f32 %v2695, %v2861
    %v2928 = vadd.f32 %v2696, %v2919
    %v2929 = vld [vmem:[#allocation2] sm:$0xf0]
    %v2930 = vld [vmem:[#allocation2 + $0x8] sm:$0xf0]
    %v2931 = vld [vmem:[#allocation2 + $0x20] sm:$0xf]
    %v2932 = vld [vmem:[#allocation2 + $0x28] sm:$0xf]
    %v2933 = vld [vmem:[#allocation2 + $0x30] sm:$0xf0]
    %v2934 = vld [vmem:[#allocation2 + $0x38] sm:$0xf0]
    %v2935 = vld [vmem:[#allocation2 + $0x50] sm:$0xf]
    %v2936 = vld [vmem:[#allocation2 + $0x58] sm:$0xf]
    %v2945 = vrot.slane %v2929, 4
    %v2946 = vrot.slane %v2051, 4
    %v2947 = vsel %vm332, %v2945, %v2946
    %v2948 = vrot.slane %v2930, 4
    %v2949 = vrot.slane %v2052, 4
    %v2950 = vsel %vm332, %v2948, %v2949
    %v2951 = vrot.slane %v2931, 4
    %v2952 = vsel %vm332, %v2946, %v2951
    %v2953 = vrot.slane %v2932, 4
    %v2954 = vsel %vm332, %v2949, %v2953
    %v2955 = vrot.slane %v2933, 4
    %v2956 = vrot.slane %v2055, 4
    %v2957 = vsel %vm332, %v2955, %v2956
    %v2958 = vrot.slane %v2934, 4
    %v2959 = vrot.slane %v2056, 4
    %v2960 = vsel %vm332, %v2958, %v2959
    %v2961 = vrot.slane %v2935, 4
    %v2962 = vsel %vm332, %v2956, %v2961
    %v2963 = vrot.slane %v2936, 4
    %v2964 = vsel %vm332, %v2959, %v2963
    %v2973 = vld [vmem:[%s11 + $0x800] sm:$0xff]
    %v2974 = vld [vmem:[%s11 + $0x808] sm:$0xff]
    %v2975 = vld [vmem:[%s11 + $0x810] sm:$0xff]
    %v2976 = vld [vmem:[%s11 + $0x818] sm:$0xff]
    %v2977 = vld [vmem:[%s11 + $0x820] sm:$0xff]
    %v2978 = vld [vmem:[%s11 + $0x828] sm:$0xff]
    %v2979 = vld [vmem:[%s11 + $0x830] sm:$0xff]
    %v2980 = vld [vmem:[%s11 + $0x838] sm:$0xff]
    %v2981 = vld [vmem:[%s11 + $0x840] sm:$0xff]
    %v2982 = vld [vmem:[%s11 + $0x848] sm:$0xff]
    %v2983 = vld [vmem:[%s11 + $0x850] sm:$0xff]
    %v2984 = vld [vmem:[%s11 + $0x858] sm:$0xff]
    %v2985 = vld [vmem:[%s11 + $0x860] sm:$0xff]
    %v2986 = vld [vmem:[%s11 + $0x868] sm:$0xff]
    %v2987 = vld [vmem:[%s11 + $0x870] sm:$0xff]
    %v2988 = vld [vmem:[%s11 + $0x878] sm:$0xff]
    %v2989 = vld [vmem:[%s11 + $0x880] sm:$0xff]
    %v2990 = vld [vmem:[%s11 + $0x888] sm:$0xff]
    %v2991 = vld [vmem:[%s11 + $0x890] sm:$0xff]
    %v2992 = vld [vmem:[%s11 + $0x898] sm:$0xff]
    %v2993 = vld [vmem:[%s11 + $0x8a0] sm:$0xff]
    %v2994 = vld [vmem:[%s11 + $0x8a8] sm:$0xff]
    %v2995 = vld [vmem:[%s11 + $0x8b0] sm:$0xff]
    %v2996 = vld [vmem:[%s11 + $0x8b8] sm:$0xff]
    %v2997 = vld [vmem:[%s11 + $0x8c0] sm:$0xff]
    %v2998 = vld [vmem:[%s11 + $0x8c8] sm:$0xff]
    %v2999 = vld [vmem:[%s11 + $0x8d0] sm:$0xff]
    %v3000 = vld [vmem:[%s11 + $0x8d8] sm:$0xff]
    %v3001 = vld [vmem:[%s11 + $0x8e0] sm:$0xff]
    %v3002 = vld [vmem:[%s11 + $0x8e8] sm:$0xff]
    %v3003 = vld [vmem:[%s11 + $0x8f0] sm:$0xff]
    %v3004 = vld [vmem:[%s11 + $0x8f8] sm:$0xff]
    %v3005 = vld [vmem:[%s11 + $0x900] sm:$0xff]
    %v3006 = vld [vmem:[%s11 + $0x908] sm:$0xff]
    %v3007 = vld [vmem:[%s11 + $0x910] sm:$0xff]
    %v3008 = vld [vmem:[%s11 + $0x918] sm:$0xff]
    %v3009 = vld [vmem:[%s11 + $0x920] sm:$0xff]
    %v3010 = vld [vmem:[%s11 + $0x928] sm:$0xff]
    %v3011 = vld [vmem:[%s11 + $0x930] sm:$0xff]
    %v3012 = vld [vmem:[%s11 + $0x938] sm:$0xff]
    %v3013 = vld [vmem:[%s11 + $0x940] sm:$0xff]
    %v3014 = vld [vmem:[%s11 + $0x948] sm:$0xff]
    %v3015 = vld [vmem:[%s11 + $0x950] sm:$0xff]
    %v3016 = vld [vmem:[%s11 + $0x958] sm:$0xff]
    %v3017 = vld [vmem:[%s11 + $0x960] sm:$0xff]
    %v3018 = vld [vmem:[%s11 + $0x968] sm:$0xff]
    %v3019 = vld [vmem:[%s11 + $0x970] sm:$0xff]
    %v3020 = vld [vmem:[%s11 + $0x978] sm:$0xff]
    %v3021 = vld [vmem:[%s11 + $0x980] sm:$0xff]
    %v3022 = vld [vmem:[%s11 + $0x988] sm:$0xff]
    %v3023 = vld [vmem:[%s11 + $0x990] sm:$0xff]
    %v3024 = vld [vmem:[%s11 + $0x998] sm:$0xff]
    %v3025 = vld [vmem:[%s11 + $0x9a0] sm:$0xff]
    %v3026 = vld [vmem:[%s11 + $0x9a8] sm:$0xff]
    %v3027 = vld [vmem:[%s11 + $0x9b0] sm:$0xff]
    %v3028 = vld [vmem:[%s11 + $0x9b8] sm:$0xff]
    %v3029 = vld [vmem:[%s11 + $0x9c0] sm:$0xff]
    %v3030 = vld [vmem:[%s11 + $0x9c8] sm:$0xff]
    %v3031 = vld [vmem:[%s11 + $0x9d0] sm:$0xff]
    %v3032 = vld [vmem:[%s11 + $0x9d8] sm:$0xff]
    %v3033 = vld [vmem:[%s11 + $0x9e0] sm:$0xff]
    %v3034 = vld [vmem:[%s11 + $0x9e8] sm:$0xff]
    %v3035 = vld [vmem:[%s11 + $0x9f0] sm:$0xff]
    %v3036 = vld [vmem:[%s11 + $0x9f8] sm:$0xff]
    %3037 = vmatpush.msra.mxu0 %v3003
    %3038 = vmatpush.msra.mxu0 %v3001
    %3039 = vmatpush.msra.mxu0 %v2999
    %3040 = vmatpush.msra.mxu0 %v2997
    %3041 = vmatpush.msra.mxu0 %v2995
    %3042 = vmatpush.msra.mxu0 %v2993
    %3043 = vmatpush.msra.mxu0 %v2991
    %3044 = vmatpush.msra.mxu0 %v2989
    %3045 = vmatpush.msra.mxu0 %v2987
    %3046 = vmatpush.msra.mxu0 %v2985
    %3047 = vmatpush.msra.mxu0 %v2983
    %3048 = vmatpush.msra.mxu0 %v2981
    %3049 = vmatpush.msra.mxu0 %v2979
    %3050 = vmatpush.msra.mxu0 %v2977
    %3051 = vmatpush.msra.mxu0 %v2975
    %3052 = vmatpush.msra.mxu0 %v2973
    %3053 = vmatmul.f32.gmra.mxu0 %v2947
    %v3054 = vpop.f32.mrf.mxu0
    %v3055 = vadd.f32 0.0, %v3054
    %3056 = vmatmul.f32.gmra.mxu0 %v2952
    %v3057 = vpop.f32.mrf.mxu0
    %v3058 = vadd.f32 0.0, %v3057
    %3059 = vmatmul.f32.gmra.mxu0 %v2957
    %v3060 = vpop.f32.mrf.mxu0
    %v3061 = vadd.f32 0.0, %v3060
    %3062 = vmatmul.f32.gmra.mxu0 %v2962
    %v3063 = vpop.f32.mrf.mxu0
    %v3064 = vadd.f32 0.0, %v3063
    %3065 = vdwg.mxu0
    %3066 = vmatpush.msra.mxu0 %v3035
    %3067 = vmatpush.msra.mxu0 %v3033
    %3068 = vmatpush.msra.mxu0 %v3031
    %3069 = vmatpush.msra.mxu0 %v3029
    %3070 = vmatpush.msra.mxu0 %v3027
    %3071 = vmatpush.msra.mxu0 %v3025
    %3072 = vmatpush.msra.mxu0 %v3023
    %3073 = vmatpush.msra.mxu0 %v3021
    %3074 = vmatpush.msra.mxu0 %v3019
    %3075 = vmatpush.msra.mxu0 %v3017
    %3076 = vmatpush.msra.mxu0 %v3015
    %3077 = vmatpush.msra.mxu0 %v3013
    %3078 = vmatpush.msra.mxu0 %v3011
    %3079 = vmatpush.msra.mxu0 %v3009
    %3080 = vmatpush.msra.mxu0 %v3007
    %3081 = vmatpush.msra.mxu0 %v3005
    %3082 = vmatmul.f32.gmra.mxu0 %v2950
    %v3083 = vpop.f32.mrf.mxu0
    %v3084 = vadd.f32 %v3055, %v3083
    %3085 = vmatmul.f32.gmra.mxu0 %v2954
    %v3086 = vpop.f32.mrf.mxu0
    %v3087 = vadd.f32 %v3058, %v3086
    %3088 = vmatmul.f32.gmra.mxu0 %v2960
    %v3089 = vpop.f32.mrf.mxu0
    %v3090 = vadd.f32 %v3061, %v3089
    %3091 = vmatmul.f32.gmra.mxu0 %v2964
    %v3092 = vpop.f32.mrf.mxu0
    %v3093 = vadd.f32 %v3064, %v3092
    %3094 = vdwg.mxu0
    %3095 = vmatpush.msra.mxu0 %v3004
    %3096 = vmatpush.msra.mxu0 %v3002
    %3097 = vmatpush.msra.mxu0 %v3000
    %3098 = vmatpush.msra.mxu0 %v2998
    %3099 = vmatpush.msra.mxu0 %v2996
    %3100 = vmatpush.msra.mxu0 %v2994
    %3101 = vmatpush.msra.mxu0 %v2992
    %3102 = vmatpush.msra.mxu0 %v2990
    %3103 = vmatpush.msra.mxu0 %v2988
    %3104 = vmatpush.msra.mxu0 %v2986
    %3105 = vmatpush.msra.mxu0 %v2984
    %3106 = vmatpush.msra.mxu0 %v2982
    %3107 = vmatpush.msra.mxu0 %v2980
    %3108 = vmatpush.msra.mxu0 %v2978
    %3109 = vmatpush.msra.mxu0 %v2976
    %3110 = vmatpush.msra.mxu0 %v2974
    %3111 = vmatmul.f32.gmra.mxu0 %v2947
    %v3112 = vpop.f32.mrf.mxu0
    %v3113 = vadd.f32 0.0, %v3112
    %3114 = vmatmul.f32.gmra.mxu0 %v2952
    %v3115 = vpop.f32.mrf.mxu0
    %v3116 = vadd.f32 0.0, %v3115
    %3117 = vmatmul.f32.gmra.mxu0 %v2957
    %v3118 = vpop.f32.mrf.mxu0
    %v3119 = vadd.f32 0.0, %v3118
    %3120 = vmatmul.f32.gmra.mxu0 %v2962
    %v3121 = vpop.f32.mrf.mxu0
    %v3122 = vadd.f32 0.0, %v3121
    %3123 = vdwg.mxu0
    %3124 = vmatpush.msra.mxu0 %v3036
    %3125 = vmatpush.msra.mxu0 %v3034
    %3126 = vmatpush.msra.mxu0 %v3032
    %3127 = vmatpush.msra.mxu0 %v3030
    %3128 = vmatpush.msra.mxu0 %v3028
    %3129 = vmatpush.msra.mxu0 %v3026
    %3130 = vmatpush.msra.mxu0 %v3024
    %3131 = vmatpush.msra.mxu0 %v3022
    %3132 = vmatpush.msra.mxu0 %v3020
    %3133 = vmatpush.msra.mxu0 %v3018
    %3134 = vmatpush.msra.mxu0 %v3016
    %3135 = vmatpush.msra.mxu0 %v3014
    %3136 = vmatpush.msra.mxu0 %v3012
    %3137 = vmatpush.msra.mxu0 %v3010
    %3138 = vmatpush.msra.mxu0 %v3008
    %3139 = vmatpush.msra.mxu0 %v3006
    %3140 = vmatmul.f32.gmra.mxu0 %v2950
    %v3141 = vpop.f32.mrf.mxu0
    %v3142 = vadd.f32 %v3113, %v3141
    %3143 = vmatmul.f32.gmra.mxu0 %v2954
    %v3144 = vpop.f32.mrf.mxu0
    %v3145 = vadd.f32 %v3116, %v3144
    %3146 = vmatmul.f32.gmra.mxu0 %v2960
    %v3147 = vpop.f32.mrf.mxu0
    %v3148 = vadd.f32 %v3119, %v3147
    %3149 = vmatmul.f32.gmra.mxu0 %v2964
    %v3150 = vpop.f32.mrf.mxu0
    %v3151 = vadd.f32 %v3122, %v3150
    %3152 = vdwg.mxu0
    %v3153 = vadd.f32 %v2921, %v3084
    %v3154 = vadd.f32 %v2922, %v3142
    %v3155 = vadd.f32 %v2923, %v3087
    %v3156 = vadd.f32 %v2924, %v3145
    %v3157 = vadd.f32 %v2925, %v3090
    %v3158 = vadd.f32 %v2926, %v3148
    %v3159 = vadd.f32 %v2927, %v3093
    %v3160 = vadd.f32 %v2928, %v3151
    %v3161 = vld [vmem:[%s12] sm:$0x3]
    %v3163 = vperm.slane %v3161, 0
    %v3164 = vperm.slane %v3161, 1
    %v3167 = vadd.f32 %v3153, %v3163
    %v3168 = vadd.f32 %v3154, %v3164
    %v3169 = vadd.f32 %v3155, %v3163
    %v3170 = vadd.f32 %v3156, %v3164
    %v3171 = vadd.f32 %v3157, %v3163
    %v3172 = vadd.f32 %v3158, %v3164
    %v3173 = vadd.f32 %v3159, %v3163
    %v3174 = vadd.f32 %v3160, %v3164
    %v3175 = vmax.f32 %v3167, 0.0
    %v3176 = vmax.f32 %v3168, 0.0
    %v3177 = vmax.f32 %v3169, 0.0
    %v3178 = vmax.f32 %v3170, 0.0
    %v3179 = vmax.f32 %v3171, 0.0
    %v3180 = vmax.f32 %v3172, 0.0
    %v3181 = vmax.f32 %v3173, 0.0
    %v3182 = vmax.f32 %v3174, 0.0
    %v3191 = vrot.slane %v3175, 6
    %v3192 = vrot.slane %v3176, 6
    %v3193 = vrot.slane %v3177, 6
    %v3194 = vsel %vm133, %v3191, %v3193
    %v3195 = vrot.slane %v3178, 6
    %v3196 = vsel %vm133, %v3192, %v3195
    %v3197 = vrot.slane %v3179, 6
    %v3198 = vrot.slane %v3180, 6
    %v3199 = vrot.slane %v3181, 6
    %v3200 = vsel %vm133, %v3197, %v3199
    %v3201 = vrot.slane %v3182, 6
    %v3202 = vsel %vm133, %v3198, %v3201
    %3215 = vst [vmem:[#allocation2] sm:$0xfc] %v3191
    %3216 = vst [vmem:[#allocation2 + $0x8] sm:$0xfc] %v3192
    %3217 = vst [vmem:[#allocation2 + $0x10] sm:$0xff] %v3194
    %3218 = vst [vmem:[#allocation2 + $0x18] sm:$0xff] %v3196
    %3219 = vst [vmem:[#allocation2 + $0x20] sm:$0x3] %v3193
    %3220 = vst [vmem:[#allocation2 + $0x28] sm:$0x3] %v3195
    %3221 = vst [vmem:[#allocation2 + $0x30] sm:$0xfc] %v3197
    %3222 = vst [vmem:[#allocation2 + $0x38] sm:$0xfc] %v3198
    %3223 = vst [vmem:[#allocation2 + $0x40] sm:$0xff] %v3200
    %3224 = vst [vmem:[#allocation2 + $0x48] sm:$0xff] %v3202
    %3225 = vst [vmem:[#allocation2 + $0x50] sm:$0x3] %v3199
    %3226 = vst [vmem:[#allocation2 + $0x58] sm:$0x3] %v3201
    %v3227 = vld [vmem:[#allocation2] sm:$0xff]
    %v3228 = vld [vmem:[#allocation2 + $0x8] sm:$0xff]
    %v3229 = vld [vmem:[#allocation2 + $0x10] sm:$0xff]
    %v3230 = vld [vmem:[#allocation2 + $0x18] sm:$0xff]
    %v3231 = vld [vmem:[#allocation2 + $0x30] sm:$0xff]
    %v3232 = vld [vmem:[#allocation2 + $0x38] sm:$0xff]
    %v3233 = vld [vmem:[#allocation2 + $0x40] sm:$0xff]
    %v3234 = vld [vmem:[#allocation2 + $0x48] sm:$0xff]
    %v3235 = vld [vmem:[#allocation8] sm:$0xff]
    %v3236 = vld [vmem:[#allocation8 + $0x8] sm:$0xff]
    %v3237 = vld [vmem:[#allocation8 + $0x10] sm:$0xff]
    %v3238 = vld [vmem:[#allocation8 + $0x18] sm:$0xff]
    %v3239 = vld [vmem:[#allocation8 + $0x20] sm:$0xff]
    %v3240 = vld [vmem:[#allocation8 + $0x28] sm:$0xff]
    %v3241 = vld [vmem:[#allocation8 + $0x30] sm:$0xff]
    %v3242 = vld [vmem:[#allocation8 + $0x38] sm:$0xff]
    %v3243 = vld [vmem:[#allocation8 + $0x40] sm:$0xff]
    %v3244 = vld [vmem:[#allocation8 + $0x48] sm:$0xff]
    %v3245 = vld [vmem:[#allocation8 + $0x50] sm:$0xff]
    %v3246 = vld [vmem:[#allocation8 + $0x58] sm:$0xff]
    %v3247 = vld [vmem:[#allocation8 + $0x60] sm:$0xff]
    %v3248 = vld [vmem:[#allocation8 + $0x68] sm:$0xff]
    %v3249 = vld [vmem:[#allocation8 + $0x70] sm:$0xff]
    %v3250 = vld [vmem:[#allocation8 + $0x78] sm:$0xff]
    %v3251 = vld [vmem:[#allocation8 + $0x80] sm:$0xff]
    %v3252 = vld [vmem:[#allocation8 + $0x88] sm:$0xff]
    %v3253 = vld [vmem:[#allocation8 + $0x90] sm:$0xff]
    %v3254 = vld [vmem:[#allocation8 + $0x98] sm:$0xff]
    %v3255 = vld [vmem:[#allocation8 + $0xa0] sm:$0xff]
    %v3256 = vld [vmem:[#allocation8 + $0xa8] sm:$0xff]
    %v3257 = vld [vmem:[#allocation8 + $0xb0] sm:$0xff]
    %v3258 = vld [vmem:[#allocation8 + $0xb8] sm:$0xff]
    %v3259 = vld [vmem:[#allocation8 + $0xc0] sm:$0xff]
    %v3260 = vld [vmem:[#allocation8 + $0xc8] sm:$0xff]
    %v3261 = vld [vmem:[#allocation8 + $0xd0] sm:$0xff]
    %v3262 = vld [vmem:[#allocation8 + $0xd8] sm:$0xff]
    %v3263 = vld [vmem:[#allocation8 + $0xe0] sm:$0xff]
    %v3264 = vld [vmem:[#allocation8 + $0xe8] sm:$0xff]
    %v3265 = vld [vmem:[#allocation8 + $0xf0] sm:$0xff]
    %v3266 = vld [vmem:[#allocation8 + $0xf8] sm:$0xff]
    %v3267 = vld [vmem:[#allocation8 + $0x100] sm:$0xff]
    %v3268 = vld [vmem:[#allocation8 + $0x108] sm:$0xff]
    %v3269 = vld [vmem:[#allocation8 + $0x110] sm:$0xff]
    %v3270 = vld [vmem:[#allocation8 + $0x118] sm:$0xff]
    %v3271 = vld [vmem:[#allocation8 + $0x120] sm:$0xff]
    %v3272 = vld [vmem:[#allocation8 + $0x128] sm:$0xff]
    %v3273 = vld [vmem:[#allocation8 + $0x130] sm:$0xff]
    %v3274 = vld [vmem:[#allocation8 + $0x138] sm:$0xff]
    %v3275 = vld [vmem:[#allocation8 + $0x140] sm:$0xff]
    %v3276 = vld [vmem:[#allocation8 + $0x148] sm:$0xff]
    %v3277 = vld [vmem:[#allocation8 + $0x150] sm:$0xff]
    %v3278 = vld [vmem:[#allocation8 + $0x158] sm:$0xff]
    %v3279 = vld [vmem:[#allocation8 + $0x160] sm:$0xff]
    %v3280 = vld [vmem:[#allocation8 + $0x168] sm:$0xff]
    %v3281 = vld [vmem:[#allocation8 + $0x170] sm:$0xff]
    %v3282 = vld [vmem:[#allocation8 + $0x178] sm:$0xff]
    %v3283 = vld [vmem:[#allocation8 + $0x180] sm:$0xff]
    %v3284 = vld [vmem:[#allocation8 + $0x188] sm:$0xff]
    %v3285 = vld [vmem:[#allocation8 + $0x190] sm:$0xff]
    %v3286 = vld [vmem:[#allocation8 + $0x198] sm:$0xff]
    %v3287 = vld [vmem:[#allocation8 + $0x1a0] sm:$0xff]
    %v3288 = vld [vmem:[#allocation8 + $0x1a8] sm:$0xff]
    %v3289 = vld [vmem:[#allocation8 + $0x1b0] sm:$0xff]
    %v3290 = vld [vmem:[#allocation8 + $0x1b8] sm:$0xff]
    %v3291 = vld [vmem:[#allocation8 + $0x1c0] sm:$0xff]
    %v3292 = vld [vmem:[#allocation8 + $0x1c8] sm:$0xff]
    %v3293 = vld [vmem:[#allocation8 + $0x1d0] sm:$0xff]
    %v3294 = vld [vmem:[#allocation8 + $0x1d8] sm:$0xff]
    %v3295 = vld [vmem:[#allocation8 + $0x1e0] sm:$0xff]
    %v3296 = vld [vmem:[#allocation8 + $0x1e8] sm:$0xff]
    %v3297 = vld [vmem:[#allocation8 + $0x1f0] sm:$0xff]
    %v3298 = vld [vmem:[#allocation8 + $0x1f8] sm:$0xff]
    %v3299 = vld [vmem:[#allocation2] sm:$0xfe]
    %v3300 = vld [vmem:[#allocation2 + $0x8] sm:$0xfe]
    %v3301 = vld [vmem:[#allocation2 + $0x20] sm:$0x1]
    %v3302 = vld [vmem:[#allocation2 + $0x28] sm:$0x1]
    %v3303 = vld [vmem:[#allocation2 + $0x30] sm:$0xfe]
    %v3304 = vld [vmem:[#allocation2 + $0x38] sm:$0xfe]
    %v3305 = vld [vmem:[#allocation2 + $0x50] sm:$0x1]
    %v3306 = vld [vmem:[#allocation2 + $0x58] sm:$0x1]
    %v3319 = vrot.slane %v3299, 1
    %v3320 = vrot.slane %v3229, 1
    %v3321 = vsel %vm197, %v3319, %v3320
    %v3322 = vrot.slane %v3300, 1
    %v3323 = vrot.slane %v3230, 1
    %v3324 = vsel %vm197, %v3322, %v3323
    %v3325 = vrot.slane %v3301, 1
    %v3326 = vsel %vm197, %v3320, %v3325
    %v3327 = vrot.slane %v3302, 1
    %v3328 = vsel %vm197, %v3323, %v3327
    %v3329 = vrot.slane %v3303, 1
    %v3330 = vrot.slane %v3233, 1
    %v3331 = vsel %vm197, %v3329, %v3330
    %v3332 = vrot.slane %v3304, 1
    %v3333 = vrot.slane %v3234, 1
    %v3334 = vsel %vm197, %v3332, %v3333
    %v3335 = vrot.slane %v3305, 1
    %v3336 = vsel %vm197, %v3330, %v3335
    %v3337 = vrot.slane %v3306, 1
    %v3338 = vsel %vm197, %v3333, %v3337
    %v3347 = vld [vmem:[#allocation8 + $0x200] sm:$0xff]
    %v3348 = vld [vmem:[#allocation8 + $0x208] sm:$0xff]
    %v3349 = vld [vmem:[#allocation8 + $0x210] sm:$0xff]
    %v3350 = vld [vmem:[#allocation8 + $0x218] sm:$0xff]
    %v3351 = vld [vmem:[#allocation8 + $0x220] sm:$0xff]
    %v3352 = vld [vmem:[#allocation8 + $0x228] sm:$0xff]
    %v3353 = vld [vmem:[#allocation8 + $0x230] sm:$0xff]
    %v3354 = vld [vmem:[#allocation8 + $0x238] sm:$0xff]
    %v3355 = vld [vmem:[#allocation8 + $0x240] sm:$0xff]
    %v3356 = vld [vmem:[#allocation8 + $0x248] sm:$0xff]
    %v3357 = vld [vmem:[#allocation8 + $0x250] sm:$0xff]
    %v3358 = vld [vmem:[#allocation8 + $0x258] sm:$0xff]
    %v3359 = vld [vmem:[#allocation8 + $0x260] sm:$0xff]
    %v3360 = vld [vmem:[#allocation8 + $0x268] sm:$0xff]
    %v3361 = vld [vmem:[#allocation8 + $0x270] sm:$0xff]
    %v3362 = vld [vmem:[#allocation8 + $0x278] sm:$0xff]
    %v3363 = vld [vmem:[#allocation8 + $0x280] sm:$0xff]
    %v3364 = vld [vmem:[#allocation8 + $0x288] sm:$0xff]
    %v3365 = vld [vmem:[#allocation8 + $0x290] sm:$0xff]
    %v3366 = vld [vmem:[#allocation8 + $0x298] sm:$0xff]
    %v3367 = vld [vmem:[#allocation8 + $0x2a0] sm:$0xff]
    %v3368 = vld [vmem:[#allocation8 + $0x2a8] sm:$0xff]
    %v3369 = vld [vmem:[#allocation8 + $0x2b0] sm:$0xff]
    %v3370 = vld [vmem:[#allocation8 + $0x2b8] sm:$0xff]
    %v3371 = vld [vmem:[#allocation8 + $0x2c0] sm:$0xff]
    %v3372 = vld [vmem:[#allocation8 + $0x2c8] sm:$0xff]
    %v3373 = vld [vmem:[#allocation8 + $0x2d0] sm:$0xff]
    %v3374 = vld [vmem:[#allocation8 + $0x2d8] sm:$0xff]
    %v3375 = vld [vmem:[#allocation8 + $0x2e0] sm:$0xff]
    %v3376 = vld [vmem:[#allocation8 + $0x2e8] sm:$0xff]
    %v3377 = vld [vmem:[#allocation8 + $0x2f0] sm:$0xff]
    %v3378 = vld [vmem:[#allocation8 + $0x2f8] sm:$0xff]
    %v3379 = vld [vmem:[#allocation8 + $0x300] sm:$0xff]
    %v3380 = vld [vmem:[#allocation8 + $0x308] sm:$0xff]
    %v3381 = vld [vmem:[#allocation8 + $0x310] sm:$0xff]
    %v3382 = vld [vmem:[#allocation8 + $0x318] sm:$0xff]
    %v3383 = vld [vmem:[#allocation8 + $0x320] sm:$0xff]
    %v3384 = vld [vmem:[#allocation8 + $0x328] sm:$0xff]
    %v3385 = vld [vmem:[#allocation8 + $0x330] sm:$0xff]
    %v3386 = vld [vmem:[#allocation8 + $0x338] sm:$0xff]
    %v3387 = vld [vmem:[#allocation8 + $0x340] sm:$0xff]
    %v3388 = vld [vmem:[#allocation8 + $0x348] sm:$0xff]
    %v3389 = vld [vmem:[#allocation8 + $0x350] sm:$0xff]
    %v3390 = vld [vmem:[#allocation8 + $0x358] sm:$0xff]
    %v3391 = vld [vmem:[#allocation8 + $0x360] sm:$0xff]
    %v3392 = vld [vmem:[#allocation8 + $0x368] sm:$0xff]
    %v3393 = vld [vmem:[#allocation8 + $0x370] sm:$0xff]
    %v3394 = vld [vmem:[#allocation8 + $0x378] sm:$0xff]
    %v3395 = vld [vmem:[#allocation8 + $0x380] sm:$0xff]
    %v3396 = vld [vmem:[#allocation8 + $0x388] sm:$0xff]
    %v3397 = vld [vmem:[#allocation8 + $0x390] sm:$0xff]
    %v3398 = vld [vmem:[#allocation8 + $0x398] sm:$0xff]
    %v3399 = vld [vmem:[#allocation8 + $0x3a0] sm:$0xff]
    %v3400 = vld [vmem:[#allocation8 + $0x3a8] sm:$0xff]
    %v3401 = vld [vmem:[#allocation8 + $0x3b0] sm:$0xff]
    %v3402 = vld [vmem:[#allocation8 + $0x3b8] sm:$0xff]
    %v3403 = vld [vmem:[#allocation8 + $0x3c0] sm:$0xff]
    %v3404 = vld [vmem:[#allocation8 + $0x3c8] sm:$0xff]
    %v3405 = vld [vmem:[#allocation8 + $0x3d0] sm:$0xff]
    %v3406 = vld [vmem:[#allocation8 + $0x3d8] sm:$0xff]
    %v3407 = vld [vmem:[#allocation8 + $0x3e0] sm:$0xff]
    %v3408 = vld [vmem:[#allocation8 + $0x3e8] sm:$0xff]
    %v3409 = vld [vmem:[#allocation8 + $0x3f0] sm:$0xff]
    %v3410 = vld [vmem:[#allocation8 + $0x3f8] sm:$0xff]
    %3411 = vmatpush.msra.mxu0 %v3377
    %3412 = vmatpush.msra.mxu0 %v3375
    %3413 = vmatpush.msra.mxu0 %v3373
    %3414 = vmatpush.msra.mxu0 %v3371
    %3415 = vmatpush.msra.mxu0 %v3369
    %3416 = vmatpush.msra.mxu0 %v3367
    %3417 = vmatpush.msra.mxu0 %v3365
    %3418 = vmatpush.msra.mxu0 %v3363
    %3419 = vmatpush.msra.mxu0 %v3361
    %3420 = vmatpush.msra.mxu0 %v3359
    %3421 = vmatpush.msra.mxu0 %v3357
    %3422 = vmatpush.msra.mxu0 %v3355
    %3423 = vmatpush.msra.mxu0 %v3353
    %3424 = vmatpush.msra.mxu0 %v3351
    %3425 = vmatpush.msra.mxu0 %v3349
    %3426 = vmatpush.msra.mxu0 %v3347
    %3427 = vmatmul.f32.gmra.mxu0 %v3321
    %v3428 = vpop.f32.mrf.mxu0
    %v3429 = vadd.f32 0.0, %v3428
    %3430 = vmatmul.f32.gmra.mxu0 %v3326
    %v3431 = vpop.f32.mrf.mxu0
    %v3432 = vadd.f32 0.0, %v3431
    %3433 = vmatmul.f32.gmra.mxu0 %v3331
    %v3434 = vpop.f32.mrf.mxu0
    %v3435 = vadd.f32 0.0, %v3434
    %3436 = vmatmul.f32.gmra.mxu0 %v3336
    %v3437 = vpop.f32.mrf.mxu0
    %v3438 = vadd.f32 0.0, %v3437
    %3439 = vdwg.mxu0
    %3440 = vmatpush.msra.mxu0 %v3409
    %3441 = vmatpush.msra.mxu0 %v3407
    %3442 = vmatpush.msra.mxu0 %v3405
    %3443 = vmatpush.msra.mxu0 %v3403
    %3444 = vmatpush.msra.mxu0 %v3401
    %3445 = vmatpush.msra.mxu0 %v3399
    %3446 = vmatpush.msra.mxu0 %v3397
    %3447 = vmatpush.msra.mxu0 %v3395
    %3448 = vmatpush.msra.mxu0 %v3393
    %3449 = vmatpush.msra.mxu0 %v3391
    %3450 = vmatpush.msra.mxu0 %v3389
    %3451 = vmatpush.msra.mxu0 %v3387
    %3452 = vmatpush.msra.mxu0 %v3385
    %3453 = vmatpush.msra.mxu0 %v3383
    %3454 = vmatpush.msra.mxu0 %v3381
    %3455 = vmatpush.msra.mxu0 %v3379
    %3456 = vmatmul.f32.gmra.mxu0 %v3324
    %v3457 = vpop.f32.mrf.mxu0
    %v3458 = vadd.f32 %v3429, %v3457
    %3459 = vmatmul.f32.gmra.mxu0 %v3328
    %v3460 = vpop.f32.mrf.mxu0
    %v3461 = vadd.f32 %v3432, %v3460
    %3462 = vmatmul.f32.gmra.mxu0 %v3334
    %v3463 = vpop.f32.mrf.mxu0
    %v3464 = vadd.f32 %v3435, %v3463
    %3465 = vmatmul.f32.gmra.mxu0 %v3338
    %v3466 = vpop.f32.mrf.mxu0
    %v3467 = vadd.f32 %v3438, %v3466
    %3468 = vdwg.mxu0
    %3469 = vmatpush.msra.mxu0 %v3378
    %3470 = vmatpush.msra.mxu0 %v3376
    %3471 = vmatpush.msra.mxu0 %v3374
    %3472 = vmatpush.msra.mxu0 %v3372
    %3473 = vmatpush.msra.mxu0 %v3370
    %3474 = vmatpush.msra.mxu0 %v3368
    %3475 = vmatpush.msra.mxu0 %v3366
    %3476 = vmatpush.msra.mxu0 %v3364
    %3477 = vmatpush.msra.mxu0 %v3362
    %3478 = vmatpush.msra.mxu0 %v3360
    %3479 = vmatpush.msra.mxu0 %v3358
    %3480 = vmatpush.msra.mxu0 %v3356
    %3481 = vmatpush.msra.mxu0 %v3354
    %3482 = vmatpush.msra.mxu0 %v3352
    %3483 = vmatpush.msra.mxu0 %v3350
    %3484 = vmatpush.msra.mxu0 %v3348
    %3485 = vmatmul.f32.gmra.mxu0 %v3321
    %v3486 = vpop.f32.mrf.mxu0
    %v3487 = vadd.f32 0.0, %v3486
    %3488 = vmatmul.f32.gmra.mxu0 %v3326
    %v3489 = vpop.f32.mrf.mxu0
    %v3490 = vadd.f32 0.0, %v3489
    %3491 = vmatmul.f32.gmra.mxu0 %v3331
    %v3492 = vpop.f32.mrf.mxu0
    %v3493 = vadd.f32 0.0, %v3492
    %3494 = vmatmul.f32.gmra.mxu0 %v3336
    %v3495 = vpop.f32.mrf.mxu0
    %v3496 = vadd.f32 0.0, %v3495
    %3497 = vdwg.mxu0
    %3498 = vmatpush.msra.mxu0 %v3410
    %3499 = vmatpush.msra.mxu0 %v3408
    %3500 = vmatpush.msra.mxu0 %v3406
    %3501 = vmatpush.msra.mxu0 %v3404
    %3502 = vmatpush.msra.mxu0 %v3402
    %3503 = vmatpush.msra.mxu0 %v3400
    %3504 = vmatpush.msra.mxu0 %v3398
    %3505 = vmatpush.msra.mxu0 %v3396
    %3506 = vmatpush.msra.mxu0 %v3394
    %3507 = vmatpush.msra.mxu0 %v3392
    %3508 = vmatpush.msra.mxu0 %v3390
    %3509 = vmatpush.msra.mxu0 %v3388
    %3510 = vmatpush.msra.mxu0 %v3386
    %3511 = vmatpush.msra.mxu0 %v3384
    %3512 = vmatpush.msra.mxu0 %v3382
    %3513 = vmatpush.msra.mxu0 %v3380
    %3514 = vmatmul.f32.gmra.mxu0 %v3324
    %v3515 = vpop.f32.mrf.mxu0
    %v3516 = vadd.f32 %v3487, %v3515
    %3517 = vmatmul.f32.gmra.mxu0 %v3328
    %v3518 = vpop.f32.mrf.mxu0
    %v3519 = vadd.f32 %v3490, %v3518
    %3520 = vmatmul.f32.gmra.mxu0 %v3334
    %v3521 = vpop.f32.mrf.mxu0
    %v3522 = vadd.f32 %v3493, %v3521
    %3523 = vmatmul.f32.gmra.mxu0 %v3338
    %v3524 = vpop.f32.mrf.mxu0
    %v3525 = vadd.f32 %v3496, %v3524
    %3526 = vdwg.mxu0
    %3527 = vmatpush.msra.mxu0 %v3265
    %3528 = vmatpush.msra.mxu0 %v3263
    %3529 = vmatpush.msra.mxu0 %v3261
    %3530 = vmatpush.msra.mxu0 %v3259
    %3531 = vmatpush.msra.mxu0 %v3257
    %3532 = vmatpush.msra.mxu0 %v3255
    %3533 = vmatpush.msra.mxu0 %v3253
    %3534 = vmatpush.msra.mxu0 %v3251
    %3535 = vmatpush.msra.mxu0 %v3249
    %3536 = vmatpush.msra.mxu0 %v3247
    %3537 = vmatpush.msra.mxu0 %v3245
    %3538 = vmatpush.msra.mxu0 %v3243
    %3539 = vmatpush.msra.mxu0 %v3241
    %3540 = vmatpush.msra.mxu0 %v3239
    %3541 = vmatpush.msra.mxu0 %v3237
    %3542 = vmatpush.msra.mxu0 %v3235
    %3543 = vmatmul.f32.gmra.mxu0 %v3227
    %v3544 = vpop.f32.mrf.mxu0
    %v3545 = vadd.f32 %v3458, %v3544
    %3546 = vmatmul.f32.gmra.mxu0 %v3229
    %v3547 = vpop.f32.mrf.mxu0
    %v3548 = vadd.f32 %v3461, %v3547
    %3549 = vmatmul.f32.gmra.mxu0 %v3231
    %v3550 = vpop.f32.mrf.mxu0
    %v3551 = vadd.f32 %v3464, %v3550
    %3552 = vmatmul.f32.gmra.mxu0 %v3233
    %v3553 = vpop.f32.mrf.mxu0
    %v3554 = vadd.f32 %v3467, %v3553
    %3555 = vdwg.mxu0
    %3556 = vmatpush.msra.mxu0 %v3297
    %3557 = vmatpush.msra.mxu0 %v3295
    %3558 = vmatpush.msra.mxu0 %v3293
    %3559 = vmatpush.msra.mxu0 %v3291
    %3560 = vmatpush.msra.mxu0 %v3289
    %3561 = vmatpush.msra.mxu0 %v3287
    %3562 = vmatpush.msra.mxu0 %v3285
    %3563 = vmatpush.msra.mxu0 %v3283
    %3564 = vmatpush.msra.mxu0 %v3281
    %3565 = vmatpush.msra.mxu0 %v3279
    %3566 = vmatpush.msra.mxu0 %v3277
    %3567 = vmatpush.msra.mxu0 %v3275
    %3568 = vmatpush.msra.mxu0 %v3273
    %3569 = vmatpush.msra.mxu0 %v3271
    %3570 = vmatpush.msra.mxu0 %v3269
    %3571 = vmatpush.msra.mxu0 %v3267
    %3572 = vmatmul.f32.gmra.mxu0 %v3228
    %v3573 = vpop.f32.mrf.mxu0
    %v3574 = vadd.f32 %v3545, %v3573
    %3575 = vmatmul.f32.gmra.mxu0 %v3230
    %v3576 = vpop.f32.mrf.mxu0
    %v3577 = vadd.f32 %v3548, %v3576
    %3578 = vmatmul.f32.gmra.mxu0 %v3232
    %v3579 = vpop.f32.mrf.mxu0
    %v3580 = vadd.f32 %v3551, %v3579
    %3581 = vmatmul.f32.gmra.mxu0 %v3234
    %v3582 = vpop.f32.mrf.mxu0
    %v3583 = vadd.f32 %v3554, %v3582
    %3584 = vdwg.mxu0
    %3585 = vmatpush.msra.mxu0 %v3266
    %3586 = vmatpush.msra.mxu0 %v3264
    %3587 = vmatpush.msra.mxu0 %v3262
    %3588 = vmatpush.msra.mxu0 %v3260
    %3589 = vmatpush.msra.mxu0 %v3258
    %3590 = vmatpush.msra.mxu0 %v3256
    %3591 = vmatpush.msra.mxu0 %v3254
    %3592 = vmatpush.msra.mxu0 %v3252
    %3593 = vmatpush.msra.mxu0 %v3250
    %3594 = vmatpush.msra.mxu0 %v3248
    %3595 = vmatpush.msra.mxu0 %v3246
    %3596 = vmatpush.msra.mxu0 %v3244
    %3597 = vmatpush.msra.mxu0 %v3242
    %3598 = vmatpush.msra.mxu0 %v3240
    %3599 = vmatpush.msra.mxu0 %v3238
    %3600 = vmatpush.msra.mxu0 %v3236
    %3601 = vmatmul.f32.gmra.mxu0 %v3227
    %v3602 = vpop.f32.mrf.mxu0
    %v3603 = vadd.f32 %v3516, %v3602
    %3604 = vmatmul.f32.gmra.mxu0 %v3229
    %v3605 = vpop.f32.mrf.mxu0
    %v3606 = vadd.f32 %v3519, %v3605
    %3607 = vmatmul.f32.gmra.mxu0 %v3231
    %v3608 = vpop.f32.mrf.mxu0
    %v3609 = vadd.f32 %v3522, %v3608
    %3610 = vmatmul.f32.gmra.mxu0 %v3233
    %v3611 = vpop.f32.mrf.mxu0
    %v3612 = vadd.f32 %v3525, %v3611
    %3613 = vdwg.mxu0
    %3614 = vmatpush.msra.mxu0 %v3298
    %3615 = vmatpush.msra.mxu0 %v3296
    %3616 = vmatpush.msra.mxu0 %v3294
    %3617 = vmatpush.msra.mxu0 %v3292
    %3618 = vmatpush.msra.mxu0 %v3290
    %3619 = vmatpush.msra.mxu0 %v3288
    %3620 = vmatpush.msra.mxu0 %v3286
    %3621 = vmatpush.msra.mxu0 %v3284
    %3622 = vmatpush.msra.mxu0 %v3282
    %3623 = vmatpush.msra.mxu0 %v3280
    %3624 = vmatpush.msra.mxu0 %v3278
    %3625 = vmatpush.msra.mxu0 %v3276
    %3626 = vmatpush.msra.mxu0 %v3274
    %3627 = vmatpush.msra.mxu0 %v3272
    %3628 = vmatpush.msra.mxu0 %v3270
    %3629 = vmatpush.msra.mxu0 %v3268
    %3630 = vmatmul.f32.gmra.mxu0 %v3228
    %v3631 = vpop.f32.mrf.mxu0
    %v3632 = vadd.f32 %v3603, %v3631
    %3633 = vmatmul.f32.gmra.mxu0 %v3230
    %v3634 = vpop.f32.mrf.mxu0
    %v3635 = vadd.f32 %v3606, %v3634
    %3636 = vmatmul.f32.gmra.mxu0 %v3232
    %v3637 = vpop.f32.mrf.mxu0
    %v3638 = vadd.f32 %v3609, %v3637
    %3639 = vmatmul.f32.gmra.mxu0 %v3234
    %v3640 = vpop.f32.mrf.mxu0
    %v3641 = vadd.f32 %v3612, %v3640
    %3642 = vdwg.mxu0
    %v3643 = vld [vmem:[#allocation2] sm:$0xfc]
    %v3644 = vld [vmem:[#allocation2 + $0x8] sm:$0xfc]
    %v3645 = vld [vmem:[#allocation2 + $0x20] sm:$0x3]
    %v3646 = vld [vmem:[#allocation2 + $0x28] sm:$0x3]
    %v3647 = vld [vmem:[#allocation2 + $0x30] sm:$0xfc]
    %v3648 = vld [vmem:[#allocation2 + $0x38] sm:$0xfc]
    %v3649 = vld [vmem:[#allocation2 + $0x50] sm:$0x3]
    %v3650 = vld [vmem:[#allocation2 + $0x58] sm:$0x3]
    %v3659 = vrot.slane %v3643, 2
    %v3660 = vrot.slane %v3229, 2
    %v3661 = vsel %vm242, %v3659, %v3660
    %v3662 = vrot.slane %v3644, 2
    %v3663 = vrot.slane %v3230, 2
    %v3664 = vsel %vm242, %v3662, %v3663
    %v3665 = vrot.slane %v3645, 2
    %v3666 = vsel %vm242, %v3660, %v3665
    %v3667 = vrot.slane %v3646, 2
    %v3668 = vsel %vm242, %v3663, %v3667
    %v3669 = vrot.slane %v3647, 2
    %v3670 = vrot.slane %v3233, 2
    %v3671 = vsel %vm242, %v3669, %v3670
    %v3672 = vrot.slane %v3648, 2
    %v3673 = vrot.slane %v3234, 2
    %v3674 = vsel %vm242, %v3672, %v3673
    %v3675 = vrot.slane %v3649, 2
    %v3676 = vsel %vm242, %v3670, %v3675
    %v3677 = vrot.slane %v3650, 2
    %v3678 = vsel %vm242, %v3673, %v3677
    %v3687 = vld [vmem:[#allocation8 + $0x400] sm:$0xff]
    %v3688 = vld [vmem:[#allocation8 + $0x408] sm:$0xff]
    %v3689 = vld [vmem:[#allocation8 + $0x410] sm:$0xff]
    %v3690 = vld [vmem:[#allocation8 + $0x418] sm:$0xff]
    %v3691 = vld [vmem:[#allocation8 + $0x420] sm:$0xff]
    %v3692 = vld [vmem:[#allocation8 + $0x428] sm:$0xff]
    %v3693 = vld [vmem:[#allocation8 + $0x430] sm:$0xff]
    %v3694 = vld [vmem:[#allocation8 + $0x438] sm:$0xff]
    %v3695 = vld [vmem:[#allocation8 + $0x440] sm:$0xff]
    %v3696 = vld [vmem:[#allocation8 + $0x448] sm:$0xff]
    %v3697 = vld [vmem:[#allocation8 + $0x450] sm:$0xff]
    %v3698 = vld [vmem:[#allocation8 + $0x458] sm:$0xff]
    %v3699 = vld [vmem:[#allocation8 + $0x460] sm:$0xff]
    %v3700 = vld [vmem:[#allocation8 + $0x468] sm:$0xff]
    %v3701 = vld [vmem:[#allocation8 + $0x470] sm:$0xff]
    %v3702 = vld [vmem:[#allocation8 + $0x478] sm:$0xff]
    %v3703 = vld [vmem:[#allocation8 + $0x480] sm:$0xff]
    %v3704 = vld [vmem:[#allocation8 + $0x488] sm:$0xff]
    %v3705 = vld [vmem:[#allocation8 + $0x490] sm:$0xff]
    %v3706 = vld [vmem:[#allocation8 + $0x498] sm:$0xff]
    %v3707 = vld [vmem:[#allocation8 + $0x4a0] sm:$0xff]
    %v3708 = vld [vmem:[#allocation8 + $0x4a8] sm:$0xff]
    %v3709 = vld [vmem:[#allocation8 + $0x4b0] sm:$0xff]
    %v3710 = vld [vmem:[#allocation8 + $0x4b8] sm:$0xff]
    %v3711 = vld [vmem:[#allocation8 + $0x4c0] sm:$0xff]
    %v3712 = vld [vmem:[#allocation8 + $0x4c8] sm:$0xff]
    %v3713 = vld [vmem:[#allocation8 + $0x4d0] sm:$0xff]
    %v3714 = vld [vmem:[#allocation8 + $0x4d8] sm:$0xff]
    %v3715 = vld [vmem:[#allocation8 + $0x4e0] sm:$0xff]
    %v3716 = vld [vmem:[#allocation8 + $0x4e8] sm:$0xff]
    %v3717 = vld [vmem:[#allocation8 + $0x4f0] sm:$0xff]
    %v3718 = vld [vmem:[#allocation8 + $0x4f8] sm:$0xff]
    %v3719 = vld [vmem:[#allocation8 + $0x500] sm:$0xff]
    %v3720 = vld [vmem:[#allocation8 + $0x508] sm:$0xff]
    %v3721 = vld [vmem:[#allocation8 + $0x510] sm:$0xff]
    %v3722 = vld [vmem:[#allocation8 + $0x518] sm:$0xff]
    %v3723 = vld [vmem:[#allocation8 + $0x520] sm:$0xff]
    %v3724 = vld [vmem:[#allocation8 + $0x528] sm:$0xff]
    %v3725 = vld [vmem:[#allocation8 + $0x530] sm:$0xff]
    %v3726 = vld [vmem:[#allocation8 + $0x538] sm:$0xff]
    %v3727 = vld [vmem:[#allocation8 + $0x540] sm:$0xff]
    %v3728 = vld [vmem:[#allocation8 + $0x548] sm:$0xff]
    %v3729 = vld [vmem:[#allocation8 + $0x550] sm:$0xff]
    %v3730 = vld [vmem:[#allocation8 + $0x558] sm:$0xff]
    %v3731 = vld [vmem:[#allocation8 + $0x560] sm:$0xff]
    %v3732 = vld [vmem:[#allocation8 + $0x568] sm:$0xff]
    %v3733 = vld [vmem:[#allocation8 + $0x570] sm:$0xff]
    %v3734 = vld [vmem:[#allocation8 + $0x578] sm:$0xff]
    %v3735 = vld [vmem:[#allocation8 + $0x580] sm:$0xff]
    %v3736 = vld [vmem:[#allocation8 + $0x588] sm:$0xff]
    %v3737 = vld [vmem:[#allocation8 + $0x590] sm:$0xff]
    %v3738 = vld [vmem:[#allocation8 + $0x598] sm:$0xff]
    %v3739 = vld [vmem:[#allocation8 + $0x5a0] sm:$0xff]
    %v3740 = vld [vmem:[#allocation8 + $0x5a8] sm:$0xff]
    %v3741 = vld [vmem:[#allocation8 + $0x5b0] sm:$0xff]
    %v3742 = vld [vmem:[#allocation8 + $0x5b8] sm:$0xff]
    %v3743 = vld [vmem:[#allocation8 + $0x5c0] sm:$0xff]
    %v3744 = vld [vmem:[#allocation8 + $0x5c8] sm:$0xff]
    %v3745 = vld [vmem:[#allocation8 + $0x5d0] sm:$0xff]
    %v3746 = vld [vmem:[#allocation8 + $0x5d8] sm:$0xff]
    %v3747 = vld [vmem:[#allocation8 + $0x5e0] sm:$0xff]
    %v3748 = vld [vmem:[#allocation8 + $0x5e8] sm:$0xff]
    %v3749 = vld [vmem:[#allocation8 + $0x5f0] sm:$0xff]
    %v3750 = vld [vmem:[#allocation8 + $0x5f8] sm:$0xff]
    %3751 = vmatpush.msra.mxu0 %v3717
    %3752 = vmatpush.msra.mxu0 %v3715
    %3753 = vmatpush.msra.mxu0 %v3713
    %3754 = vmatpush.msra.mxu0 %v3711
    %3755 = vmatpush.msra.mxu0 %v3709
    %3756 = vmatpush.msra.mxu0 %v3707
    %3757 = vmatpush.msra.mxu0 %v3705
    %3758 = vmatpush.msra.mxu0 %v3703
    %3759 = vmatpush.msra.mxu0 %v3701
    %3760 = vmatpush.msra.mxu0 %v3699
    %3761 = vmatpush.msra.mxu0 %v3697
    %3762 = vmatpush.msra.mxu0 %v3695
    %3763 = vmatpush.msra.mxu0 %v3693
    %3764 = vmatpush.msra.mxu0 %v3691
    %3765 = vmatpush.msra.mxu0 %v3689
    %3766 = vmatpush.msra.mxu0 %v3687
    %3767 = vmatmul.f32.gmra.mxu0 %v3661
    %v3768 = vpop.f32.mrf.mxu0
    %v3769 = vadd.f32 0.0, %v3768
    %3770 = vmatmul.f32.gmra.mxu0 %v3666
    %v3771 = vpop.f32.mrf.mxu0
    %v3772 = vadd.f32 0.0, %v3771
    %3773 = vmatmul.f32.gmra.mxu0 %v3671
    %v3774 = vpop.f32.mrf.mxu0
    %v3775 = vadd.f32 0.0, %v3774
    %3776 = vmatmul.f32.gmra.mxu0 %v3676
    %v3777 = vpop.f32.mrf.mxu0
    %v3778 = vadd.f32 0.0, %v3777
    %3779 = vdwg.mxu0
    %3780 = vmatpush.msra.mxu0 %v3749
    %3781 = vmatpush.msra.mxu0 %v3747
    %3782 = vmatpush.msra.mxu0 %v3745
    %3783 = vmatpush.msra.mxu0 %v3743
    %3784 = vmatpush.msra.mxu0 %v3741
    %3785 = vmatpush.msra.mxu0 %v3739
    %3786 = vmatpush.msra.mxu0 %v3737
    %3787 = vmatpush.msra.mxu0 %v3735
    %3788 = vmatpush.msra.mxu0 %v3733
    %3789 = vmatpush.msra.mxu0 %v3731
    %3790 = vmatpush.msra.mxu0 %v3729
    %3791 = vmatpush.msra.mxu0 %v3727
    %3792 = vmatpush.msra.mxu0 %v3725
    %3793 = vmatpush.msra.mxu0 %v3723
    %3794 = vmatpush.msra.mxu0 %v3721
    %3795 = vmatpush.msra.mxu0 %v3719
    %3796 = vmatmul.f32.gmra.mxu0 %v3664
    %v3797 = vpop.f32.mrf.mxu0
    %v3798 = vadd.f32 %v3769, %v3797
    %3799 = vmatmul.f32.gmra.mxu0 %v3668
    %v3800 = vpop.f32.mrf.mxu0
    %v3801 = vadd.f32 %v3772, %v3800
    %3802 = vmatmul.f32.gmra.mxu0 %v3674
    %v3803 = vpop.f32.mrf.mxu0
    %v3804 = vadd.f32 %v3775, %v3803
    %3805 = vmatmul.f32.gmra.mxu0 %v3678
    %v3806 = vpop.f32.mrf.mxu0
    %v3807 = vadd.f32 %v3778, %v3806
    %3808 = vdwg.mxu0
    %3809 = vmatpush.msra.mxu0 %v3718
    %3810 = vmatpush.msra.mxu0 %v3716
    %3811 = vmatpush.msra.mxu0 %v3714
    %3812 = vmatpush.msra.mxu0 %v3712
    %3813 = vmatpush.msra.mxu0 %v3710
    %3814 = vmatpush.msra.mxu0 %v3708
    %3815 = vmatpush.msra.mxu0 %v3706
    %3816 = vmatpush.msra.mxu0 %v3704
    %3817 = vmatpush.msra.mxu0 %v3702
    %3818 = vmatpush.msra.mxu0 %v3700
    %3819 = vmatpush.msra.mxu0 %v3698
    %3820 = vmatpush.msra.mxu0 %v3696
    %3821 = vmatpush.msra.mxu0 %v3694
    %3822 = vmatpush.msra.mxu0 %v3692
    %3823 = vmatpush.msra.mxu0 %v3690
    %3824 = vmatpush.msra.mxu0 %v3688
    %3825 = vmatmul.f32.gmra.mxu0 %v3661
    %v3826 = vpop.f32.mrf.mxu0
    %v3827 = vadd.f32 0.0, %v3826
    %3828 = vmatmul.f32.gmra.mxu0 %v3666
    %v3829 = vpop.f32.mrf.mxu0
    %v3830 = vadd.f32 0.0, %v3829
    %3831 = vmatmul.f32.gmra.mxu0 %v3671
    %v3832 = vpop.f32.mrf.mxu0
    %v3833 = vadd.f32 0.0, %v3832
    %3834 = vmatmul.f32.gmra.mxu0 %v3676
    %v3835 = vpop.f32.mrf.mxu0
    %v3836 = vadd.f32 0.0, %v3835
    %3837 = vdwg.mxu0
    %3838 = vmatpush.msra.mxu0 %v3750
    %3839 = vmatpush.msra.mxu0 %v3748
    %3840 = vmatpush.msra.mxu0 %v3746
    %3841 = vmatpush.msra.mxu0 %v3744
    %3842 = vmatpush.msra.mxu0 %v3742
    %3843 = vmatpush.msra.mxu0 %v3740
    %3844 = vmatpush.msra.mxu0 %v3738
    %3845 = vmatpush.msra.mxu0 %v3736
    %3846 = vmatpush.msra.mxu0 %v3734
    %3847 = vmatpush.msra.mxu0 %v3732
    %3848 = vmatpush.msra.mxu0 %v3730
    %3849 = vmatpush.msra.mxu0 %v3728
    %3850 = vmatpush.msra.mxu0 %v3726
    %3851 = vmatpush.msra.mxu0 %v3724
    %3852 = vmatpush.msra.mxu0 %v3722
    %3853 = vmatpush.msra.mxu0 %v3720
    %3854 = vmatmul.f32.gmra.mxu0 %v3664
    %v3855 = vpop.f32.mrf.mxu0
    %v3856 = vadd.f32 %v3827, %v3855
    %3857 = vmatmul.f32.gmra.mxu0 %v3668
    %v3858 = vpop.f32.mrf.mxu0
    %v3859 = vadd.f32 %v3830, %v3858
    %3860 = vmatmul.f32.gmra.mxu0 %v3674
    %v3861 = vpop.f32.mrf.mxu0
    %v3862 = vadd.f32 %v3833, %v3861
    %3863 = vmatmul.f32.gmra.mxu0 %v3678
    %v3864 = vpop.f32.mrf.mxu0
    %v3865 = vadd.f32 %v3836, %v3864
    %3866 = vdwg.mxu0
    %v3867 = vadd.f32 %v3574, %v3798
    %v3868 = vadd.f32 %v3632, %v3856
    %v3869 = vadd.f32 %v3577, %v3801
    %v3870 = vadd.f32 %v3635, %v3859
    %v3871 = vadd.f32 %v3580, %v3804
    %v3872 = vadd.f32 %v3638, %v3862
    %v3873 = vadd.f32 %v3583, %v3807
    %v3874 = vadd.f32 %v3641, %v3865
    %v3875 = vld [vmem:[#allocation2] sm:$0xf8]
    %v3876 = vld [vmem:[#allocation2 + $0x8] sm:$0xf8]
    %v3877 = vld [vmem:[#allocation2 + $0x20] sm:$0x7]
    %v3878 = vld [vmem:[#allocation2 + $0x28] sm:$0x7]
    %v3879 = vld [vmem:[#allocation2 + $0x30] sm:$0xf8]
    %v3880 = vld [vmem:[#allocation2 + $0x38] sm:$0xf8]
    %v3881 = vld [vmem:[#allocation2 + $0x50] sm:$0x7]
    %v3882 = vld [vmem:[#allocation2 + $0x58] sm:$0x7]
    %v3891 = vrot.slane %v3875, 3
    %v3892 = vrot.slane %v3229, 3
    %v3893 = vsel %vm287, %v3891, %v3892
    %v3894 = vrot.slane %v3876, 3
    %v3895 = vrot.slane %v3230, 3
    %v3896 = vsel %vm287, %v3894, %v3895
    %v3897 = vrot.slane %v3877, 3
    %v3898 = vsel %vm287, %v3892, %v3897
    %v3899 = vrot.slane %v3878, 3
    %v3900 = vsel %vm287, %v3895, %v3899
    %v3901 = vrot.slane %v3879, 3
    %v3902 = vrot.slane %v3233, 3
    %v3903 = vsel %vm287, %v3901, %v3902
    %v3904 = vrot.slane %v3880, 3
    %v3905 = vrot.slane %v3234, 3
    %v3906 = vsel %vm287, %v3904, %v3905
    %v3907 = vrot.slane %v3881, 3
    %v3908 = vsel %vm287, %v3902, %v3907
    %v3909 = vrot.slane %v3882, 3
    %v3910 = vsel %vm287, %v3905, %v3909
    %v3919 = vld [vmem:[#allocation8 + $0x600] sm:$0xff]
    %v3920 = vld [vmem:[#allocation8 + $0x608] sm:$0xff]
    %v3921 = vld [vmem:[#allocation8 + $0x610] sm:$0xff]
    %v3922 = vld [vmem:[#allocation8 + $0x618] sm:$0xff]
    %v3923 = vld [vmem:[#allocation8 + $0x620] sm:$0xff]
    %v3924 = vld [vmem:[#allocation8 + $0x628] sm:$0xff]
    %v3925 = vld [vmem:[#allocation8 + $0x630] sm:$0xff]
    %v3926 = vld [vmem:[#allocation8 + $0x638] sm:$0xff]
    %v3927 = vld [vmem:[#allocation8 + $0x640] sm:$0xff]
    %v3928 = vld [vmem:[#allocation8 + $0x648] sm:$0xff]
    %v3929 = vld [vmem:[#allocation8 + $0x650] sm:$0xff]
    %v3930 = vld [vmem:[#allocation8 + $0x658] sm:$0xff]
    %v3931 = vld [vmem:[#allocation8 + $0x660] sm:$0xff]
    %v3932 = vld [vmem:[#allocation8 + $0x668] sm:$0xff]
    %v3933 = vld [vmem:[#allocation8 + $0x670] sm:$0xff]
    %v3934 = vld [vmem:[#allocation8 + $0x678] sm:$0xff]
    %v3935 = vld [vmem:[#allocation8 + $0x680] sm:$0xff]
    %v3936 = vld [vmem:[#allocation8 + $0x688] sm:$0xff]
    %v3937 = vld [vmem:[#allocation8 + $0x690] sm:$0xff]
    %v3938 = vld [vmem:[#allocation8 + $0x698] sm:$0xff]
    %v3939 = vld [vmem:[#allocation8 + $0x6a0] sm:$0xff]
    %v3940 = vld [vmem:[#allocation8 + $0x6a8] sm:$0xff]
    %v3941 = vld [vmem:[#allocation8 + $0x6b0] sm:$0xff]
    %v3942 = vld [vmem:[#allocation8 + $0x6b8] sm:$0xff]
    %v3943 = vld [vmem:[#allocation8 + $0x6c0] sm:$0xff]
    %v3944 = vld [vmem:[#allocation8 + $0x6c8] sm:$0xff]
    %v3945 = vld [vmem:[#allocation8 + $0x6d0] sm:$0xff]
    %v3946 = vld [vmem:[#allocation8 + $0x6d8] sm:$0xff]
    %v3947 = vld [vmem:[#allocation8 + $0x6e0] sm:$0xff]
    %v3948 = vld [vmem:[#allocation8 + $0x6e8] sm:$0xff]
    %v3949 = vld [vmem:[#allocation8 + $0x6f0] sm:$0xff]
    %v3950 = vld [vmem:[#allocation8 + $0x6f8] sm:$0xff]
    %v3951 = vld [vmem:[#allocation8 + $0x700] sm:$0xff]
    %v3952 = vld [vmem:[#allocation8 + $0x708] sm:$0xff]
    %v3953 = vld [vmem:[#allocation8 + $0x710] sm:$0xff]
    %v3954 = vld [vmem:[#allocation8 + $0x718] sm:$0xff]
    %v3955 = vld [vmem:[#allocation8 + $0x720] sm:$0xff]
    %v3956 = vld [vmem:[#allocation8 + $0x728] sm:$0xff]
    %v3957 = vld [vmem:[#allocation8 + $0x730] sm:$0xff]
    %v3958 = vld [vmem:[#allocation8 + $0x738] sm:$0xff]
    %v3959 = vld [vmem:[#allocation8 + $0x740] sm:$0xff]
    %v3960 = vld [vmem:[#allocation8 + $0x748] sm:$0xff]
    %v3961 = vld [vmem:[#allocation8 + $0x750] sm:$0xff]
    %v3962 = vld [vmem:[#allocation8 + $0x758] sm:$0xff]
    %v3963 = vld [vmem:[#allocation8 + $0x760] sm:$0xff]
    %v3964 = vld [vmem:[#allocation8 + $0x768] sm:$0xff]
    %v3965 = vld [vmem:[#allocation8 + $0x770] sm:$0xff]
    %v3966 = vld [vmem:[#allocation8 + $0x778] sm:$0xff]
    %v3967 = vld [vmem:[#allocation8 + $0x780] sm:$0xff]
    %v3968 = vld [vmem:[#allocation8 + $0x788] sm:$0xff]
    %v3969 = vld [vmem:[#allocation8 + $0x790] sm:$0xff]
    %v3970 = vld [vmem:[#allocation8 + $0x798] sm:$0xff]
    %v3971 = vld [vmem:[#allocation8 + $0x7a0] sm:$0xff]
    %v3972 = vld [vmem:[#allocation8 + $0x7a8] sm:$0xff]
    %v3973 = vld [vmem:[#allocation8 + $0x7b0] sm:$0xff]
    %v3974 = vld [vmem:[#allocation8 + $0x7b8] sm:$0xff]
    %v3975 = vld [vmem:[#allocation8 + $0x7c0] sm:$0xff]
    %v3976 = vld [vmem:[#allocation8 + $0x7c8] sm:$0xff]
    %v3977 = vld [vmem:[#allocation8 + $0x7d0] sm:$0xff]
    %v3978 = vld [vmem:[#allocation8 + $0x7d8] sm:$0xff]
    %v3979 = vld [vmem:[#allocation8 + $0x7e0] sm:$0xff]
    %v3980 = vld [vmem:[#allocation8 + $0x7e8] sm:$0xff]
    %v3981 = vld [vmem:[#allocation8 + $0x7f0] sm:$0xff]
    %v3982 = vld [vmem:[#allocation8 + $0x7f8] sm:$0xff]
    %3983 = vmatpush.msra.mxu0 %v3949
    %3984 = vmatpush.msra.mxu0 %v3947
    %3985 = vmatpush.msra.mxu0 %v3945
    %3986 = vmatpush.msra.mxu0 %v3943
    %3987 = vmatpush.msra.mxu0 %v3941
    %3988 = vmatpush.msra.mxu0 %v3939
    %3989 = vmatpush.msra.mxu0 %v3937
    %3990 = vmatpush.msra.mxu0 %v3935
    %3991 = vmatpush.msra.mxu0 %v3933
    %3992 = vmatpush.msra.mxu0 %v3931
    %3993 = vmatpush.msra.mxu0 %v3929
    %3994 = vmatpush.msra.mxu0 %v3927
    %3995 = vmatpush.msra.mxu0 %v3925
    %3996 = vmatpush.msra.mxu0 %v3923
    %3997 = vmatpush.msra.mxu0 %v3921
    %3998 = vmatpush.msra.mxu0 %v3919
    %3999 = vmatmul.f32.gmra.mxu0 %v3893
    %v4000 = vpop.f32.mrf.mxu0
    %v4001 = vadd.f32 0.0, %v4000
    %4002 = vmatmul.f32.gmra.mxu0 %v3898
    %v4003 = vpop.f32.mrf.mxu0
    %v4004 = vadd.f32 0.0, %v4003
    %4005 = vmatmul.f32.gmra.mxu0 %v3903
    %v4006 = vpop.f32.mrf.mxu0
    %v4007 = vadd.f32 0.0, %v4006
    %4008 = vmatmul.f32.gmra.mxu0 %v3908
    %v4009 = vpop.f32.mrf.mxu0
    %v4010 = vadd.f32 0.0, %v4009
    %4011 = vdwg.mxu0
    %4012 = vmatpush.msra.mxu0 %v3981
    %4013 = vmatpush.msra.mxu0 %v3979
    %4014 = vmatpush.msra.mxu0 %v3977
    %4015 = vmatpush.msra.mxu0 %v3975
    %4016 = vmatpush.msra.mxu0 %v3973
    %4017 = vmatpush.msra.mxu0 %v3971
    %4018 = vmatpush.msra.mxu0 %v3969
    %4019 = vmatpush.msra.mxu0 %v3967
    %4020 = vmatpush.msra.mxu0 %v3965
    %4021 = vmatpush.msra.mxu0 %v3963
    %4022 = vmatpush.msra.mxu0 %v3961
    %4023 = vmatpush.msra.mxu0 %v3959
    %4024 = vmatpush.msra.mxu0 %v3957
    %4025 = vmatpush.msra.mxu0 %v3955
    %4026 = vmatpush.msra.mxu0 %v3953
    %4027 = vmatpush.msra.mxu0 %v3951
    %4028 = vmatmul.f32.gmra.mxu0 %v3896
    %v4029 = vpop.f32.mrf.mxu0
    %v4030 = vadd.f32 %v4001, %v4029
    %4031 = vmatmul.f32.gmra.mxu0 %v3900
    %v4032 = vpop.f32.mrf.mxu0
    %v4033 = vadd.f32 %v4004, %v4032
    %4034 = vmatmul.f32.gmra.mxu0 %v3906
    %v4035 = vpop.f32.mrf.mxu0
    %v4036 = vadd.f32 %v4007, %v4035
    %4037 = vmatmul.f32.gmra.mxu0 %v3910
    %v4038 = vpop.f32.mrf.mxu0
    %v4039 = vadd.f32 %v4010, %v4038
    %4040 = vdwg.mxu0
    %4041 = vmatpush.msra.mxu0 %v3950
    %4042 = vmatpush.msra.mxu0 %v3948
    %4043 = vmatpush.msra.mxu0 %v3946
    %4044 = vmatpush.msra.mxu0 %v3944
    %4045 = vmatpush.msra.mxu0 %v3942
    %4046 = vmatpush.msra.mxu0 %v3940
    %4047 = vmatpush.msra.mxu0 %v3938
    %4048 = vmatpush.msra.mxu0 %v3936
    %4049 = vmatpush.msra.mxu0 %v3934
    %4050 = vmatpush.msra.mxu0 %v3932
    %4051 = vmatpush.msra.mxu0 %v3930
    %4052 = vmatpush.msra.mxu0 %v3928
    %4053 = vmatpush.msra.mxu0 %v3926
    %4054 = vmatpush.msra.mxu0 %v3924
    %4055 = vmatpush.msra.mxu0 %v3922
    %4056 = vmatpush.msra.mxu0 %v3920
    %4057 = vmatmul.f32.gmra.mxu0 %v3893
    %v4058 = vpop.f32.mrf.mxu0
    %v4059 = vadd.f32 0.0, %v4058
    %4060 = vmatmul.f32.gmra.mxu0 %v3898
    %v4061 = vpop.f32.mrf.mxu0
    %v4062 = vadd.f32 0.0, %v4061
    %4063 = vmatmul.f32.gmra.mxu0 %v3903
    %v4064 = vpop.f32.mrf.mxu0
    %v4065 = vadd.f32 0.0, %v4064
    %4066 = vmatmul.f32.gmra.mxu0 %v3908
    %v4067 = vpop.f32.mrf.mxu0
    %v4068 = vadd.f32 0.0, %v4067
    %4069 = vdwg.mxu0
    %4070 = vmatpush.msra.mxu0 %v3982
    %4071 = vmatpush.msra.mxu0 %v3980
    %4072 = vmatpush.msra.mxu0 %v3978
    %4073 = vmatpush.msra.mxu0 %v3976
    %4074 = vmatpush.msra.mxu0 %v3974
    %4075 = vmatpush.msra.mxu0 %v3972
    %4076 = vmatpush.msra.mxu0 %v3970
    %4077 = vmatpush.msra.mxu0 %v3968
    %4078 = vmatpush.msra.mxu0 %v3966
    %4079 = vmatpush.msra.mxu0 %v3964
    %4080 = vmatpush.msra.mxu0 %v3962
    %4081 = vmatpush.msra.mxu0 %v3960
    %4082 = vmatpush.msra.mxu0 %v3958
    %4083 = vmatpush.msra.mxu0 %v3956
    %4084 = vmatpush.msra.mxu0 %v3954
    %4085 = vmatpush.msra.mxu0 %v3952
    %4086 = vmatmul.f32.gmra.mxu0 %v3896
    %v4087 = vpop.f32.mrf.mxu0
    %v4088 = vadd.f32 %v4059, %v4087
    %4089 = vmatmul.f32.gmra.mxu0 %v3900
    %v4090 = vpop.f32.mrf.mxu0
    %v4091 = vadd.f32 %v4062, %v4090
    %4092 = vmatmul.f32.gmra.mxu0 %v3906
    %v4093 = vpop.f32.mrf.mxu0
    %v4094 = vadd.f32 %v4065, %v4093
    %4095 = vmatmul.f32.gmra.mxu0 %v3910
    %v4096 = vpop.f32.mrf.mxu0
    %v4097 = vadd.f32 %v4068, %v4096
    %4098 = vdwg.mxu0
    %v4099 = vadd.f32 %v3867, %v4030
    %v4100 = vadd.f32 %v3868, %v4088
    %v4101 = vadd.f32 %v3869, %v4033
    %v4102 = vadd.f32 %v3870, %v4091
    %v4103 = vadd.f32 %v3871, %v4036
    %v4104 = vadd.f32 %v3872, %v4094
    %v4105 = vadd.f32 %v3873, %v4039
    %v4106 = vadd.f32 %v3874, %v4097
    %v4107 = vld [vmem:[#allocation2] sm:$0xf0]
    %v4108 = vld [vmem:[#allocation2 + $0x8] sm:$0xf0]
    %v4109 = vld [vmem:[#allocation2 + $0x20] sm:$0xf]
    %v4110 = vld [vmem:[#allocation2 + $0x28] sm:$0xf]
    %v4111 = vld [vmem:[#allocation2 + $0x30] sm:$0xf0]
    %v4112 = vld [vmem:[#allocation2 + $0x38] sm:$0xf0]
    %v4113 = vld [vmem:[#allocation2 + $0x50] sm:$0xf]
    %v4114 = vld [vmem:[#allocation2 + $0x58] sm:$0xf]
    %v4123 = vrot.slane %v4107, 4
    %v4124 = vrot.slane %v3229, 4
    %v4125 = vsel %vm332, %v4123, %v4124
    %v4126 = vrot.slane %v4108, 4
    %v4127 = vrot.slane %v3230, 4
    %v4128 = vsel %vm332, %v4126, %v4127
    %v4129 = vrot.slane %v4109, 4
    %v4130 = vsel %vm332, %v4124, %v4129
    %v4131 = vrot.slane %v4110, 4
    %v4132 = vsel %vm332, %v4127, %v4131
    %v4133 = vrot.slane %v4111, 4
    %v4134 = vrot.slane %v3233, 4
    %v4135 = vsel %vm332, %v4133, %v4134
    %v4136 = vrot.slane %v4112, 4
    %v4137 = vrot.slane %v3234, 4
    %v4138 = vsel %vm332, %v4136, %v4137
    %v4139 = vrot.slane %v4113, 4
    %v4140 = vsel %vm332, %v4134, %v4139
    %v4141 = vrot.slane %v4114, 4
    %v4142 = vsel %vm332, %v4137, %v4141
    %v4151 = vld [vmem:[#allocation8 + $0x800] sm:$0xff]
    %v4152 = vld [vmem:[#allocation8 + $0x808] sm:$0xff]
    %v4153 = vld [vmem:[#allocation8 + $0x810] sm:$0xff]
    %v4154 = vld [vmem:[#allocation8 + $0x818] sm:$0xff]
    %v4155 = vld [vmem:[#allocation8 + $0x820] sm:$0xff]
    %v4156 = vld [vmem:[#allocation8 + $0x828] sm:$0xff]
    %v4157 = vld [vmem:[#allocation8 + $0x830] sm:$0xff]
    %v4158 = vld [vmem:[#allocation8 + $0x838] sm:$0xff]
    %v4159 = vld [vmem:[#allocation8 + $0x840] sm:$0xff]
    %v4160 = vld [vmem:[#allocation8 + $0x848] sm:$0xff]
    %v4161 = vld [vmem:[#allocation8 + $0x850] sm:$0xff]
    %v4162 = vld [vmem:[#allocation8 + $0x858] sm:$0xff]
    %v4163 = vld [vmem:[#allocation8 + $0x860] sm:$0xff]
    %v4164 = vld [vmem:[#allocation8 + $0x868] sm:$0xff]
    %v4165 = vld [vmem:[#allocation8 + $0x870] sm:$0xff]
    %v4166 = vld [vmem:[#allocation8 + $0x878] sm:$0xff]
    %v4167 = vld [vmem:[#allocation8 + $0x880] sm:$0xff]
    %v4168 = vld [vmem:[#allocation8 + $0x888] sm:$0xff]
    %v4169 = vld [vmem:[#allocation8 + $0x890] sm:$0xff]
    %v4170 = vld [vmem:[#allocation8 + $0x898] sm:$0xff]
    %v4171 = vld [vmem:[#allocation8 + $0x8a0] sm:$0xff]
    %v4172 = vld [vmem:[#allocation8 + $0x8a8] sm:$0xff]
    %v4173 = vld [vmem:[#allocation8 + $0x8b0] sm:$0xff]
    %v4174 = vld [vmem:[#allocation8 + $0x8b8] sm:$0xff]
    %v4175 = vld [vmem:[#allocation8 + $0x8c0] sm:$0xff]
    %v4176 = vld [vmem:[#allocation8 + $0x8c8] sm:$0xff]
    %v4177 = vld [vmem:[#allocation8 + $0x8d0] sm:$0xff]
    %v4178 = vld [vmem:[#allocation8 + $0x8d8] sm:$0xff]
    %v4179 = vld [vmem:[#allocation8 + $0x8e0] sm:$0xff]
    %v4180 = vld [vmem:[#allocation8 + $0x8e8] sm:$0xff]
    %v4181 = vld [vmem:[#allocation8 + $0x8f0] sm:$0xff]
    %v4182 = vld [vmem:[#allocation8 + $0x8f8] sm:$0xff]
    %v4183 = vld [vmem:[#allocation8 + $0x900] sm:$0xff]
    %v4184 = vld [vmem:[#allocation8 + $0x908] sm:$0xff]
    %v4185 = vld [vmem:[#allocation8 + $0x910] sm:$0xff]
    %v4186 = vld [vmem:[#allocation8 + $0x918] sm:$0xff]
    %v4187 = vld [vmem:[#allocation8 + $0x920] sm:$0xff]
    %v4188 = vld [vmem:[#allocation8 + $0x928] sm:$0xff]
    %v4189 = vld [vmem:[#allocation8 + $0x930] sm:$0xff]
    %v4190 = vld [vmem:[#allocation8 + $0x938] sm:$0xff]
    %v4191 = vld [vmem:[#allocation8 + $0x940] sm:$0xff]
    %v4192 = vld [vmem:[#allocation8 + $0x948] sm:$0xff]
    %v4193 = vld [vmem:[#allocation8 + $0x950] sm:$0xff]
    %v4194 = vld [vmem:[#allocation8 + $0x958] sm:$0xff]
    %v4195 = vld [vmem:[#allocation8 + $0x960] sm:$0xff]
    %v4196 = vld [vmem:[#allocation8 + $0x968] sm:$0xff]
    %v4197 = vld [vmem:[#allocation8 + $0x970] sm:$0xff]
    %v4198 = vld [vmem:[#allocation8 + $0x978] sm:$0xff]
    %v4199 = vld [vmem:[#allocation8 + $0x980] sm:$0xff]
    %v4200 = vld [vmem:[#allocation8 + $0x988] sm:$0xff]
    %v4201 = vld [vmem:[#allocation8 + $0x990] sm:$0xff]
    %v4202 = vld [vmem:[#allocation8 + $0x998] sm:$0xff]
    %v4203 = vld [vmem:[#allocation8 + $0x9a0] sm:$0xff]
    %v4204 = vld [vmem:[#allocation8 + $0x9a8] sm:$0xff]
    %v4205 = vld [vmem:[#allocation8 + $0x9b0] sm:$0xff]
    %v4206 = vld [vmem:[#allocation8 + $0x9b8] sm:$0xff]
    %v4207 = vld [vmem:[#allocation8 + $0x9c0] sm:$0xff]
    %v4208 = vld [vmem:[#allocation8 + $0x9c8] sm:$0xff]
    %v4209 = vld [vmem:[#allocation8 + $0x9d0] sm:$0xff]
    %v4210 = vld [vmem:[#allocation8 + $0x9d8] sm:$0xff]
    %v4211 = vld [vmem:[#allocation8 + $0x9e0] sm:$0xff]
    %v4212 = vld [vmem:[#allocation8 + $0x9e8] sm:$0xff]
    %v4213 = vld [vmem:[#allocation8 + $0x9f0] sm:$0xff]
    %v4214 = vld [vmem:[#allocation8 + $0x9f8] sm:$0xff]
    %4215 = vmatpush.msra.mxu0 %v4181
    %4216 = vmatpush.msra.mxu0 %v4179
    %4217 = vmatpush.msra.mxu0 %v4177
    %4218 = vmatpush.msra.mxu0 %v4175
    %4219 = vmatpush.msra.mxu0 %v4173
    %4220 = vmatpush.msra.mxu0 %v4171
    %4221 = vmatpush.msra.mxu0 %v4169
    %4222 = vmatpush.msra.mxu0 %v4167
    %4223 = vmatpush.msra.mxu0 %v4165
    %4224 = vmatpush.msra.mxu0 %v4163
    %4225 = vmatpush.msra.mxu0 %v4161
    %4226 = vmatpush.msra.mxu0 %v4159
    %4227 = vmatpush.msra.mxu0 %v4157
    %4228 = vmatpush.msra.mxu0 %v4155
    %4229 = vmatpush.msra.mxu0 %v4153
    %4230 = vmatpush.msra.mxu0 %v4151
    %4231 = vmatmul.f32.gmra.mxu0 %v4125
    %v4232 = vpop.f32.mrf.mxu0
    %v4233 = vadd.f32 0.0, %v4232
    %4234 = vmatmul.f32.gmra.mxu0 %v4130
    %v4235 = vpop.f32.mrf.mxu0
    %v4236 = vadd.f32 0.0, %v4235
    %4237 = vmatmul.f32.gmra.mxu0 %v4135
    %v4238 = vpop.f32.mrf.mxu0
    %v4239 = vadd.f32 0.0, %v4238
    %4240 = vmatmul.f32.gmra.mxu0 %v4140
    %v4241 = vpop.f32.mrf.mxu0
    %v4242 = vadd.f32 0.0, %v4241
    %4243 = vdwg.mxu0
    %4244 = vmatpush.msra.mxu0 %v4213
    %4245 = vmatpush.msra.mxu0 %v4211
    %4246 = vmatpush.msra.mxu0 %v4209
    %4247 = vmatpush.msra.mxu0 %v4207
    %4248 = vmatpush.msra.mxu0 %v4205
    %4249 = vmatpush.msra.mxu0 %v4203
    %4250 = vmatpush.msra.mxu0 %v4201
    %4251 = vmatpush.msra.mxu0 %v4199
    %4252 = vmatpush.msra.mxu0 %v4197
    %4253 = vmatpush.msra.mxu0 %v4195
    %4254 = vmatpush.msra.mxu0 %v4193
    %4255 = vmatpush.msra.mxu0 %v4191
    %4256 = vmatpush.msra.mxu0 %v4189
    %4257 = vmatpush.msra.mxu0 %v4187
    %4258 = vmatpush.msra.mxu0 %v4185
    %4259 = vmatpush.msra.mxu0 %v4183
    %4260 = vmatmul.f32.gmra.mxu0 %v4128
    %v4261 = vpop.f32.mrf.mxu0
    %v4262 = vadd.f32 %v4233, %v4261
    %4263 = vmatmul.f32.gmra.mxu0 %v4132
    %v4264 = vpop.f32.mrf.mxu0
    %v4265 = vadd.f32 %v4236, %v4264
    %4266 = vmatmul.f32.gmra.mxu0 %v4138
    %v4267 = vpop.f32.mrf.mxu0
    %v4268 = vadd.f32 %v4239, %v4267
    %4269 = vmatmul.f32.gmra.mxu0 %v4142
    %v4270 = vpop.f32.mrf.mxu0
    %v4271 = vadd.f32 %v4242, %v4270
    %4272 = vdwg.mxu0
    %4273 = vmatpush.msra.mxu0 %v4182
    %4274 = vmatpush.msra.mxu0 %v4180
    %4275 = vmatpush.msra.mxu0 %v4178
    %4276 = vmatpush.msra.mxu0 %v4176
    %4277 = vmatpush.msra.mxu0 %v4174
    %4278 = vmatpush.msra.mxu0 %v4172
    %4279 = vmatpush.msra.mxu0 %v4170
    %4280 = vmatpush.msra.mxu0 %v4168
    %4281 = vmatpush.msra.mxu0 %v4166
    %4282 = vmatpush.msra.mxu0 %v4164
    %4283 = vmatpush.msra.mxu0 %v4162
    %4284 = vmatpush.msra.mxu0 %v4160
    %4285 = vmatpush.msra.mxu0 %v4158
    %4286 = vmatpush.msra.mxu0 %v4156
    %4287 = vmatpush.msra.mxu0 %v4154
    %4288 = vmatpush.msra.mxu0 %v4152
    %4289 = vmatmul.f32.gmra.mxu0 %v4125
    %v4290 = vpop.f32.mrf.mxu0
    %v4291 = vadd.f32 0.0, %v4290
    %4292 = vmatmul.f32.gmra.mxu0 %v4130
    %v4293 = vpop.f32.mrf.mxu0
    %v4294 = vadd.f32 0.0, %v4293
    %4295 = vmatmul.f32.gmra.mxu0 %v4135
    %v4296 = vpop.f32.mrf.mxu0
    %v4297 = vadd.f32 0.0, %v4296
    %4298 = vmatmul.f32.gmra.mxu0 %v4140
    %v4299 = vpop.f32.mrf.mxu0
    %v4300 = vadd.f32 0.0, %v4299
    %4301 = vdwg.mxu0
    %4302 = vmatpush.msra.mxu0 %v4214
    %4303 = vmatpush.msra.mxu0 %v4212
    %4304 = vmatpush.msra.mxu0 %v4210
    %4305 = vmatpush.msra.mxu0 %v4208
    %4306 = vmatpush.msra.mxu0 %v4206
    %4307 = vmatpush.msra.mxu0 %v4204
    %4308 = vmatpush.msra.mxu0 %v4202
    %4309 = vmatpush.msra.mxu0 %v4200
    %4310 = vmatpush.msra.mxu0 %v4198
    %4311 = vmatpush.msra.mxu0 %v4196
    %4312 = vmatpush.msra.mxu0 %v4194
    %4313 = vmatpush.msra.mxu0 %v4192
    %4314 = vmatpush.msra.mxu0 %v4190
    %4315 = vmatpush.msra.mxu0 %v4188
    %4316 = vmatpush.msra.mxu0 %v4186
    %4317 = vmatpush.msra.mxu0 %v4184
    %4318 = vmatmul.f32.gmra.mxu0 %v4128
    %v4319 = vpop.f32.mrf.mxu0
    %v4320 = vadd.f32 %v4291, %v4319
    %4321 = vmatmul.f32.gmra.mxu0 %v4132
    %v4322 = vpop.f32.mrf.mxu0
    %v4323 = vadd.f32 %v4294, %v4322
    %4324 = vmatmul.f32.gmra.mxu0 %v4138
    %v4325 = vpop.f32.mrf.mxu0
    %v4326 = vadd.f32 %v4297, %v4325
    %4327 = vmatmul.f32.gmra.mxu0 %v4142
    %v4328 = vpop.f32.mrf.mxu0
    %v4329 = vadd.f32 %v4300, %v4328
    %4330 = vdwg.mxu0
    %v4331 = vadd.f32 %v4099, %v4262
    %v4332 = vadd.f32 %v4100, %v4320
    %v4333 = vadd.f32 %v4101, %v4265
    %v4334 = vadd.f32 %v4102, %v4323
    %v4335 = vadd.f32 %v4103, %v4268
    %v4336 = vadd.f32 %v4104, %v4326
    %v4337 = vadd.f32 %v4105, %v4271
    %v4338 = vadd.f32 %v4106, %v4329
    %v4339 = vld [vmem:[%s14] sm:$0x3]
    %v4341 = vperm.slane %v4339, 0
    %v4342 = vperm.slane %v4339, 1
    %v4345 = vadd.f32 %v4331, %v4341
    %v4346 = vadd.f32 %v4332, %v4342
    %v4347 = vadd.f32 %v4333, %v4341
    %v4348 = vadd.f32 %v4334, %v4342
    %v4349 = vadd.f32 %v4335, %v4341
    %v4350 = vadd.f32 %v4336, %v4342
    %v4351 = vadd.f32 %v4337, %v4341
    %v4352 = vadd.f32 %v4338, %v4342
    %v4353 = vmax.f32 %v4345, 0.0
    %v4354 = vmax.f32 %v4346, 0.0
    %v4355 = vmax.f32 %v4347, 0.0
    %v4356 = vmax.f32 %v4348, 0.0
    %v4357 = vmax.f32 %v4349, 0.0
    %v4358 = vmax.f32 %v4350, 0.0
    %v4359 = vmax.f32 %v4351, 0.0
    %v4360 = vmax.f32 %v4352, 0.0
    %v4369 = vrot.slane %v4353, 6
    %v4370 = vrot.slane %v4354, 6
    %v4371 = vrot.slane %v4355, 6
    %v4372 = vsel %vm133, %v4369, %v4371
    %v4373 = vrot.slane %v4356, 6
    %v4374 = vsel %vm133, %v4370, %v4373
    %v4375 = vrot.slane %v4357, 6
    %v4376 = vrot.slane %v4358, 6
    %v4377 = vrot.slane %v4359, 6
    %v4378 = vsel %vm133, %v4375, %v4377
    %v4379 = vrot.slane %v4360, 6
    %v4380 = vsel %vm133, %v4376, %v4379
    %4393 = vst [vmem:[#allocation2] sm:$0xfc] %v4369
    %4394 = vst [vmem:[#allocation2 + $0x8] sm:$0xfc] %v4370
    %4395 = vst [vmem:[#allocation2 + $0x10] sm:$0xff] %v4372
    %4396 = vst [vmem:[#allocation2 + $0x18] sm:$0xff] %v4374
    %4397 = vst [vmem:[#allocation2 + $0x20] sm:$0x3] %v4371
    %4398 = vst [vmem:[#allocation2 + $0x28] sm:$0x3] %v4373
    %4399 = vst [vmem:[#allocation2 + $0x30] sm:$0xfc] %v4375
    %4400 = vst [vmem:[#allocation2 + $0x38] sm:$0xfc] %v4376
    %4401 = vst [vmem:[#allocation2 + $0x40] sm:$0xff] %v4378
    %4402 = vst [vmem:[#allocation2 + $0x48] sm:$0xff] %v4380
    %4403 = vst [vmem:[#allocation2 + $0x50] sm:$0x3] %v4377
    %4404 = vst [vmem:[#allocation2 + $0x58] sm:$0x3] %v4379
    %v4405 = vld [vmem:[#allocation2] sm:$0xff]
    %v4406 = vld [vmem:[#allocation2 + $0x8] sm:$0xff]
    %v4407 = vld [vmem:[#allocation2 + $0x10] sm:$0xff]
    %v4408 = vld [vmem:[#allocation2 + $0x18] sm:$0xff]
    %v4409 = vld [vmem:[#allocation2 + $0x30] sm:$0xff]
    %v4410 = vld [vmem:[#allocation2 + $0x38] sm:$0xff]
    %v4411 = vld [vmem:[#allocation2 + $0x40] sm:$0xff]
    %v4412 = vld [vmem:[#allocation2 + $0x48] sm:$0xff]
    %v4413 = vld [vmem:[%s15] sm:$0xff]
    %v4414 = vld [vmem:[%s15 + $0x8] sm:$0xff]
    %v4415 = vld [vmem:[%s15 + $0x10] sm:$0xff]
    %v4416 = vld [vmem:[%s15 + $0x18] sm:$0xff]
    %v4417 = vld [vmem:[%s15 + $0x20] sm:$0xff]
    %v4418 = vld [vmem:[%s15 + $0x28] sm:$0xff]
    %v4419 = vld [vmem:[%s15 + $0x30] sm:$0xff]
    %v4420 = vld [vmem:[%s15 + $0x38] sm:$0xff]
    %v4421 = vld [vmem:[%s15 + $0x40] sm:$0xff]
    %v4422 = vld [vmem:[%s15 + $0x48] sm:$0xff]
    %v4423 = vld [vmem:[%s15 + $0x50] sm:$0xff]
    %v4424 = vld [vmem:[%s15 + $0x58] sm:$0xff]
    %v4425 = vld [vmem:[%s15 + $0x60] sm:$0xff]
    %v4426 = vld [vmem:[%s15 + $0x68] sm:$0xff]
    %v4427 = vld [vmem:[%s15 + $0x70] sm:$0xff]
    %v4428 = vld [vmem:[%s15 + $0x78] sm:$0xff]
    %v4429 = vld [vmem:[%s15 + $0x80] sm:$0xff]
    %v4430 = vld [vmem:[%s15 + $0x88] sm:$0xff]
    %v4431 = vld [vmem:[%s15 + $0x90] sm:$0xff]
    %v4432 = vld [vmem:[%s15 + $0x98] sm:$0xff]
    %v4433 = vld [vmem:[%s15 + $0xa0] sm:$0xff]
    %v4434 = vld [vmem:[%s15 + $0xa8] sm:$0xff]
    %v4435 = vld [vmem:[%s15 + $0xb0] sm:$0xff]
    %v4436 = vld [vmem:[%s15 + $0xb8] sm:$0xff]
    %v4437 = vld [vmem:[%s15 + $0xc0] sm:$0xff]
    %v4438 = vld [vmem:[%s15 + $0xc8] sm:$0xff]
    %v4439 = vld [vmem:[%s15 + $0xd0] sm:$0xff]
    %v4440 = vld [vmem:[%s15 + $0xd8] sm:$0xff]
    %v4441 = vld [vmem:[%s15 + $0xe0] sm:$0xff]
    %v4442 = vld [vmem:[%s15 + $0xe8] sm:$0xff]
    %v4443 = vld [vmem:[%s15 + $0xf0] sm:$0xff]
    %v4444 = vld [vmem:[%s15 + $0xf8] sm:$0xff]
    %v4445 = vld [vmem:[#allocation2] sm:$0xfe]
    %v4446 = vld [vmem:[#allocation2 + $0x8] sm:$0xfe]
    %v4447 = vld [vmem:[#allocation2 + $0x20] sm:$0x1]
    %v4448 = vld [vmem:[#allocation2 + $0x28] sm:$0x1]
    %v4449 = vld [vmem:[#allocation2 + $0x30] sm:$0xfe]
    %v4450 = vld [vmem:[#allocation2 + $0x38] sm:$0xfe]
    %v4451 = vld [vmem:[#allocation2 + $0x50] sm:$0x1]
    %v4452 = vld [vmem:[#allocation2 + $0x58] sm:$0x1]
    %v4465 = vrot.slane %v4445, 1
    %v4466 = vrot.slane %v4407, 1
    %v4467 = vsel %vm197, %v4465, %v4466
    %v4468 = vrot.slane %v4446, 1
    %v4469 = vrot.slane %v4408, 1
    %v4470 = vsel %vm197, %v4468, %v4469
    %v4471 = vrot.slane %v4447, 1
    %v4472 = vsel %vm197, %v4466, %v4471
    %v4473 = vrot.slane %v4448, 1
    %v4474 = vsel %vm197, %v4469, %v4473
    %v4475 = vrot.slane %v4449, 1
    %v4476 = vrot.slane %v4411, 1
    %v4477 = vsel %vm197, %v4475, %v4476
    %v4478 = vrot.slane %v4450, 1
    %v4479 = vrot.slane %v4412, 1
    %v4480 = vsel %vm197, %v4478, %v4479
    %v4481 = vrot.slane %v4451, 1
    %v4482 = vsel %vm197, %v4476, %v4481
    %v4483 = vrot.slane %v4452, 1
    %v4484 = vsel %vm197, %v4479, %v4483
    %v4493 = vld [vmem:[%s15 + $0x100] sm:$0xff]
    %v4494 = vld [vmem:[%s15 + $0x108] sm:$0xff]
    %v4495 = vld [vmem:[%s15 + $0x110] sm:$0xff]
    %v4496 = vld [vmem:[%s15 + $0x118] sm:$0xff]
    %v4497 = vld [vmem:[%s15 + $0x120] sm:$0xff]
    %v4498 = vld [vmem:[%s15 + $0x128] sm:$0xff]
    %v4499 = vld [vmem:[%s15 + $0x130] sm:$0xff]
    %v4500 = vld [vmem:[%s15 + $0x138] sm:$0xff]
    %v4501 = vld [vmem:[%s15 + $0x140] sm:$0xff]
    %v4502 = vld [vmem:[%s15 + $0x148] sm:$0xff]
    %v4503 = vld [vmem:[%s15 + $0x150] sm:$0xff]
    %v4504 = vld [vmem:[%s15 + $0x158] sm:$0xff]
    %v4505 = vld [vmem:[%s15 + $0x160] sm:$0xff]
    %v4506 = vld [vmem:[%s15 + $0x168] sm:$0xff]
    %v4507 = vld [vmem:[%s15 + $0x170] sm:$0xff]
    %v4508 = vld [vmem:[%s15 + $0x178] sm:$0xff]
    %v4509 = vld [vmem:[%s15 + $0x180] sm:$0xff]
    %v4510 = vld [vmem:[%s15 + $0x188] sm:$0xff]
    %v4511 = vld [vmem:[%s15 + $0x190] sm:$0xff]
    %v4512 = vld [vmem:[%s15 + $0x198] sm:$0xff]
    %v4513 = vld [vmem:[%s15 + $0x1a0] sm:$0xff]
    %v4514 = vld [vmem:[%s15 + $0x1a8] sm:$0xff]
    %v4515 = vld [vmem:[%s15 + $0x1b0] sm:$0xff]
    %v4516 = vld [vmem:[%s15 + $0x1b8] sm:$0xff]
    %v4517 = vld [vmem:[%s15 + $0x1c0] sm:$0xff]
    %v4518 = vld [vmem:[%s15 + $0x1c8] sm:$0xff]
    %v4519 = vld [vmem:[%s15 + $0x1d0] sm:$0xff]
    %v4520 = vld [vmem:[%s15 + $0x1d8] sm:$0xff]
    %v4521 = vld [vmem:[%s15 + $0x1e0] sm:$0xff]
    %v4522 = vld [vmem:[%s15 + $0x1e8] sm:$0xff]
    %v4523 = vld [vmem:[%s15 + $0x1f0] sm:$0xff]
    %v4524 = vld [vmem:[%s15 + $0x1f8] sm:$0xff]
    %4525 = vmatpush.msra.mxu0 %v4508
    %4526 = vmatpush.msra.mxu0 %v4507
    %4527 = vmatpush.msra.mxu0 %v4506
    %4528 = vmatpush.msra.mxu0 %v4505
    %4529 = vmatpush.msra.mxu0 %v4504
    %4530 = vmatpush.msra.mxu0 %v4503
    %4531 = vmatpush.msra.mxu0 %v4502
    %4532 = vmatpush.msra.mxu0 %v4501
    %4533 = vmatpush.msra.mxu0 %v4500
    %4534 = vmatpush.msra.mxu0 %v4499
    %4535 = vmatpush.msra.mxu0 %v4498
    %4536 = vmatpush.msra.mxu0 %v4497
    %4537 = vmatpush.msra.mxu0 %v4496
    %4538 = vmatpush.msra.mxu0 %v4495
    %4539 = vmatpush.msra.mxu0 %v4494
    %4540 = vmatpush.msra.mxu0 %v4493
    %4541 = vmatmul.f32.gmra.mxu0 %v4467
    %v4542 = vpop.f32.mrf.mxu0
    %v4543 = vadd.f32 0.0, %v4542
    %4544 = vmatmul.f32.gmra.mxu0 %v4472
    %v4545 = vpop.f32.mrf.mxu0
    %v4546 = vadd.f32 0.0, %v4545
    %4547 = vmatmul.f32.gmra.mxu0 %v4477
    %v4548 = vpop.f32.mrf.mxu0
    %v4549 = vadd.f32 0.0, %v4548
    %4550 = vmatmul.f32.gmra.mxu0 %v4482
    %v4551 = vpop.f32.mrf.mxu0
    %v4552 = vadd.f32 0.0, %v4551
    %4553 = vdwg.mxu0
    %4554 = vmatpush.msra.mxu0 %v4524
    %4555 = vmatpush.msra.mxu0 %v4523
    %4556 = vmatpush.msra.mxu0 %v4522
    %4557 = vmatpush.msra.mxu0 %v4521
    %4558 = vmatpush.msra.mxu0 %v4520
    %4559 = vmatpush.msra.mxu0 %v4519
    %4560 = vmatpush.msra.mxu0 %v4518
    %4561 = vmatpush.msra.mxu0 %v4517
    %4562 = vmatpush.msra.mxu0 %v4516
    %4563 = vmatpush.msra.mxu0 %v4515
    %4564 = vmatpush.msra.mxu0 %v4514
    %4565 = vmatpush.msra.mxu0 %v4513
    %4566 = vmatpush.msra.mxu0 %v4512
    %4567 = vmatpush.msra.mxu0 %v4511
    %4568 = vmatpush.msra.mxu0 %v4510
    %4569 = vmatpush.msra.mxu0 %v4509
    %4570 = vmatmul.f32.gmra.mxu0 %v4470
    %v4571 = vpop.f32.mrf.mxu0
    %v4572 = vadd.f32 %v4543, %v4571
    %4573 = vmatmul.f32.gmra.mxu0 %v4474
    %v4574 = vpop.f32.mrf.mxu0
    %v4575 = vadd.f32 %v4546, %v4574
    %4576 = vmatmul.f32.gmra.mxu0 %v4480
    %v4577 = vpop.f32.mrf.mxu0
    %v4578 = vadd.f32 %v4549, %v4577
    %4579 = vmatmul.f32.gmra.mxu0 %v4484
    %v4580 = vpop.f32.mrf.mxu0
    %v4581 = vadd.f32 %v4552, %v4580
    %4582 = vdwg.mxu0
    %4583 = vmatpush.msra.mxu0 %v4428
    %4584 = vmatpush.msra.mxu0 %v4427
    %4585 = vmatpush.msra.mxu0 %v4426
    %4586 = vmatpush.msra.mxu0 %v4425
    %4587 = vmatpush.msra.mxu0 %v4424
    %4588 = vmatpush.msra.mxu0 %v4423
    %4589 = vmatpush.msra.mxu0 %v4422
    %4590 = vmatpush.msra.mxu0 %v4421
    %4591 = vmatpush.msra.mxu0 %v4420
    %4592 = vmatpush.msra.mxu0 %v4419
    %4593 = vmatpush.msra.mxu0 %v4418
    %4594 = vmatpush.msra.mxu0 %v4417
    %4595 = vmatpush.msra.mxu0 %v4416
    %4596 = vmatpush.msra.mxu0 %v4415
    %4597 = vmatpush.msra.mxu0 %v4414
    %4598 = vmatpush.msra.mxu0 %v4413
    %4599 = vmatmul.f32.gmra.mxu0 %v4405
    %v4600 = vpop.f32.mrf.mxu0
    %v4601 = vadd.f32 %v4572, %v4600
    %4602 = vmatmul.f32.gmra.mxu0 %v4407
    %v4603 = vpop.f32.mrf.mxu0
    %v4604 = vadd.f32 %v4575, %v4603
    %4605 = vmatmul.f32.gmra.mxu0 %v4409
    %v4606 = vpop.f32.mrf.mxu0
    %v4607 = vadd.f32 %v4578, %v4606
    %4608 = vmatmul.f32.gmra.mxu0 %v4411
    %v4609 = vpop.f32.mrf.mxu0
    %v4610 = vadd.f32 %v4581, %v4609
    %4611 = vdwg.mxu0
    %4612 = vmatpush.msra.mxu0 %v4444
    %4613 = vmatpush.msra.mxu0 %v4443
    %4614 = vmatpush.msra.mxu0 %v4442
    %4615 = vmatpush.msra.mxu0 %v4441
    %4616 = vmatpush.msra.mxu0 %v4440
    %4617 = vmatpush.msra.mxu0 %v4439
    %4618 = vmatpush.msra.mxu0 %v4438
    %4619 = vmatpush.msra.mxu0 %v4437
    %4620 = vmatpush.msra.mxu0 %v4436
    %4621 = vmatpush.msra.mxu0 %v4435
    %4622 = vmatpush.msra.mxu0 %v4434
    %4623 = vmatpush.msra.mxu0 %v4433
    %4624 = vmatpush.msra.mxu0 %v4432
    %4625 = vmatpush.msra.mxu0 %v4431
    %4626 = vmatpush.msra.mxu0 %v4430
    %4627 = vmatpush.msra.mxu0 %v4429
    %4628 = vmatmul.f32.gmra.mxu0 %v4406
    %v4629 = vpop.f32.mrf.mxu0
    %v4630 = vadd.f32 %v4601, %v4629
    %4631 = vmatmul.f32.gmra.mxu0 %v4408
    %v4632 = vpop.f32.mrf.mxu0
    %v4633 = vadd.f32 %v4604, %v4632
    %4634 = vmatmul.f32.gmra.mxu0 %v4410
    %v4635 = vpop.f32.mrf.mxu0
    %v4636 = vadd.f32 %v4607, %v4635
    %4637 = vmatmul.f32.gmra.mxu0 %v4412
    %v4638 = vpop.f32.mrf.mxu0
    %v4639 = vadd.f32 %v4610, %v4638
    %4640 = vdwg.mxu0
    %v4641 = vld [vmem:[#allocation2] sm:$0xfc]
    %v4642 = vld [vmem:[#allocation2 + $0x8] sm:$0xfc]
    %v4643 = vld [vmem:[#allocation2 + $0x20] sm:$0x3]
    %v4644 = vld [vmem:[#allocation2 + $0x28] sm:$0x3]
    %v4645 = vld [vmem:[#allocation2 + $0x30] sm:$0xfc]
    %v4646 = vld [vmem:[#allocation2 + $0x38] sm:$0xfc]
    %v4647 = vld [vmem:[#allocation2 + $0x50] sm:$0x3]
    %v4648 = vld [vmem:[#allocation2 + $0x58] sm:$0x3]
    %v4657 = vrot.slane %v4641, 2
    %v4658 = vrot.slane %v4407, 2
    %v4659 = vsel %vm242, %v4657, %v4658
    %v4660 = vrot.slane %v4642, 2
    %v4661 = vrot.slane %v4408, 2
    %v4662 = vsel %vm242, %v4660, %v4661
    %v4663 = vrot.slane %v4643, 2
    %v4664 = vsel %vm242, %v4658, %v4663
    %v4665 = vrot.slane %v4644, 2
    %v4666 = vsel %vm242, %v4661, %v4665
    %v4667 = vrot.slane %v4645, 2
    %v4668 = vrot.slane %v4411, 2
    %v4669 = vsel %vm242, %v4667, %v4668
    %v4670 = vrot.slane %v4646, 2
    %v4671 = vrot.slane %v4412, 2
    %v4672 = vsel %vm242, %v4670, %v4671
    %v4673 = vrot.slane %v4647, 2
    %v4674 = vsel %vm242, %v4668, %v4673
    %v4675 = vrot.slane %v4648, 2
    %v4676 = vsel %vm242, %v4671, %v4675
    %v4685 = vld [vmem:[%s15 + $0x200] sm:$0xff]
    %v4686 = vld [vmem:[%s15 + $0x208] sm:$0xff]
    %v4687 = vld [vmem:[%s15 + $0x210] sm:$0xff]
    %v4688 = vld [vmem:[%s15 + $0x218] sm:$0xff]
    %v4689 = vld [vmem:[%s15 + $0x220] sm:$0xff]
    %v4690 = vld [vmem:[%s15 + $0x228] sm:$0xff]
    %v4691 = vld [vmem:[%s15 + $0x230] sm:$0xff]
    %v4692 = vld [vmem:[%s15 + $0x238] sm:$0xff]
    %v4693 = vld [vmem:[%s15 + $0x240] sm:$0xff]
    %v4694 = vld [vmem:[%s15 + $0x248] sm:$0xff]
    %v4695 = vld [vmem:[%s15 + $0x250] sm:$0xff]
    %v4696 = vld [vmem:[%s15 + $0x258] sm:$0xff]
    %v4697 = vld [vmem:[%s15 + $0x260] sm:$0xff]
    %v4698 = vld [vmem:[%s15 + $0x268] sm:$0xff]
    %v4699 = vld [vmem:[%s15 + $0x270] sm:$0xff]
    %v4700 = vld [vmem:[%s15 + $0x278] sm:$0xff]
    %v4701 = vld [vmem:[%s15 + $0x280] sm:$0xff]
    %v4702 = vld [vmem:[%s15 + $0x288] sm:$0xff]
    %v4703 = vld [vmem:[%s15 + $0x290] sm:$0xff]
    %v4704 = vld [vmem:[%s15 + $0x298] sm:$0xff]
    %v4705 = vld [vmem:[%s15 + $0x2a0] sm:$0xff]
    %v4706 = vld [vmem:[%s15 + $0x2a8] sm:$0xff]
    %v4707 = vld [vmem:[%s15 + $0x2b0] sm:$0xff]
    %v4708 = vld [vmem:[%s15 + $0x2b8] sm:$0xff]
    %v4709 = vld [vmem:[%s15 + $0x2c0] sm:$0xff]
    %v4710 = vld [vmem:[%s15 + $0x2c8] sm:$0xff]
    %v4711 = vld [vmem:[%s15 + $0x2d0] sm:$0xff]
    %v4712 = vld [vmem:[%s15 + $0x2d8] sm:$0xff]
    %v4713 = vld [vmem:[%s15 + $0x2e0] sm:$0xff]
    %v4714 = vld [vmem:[%s15 + $0x2e8] sm:$0xff]
    %v4715 = vld [vmem:[%s15 + $0x2f0] sm:$0xff]
    %v4716 = vld [vmem:[%s15 + $0x2f8] sm:$0xff]
    %4717 = vmatpush.msra.mxu0 %v4700
    %4718 = vmatpush.msra.mxu0 %v4699
    %4719 = vmatpush.msra.mxu0 %v4698
    %4720 = vmatpush.msra.mxu0 %v4697
    %4721 = vmatpush.msra.mxu0 %v4696
    %4722 = vmatpush.msra.mxu0 %v4695
    %4723 = vmatpush.msra.mxu0 %v4694
    %4724 = vmatpush.msra.mxu0 %v4693
    %4725 = vmatpush.msra.mxu0 %v4692
    %4726 = vmatpush.msra.mxu0 %v4691
    %4727 = vmatpush.msra.mxu0 %v4690
    %4728 = vmatpush.msra.mxu0 %v4689
    %4729 = vmatpush.msra.mxu0 %v4688
    %4730 = vmatpush.msra.mxu0 %v4687
    %4731 = vmatpush.msra.mxu0 %v4686
    %4732 = vmatpush.msra.mxu0 %v4685
    %4733 = vmatmul.f32.gmra.mxu0 %v4659
    %v4734 = vpop.f32.mrf.mxu0
    %v4735 = vadd.f32 0.0, %v4734
    %4736 = vmatmul.f32.gmra.mxu0 %v4664
    %v4737 = vpop.f32.mrf.mxu0
    %v4738 = vadd.f32 0.0, %v4737
    %4739 = vmatmul.f32.gmra.mxu0 %v4669
    %v4740 = vpop.f32.mrf.mxu0
    %v4741 = vadd.f32 0.0, %v4740
    %4742 = vmatmul.f32.gmra.mxu0 %v4674
    %v4743 = vpop.f32.mrf.mxu0
    %v4744 = vadd.f32 0.0, %v4743
    %4745 = vdwg.mxu0
    %4746 = vmatpush.msra.mxu0 %v4716
    %4747 = vmatpush.msra.mxu0 %v4715
    %4748 = vmatpush.msra.mxu0 %v4714
    %4749 = vmatpush.msra.mxu0 %v4713
    %4750 = vmatpush.msra.mxu0 %v4712
    %4751 = vmatpush.msra.mxu0 %v4711
    %4752 = vmatpush.msra.mxu0 %v4710
    %4753 = vmatpush.msra.mxu0 %v4709
    %4754 = vmatpush.msra.mxu0 %v4708
    %4755 = vmatpush.msra.mxu0 %v4707
    %4756 = vmatpush.msra.mxu0 %v4706
    %4757 = vmatpush.msra.mxu0 %v4705
    %4758 = vmatpush.msra.mxu0 %v4704
    %4759 = vmatpush.msra.mxu0 %v4703
    %4760 = vmatpush.msra.mxu0 %v4702
    %4761 = vmatpush.msra.mxu0 %v4701
    %4762 = vmatmul.f32.gmra.mxu0 %v4662
    %v4763 = vpop.f32.mrf.mxu0
    %v4764 = vadd.f32 %v4735, %v4763
    %4765 = vmatmul.f32.gmra.mxu0 %v4666
    %v4766 = vpop.f32.mrf.mxu0
    %v4767 = vadd.f32 %v4738, %v4766
    %4768 = vmatmul.f32.gmra.mxu0 %v4672
    %v4769 = vpop.f32.mrf.mxu0
    %v4770 = vadd.f32 %v4741, %v4769
    %4771 = vmatmul.f32.gmra.mxu0 %v4676
    %v4772 = vpop.f32.mrf.mxu0
    %v4773 = vadd.f32 %v4744, %v4772
    %4774 = vdwg.mxu0
    %v4775 = vadd.f32 %v4630, %v4764
    %v4776 = vadd.f32 %v4633, %v4767
    %v4777 = vadd.f32 %v4636, %v4770
    %v4778 = vadd.f32 %v4639, %v4773
    %v4779 = vld [vmem:[#allocation2] sm:$0xf8]
    %v4780 = vld [vmem:[#allocation2 + $0x8] sm:$0xf8]
    %v4781 = vld [vmem:[#allocation2 + $0x20] sm:$0x7]
    %v4782 = vld [vmem:[#allocation2 + $0x28] sm:$0x7]
    %v4783 = vld [vmem:[#allocation2 + $0x30] sm:$0xf8]
    %v4784 = vld [vmem:[#allocation2 + $0x38] sm:$0xf8]
    %v4785 = vld [vmem:[#allocation2 + $0x50] sm:$0x7]
    %v4786 = vld [vmem:[#allocation2 + $0x58] sm:$0x7]
    %v4795 = vrot.slane %v4779, 3
    %v4796 = vrot.slane %v4407, 3
    %v4797 = vsel %vm287, %v4795, %v4796
    %v4798 = vrot.slane %v4780, 3
    %v4799 = vrot.slane %v4408, 3
    %v4800 = vsel %vm287, %v4798, %v4799
    %v4801 = vrot.slane %v4781, 3
    %v4802 = vsel %vm287, %v4796, %v4801
    %v4803 = vrot.slane %v4782, 3
    %v4804 = vsel %vm287, %v4799, %v4803
    %v4805 = vrot.slane %v4783, 3
    %v4806 = vrot.slane %v4411, 3
    %v4807 = vsel %vm287, %v4805, %v4806
    %v4808 = vrot.slane %v4784, 3
    %v4809 = vrot.slane %v4412, 3
    %v4810 = vsel %vm287, %v4808, %v4809
    %v4811 = vrot.slane %v4785, 3
    %v4812 = vsel %vm287, %v4806, %v4811
    %v4813 = vrot.slane %v4786, 3
    %v4814 = vsel %vm287, %v4809, %v4813
    %v4823 = vld [vmem:[%s15 + $0x300] sm:$0xff]
    %v4824 = vld [vmem:[%s15 + $0x308] sm:$0xff]
    %v4825 = vld [vmem:[%s15 + $0x310] sm:$0xff]
    %v4826 = vld [vmem:[%s15 + $0x318] sm:$0xff]
    %v4827 = vld [vmem:[%s15 + $0x320] sm:$0xff]
    %v4828 = vld [vmem:[%s15 + $0x328] sm:$0xff]
    %v4829 = vld [vmem:[%s15 + $0x330] sm:$0xff]
    %v4830 = vld [vmem:[%s15 + $0x338] sm:$0xff]
    %v4831 = vld [vmem:[%s15 + $0x340] sm:$0xff]
    %v4832 = vld [vmem:[%s15 + $0x348] sm:$0xff]
    %v4833 = vld [vmem:[%s15 + $0x350] sm:$0xff]
    %v4834 = vld [vmem:[%s15 + $0x358] sm:$0xff]
    %v4835 = vld [vmem:[%s15 + $0x360] sm:$0xff]
    %v4836 = vld [vmem:[%s15 + $0x368] sm:$0xff]
    %v4837 = vld [vmem:[%s15 + $0x370] sm:$0xff]
    %v4838 = vld [vmem:[%s15 + $0x378] sm:$0xff]
    %v4839 = vld [vmem:[%s15 + $0x380] sm:$0xff]
    %v4840 = vld [vmem:[%s15 + $0x388] sm:$0xff]
    %v4841 = vld [vmem:[%s15 + $0x390] sm:$0xff]
    %v4842 = vld [vmem:[%s15 + $0x398] sm:$0xff]
    %v4843 = vld [vmem:[%s15 + $0x3a0] sm:$0xff]
    %v4844 = vld [vmem:[%s15 + $0x3a8] sm:$0xff]
    %v4845 = vld [vmem:[%s15 + $0x3b0] sm:$0xff]
    %v4846 = vld [vmem:[%s15 + $0x3b8] sm:$0xff]
    %v4847 = vld [vmem:[%s15 + $0x3c0] sm:$0xff]
    %v4848 = vld [vmem:[%s15 + $0x3c8] sm:$0xff]
    %v4849 = vld [vmem:[%s15 + $0x3d0] sm:$0xff]
    %v4850 = vld [vmem:[%s15 + $0x3d8] sm:$0xff]
    %v4851 = vld [vmem:[%s15 + $0x3e0] sm:$0xff]
    %v4852 = vld [vmem:[%s15 + $0x3e8] sm:$0xff]
    %v4853 = vld [vmem:[%s15 + $0x3f0] sm:$0xff]
    %v4854 = vld [vmem:[%s15 + $0x3f8] sm:$0xff]
    %4855 = vmatpush.msra.mxu0 %v4838
    %4856 = vmatpush.msra.mxu0 %v4837
    %4857 = vmatpush.msra.mxu0 %v4836
    %4858 = vmatpush.msra.mxu0 %v4835
    %4859 = vmatpush.msra.mxu0 %v4834
    %4860 = vmatpush.msra.mxu0 %v4833
    %4861 = vmatpush.msra.mxu0 %v4832
    %4862 = vmatpush.msra.mxu0 %v4831
    %4863 = vmatpush.msra.mxu0 %v4830
    %4864 = vmatpush.msra.mxu0 %v4829
    %4865 = vmatpush.msra.mxu0 %v4828
    %4866 = vmatpush.msra.mxu0 %v4827
    %4867 = vmatpush.msra.mxu0 %v4826
    %4868 = vmatpush.msra.mxu0 %v4825
    %4869 = vmatpush.msra.mxu0 %v4824
    %4870 = vmatpush.msra.mxu0 %v4823
    %4871 = vmatmul.f32.gmra.mxu0 %v4797
    %v4872 = vpop.f32.mrf.mxu0
    %v4873 = vadd.f32 0.0, %v4872
    %4874 = vmatmul.f32.gmra.mxu0 %v4802
    %v4875 = vpop.f32.mrf.mxu0
    %v4876 = vadd.f32 0.0, %v4875
    %4877 = vmatmul.f32.gmra.mxu0 %v4807
    %v4878 = vpop.f32.mrf.mxu0
    %v4879 = vadd.f32 0.0, %v4878
    %4880 = vmatmul.f32.gmra.mxu0 %v4812
    %v4881 = vpop.f32.mrf.mxu0
    %v4882 = vadd.f32 0.0, %v4881
    %4883 = vdwg.mxu0
    %4884 = vmatpush.msra.mxu0 %v4854
    %4885 = vmatpush.msra.mxu0 %v4853
    %4886 = vmatpush.msra.mxu0 %v4852
    %4887 = vmatpush.msra.mxu0 %v4851
    %4888 = vmatpush.msra.mxu0 %v4850
    %4889 = vmatpush.msra.mxu0 %v4849
    %4890 = vmatpush.msra.mxu0 %v4848
    %4891 = vmatpush.msra.mxu0 %v4847
    %4892 = vmatpush.msra.mxu0 %v4846
    %4893 = vmatpush.msra.mxu0 %v4845
    %4894 = vmatpush.msra.mxu0 %v4844
    %4895 = vmatpush.msra.mxu0 %v4843
    %4896 = vmatpush.msra.mxu0 %v4842
    %4897 = vmatpush.msra.mxu0 %v4841
    %4898 = vmatpush.msra.mxu0 %v4840
    %4899 = vmatpush.msra.mxu0 %v4839
    %4900 = vmatmul.f32.gmra.mxu0 %v4800
    %v4901 = vpop.f32.mrf.mxu0
    %v4902 = vadd.f32 %v4873, %v4901
    %4903 = vmatmul.f32.gmra.mxu0 %v4804
    %v4904 = vpop.f32.mrf.mxu0
    %v4905 = vadd.f32 %v4876, %v4904
    %4906 = vmatmul.f32.gmra.mxu0 %v4810
    %v4907 = vpop.f32.mrf.mxu0
    %v4908 = vadd.f32 %v4879, %v4907
    %4909 = vmatmul.f32.gmra.mxu0 %v4814
    %v4910 = vpop.f32.mrf.mxu0
    %v4911 = vadd.f32 %v4882, %v4910
    %4912 = vdwg.mxu0
    %v4913 = vadd.f32 %v4775, %v4902
    %v4914 = vadd.f32 %v4776, %v4905
    %v4915 = vadd.f32 %v4777, %v4908
    %v4916 = vadd.f32 %v4778, %v4911
    %v4917 = vld [vmem:[#allocation2] sm:$0xf0]
    %v4918 = vld [vmem:[#allocation2 + $0x8] sm:$0xf0]
    %v4919 = vld [vmem:[#allocation2 + $0x20] sm:$0xf]
    %v4920 = vld [vmem:[#allocation2 + $0x28] sm:$0xf]
    %v4921 = vld [vmem:[#allocation2 + $0x30] sm:$0xf0]
    %v4922 = vld [vmem:[#allocation2 + $0x38] sm:$0xf0]
    %v4923 = vld [vmem:[#allocation2 + $0x50] sm:$0xf]
    %v4924 = vld [vmem:[#allocation2 + $0x58] sm:$0xf]
    %v4933 = vrot.slane %v4917, 4
    %v4934 = vrot.slane %v4407, 4
    %v4935 = vsel %vm332, %v4933, %v4934
    %v4936 = vrot.slane %v4918, 4
    %v4937 = vrot.slane %v4408, 4
    %v4938 = vsel %vm332, %v4936, %v4937
    %v4939 = vrot.slane %v4919, 4
    %v4940 = vsel %vm332, %v4934, %v4939
    %v4941 = vrot.slane %v4920, 4
    %v4942 = vsel %vm332, %v4937, %v4941
    %v4943 = vrot.slane %v4921, 4
    %v4944 = vrot.slane %v4411, 4
    %v4945 = vsel %vm332, %v4943, %v4944
    %v4946 = vrot.slane %v4922, 4
    %v4947 = vrot.slane %v4412, 4
    %v4948 = vsel %vm332, %v4946, %v4947
    %v4949 = vrot.slane %v4923, 4
    %v4950 = vsel %vm332, %v4944, %v4949
    %v4951 = vrot.slane %v4924, 4
    %v4952 = vsel %vm332, %v4947, %v4951
    %v4961 = vld [vmem:[%s15 + $0x400] sm:$0xff]
    %v4962 = vld [vmem:[%s15 + $0x408] sm:$0xff]
    %v4963 = vld [vmem:[%s15 + $0x410] sm:$0xff]
    %v4964 = vld [vmem:[%s15 + $0x418] sm:$0xff]
    %v4965 = vld [vmem:[%s15 + $0x420] sm:$0xff]
    %v4966 = vld [vmem:[%s15 + $0x428] sm:$0xff]
    %v4967 = vld [vmem:[%s15 + $0x430] sm:$0xff]
    %v4968 = vld [vmem:[%s15 + $0x438] sm:$0xff]
    %v4969 = vld [vmem:[%s15 + $0x440] sm:$0xff]
    %v4970 = vld [vmem:[%s15 + $0x448] sm:$0xff]
    %v4971 = vld [vmem:[%s15 + $0x450] sm:$0xff]
    %v4972 = vld [vmem:[%s15 + $0x458] sm:$0xff]
    %v4973 = vld [vmem:[%s15 + $0x460] sm:$0xff]
    %v4974 = vld [vmem:[%s15 + $0x468] sm:$0xff]
    %v4975 = vld [vmem:[%s15 + $0x470] sm:$0xff]
    %v4976 = vld [vmem:[%s15 + $0x478] sm:$0xff]
    %v4977 = vld [vmem:[%s15 + $0x480] sm:$0xff]
    %v4978 = vld [vmem:[%s15 + $0x488] sm:$0xff]
    %v4979 = vld [vmem:[%s15 + $0x490] sm:$0xff]
    %v4980 = vld [vmem:[%s15 + $0x498] sm:$0xff]
    %v4981 = vld [vmem:[%s15 + $0x4a0] sm:$0xff]
    %v4982 = vld [vmem:[%s15 + $0x4a8] sm:$0xff]
    %v4983 = vld [vmem:[%s15 + $0x4b0] sm:$0xff]
    %v4984 = vld [vmem:[%s15 + $0x4b8] sm:$0xff]
    %v4985 = vld [vmem:[%s15 + $0x4c0] sm:$0xff]
    %v4986 = vld [vmem:[%s15 + $0x4c8] sm:$0xff]
    %v4987 = vld [vmem:[%s15 + $0x4d0] sm:$0xff]
    %v4988 = vld [vmem:[%s15 + $0x4d8] sm:$0xff]
    %v4989 = vld [vmem:[%s15 + $0x4e0] sm:$0xff]
    %v4990 = vld [vmem:[%s15 + $0x4e8] sm:$0xff]
    %v4991 = vld [vmem:[%s15 + $0x4f0] sm:$0xff]
    %v4992 = vld [vmem:[%s15 + $0x4f8] sm:$0xff]
    %4993 = vmatpush.msra.mxu0 %v4976
    %4994 = vmatpush.msra.mxu0 %v4975
    %4995 = vmatpush.msra.mxu0 %v4974
    %4996 = vmatpush.msra.mxu0 %v4973
    %4997 = vmatpush.msra.mxu0 %v4972
    %4998 = vmatpush.msra.mxu0 %v4971
    %4999 = vmatpush.msra.mxu0 %v4970
    %5000 = vmatpush.msra.mxu0 %v4969
    %5001 = vmatpush.msra.mxu0 %v4968
    %5002 = vmatpush.msra.mxu0 %v4967
    %5003 = vmatpush.msra.mxu0 %v4966
    %5004 = vmatpush.msra.mxu0 %v4965
    %5005 = vmatpush.msra.mxu0 %v4964
    %5006 = vmatpush.msra.mxu0 %v4963
    %5007 = vmatpush.msra.mxu0 %v4962
    %5008 = vmatpush.msra.mxu0 %v4961
    %5009 = vmatmul.f32.gmra.mxu0 %v4935
    %v5010 = vpop.f32.mrf.mxu0
    %v5011 = vadd.f32 0.0, %v5010
    %5012 = vmatmul.f32.gmra.mxu0 %v4940
    %v5013 = vpop.f32.mrf.mxu0
    %v5014 = vadd.f32 0.0, %v5013
    %5015 = vmatmul.f32.gmra.mxu0 %v4945
    %v5016 = vpop.f32.mrf.mxu0
    %v5017 = vadd.f32 0.0, %v5016
    %5018 = vmatmul.f32.gmra.mxu0 %v4950
    %v5019 = vpop.f32.mrf.mxu0
    %v5020 = vadd.f32 0.0, %v5019
    %5021 = vdwg.mxu0
    %5022 = vmatpush.msra.mxu0 %v4992
    %5023 = vmatpush.msra.mxu0 %v4991
    %5024 = vmatpush.msra.mxu0 %v4990
    %5025 = vmatpush.msra.mxu0 %v4989
    %5026 = vmatpush.msra.mxu0 %v4988
    %5027 = vmatpush.msra.mxu0 %v4987
    %5028 = vmatpush.msra.mxu0 %v4986
    %5029 = vmatpush.msra.mxu0 %v4985
    %5030 = vmatpush.msra.mxu0 %v4984
    %5031 = vmatpush.msra.mxu0 %v4983
    %5032 = vmatpush.msra.mxu0 %v4982
    %5033 = vmatpush.msra.mxu0 %v4981
    %5034 = vmatpush.msra.mxu0 %v4980
    %5035 = vmatpush.msra.mxu0 %v4979
    %5036 = vmatpush.msra.mxu0 %v4978
    %5037 = vmatpush.msra.mxu0 %v4977
    %5038 = vmatmul.f32.gmra.mxu0 %v4938
    %v5039 = vpop.f32.mrf.mxu0
    %v5040 = vadd.f32 %v5011, %v5039
    %5041 = vmatmul.f32.gmra.mxu0 %v4942
    %v5042 = vpop.f32.mrf.mxu0
    %v5043 = vadd.f32 %v5014, %v5042
    %5044 = vmatmul.f32.gmra.mxu0 %v4948
    %v5045 = vpop.f32.mrf.mxu0
    %v5046 = vadd.f32 %v5017, %v5045
    %5047 = vmatmul.f32.gmra.mxu0 %v4952
    %v5048 = vpop.f32.mrf.mxu0
    %v5049 = vadd.f32 %v5020, %v5048
    %5050 = vdwg.mxu0
    %v5051 = vadd.f32 %v4913, %v5040
    %v5052 = vadd.f32 %v4914, %v5043
    %v5053 = vadd.f32 %v4915, %v5046
    %v5054 = vadd.f32 %v4916, %v5049
    %v5055 = vld [vmem:[%s16] sm:$0x1]
    %v5057 = vperm.slane %v5055, 0
    %v5059 = vadd.f32 %v5051, %v5057
    %v5060 = vadd.f32 %v5052, %v5057
    %v5061 = vadd.f32 %v5053, %v5057
    %v5062 = vadd.f32 %v5054, %v5057
    %v5063 = vmax.f32 %v5059, 0.0
    %v5064 = vmax.f32 %v5060, 0.0
    %v5065 = vmax.f32 %v5061, 0.0
    %v5066 = vmax.f32 %v5062, 0.0
    %v5071 = vrot.slane %v5063, 6
    %v5072 = vrot.slane %v5064, 6
    %v5073 = vsel %vm133, %v5071, %v5072
    %v5074 = vrot.slane %v5065, 6
    %v5075 = vrot.slane %v5066, 6
    %v5076 = vsel %vm133, %v5074, %v5075
    %5083 = vst.msk [vmem:[#allocation2] sm:$0xfc] %vm1055, %v5071
    %5084 = vst.msk [vmem:[#allocation2 + $0x10] sm:$0xff] %vm1057, %v5073
    %5085 = vst.msk [vmem:[#allocation2 + $0x20] sm:$0x3] %vm1059, %v5072
    %5086 = vst.msk [vmem:[#allocation2 + $0x30] sm:$0xfc] %vm1055, %v5074
    %5087 = vst.msk [vmem:[#allocation2 + $0x40] sm:$0xff] %vm1057, %v5076
    %5088 = vst.msk [vmem:[#allocation2 + $0x50] sm:$0x3] %vm1059, %v5075
    %v5089 = vld [vmem:[#allocation2] sm:$0xff]
    %v5090 = vld [vmem:[#allocation2 + $0x10] sm:$0xff]
    %v5091 = vld [vmem:[#allocation2 + $0x30] sm:$0xff]
    %v5092 = vld [vmem:[#allocation2 + $0x40] sm:$0xff]
    %v5093 = vld [vmem:[%s17] sm:$0xff]
    %v5094 = vld [vmem:[%s17 + $0x8] sm:$0xff]
    %v5095 = vld [vmem:[%s17 + $0x10] sm:$0xff]
    %v5096 = vld [vmem:[%s17 + $0x18] sm:$0xff]
    %v5097 = vld [vmem:[%s17 + $0x20] sm:$0xff]
    %v5098 = vld [vmem:[%s17 + $0x28] sm:$0xff]
    %v5099 = vld [vmem:[%s17 + $0x30] sm:$0xff]
    %v5100 = vld [vmem:[%s17 + $0x38] sm:$0xff]
    %v5101 = vld [vmem:[#allocation2] sm:$0xfe]
    %v5102 = vld [vmem:[#allocation2 + $0x20] sm:$0x1]
    %v5103 = vld [vmem:[#allocation2 + $0x30] sm:$0xfe]
    %v5104 = vld [vmem:[#allocation2 + $0x50] sm:$0x1]
    %v5111 = vrot.slane %v5101, 1
    %v5112 = vrot.slane %v5090, 1
    %v5113 = vsel %vm197, %v5111, %v5112
    %v5114 = vrot.slane %v5102, 1
    %v5115 = vsel %vm197, %v5112, %v5114
    %v5116 = vrot.slane %v5103, 1
    %v5117 = vrot.slane %v5092, 1
    %v5118 = vsel %vm197, %v5116, %v5117
    %v5119 = vrot.slane %v5104, 1
    %v5120 = vsel %vm197, %v5117, %v5119
    %v5121 = vld [vmem:[%s17 + $0x40] sm:$0xff]
    %v5122 = vld [vmem:[%s17 + $0x48] sm:$0xff]
    %v5123 = vld [vmem:[%s17 + $0x50] sm:$0xff]
    %v5124 = vld [vmem:[%s17 + $0x58] sm:$0xff]
    %v5125 = vld [vmem:[%s17 + $0x60] sm:$0xff]
    %v5126 = vld [vmem:[%s17 + $0x68] sm:$0xff]
    %v5127 = vld [vmem:[%s17 + $0x70] sm:$0xff]
    %v5128 = vld [vmem:[%s17 + $0x78] sm:$0xff]
    %v5129 = vsel %vm1057, %v5113, 0
    %v5131 = vsel %vm1057, %v5115, 0
    %v5133 = vsel %vm1057, %v5118, 0
    %v5135 = vsel %vm1057, %v5120, 0
    %5137 = vmatpush.msra.mxu0 0.0
    %5138 = vmatpush.msra.mxu0 0.0
    %5139 = vmatpush.msra.mxu0 0.0
    %5140 = vmatpush.msra.mxu0 0.0
    %5141 = vmatpush.msra.mxu0 0.0
    %5142 = vmatpush.msra.mxu0 0.0
    %5143 = vmatpush.msra.mxu0 0.0
    %5144 = vmatpush.msra.mxu0 0.0
    %5145 = vmatpush.msra.mxu0 %v5128
    %5146 = vmatpush.msra.mxu0 %v5127
    %5147 = vmatpush.msra.mxu0 %v5126
    %5148 = vmatpush.msra.mxu0 %v5125
    %5149 = vmatpush.msra.mxu0 %v5124
    %5150 = vmatpush.msra.mxu0 %v5123
    %5151 = vmatpush.msra.mxu0 %v5122
    %5152 = vmatpush.msra.mxu0 %v5121
    %5153 = vmatmul.f32.gmra.mxu0 %v5129
    %v5154 = vpop.f32.mrf.mxu0
    %v5155 = vadd.f32 0.0, %v5154
    %5156 = vmatmul.f32.gmra.mxu0 %v5131
    %v5157 = vpop.f32.mrf.mxu0
    %v5158 = vadd.f32 0.0, %v5157
    %5159 = vmatmul.f32.gmra.mxu0 %v5133
    %v5160 = vpop.f32.mrf.mxu0
    %v5161 = vadd.f32 0.0, %v5160
    %5162 = vmatmul.f32.gmra.mxu0 %v5135
    %v5163 = vpop.f32.mrf.mxu0
    %v5164 = vadd.f32 0.0, %v5163
    %5165 = vdwg.mxu0
    %v5167 = vsel %vm1057, %v5089, 0
    %v5169 = vsel %vm1057, %v5090, 0
    %v5172 = vsel %vm1057, %v5091, 0
    %v5174 = vsel %vm1057, %v5092, 0
    %5176 = vmatpush.msra.mxu0 0.0
    %5177 = vmatpush.msra.mxu0 0.0
    %5178 = vmatpush.msra.mxu0 0.0
    %5179 = vmatpush.msra.mxu0 0.0
    %5180 = vmatpush.msra.mxu0 0.0
    %5181 = vmatpush.msra.mxu0 0.0
    %5182 = vmatpush.msra.mxu0 0.0
    %5183 = vmatpush.msra.mxu0 0.0
    %5184 = vmatpush.msra.mxu0 %v5100
    %5185 = vmatpush.msra.mxu0 %v5099
    %5186 = vmatpush.msra.mxu0 %v5098
    %5187 = vmatpush.msra.mxu0 %v5097
    %5188 = vmatpush.msra.mxu0 %v5096
    %5189 = vmatpush.msra.mxu0 %v5095
    %5190 = vmatpush.msra.mxu0 %v5094
    %5191 = vmatpush.msra.mxu0 %v5093
    %5192 = vmatmul.f32.gmra.mxu0 %v5167
    %v5193 = vpop.f32.mrf.mxu0
    %v5194 = vadd.f32 %v5155, %v5193
    %5195 = vmatmul.f32.gmra.mxu0 %v5169
    %v5196 = vpop.f32.mrf.mxu0
    %v5197 = vadd.f32 %v5158, %v5196
    %5198 = vmatmul.f32.gmra.mxu0 %v5172
    %v5199 = vpop.f32.mrf.mxu0
    %v5200 = vadd.f32 %v5161, %v5199
    %5201 = vmatmul.f32.gmra.mxu0 %v5174
    %v5202 = vpop.f32.mrf.mxu0
    %v5203 = vadd.f32 %v5164, %v5202
    %5204 = vdwg.mxu0
    %v5205 = vld [vmem:[#allocation2] sm:$0xfc]
    %v5206 = vld [vmem:[#allocation2 + $0x20] sm:$0x3]
    %v5207 = vld [vmem:[#allocation2 + $0x30] sm:$0xfc]
    %v5208 = vld [vmem:[#allocation2 + $0x50] sm:$0x3]
    %v5213 = vrot.slane %v5205, 2
    %v5214 = vrot.slane %v5090, 2
    %v5215 = vsel %vm242, %v5213, %v5214
    %v5216 = vrot.slane %v5206, 2
    %v5217 = vsel %vm242, %v5214, %v5216
    %v5218 = vrot.slane %v5207, 2
    %v5219 = vrot.slane %v5092, 2
    %v5220 = vsel %vm242, %v5218, %v5219
    %v5221 = vrot.slane %v5208, 2
    %v5222 = vsel %vm242, %v5219, %v5221
    %v5223 = vld [vmem:[%s17 + $0x80] sm:$0xff]
    %v5224 = vld [vmem:[%s17 + $0x88] sm:$0xff]
    %v5225 = vld [vmem:[%s17 + $0x90] sm:$0xff]
    %v5226 = vld [vmem:[%s17 + $0x98] sm:$0xff]
    %v5227 = vld [vmem:[%s17 + $0xa0] sm:$0xff]
    %v5228 = vld [vmem:[%s17 + $0xa8] sm:$0xff]
    %v5229 = vld [vmem:[%s17 + $0xb0] sm:$0xff]
    %v5230 = vld [vmem:[%s17 + $0xb8] sm:$0xff]
    %v5231 = vsel %vm1057, %v5215, 0
    %v5233 = vsel %vm1057, %v5217, 0
    %v5235 = vsel %vm1057, %v5220, 0
    %v5237 = vsel %vm1057, %v5222, 0
    %5239 = vmatpush.msra.mxu0 0.0
    %5240 = vmatpush.msra.mxu0 0.0
    %5241 = vmatpush.msra.mxu0 0.0
    %5242 = vmatpush.msra.mxu0 0.0
    %5243 = vmatpush.msra.mxu0 0.0
    %5244 = vmatpush.msra.mxu0 0.0
    %5245 = vmatpush.msra.mxu0 0.0
    %5246 = vmatpush.msra.mxu0 0.0
    %5247 = vmatpush.msra.mxu0 %v5230
    %5248 = vmatpush.msra.mxu0 %v5229
    %5249 = vmatpush.msra.mxu0 %v5228
    %5250 = vmatpush.msra.mxu0 %v5227
    %5251 = vmatpush.msra.mxu0 %v5226
    %5252 = vmatpush.msra.mxu0 %v5225
    %5253 = vmatpush.msra.mxu0 %v5224
    %5254 = vmatpush.msra.mxu0 %v5223
    %5255 = vmatmul.f32.gmra.mxu0 %v5231
    %v5256 = vpop.f32.mrf.mxu0
    %v5257 = vadd.f32 0.0, %v5256
    %5258 = vmatmul.f32.gmra.mxu0 %v5233
    %v5259 = vpop.f32.mrf.mxu0
    %v5260 = vadd.f32 0.0, %v5259
    %5261 = vmatmul.f32.gmra.mxu0 %v5235
    %v5262 = vpop.f32.mrf.mxu0
    %v5263 = vadd.f32 0.0, %v5262
    %5264 = vmatmul.f32.gmra.mxu0 %v5237
    %v5265 = vpop.f32.mrf.mxu0
    %v5266 = vadd.f32 0.0, %v5265
    %5267 = vdwg.mxu0
    %v5268 = vadd.f32 %v5194, %v5257
    %v5269 = vadd.f32 %v5197, %v5260
    %v5270 = vadd.f32 %v5200, %v5263
    %v5271 = vadd.f32 %v5203, %v5266
    %v5272 = vld [vmem:[#allocation2] sm:$0xf8]
    %v5273 = vld [vmem:[#allocation2 + $0x20] sm:$0x7]
    %v5274 = vld [vmem:[#allocation2 + $0x30] sm:$0xf8]
    %v5275 = vld [vmem:[#allocation2 + $0x50] sm:$0x7]
    %v5280 = vrot.slane %v5272, 3
    %v5281 = vrot.slane %v5090, 3
    %v5282 = vsel %vm287, %v5280, %v5281
    %v5283 = vrot.slane %v5273, 3
    %v5284 = vsel %vm287, %v5281, %v5283
    %v5285 = vrot.slane %v5274, 3
    %v5286 = vrot.slane %v5092, 3
    %v5287 = vsel %vm287, %v5285, %v5286
    %v5288 = vrot.slane %v5275, 3
    %v5289 = vsel %vm287, %v5286, %v5288
    %v5290 = vld [vmem:[%s17 + $0xc0] sm:$0xff]
    %v5291 = vld [vmem:[%s17 + $0xc8] sm:$0xff]
    %v5292 = vld [vmem:[%s17 + $0xd0] sm:$0xff]
    %v5293 = vld [vmem:[%s17 + $0xd8] sm:$0xff]
    %v5294 = vld [vmem:[%s17 + $0xe0] sm:$0xff]
    %v5295 = vld [vmem:[%s17 + $0xe8] sm:$0xff]
    %v5296 = vld [vmem:[%s17 + $0xf0] sm:$0xff]
    %v5297 = vld [vmem:[%s17 + $0xf8] sm:$0xff]
    %v5298 = vsel %vm1057, %v5282, 0
    %v5300 = vsel %vm1057, %v5284, 0
    %v5302 = vsel %vm1057, %v5287, 0
    %v5304 = vsel %vm1057, %v5289, 0
    %5306 = vmatpush.msra.mxu0 0.0
    %5307 = vmatpush.msra.mxu0 0.0
    %5308 = vmatpush.msra.mxu0 0.0
    %5309 = vmatpush.msra.mxu0 0.0
    %5310 = vmatpush.msra.mxu0 0.0
    %5311 = vmatpush.msra.mxu0 0.0
    %5312 = vmatpush.msra.mxu0 0.0
    %5313 = vmatpush.msra.mxu0 0.0
    %5314 = vmatpush.msra.mxu0 %v5297
    %5315 = vmatpush.msra.mxu0 %v5296
    %5316 = vmatpush.msra.mxu0 %v5295
    %5317 = vmatpush.msra.mxu0 %v5294
    %5318 = vmatpush.msra.mxu0 %v5293
    %5319 = vmatpush.msra.mxu0 %v5292
    %5320 = vmatpush.msra.mxu0 %v5291
    %5321 = vmatpush.msra.mxu0 %v5290
    %5322 = vmatmul.f32.gmra.mxu0 %v5298
    %v5323 = vpop.f32.mrf.mxu0
    %v5324 = vadd.f32 0.0, %v5323
    %5325 = vmatmul.f32.gmra.mxu0 %v5300
    %v5326 = vpop.f32.mrf.mxu0
    %v5327 = vadd.f32 0.0, %v5326
    %5328 = vmatmul.f32.gmra.mxu0 %v5302
    %v5329 = vpop.f32.mrf.mxu0
    %v5330 = vadd.f32 0.0, %v5329
    %5331 = vmatmul.f32.gmra.mxu0 %v5304
    %v5332 = vpop.f32.mrf.mxu0
    %v5333 = vadd.f32 0.0, %v5332
    %5334 = vdwg.mxu0
    %v5335 = vadd.f32 %v5268, %v5324
    %v5336 = vadd.f32 %v5269, %v5327
    %v5337 = vadd.f32 %v5270, %v5330
    %v5338 = vadd.f32 %v5271, %v5333
    %v5339 = vld [vmem:[#allocation2] sm:$0xf0]
    %v5340 = vld [vmem:[#allocation2 + $0x20] sm:$0xf]
    %v5341 = vld [vmem:[#allocation2 + $0x30] sm:$0xf0]
    %v5342 = vld [vmem:[#allocation2 + $0x50] sm:$0xf]
    %v5347 = vrot.slane %v5339, 4
    %v5348 = vrot.slane %v5090, 4
    %v5349 = vsel %vm332, %v5347, %v5348
    %v5350 = vrot.slane %v5340, 4
    %v5351 = vsel %vm332, %v5348, %v5350
    %v5352 = vrot.slane %v5341, 4
    %v5353 = vrot.slane %v5092, 4
    %v5354 = vsel %vm332, %v5352, %v5353
    %v5355 = vrot.slane %v5342, 4
    %v5356 = vsel %vm332, %v5353, %v5355
    %v5357 = vld [vmem:[%s17 + $0x100] sm:$0xff]
    %v5358 = vld [vmem:[%s17 + $0x108] sm:$0xff]
    %v5359 = vld [vmem:[%s17 + $0x110] sm:$0xff]
    %v5360 = vld [vmem:[%s17 + $0x118] sm:$0xff]
    %v5361 = vld [vmem:[%s17 + $0x120] sm:$0xff]
    %v5362 = vld [vmem:[%s17 + $0x128] sm:$0xff]
    %v5363 = vld [vmem:[%s17 + $0x130] sm:$0xff]
    %v5364 = vld [vmem:[%s17 + $0x138] sm:$0xff]
    %v5365 = vsel %vm1057, %v5349, 0
    %v5367 = vsel %vm1057, %v5351, 0
    %v5369 = vsel %vm1057, %v5354, 0
    %v5371 = vsel %vm1057, %v5356, 0
    %5373 = vmatpush.msra.mxu0 0.0
    %5374 = vmatpush.msra.mxu0 0.0
    %5375 = vmatpush.msra.mxu0 0.0
    %5376 = vmatpush.msra.mxu0 0.0
    %5377 = vmatpush.msra.mxu0 0.0
    %5378 = vmatpush.msra.mxu0 0.0
    %5379 = vmatpush.msra.mxu0 0.0
    %5380 = vmatpush.msra.mxu0 0.0
    %5381 = vmatpush.msra.mxu0 %v5364
    %5382 = vmatpush.msra.mxu0 %v5363
    %5383 = vmatpush.msra.mxu0 %v5362
    %5384 = vmatpush.msra.mxu0 %v5361
    %5385 = vmatpush.msra.mxu0 %v5360
    %5386 = vmatpush.msra.mxu0 %v5359
    %5387 = vmatpush.msra.mxu0 %v5358
    %5388 = vmatpush.msra.mxu0 %v5357
    %5389 = vmatmul.f32.gmra.mxu0 %v5365
    %v5390 = vpop.f32.mrf.mxu0
    %v5391 = vadd.f32 0.0, %v5390
    %5392 = vmatmul.f32.gmra.mxu0 %v5367
    %v5393 = vpop.f32.mrf.mxu0
    %v5394 = vadd.f32 0.0, %v5393
    %5395 = vmatmul.f32.gmra.mxu0 %v5369
    %v5396 = vpop.f32.mrf.mxu0
    %v5397 = vadd.f32 0.0, %v5396
    %5398 = vmatmul.f32.gmra.mxu0 %v5371
    %v5399 = vpop.f32.mrf.mxu0
    %v5400 = vadd.f32 0.0, %v5399
    %5401 = vdwg.mxu0
    %v5402 = vadd.f32 %v5335, %v5391
    %v5403 = vadd.f32 %v5336, %v5394
    %v5404 = vadd.f32 %v5337, %v5397
    %v5405 = vadd.f32 %v5338, %v5400
    %v5406 = vld [vmem:[%s18] sm:$0x1]
    %v5408 = vperm.slane %v5406, 0
    %v5410 = vadd.f32 %v5402, %v5408
    %v5411 = vadd.f32 %v5403, %v5408
    %v5412 = vadd.f32 %v5404, %v5408
    %v5413 = vadd.f32 %v5405, %v5408
    %v5414 = vmax.f32 %v5410, 0.0
    %v5415 = vmax.f32 %v5411, 0.0
    %v5416 = vmax.f32 %v5412, 0.0
    %v5417 = vmax.f32 %v5413, 0.0
    %v5418 = vld [vmem:[%s19] sm:$0xff]
    %v5419 = vld [vmem:[%s19 + $0x8] sm:$0xff]
    %v5420 = vld [vmem:[%s19 + $0x10] sm:$0xff]
    %v5421 = vld [vmem:[%s19 + $0x18] sm:$0xff]
    %v5422 = vld [vmem:[#allocation3] sm:$0x1]
    %v5424 = vperm.slane %v5422, 0
    %v5427 = vsel %vm723, %v5414, 0
    %v5430 = vsel %vm723, %v5415, 0
    %v5433 = vsel %vm723, %v5416, 0
    %v5436 = vsel %vm723, %v5417, 0
    %5438 = vmatpush.msra.mxu0 0.0
    %5439 = vmatpush.msra.mxu0 0.0
    %5440 = vmatpush.msra.mxu0 0.0
    %5441 = vmatpush.msra.mxu0 0.0
    %5442 = vmatpush.msra.mxu0 0.0
    %5443 = vmatpush.msra.mxu0 0.0
    %5444 = vmatpush.msra.mxu0 0.0
    %5445 = vmatpush.msra.mxu0 0.0
    %5446 = vmatpush.msra.mxu0 0.0
    %5447 = vmatpush.msra.mxu0 0.0
    %5448 = vmatpush.msra.mxu0 0.0
    %5449 = vmatpush.msra.mxu0 0.0
    %5450 = vmatpush.msra.mxu0 %v5421
    %5451 = vmatpush.msra.mxu0 %v5420
    %5452 = vmatpush.msra.mxu0 %v5419
    %5453 = vmatpush.msra.mxu0 %v5418
    %5454 = vmatmul.f32.gmra.mxu0 %v5427
    %v5455 = vpop.f32.mrf.mxu0
    %v5456 = vadd.f32 %v5424, %v5455
    %5457 = vmatmul.f32.gmra.mxu0 %v5430
    %v5458 = vpop.f32.mrf.mxu0
    %v5459 = vadd.f32 %v5424, %v5458
    %5460 = vmatmul.f32.gmra.mxu0 %v5433
    %v5461 = vpop.f32.mrf.mxu0
    %v5462 = vadd.f32 %v5424, %v5461
    %5463 = vmatmul.f32.gmra.mxu0 %v5436
    %v5464 = vpop.f32.mrf.mxu0
    %v5465 = vadd.f32 %v5424, %v5464
    %5466 = vdwg.mxu0
    %5467 = vst.msk [vmem:[%s21] sm:$0xff] %vm148, %v5456
    %5468 = vst.msk [vmem:[%s21 + $0x8] sm:$0xff] %vm148, %v5459
    %5469 = vst.msk [vmem:[%s21 + $0x10] sm:$0xff] %vm148, %v5462
    %5470 = vst.msk [vmem:[%s21 + $0x18] sm:$0xff] %vm148, %v5465
    // Predicated region
    $region98: #{test_conv_net_forward.1} parent=1 // pred_check
      _
    $region99: #{test_conv_net_forward.1} parent=1 // pred_check_branch
      %5472 = sbr.rel (0) target = $region101
    $region100: #{test_conv_net_forward.1} parent=1 // pred_region
      _
    $region101: #{test_conv_net_forward.1} parent=1 // pred_fallthru
      _
    // Predicated region
    $region102: #{test_conv_net_forward.1} parent=1 // pred_check
      _
    $region103: #{test_conv_net_forward.1} parent=1 // pred_check_branch
      %5474 = sbr.rel (0) target = $region105
    $region104: #{test_conv_net_forward.1} parent=1 // pred_region
      _
    $region105: #{test_conv_net_forward.1} parent=1 // pred_fallthru
      _
    %5475 = vsyncpa [#allocation5], 1
    %5476 = vsyncpa [#allocation7], 1

</llo_original>
